<compile_context>
chip_gen: v7x
topology: tpu7x:2x2x1
jax: 0.10.0
libtpu: 0.0.40
codegen_flags: <defaults>
</compile_context>

<pallas_src>
import functools
import math

import jax
import jax.numpy as jnp
import numpy as np
from jax.experimental import pallas as pl
from jax.experimental.pallas import tpu as pltpu


def _layernorm(x, gamma, beta, eps=1e-5):
    mu = jnp.mean(x, axis=-1, keepdims=True)
    var = jnp.mean((x - mu) ** 2, axis=-1, keepdims=True)
    return (x - mu) * jax.lax.rsqrt(var + eps) * gamma + beta


# --------------------------- stage 1: norm1 + QKV ---------------------------
def qkv_project_kernel(
    x_ref, g1_ref, be1_ref,
    wq_ref, bq_ref, wk_ref, bk_ref, wv_ref, bv_ref,
    q_ref, k_ref, v_ref,
    *, num_heads, d_k,
):
    x = x_ref[...].astype(jnp.float32)                      # (tS, D) f32
    xn = _layernorm(x, g1_ref[...], be1_ref[...])
    xn_b = xn.astype(jnp.bfloat16)                          # bf16 MXU operand

    def proj(w_ref, b_ref):
        return jnp.dot(xn_b, w_ref[...],
                       preferred_element_type=jnp.float32) + b_ref[...]

    # fold 1/sqrt(d_k) into Q so the (S, S) score tiles never need rescaling
    q = proj(wq_ref, bq_ref) * (1.0 / math.sqrt(d_k))
    k = proj(wk_ref, bk_ref)
    v = proj(wv_ref, bv_ref)

    # Per-head stores with static lane-aligned slices (multiples of d_k);
    # avoids the (tS, H, d_k) -> (H, tS, d_k) XLU transpose on the store path.
    for h in range(num_heads):
        sl = slice(h * d_k, (h + 1) * d_k)
        q_ref[h] = q[:, sl].astype(q_ref.dtype)
        k_ref[h] = k[:, sl].astype(k_ref.dtype)
        v_ref[h] = v[:, sl].astype(v_ref.dtype)


# ------------- stage 2: flash attention + out-proj + norm2 + FFN ------------
def attn_ffn_kernel(
    x_ref, q_ref, k_ref, v_ref,
    wo_ref, bo_ref, g2_ref, be2_ref,
    w1_ref, b1_ref, w2_ref, b2_ref,
    o_ref,
    m_ref, l_ref, acc_ref,
):
    ki = pl.program_id(2)

    @pl.when(ki == 0)
    def _():
        m_ref[...] = jnp.full_like(m_ref, -jnp.inf)
        l_ref[...] = jnp.zeros_like(l_ref)
        acc_ref[...] = jnp.zeros_like(acc_ref)

    q = q_ref[...]                                          # (H, tQ, d_k) bf16, pre-scaled
    k = k_ref[...]                                          # (H, tK, d_k) bf16
    v = v_ref[...]                                          # (H, tK, d_k) bf16

    # batched over heads on the MXU, f32 accumulation
    s = jnp.einsum("hqd,hkd->hqk", q, k,
                   preferred_element_type=jnp.float32)      # (H, tQ, tK)

    m_prev = m_ref[...]
    m_new = jnp.maximum(m_prev, jnp.max(s, axis=-1, keepdims=True))
    alpha = jnp.exp(m_prev - m_new)
    p = jnp.exp(s - m_new)
    l_ref[...] = alpha * l_ref[...] + jnp.sum(p, axis=-1, keepdims=True)
    acc_ref[...] = alpha * acc_ref[...] + jnp.einsum(
        "hqk,hkd->hqd", p.astype(jnp.bfloat16), v,
        preferred_element_type=jnp.float32)
    m_ref[...] = m_new

    @pl.when(ki == pl.num_programs(2) - 1)
    def _():
        num_heads = acc_ref.shape[0]
        # softmax denominator via approx reciprocal (EUP slot, once per qi)
        ctx = acc_ref[...] * pl.reciprocal(l_ref[...], approx=True)   # (H, tQ, d_k)

        # Out-projection: contract each head against its (d_k, D) slice of wo
        # directly on the MXU — no head-merge transpose/reshape relayout.
        attn_out = jnp.dot(ctx[0].astype(jnp.bfloat16), wo_ref[0],
                           preferred_element_type=jnp.float32)
        for h in range(1, num_heads):
            attn_out = attn_out + jnp.dot(ctx[h].astype(jnp.bfloat16), wo_ref[h],
                                          preferred_element_type=jnp.float32)
        attn_out = attn_out + bo_ref[...]

        x1 = x_ref[...].astype(jnp.float32) + attn_out      # residual (dropout == id)

        xn2 = _layernorm(x1, g2_ref[...], be2_ref[...])
        h1 = jnp.maximum(
            jnp.dot(xn2.astype(jnp.bfloat16), w1_ref[...],
                    preferred_element_type=jnp.float32) + b1_ref[...],
            0.0)
        ff = jnp.dot(h1.astype(jnp.bfloat16), w2_ref[...],
                     preferred_element_type=jnp.float32) + b2_ref[...]

        o_ref[...] = (x1 + ff).astype(o_ref.dtype)


# -------------------------------- wrappers ----------------------------------
def _pick_tile(size, tile, what):
    t = min(tile, size)
    if size % t != 0:
        raise ValueError(
            f"{what}: length {size} is not divisible by tile {t}. Pad the "
            "sequence or choose a divisor tile (the silent whole-sequence "
            "fallback was removed: it blows VMEM at realistic shapes).")
    return t


def _const_spec(a, n_grid_axes, pipeline_mode):
    """Replicated (constant block index) param spec, optionally single-buffered."""
    nd = a.ndim
    if n_grid_axes == 2:
        idx = lambda b, i, _n=nd: (0,) * _n
    else:
        idx = lambda b, qi, ki, _n=nd: (0,) * _n
    if pipeline_mode is None:
        return pl.BlockSpec(a.shape, idx)
    return pl.BlockSpec(a.shape, idx, pipeline_mode=pipeline_mode)


def _vmem_limit(nbytes):
    # 50% headroom + 2 MiB for compiler temporaries; floor 32 MiB (>= default
    # scoped limits everywhere), cap 64 MiB (safe on v7x's 64 MiB physical).
    want = int(nbytes * 1.5) + (2 << 20)
    return int(max(32 << 20, min(want, 64 << 20)))


def prepare_params(params, *, num_heads):
    """One-time prep: bf16 weight copies + head-major out-projection weight,
    so the per-call path never re-casts / re-reads the f32 weights."""
    D = params["wq"].shape[0]
    d_k = D // num_heads
    bf16 = lambda a: a.astype(jnp.bfloat16)
    p = dict(params)
    p["wq"], p["wk"], p["wv"] = bf16(params["wq"]), bf16(params["wk"]), bf16(params["wv"])
    p["w1"], p["w2"] = bf16(params["w1"]), bf16(params["w2"])
    p["wo_h"] = bf16(params["wo"]).reshape(num_heads, d_k, D)
    return p


def encoder_layer(x, params, *, num_heads, q_tile=512, k_tile=256, s_tile=256,
                  single_buffer_weights=True):
    B, S, D = x.shape
    assert D % num_heads == 0, "d_model must be divisible by num_heads"
    d_k = D // num_heads
    d_ff = params["w1"].shape[1]

    tS = _pick_tile(S, s_tile, "stage-1 seq tile")
    tQ = _pick_tile(S, q_tile, "stage-2 query tile")
    tK = _pick_tile(S, k_tile, "stage-2 key/value tile")
    n_s, n_q, n_k = S // tS, S // tQ, S // tK

    bf16 = lambda a: a if a.dtype == jnp.bfloat16 else a.astype(jnp.bfloat16)
    wq, wk, wv = bf16(params["wq"]), bf16(params["wk"]), bf16(params["wv"])
    w1, w2 = bf16(params["w1"]), bf16(params["w2"])
    wo_h = params.get("wo_h")
    if wo_h is None:  # prefer prepare_params() so this cast/reshape is hoisted
        wo_h = bf16(params["wo"]).reshape(num_heads, d_k, D)

    stage1_params = [params["g1"], params["be1"],
                     wq, params["bq"], wk, params["bk"], wv, params["bv"]]
    stage2_params = [wo_h, params["bo"], params["g2"], params["be2"],
                     w1, params["b1"], w2, params["b2"]]

    # ---- VMEM budgets (tiles double-buffered, weights single-buffered) -----
    s1_bytes = (2 * tS * D * 4                       # x tile (f32)
                + 2 * 3 * num_heads * tS * d_k * 2   # q/k/v out tiles (bf16)
                + 3 * D * D * 2                      # wq/wk/wv (bf16)
                + 8 * D * 4)                         # biases + norm params
    s2_bytes = (2 * tQ * D * 4                       # x tile
                + 2 * tQ * D * 4                     # out tile
                + 2 * num_heads * tQ * d_k * 2       # q tile
                + 2 * 2 * num_heads * tK * d_k * 2   # k, v tiles
                + (D * D + 2 * D * d_ff) * 2         # wo_h, w1, w2 (bf16)
                + (4 * D + d_ff) * 4                 # biases + norm params
                + 2 * num_heads * tQ * 128 * 4       # m, l scratch (lane-padded)
                + num_heads * tQ * d_k * 4           # ctx accumulator scratch
                + tQ * d_ff * 4)                     # epilogue hidden activation

    cost1 = pl.CostEstimate(
        flops=int(6 * B * S * D * D),
        transcendentals=int(B * S),
        bytes_accessed=int(4 * B * S * D + 2 * 3 * D * D + 2 * 3 * B * S * D))
    cost2 = pl.CostEstimate(
        flops=int(4 * B * S * S * D + 2 * B * S * D * D + 4 * B * S * D * d_ff),
        transcendentals=int(B * num_heads * S * S),
        bytes_accessed=int(4 * B * S * D + 2 * B * S * D
                           + 2 * 2 * n_q * B * S * D        # K/V re-reads ~ S/tQ
                           + 2 * (D * D + 2 * D * d_ff)
                           + 4 * B * S * D))

    def run(weight_mode):
        # ----------- stage 1: pre-norm QKV, head-major bf16 outputs ---------
        x_spec1 = pl.BlockSpec((None, tS, D), lambda b, i: (b, i, 0))
        head_out_spec = pl.BlockSpec((None, num_heads, tS, d_k),
                                     lambda b, i: (b, 0, i, 0))
        qkv_shape = jax.ShapeDtypeStruct((B, num_heads, S, d_k), jnp.bfloat16)
        q, k, v = pl.pallas_call(
            functools.partial(qkv_project_kernel, num_heads=num_heads, d_k=d_k),
            grid=(B, n_s),
            in_specs=[x_spec1] + [_const_spec(a, 2, weight_mode)
                                  for a in stage1_params],
            out_specs=[head_out_spec, head_out_spec, head_out_spec],
            out_shape=[qkv_shape, qkv_shape, qkv_shape],
            compiler_params=pltpu.CompilerParams(
                dimension_semantics=("parallel", "parallel"),
                vmem_limit_bytes=_vmem_limit(s1_bytes)),
            cost_estimate=cost1,
        )(x, *stage1_params)

        # ------ stage 2: flash attention over K tiles + out-proj + FFN ------
        # NOTE: B * n_q are the axes sharded across TensorCores (v7x megacore);
        # keep them >= 2 units of balanced work.
        x_spec2 = pl.BlockSpec((None, tQ, D), lambda b, qi, ki: (b, qi, 0))
        q_spec = pl.BlockSpec((None, num_heads, tQ, d_k),
                              lambda b, qi, ki: (b, 0, qi, 0))
        kv_spec = pl.BlockSpec((None, num_heads, tK, d_k),
                               lambda b, qi, ki: (b, 0, ki, 0))
        o_spec = pl.BlockSpec((None, tQ, D), lambda b, qi, ki: (b, qi, 0))
        out = pl.pallas_call(
            attn_ffn_kernel,
            grid=(B, n_q, n_k),
            in_specs=[x_spec2, q_spec, kv_spec, kv_spec]
                     + [_const_spec(a, 3, weight_mode) for a in stage2_params],
            out_specs=o_spec,
            out_shape=jax.ShapeDtypeStruct((B, S, D), x.dtype),
            scratch_shapes=[
                pltpu.VMEM((num_heads, tQ, 1), jnp.float32),    # running max
                pltpu.VMEM((num_heads, tQ, 1), jnp.float32),    # running denom
                pltpu.VMEM((num_heads, tQ, d_k), jnp.float32),  # ctx accumulator
            ],
            compiler_params=pltpu.CompilerParams(
                dimension_semantics=("parallel", "parallel", "arbitrary"),
                vmem_limit_bytes=_vmem_limit(s2_bytes)),
            cost_estimate=cost2,
        )(x, q, k, v, *stage2_params)
        return out

    if single_buffer_weights:
        try:
            # Weights / biases have constant block indices: single-buffer them
            # to roughly halve their VMEM footprint (v7x / v5e headroom).
            return run(pl.Buffered(buffer_count=1))
        except Exception:
            # pl.Buffered(1) not supported by this jax build/backend:
            # fall back to default (double-buffered) parameter specs.
            pass
    return run(None)


# ---------------------------- params & reference ----------------------------
def make_params(key, d_model, num_heads, d_ff):
    """Deterministic synthetic weights. Linear weights are (in, out) so the
    kernel computes x @ W + b (equivalent to torch's x @ weight.T + bias)."""
    ks = jax.random.split(key, 6)

    def lin(k, fan_in, fan_out):
        bound = 1.0 / math.sqrt(fan_in)
        kw, kb = jax.random.split(k)
        w = jax.random.uniform(kw, (fan_in, fan_out), jnp.float32, -bound, bound)
        b = jax.random.uniform(kb, (1, fan_out), jnp.float32, -bound, bound)
        return w, b

    wq, bq = lin(ks[0], d_model, d_model)
    wk, bk = lin(ks[1], d_model, d_model)
    wv, bv = lin(ks[2], d_model, d_model)
    wo, bo = lin(ks[3], d_model, d_model)
    w1, b1 = lin(ks[4], d_model, d_ff)
    w2, b2 = lin(ks[5], d_ff, d_model)
    g1 = jnp.ones((1, d_model), jnp.float32)
    be1 = jnp.zeros((1, d_model), jnp.float32)
    g2 = jnp.ones((1, d_model), jnp.float32)
    be2 = jnp.zeros((1, d_model), jnp.float32)
    return dict(wq=wq, bq=bq, wk=wk, bk=bk, wv=wv, bv=bv, wo=wo, bo=bo,
                w1=w1, b1=b1, w2=w2, b2=b2, g1=g1, be1=be1, g2=g2, be2=be2)


def reference_encoder_layer(x, p, *, num_heads):
    """Pure-JAX f32 reference matching the PyTorch forward (eval mode)."""
    B, S, D = x.shape
    d_k = D // num_heads

    def ln(v, g, b, eps=1e-5):
        mu = jnp.mean(v, axis=-1, keepdims=True)
        var = jnp.mean((v - mu) ** 2, axis=-1, keepdims=True)
        return (v - mu) / jnp.sqrt(var + eps) * g + b

    xn = ln(x, p["g1"], p["be1"])
    q = xn @ p["wq"] + p["bq"]
    k = xn @ p["wk"] + p["bk"]
    v = xn @ p["wv"] + p["bv"]
    q = q.reshape(B, S, num_heads, d_k).transpose(0, 2, 1, 3)
    k = k.reshape(B, S, num_heads, d_k).transpose(0, 2, 1, 3)
    v = v.reshape(B, S, num_heads, d_k).transpose(0, 2, 1, 3)
    s = jnp.einsum("bhqd,bhkd->bhqk", q, k) / math.sqrt(d_k)
    a = jax.nn.softmax(s, axis=-1)
    o = jnp.einsum("bhqk,bhkd->bhqd", a, v).transpose(0, 2, 1, 3).reshape(B, S, D)
    attn_out = o @ p["wo"] + p["bo"]
    x1 = x + attn_out
    xn2 = ln(x1, p["g2"], p["be2"])
    ff = jnp.maximum(xn2 @ p["w1"] + p["b1"], 0.0) @ p["w2"] + p["b2"]
    return x1 + ff


if __name__ == "__main__":
    # Small but lane-aligned shapes (D, d_ff, d_k multiples of 128; S a
    # multiple of the decoupled tQ=512 / tK=256 tiles -> multi-K-tile flash).
    B, S, d_model, num_heads, d_ff = 2, 512, 256, 2, 512

    key = jax.random.PRNGKey(0)
    kx, kp = jax.random.split(key)
    x = jax.random.normal(kx, (B, S, d_model), jnp.float32)
    params = make_params(kp, d_model, num_heads, d_ff)
    # Hoist the bf16 weight casts / head-major wo reshape out of the call path.
    prepped = prepare_params(params, num_heads=num_heads)

    out = jax.block_until_ready(encoder_layer(x, prepped, num_heads=num_heads))

    # Kernel uses bf16 matmul operands (f32 accumulation); compare against the
    # pure-f32 reference with a tolerance that covers bf16 operand rounding.
    ref = reference_encoder_layer(x, params, num_heads=num_heads)
    np.testing.assert_allclose(np.asarray(out), np.asarray(ref),
                               rtol=5e-2, atol=5e-2)

    print("KERNEL_OK")
</pallas_src>

<mosaic_0001>
module attributes {stable_mosaic.version = 11 : i64} {
  func.func @qkv_project_kernel(%arg0: i32, %arg1: i32, %arg2: memref<1x256x256xf32, #tpu.memory_space<vmem>>, %arg3: memref<1x256xf32, #tpu.memory_space<vmem>>, %arg4: memref<1x256xf32, #tpu.memory_space<vmem>>, %arg5: memref<256x256xbf16, #tpu.memory_space<vmem>>, %arg6: memref<1x256xf32, #tpu.memory_space<vmem>>, %arg7: memref<256x256xbf16, #tpu.memory_space<vmem>>, %arg8: memref<1x256xf32, #tpu.memory_space<vmem>>, %arg9: memref<256x256xbf16, #tpu.memory_space<vmem>>, %arg10: memref<1x256xf32, #tpu.memory_space<vmem>>, %arg11: memref<1x2x256x128xbf16, #tpu.memory_space<vmem>>, %arg12: memref<1x2x256x128xbf16, #tpu.memory_space<vmem>>, %arg13: memref<1x2x256x128xbf16, #tpu.memory_space<vmem>>) attributes {dimension_semantics = [#tpu.dimension_semantics<parallel>, #tpu.dimension_semantics<parallel>], iteration_bounds = array<i64: 2, 2>, scalar_prefetch = 0 : i64, scratch_operands = 0 : i64, tpu.core_type = #tpu.core_type<tc>, window_params = [{transform_indices = @transform_0, window_bounds = array<i64: 1, 256, 256>}, {pipeline_mode = #tpu.pipeline_mode<synchronous>, transform_indices = @transform_1, window_bounds = array<i64: 1, 256>}, {pipeline_mode = #tpu.pipeline_mode<synchronous>, transform_indices = @transform_2, window_bounds = array<i64: 1, 256>}, {pipeline_mode = #tpu.pipeline_mode<synchronous>, transform_indices = @transform_3, window_bounds = array<i64: 256, 256>}, {pipeline_mode = #tpu.pipeline_mode<synchronous>, transform_indices = @transform_4, window_bounds = array<i64: 1, 256>}, {pipeline_mode = #tpu.pipeline_mode<synchronous>, transform_indices = @transform_5, window_bounds = array<i64: 256, 256>}, {pipeline_mode = #tpu.pipeline_mode<synchronous>, transform_indices = @transform_6, window_bounds = array<i64: 1, 256>}, {pipeline_mode = #tpu.pipeline_mode<synchronous>, transform_indices = @transform_7, window_bounds = array<i64: 256, 256>}, {pipeline_mode = #tpu.pipeline_mode<synchronous>, transform_indices = @transform_8, window_bounds = array<i64: 1, 256>}, {transform_indices = @transform_9, window_bounds = array<i64: 1, 2, 256, 128>}, {transform_indices = @transform_10, window_bounds = array<i64: 1, 2, 256, 128>}, {transform_indices = @transform_11, window_bounds = array<i64: 1, 2, 256, 128>}]} {
    %c0 = arith.constant 0 : index
    %c0_0 = arith.constant 0 : index
    %c0_1 = arith.constant 0 : index
    %0 = vector.load %arg2[%c0, %c0_0, %c0_1] : memref<1x256x256xf32, #tpu.memory_space<vmem>>, vector<1x256x256xf32>
    %1 = vector.shape_cast %0 : vector<1x256x256xf32> to vector<256x256xf32>
    %c0_2 = arith.constant 0 : index
    %c0_3 = arith.constant 0 : index
    %2 = vector.load %arg3[%c0_2, %c0_3] : memref<1x256xf32, #tpu.memory_space<vmem>>, vector<1x256xf32>
    %c0_4 = arith.constant 0 : index
    %c0_5 = arith.constant 0 : index
    %3 = vector.load %arg4[%c0_4, %c0_5] : memref<1x256xf32, #tpu.memory_space<vmem>>, vector<1x256xf32>
    %cst = arith.constant dense<0.000000e+00> : vector<256xf32>
    %4 = vector.multi_reduction <add>, %1, %cst [1] : vector<256x256xf32> to vector<256xf32>
    %5 = vector.shape_cast %4 : vector<256xf32> to vector<256x1xf32>
    %cst_6 = arith.constant 2.560000e+02 : f32
    %6 = vector.broadcast %cst_6 : f32 to vector<256x1xf32>
    %7 = arith.divf %5, %6 : vector<256x1xf32>
    %8 = vector.broadcast %7 : vector<256x1xf32> to vector<256x256xf32>
    %9 = arith.subf %1, %8 : vector<256x256xf32>
    %10 = arith.mulf %9, %9 : vector<256x256xf32>
    %cst_7 = arith.constant dense<0.000000e+00> : vector<256xf32>
    %11 = vector.multi_reduction <add>, %10, %cst_7 [1] : vector<256x256xf32> to vector<256xf32>
    %12 = vector.shape_cast %11 : vector<256xf32> to vector<256x1xf32>
    %cst_8 = arith.constant 2.560000e+02 : f32
    %13 = vector.broadcast %cst_8 : f32 to vector<256x1xf32>
    %14 = arith.divf %12, %13 : vector<256x1xf32>
    %15 = vector.broadcast %7 : vector<256x1xf32> to vector<256x256xf32>
    %16 = arith.subf %1, %15 : vector<256x256xf32>
    %cst_9 = arith.constant 9.99999974E-6 : f32
    %17 = vector.broadcast %cst_9 : f32 to vector<256x1xf32>
    %18 = arith.addf %14, %17 : vector<256x1xf32>
    %19 = math.rsqrt %18 : vector<256x1xf32>
    %20 = vector.broadcast %19 : vector<256x1xf32> to vector<256x256xf32>
    %21 = arith.mulf %16, %20 : vector<256x256xf32>
    %22 = vector.broadcast %2 : vector<1x256xf32> to vector<256x256xf32>
    %23 = arith.mulf %21, %22 : vector<256x256xf32>
    %24 = vector.broadcast %3 : vector<1x256xf32> to vector<256x256xf32>
    %25 = arith.addf %23, %24 : vector<256x256xf32>
    %26 = arith.truncf %25 : vector<256x256xf32> to vector<256x256xbf16>
    %c0_10 = arith.constant 0 : index
    %c0_11 = arith.constant 0 : index
    %27 = vector.load %arg5[%c0_10, %c0_11] : memref<256x256xbf16, #tpu.memory_space<vmem>>, vector<256x256xbf16>
    %cst_12 = arith.constant dense<0.000000e+00> : vector<256x256xf32>
    %28 = tpu.matmul %26, %27, %cst_12 {dimension_numbers = #tpu.dot_dimension_numbers<[1], [0], [0], [1], [0, 0, 1, 1], [], []>} : vector<256x256xbf16>, vector<256x256xbf16>, vector<256x256xf32> -> vector<256x256xf32>
    %c0_13 = arith.constant 0 : index
    %c0_14 = arith.constant 0 : index
    %29 = vector.load %arg6[%c0_13, %c0_14] : memref<1x256xf32, #tpu.memory_space<vmem>>, vector<1x256xf32>
    %30 = vector.broadcast %29 : vector<1x256xf32> to vector<256x256xf32>
    %31 = arith.addf %28, %30 : vector<256x256xf32>
    %cst_15 = arith.constant 0.0883883461 : f32
    %32 = vector.broadcast %cst_15 : f32 to vector<256x256xf32>
    %33 = arith.mulf %31, %32 : vector<256x256xf32>
    %c0_16 = arith.constant 0 : index
    %c0_17 = arith.constant 0 : index
    %34 = vector.load %arg7[%c0_16, %c0_17] : memref<256x256xbf16, #tpu.memory_space<vmem>>, vector<256x256xbf16>
    %cst_18 = arith.constant dense<0.000000e+00> : vector<256x256xf32>
    %35 = tpu.matmul %26, %34, %cst_18 {dimension_numbers = #tpu.dot_dimension_numbers<[1], [0], [0], [1], [0, 0, 1, 1], [], []>} : vector<256x256xbf16>, vector<256x256xbf16>, vector<256x256xf32> -> vector<256x256xf32>
    %c0_19 = arith.constant 0 : index
    %c0_20 = arith.constant 0 : index
    %36 = vector.load %arg8[%c0_19, %c0_20] : memref<1x256xf32, #tpu.memory_space<vmem>>, vector<1x256xf32>
    %37 = vector.broadcast %36 : vector<1x256xf32> to vector<256x256xf32>
    %38 = arith.addf %35, %37 : vector<256x256xf32>
    %c0_21 = arith.constant 0 : index
    %c0_22 = arith.constant 0 : index
    %39 = vector.load %arg9[%c0_21, %c0_22] : memref<256x256xbf16, #tpu.memory_space<vmem>>, vector<256x256xbf16>
    %cst_23 = arith.constant dense<0.000000e+00> : vector<256x256xf32>
    %40 = tpu.matmul %26, %39, %cst_23 {dimension_numbers = #tpu.dot_dimension_numbers<[1], [0], [0], [1], [0, 0, 1, 1], [], []>} : vector<256x256xbf16>, vector<256x256xbf16>, vector<256x256xf32> -> vector<256x256xf32>
    %c0_24 = arith.constant 0 : index
    %c0_25 = arith.constant 0 : index
    %41 = vector.load %arg10[%c0_24, %c0_25] : memref<1x256xf32, #tpu.memory_space<vmem>>, vector<1x256xf32>
    %42 = vector.broadcast %41 : vector<1x256xf32> to vector<256x256xf32>
    %43 = arith.addf %40, %42 : vector<256x256xf32>
    %44 = vector.extract_strided_slice %33 {offsets = [0, 0], sizes = [256, 128], strides = [1, 1]} : vector<256x256xf32> to vector<256x128xf32>
    %45 = arith.truncf %44 : vector<256x128xf32> to vector<256x128xbf16>
    %c0_26 = arith.constant 0 : index
    %c0_27 = arith.constant 0 : index
    %c0_28 = arith.constant 0 : index
    %c0_29 = arith.constant 0 : index
    %46 = vector.load %arg11[%c0_26, %c0_27, %c0_28, %c0_29] : memref<1x2x256x128xbf16, #tpu.memory_space<vmem>>, vector<1x1x256x128xbf16>
    %47 = vector.shape_cast %46 : vector<1x1x256x128xbf16> to vector<256x128xbf16>
    %48 = vector.shape_cast %45 : vector<256x128xbf16> to vector<1x1x256x128xbf16>
    tpu.vector_store %arg11[%c0_26, %c0_27, %c0_28, %c0_29], %48 {strides = array<i32>} : memref<1x2x256x128xbf16, #tpu.memory_space<vmem>>, vector<1x1x256x128xbf16>,
    %49 = vector.extract_strided_slice %38 {offsets = [0, 0], sizes = [256, 128], strides = [1, 1]} : vector<256x256xf32> to vector<256x128xf32>
    %50 = arith.truncf %49 : vector<256x128xf32> to vector<256x128xbf16>
    %c0_30 = arith.constant 0 : index
    %c0_31 = arith.constant 0 : index
    %c0_32 = arith.constant 0 : index
    %c0_33 = arith.constant 0 : index
    %51 = vector.load %arg12[%c0_30, %c0_31, %c0_32, %c0_33] : memref<1x2x256x128xbf16, #tpu.memory_space<vmem>>, vector<1x1x256x128xbf16>
    %52 = vector.shape_cast %51 : vector<1x1x256x128xbf16> to vector<256x128xbf16>
    %53 = vector.shape_cast %50 : vector<256x128xbf16> to vector<1x1x256x128xbf16>
    tpu.vector_store %arg12[%c0_30, %c0_31, %c0_32, %c0_33], %53 {strides = array<i32>} : memref<1x2x256x128xbf16, #tpu.memory_space<vmem>>, vector<1x1x256x128xbf16>,
    %54 = vector.extract_strided_slice %43 {offsets = [0, 0], sizes = [256, 128], strides = [1, 1]} : vector<256x256xf32> to vector<256x128xf32>
    %55 = arith.truncf %54 : vector<256x128xf32> to vector<256x128xbf16>
    %c0_34 = arith.constant 0 : index
    %c0_35 = arith.constant 0 : index
    %c0_36 = arith.constant 0 : index
    %c0_37 = arith.constant 0 : index
    %56 = vector.load %arg13[%c0_34, %c0_35, %c0_36, %c0_37] : memref<1x2x256x128xbf16, #tpu.memory_space<vmem>>, vector<1x1x256x128xbf16>
    %57 = vector.shape_cast %56 : vector<1x1x256x128xbf16> to vector<256x128xbf16>
    %58 = vector.shape_cast %55 : vector<256x128xbf16> to vector<1x1x256x128xbf16>
    tpu.vector_store %arg13[%c0_34, %c0_35, %c0_36, %c0_37], %58 {strides = array<i32>} : memref<1x2x256x128xbf16, #tpu.memory_space<vmem>>, vector<1x1x256x128xbf16>,
    %59 = vector.extract_strided_slice %33 {offsets = [0, 128], sizes = [256, 128], strides = [1, 1]} : vector<256x256xf32> to vector<256x128xf32>
    %60 = arith.truncf %59 : vector<256x128xf32> to vector<256x128xbf16>
    %c0_38 = arith.constant 0 : index
    %c1 = arith.constant 1 : index
    %c0_39 = arith.constant 0 : index
    %c0_40 = arith.constant 0 : index
    %61 = vector.load %arg11[%c0_38, %c1, %c0_39, %c0_40] : memref<1x2x256x128xbf16, #tpu.memory_space<vmem>>, vector<1x1x256x128xbf16>
    %62 = vector.shape_cast %61 : vector<1x1x256x128xbf16> to vector<256x128xbf16>
    %63 = vector.shape_cast %60 : vector<256x128xbf16> to vector<1x1x256x128xbf16>
    tpu.vector_store %arg11[%c0_38, %c1, %c0_39, %c0_40], %63 {strides = array<i32>} : memref<1x2x256x128xbf16, #tpu.memory_space<vmem>>, vector<1x1x256x128xbf16>,
    %64 = vector.extract_strided_slice %38 {offsets = [0, 128], sizes = [256, 128], strides = [1, 1]} : vector<256x256xf32> to vector<256x128xf32>
    %65 = arith.truncf %64 : vector<256x128xf32> to vector<256x128xbf16>
    %c0_41 = arith.constant 0 : index
    %c1_42 = arith.constant 1 : index
    %c0_43 = arith.constant 0 : index
    %c0_44 = arith.constant 0 : index
    %66 = vector.load %arg12[%c0_41, %c1_42, %c0_43, %c0_44] : memref<1x2x256x128xbf16, #tpu.memory_space<vmem>>, vector<1x1x256x128xbf16>
    %67 = vector.shape_cast %66 : vector<1x1x256x128xbf16> to vector<256x128xbf16>
    %68 = vector.shape_cast %65 : vector<256x128xbf16> to vector<1x1x256x128xbf16>
    tpu.vector_store %arg12[%c0_41, %c1_42, %c0_43, %c0_44], %68 {strides = array<i32>} : memref<1x2x256x128xbf16, #tpu.memory_space<vmem>>, vector<1x1x256x128xbf16>,
    %69 = vector.extract_strided_slice %43 {offsets = [0, 128], sizes = [256, 128], strides = [1, 1]} : vector<256x256xf32> to vector<256x128xf32>
    %70 = arith.truncf %69 : vector<256x128xf32> to vector<256x128xbf16>
    %c0_45 = arith.constant 0 : index
    %c1_46 = arith.constant 1 : index
    %c0_47 = arith.constant 0 : index
    %c0_48 = arith.constant 0 : index
    %71 = vector.load %arg13[%c0_45, %c1_46, %c0_47, %c0_48] : memref<1x2x256x128xbf16, #tpu.memory_space<vmem>>, vector<1x1x256x128xbf16>
    %72 = vector.shape_cast %71 : vector<1x1x256x128xbf16> to vector<256x128xbf16>
    %73 = vector.shape_cast %70 : vector<256x128xbf16> to vector<1x1x256x128xbf16>
    tpu.vector_store %arg13[%c0_45, %c1_46, %c0_47, %c0_48], %73 {strides = array<i32>} : memref<1x2x256x128xbf16, #tpu.memory_space<vmem>>, vector<1x1x256x128xbf16>,
    return
  }
  func.func @transform_0(%arg0: i32, %arg1: i32) -> (i32, i32, i32) {
    %c0_i32 = arith.constant 0 : i32
    %c0_i32_0 = arith.constant 0 : i32
    return %arg0, %arg1, %c0_i32 : i32, i32, i32
  }
  func.func @transform_1(%arg0: i32, %arg1: i32) -> (i32, i32) {
    %c0_i32 = arith.constant 0 : i32
    %c0_i32_0 = arith.constant 0 : i32
    %c0_i32_1 = arith.constant 0 : i32
    return %c0_i32, %c0_i32_0 : i32, i32
  }
  func.func @transform_2(%arg0: i32, %arg1: i32) -> (i32, i32) {
    %c0_i32 = arith.constant 0 : i32
    %c0_i32_0 = arith.constant 0 : i32
    %c0_i32_1 = arith.constant 0 : i32
    return %c0_i32, %c0_i32_0 : i32, i32
  }
  func.func @transform_3(%arg0: i32, %arg1: i32) -> (i32, i32) {
    %c0_i32 = arith.constant 0 : i32
    %c0_i32_0 = arith.constant 0 : i32
    %c0_i32_1 = arith.constant 0 : i32
    return %c0_i32, %c0_i32_0 : i32, i32
  }
  func.func @transform_4(%arg0: i32, %arg1: i32) -> (i32, i32) {
    %c0_i32 = arith.constant 0 : i32
    %c0_i32_0 = arith.constant 0 : i32
    %c0_i32_1 = arith.constant 0 : i32
    return %c0_i32, %c0_i32_0 : i32, i32
  }
  func.func @transform_5(%arg0: i32, %arg1: i32) -> (i32, i32) {
    %c0_i32 = arith.constant 0 : i32
    %c0_i32_0 = arith.constant 0 : i32
    %c0_i32_1 = arith.constant 0 : i32
    return %c0_i32, %c0_i32_0 : i32, i32
  }
  func.func @transform_6(%arg0: i32, %arg1: i32) -> (i32, i32) {
    %c0_i32 = arith.constant 0 : i32
    %c0_i32_0 = arith.constant 0 : i32
    %c0_i32_1 = arith.constant 0 : i32
    return %c0_i32, %c0_i32_0 : i32, i32
  }
  func.func @transform_7(%arg0: i32, %arg1: i32) -> (i32, i32) {
    %c0_i32 = arith.constant 0 : i32
    %c0_i32_0 = arith.constant 0 : i32
    %c0_i32_1 = arith.constant 0 : i32
    return %c0_i32, %c0_i32_0 : i32, i32
  }
  func.func @transform_8(%arg0: i32, %arg1: i32) -> (i32, i32) {
    %c0_i32 = arith.constant 0 : i32
    %c0_i32_0 = arith.constant 0 : i32
    %c0_i32_1 = arith.constant 0 : i32
    return %c0_i32, %c0_i32_0 : i32, i32
  }
  func.func @transform_9(%arg0: i32, %arg1: i32) -> (i32, i32, i32, i32) {
    %c0_i32 = arith.constant 0 : i32
    %c0_i32_0 = arith.constant 0 : i32
    %c0_i32_1 = arith.constant 0 : i32
    return %arg0, %c0_i32, %arg1, %c0_i32_0 : i32, i32, i32, i32
  }
  func.func @transform_10(%arg0: i32, %arg1: i32) -> (i32, i32, i32, i32) {
    %c0_i32 = arith.constant 0 : i32
    %c0_i32_0 = arith.constant 0 : i32
    %c0_i32_1 = arith.constant 0 : i32
    return %arg0, %c0_i32, %arg1, %c0_i32_0 : i32, i32, i32, i32
  }
  func.func @transform_11(%arg0: i32, %arg1: i32) -> (i32, i32, i32, i32) {
    %c0_i32 = arith.constant 0 : i32
    %c0_i32_0 = arith.constant 0 : i32
    %c0_i32_1 = arith.constant 0 : i32
    return %arg0, %c0_i32, %arg1, %c0_i32_0 : i32, i32, i32, i32
  }
}

module attributes {stable_mosaic.version = 11 : i64} {
  func.func @qkv_project_kernel(%arg0: i32, %arg1: i32, %arg2: memref<1x256x256xf32, #tpu.memory_space<vmem>>, %arg3: memref<1x256xf32, #tpu.memory_space<vmem>>, %arg4: memref<1x256xf32, #tpu.memory_space<vmem>>, %arg5: memref<256x256xbf16, #tpu.memory_space<vmem>>, %arg6: memref<1x256xf32, #tpu.memory_space<vmem>>, %arg7: memref<256x256xbf16, #tpu.memory_space<vmem>>, %arg8: memref<1x256xf32, #tpu.memory_space<vmem>>, %arg9: memref<256x256xbf16, #tpu.memory_space<vmem>>, %arg10: memref<1x256xf32, #tpu.memory_space<vmem>>, %arg11: memref<1x2x256x128xbf16, #tpu.memory_space<vmem>>, %arg12: memref<1x2x256x128xbf16, #tpu.memory_space<vmem>>, %arg13: memref<1x2x256x128xbf16, #tpu.memory_space<vmem>>) attributes {dimension_semantics = [#tpu.dimension_semantics<parallel>, #tpu.dimension_semantics<parallel>], iteration_bounds = array<i64: 2, 2>, scalar_prefetch = 0 : i64, scratch_operands = 0 : i64, tpu.core_type = #tpu.core_type<tc>, window_params = [{transform_indices = @transform_0, window_bounds = array<i64: 1, 256, 256>}, {pipeline_mode = #tpu.pipeline_mode<synchronous>, transform_indices = @transform_1, window_bounds = array<i64: 1, 256>}, {pipeline_mode = #tpu.pipeline_mode<synchronous>, transform_indices = @transform_2, window_bounds = array<i64: 1, 256>}, {pipeline_mode = #tpu.pipeline_mode<synchronous>, transform_indices = @transform_3, window_bounds = array<i64: 256, 256>}, {pipeline_mode = #tpu.pipeline_mode<synchronous>, transform_indices = @transform_4, window_bounds = array<i64: 1, 256>}, {pipeline_mode = #tpu.pipeline_mode<synchronous>, transform_indices = @transform_5, window_bounds = array<i64: 256, 256>}, {pipeline_mode = #tpu.pipeline_mode<synchronous>, transform_indices = @transform_6, window_bounds = array<i64: 1, 256>}, {pipeline_mode = #tpu.pipeline_mode<synchronous>, transform_indices = @transform_7, window_bounds = array<i64: 256, 256>}, {pipeline_mode = #tpu.pipeline_mode<synchronous>, transform_indices = @transform_8, window_bounds = array<i64: 1, 256>}, {transform_indices = @transform_9, window_bounds = array<i64: 1, 2, 256, 128>}, {transform_indices = @transform_10, window_bounds = array<i64: 1, 2, 256, 128>}, {transform_indices = @transform_11, window_bounds = array<i64: 1, 2, 256, 128>}]} {
    %c0 = arith.constant 0 : index
    %c0_0 = arith.constant 0 : index
    %c0_1 = arith.constant 0 : index
    %0 = vector.load %arg2[%c0, %c0_0, %c0_1] : memref<1x256x256xf32, #tpu.memory_space<vmem>>, vector<1x256x256xf32>
    %1 = vector.shape_cast %0 : vector<1x256x256xf32> to vector<256x256xf32>
    %c0_2 = arith.constant 0 : index
    %c0_3 = arith.constant 0 : index
    %2 = vector.load %arg3[%c0_2, %c0_3] : memref<1x256xf32, #tpu.memory_space<vmem>>, vector<1x256xf32>
    %c0_4 = arith.constant 0 : index
    %c0_5 = arith.constant 0 : index
    %3 = vector.load %arg4[%c0_4, %c0_5] : memref<1x256xf32, #tpu.memory_space<vmem>>, vector<1x256xf32>
    %cst = arith.constant dense<0.000000e+00> : vector<256xf32>
    %4 = vector.multi_reduction <add>, %1, %cst [1] : vector<256x256xf32> to vector<256xf32>
    %5 = vector.shape_cast %4 : vector<256xf32> to vector<256x1xf32>
    %cst_6 = arith.constant 2.560000e+02 : f32
    %6 = vector.broadcast %cst_6 : f32 to vector<256x1xf32>
    %7 = arith.divf %5, %6 : vector<256x1xf32>
    %8 = vector.broadcast %7 : vector<256x1xf32> to vector<256x256xf32>
    %9 = arith.subf %1, %8 : vector<256x256xf32>
    %10 = arith.mulf %9, %9 : vector<256x256xf32>
    %cst_7 = arith.constant dense<0.000000e+00> : vector<256xf32>
    %11 = vector.multi_reduction <add>, %10, %cst_7 [1] : vector<256x256xf32> to vector<256xf32>
    %12 = vector.shape_cast %11 : vector<256xf32> to vector<256x1xf32>
    %cst_8 = arith.constant 2.560000e+02 : f32
    %13 = vector.broadcast %cst_8 : f32 to vector<256x1xf32>
    %14 = arith.divf %12, %13 : vector<256x1xf32>
    %15 = vector.broadcast %7 : vector<256x1xf32> to vector<256x256xf32>
    %16 = arith.subf %1, %15 : vector<256x256xf32>
    %cst_9 = arith.constant 9.99999974E-6 : f32
    %17 = vector.broadcast %cst_9 : f32 to vector<256x1xf32>
    %18 = arith.addf %14, %17 : vector<256x1xf32>
    %19 = math.rsqrt %18 : vector<256x1xf32>
    %20 = vector.broadcast %19 : vector<256x1xf32> to vector<256x256xf32>
    %21 = arith.mulf %16, %20 : vector<256x256xf32>
    %22 = vector.broadcast %2 : vector<1x256xf32> to vector<256x256xf32>
    %23 = arith.mulf %21, %22 : vector<256x256xf32>
    %24 = vector.broadcast %3 : vector<1x256xf32> to vector<256x256xf32>
    %25 = arith.addf %23, %24 : vector<256x256xf32>
    %26 = arith.truncf %25 : vector<256x256xf32> to vector<256x256xbf16>
    %c0_10 = arith.constant 0 : index
    %c0_11 = arith.constant 0 : index
    %27 = vector.load %arg5[%c0_10, %c0_11] : memref<256x256xbf16, #tpu.memory_space<vmem>>, vector<256x256xbf16>
    %cst_12 = arith.constant dense<0.000000e+00> : vector<256x256xf32>
    %28 = tpu.matmul %26, %27, %cst_12 {dimension_numbers = #tpu.dot_dimension_numbers<[1], [0], [0], [1], [0, 0, 1, 1], [], []>} : vector<256x256xbf16>, vector<256x256xbf16>, vector<256x256xf32> -> vector<256x256xf32>
    %c0_13 = arith.constant 0 : index
    %c0_14 = arith.constant 0 : index
    %29 = vector.load %arg6[%c0_13, %c0_14] : memref<1x256xf32, #tpu.memory_space<vmem>>, vector<1x256xf32>
    %30 = vector.broadcast %29 : vector<1x256xf32> to vector<256x256xf32>
    %31 = arith.addf %28, %30 : vector<256x256xf32>
    %cst_15 = arith.constant 0.0883883461 : f32
    %32 = vector.broadcast %cst_15 : f32 to vector<256x256xf32>
    %33 = arith.mulf %31, %32 : vector<256x256xf32>
    %c0_16 = arith.constant 0 : index
    %c0_17 = arith.constant 0 : index
    %34 = vector.load %arg7[%c0_16, %c0_17] : memref<256x256xbf16, #tpu.memory_space<vmem>>, vector<256x256xbf16>
    %cst_18 = arith.constant dense<0.000000e+00> : vector<256x256xf32>
    %35 = tpu.matmul %26, %34, %cst_18 {dimension_numbers = #tpu.dot_dimension_numbers<[1], [0], [0], [1], [0, 0, 1, 1], [], []>} : vector<256x256xbf16>, vector<256x256xbf16>, vector<256x256xf32> -> vector<256x256xf32>
    %c0_19 = arith.constant 0 : index
    %c0_20 = arith.constant 0 : index
    %36 = vector.load %arg8[%c0_19, %c0_20] : memref<1x256xf32, #tpu.memory_space<vmem>>, vector<1x256xf32>
    %37 = vector.broadcast %36 : vector<1x256xf32> to vector<256x256xf32>
    %38 = arith.addf %35, %37 : vector<256x256xf32>
    %c0_21 = arith.constant 0 : index
    %c0_22 = arith.constant 0 : index
    %39 = vector.load %arg9[%c0_21, %c0_22] : memref<256x256xbf16, #tpu.memory_space<vmem>>, vector<256x256xbf16>
    %cst_23 = arith.constant dense<0.000000e+00> : vector<256x256xf32>
    %40 = tpu.matmul %26, %39, %cst_23 {dimension_numbers = #tpu.dot_dimension_numbers<[1], [0], [0], [1], [0, 0, 1, 1], [], []>} : vector<256x256xbf16>, vector<256x256xbf16>, vector<256x256xf32> -> vector<256x256xf32>
    %c0_24 = arith.constant 0 : index
    %c0_25 = arith.constant 0 : index
    %41 = vector.load %arg10[%c0_24, %c0_25] : memref<1x256xf32, #tpu.memory_space<vmem>>, vector<1x256xf32>
    %42 = vector.broadcast %41 : vector<1x256xf32> to vector<256x256xf32>
    %43 = arith.addf %40, %42 : vector<256x256xf32>
    %44 = vector.extract_strided_slice %33 {offsets = [0, 0], sizes = [256, 128], strides = [1, 1]} : vector<256x256xf32> to vector<256x128xf32>
    %45 = arith.truncf %44 : vector<256x128xf32> to vector<256x128xbf16>
    %c0_26 = arith.constant 0 : index
    %c0_27 = arith.constant 0 : index
    %c0_28 = arith.constant 0 : index
    %c0_29 = arith.constant 0 : index
    %46 = vector.load %arg11[%c0_26, %c0_27, %c0_28, %c0_29] : memref<1x2x256x128xbf16, #tpu.memory_space<vmem>>, vector<1x1x256x128xbf16>
    %47 = vector.shape_cast %46 : vector<1x1x256x128xbf16> to vector<256x128xbf16>
    %48 = vector.shape_cast %45 : vector<256x128xbf16> to vector<1x1x256x128xbf16>
    tpu.vector_store %arg11[%c0_26, %c0_27, %c0_28, %c0_29], %48 {strides = array<i32>} : memref<1x2x256x128xbf16, #tpu.memory_space<vmem>>, vector<1x1x256x128xbf16>,
    %49 = vector.extract_strided_slice %38 {offsets = [0, 0], sizes = [256, 128], strides = [1, 1]} : vector<256x256xf32> to vector<256x128xf32>
    %50 = arith.truncf %49 : vector<256x128xf32> to vector<256x128xbf16>
    %c0_30 = arith.constant 0 : index
    %c0_31 = arith.constant 0 : index
    %c0_32 = arith.constant 0 : index
    %c0_33 = arith.constant 0 : index
    %51 = vector.load %arg12[%c0_30, %c0_31, %c0_32, %c0_33] : memref<1x2x256x128xbf16, #tpu.memory_space<vmem>>, vector<1x1x256x128xbf16>
    %52 = vector.shape_cast %51 : vector<1x1x256x128xbf16> to vector<256x128xbf16>
    %53 = vector.shape_cast %50 : vector<256x128xbf16> to vector<1x1x256x128xbf16>
    tpu.vector_store %arg12[%c0_30, %c0_31, %c0_32, %c0_33], %53 {strides = array<i32>} : memref<1x2x256x128xbf16, #tpu.memory_space<vmem>>, vector<1x1x256x128xbf16>,
    %54 = vector.extract_strided_slice %43 {offsets = [0, 0], sizes = [256, 128], strides = [1, 1]} : vector<256x256xf32> to vector<256x128xf32>
    %55 = arith.truncf %54 : vector<256x128xf32> to vector<256x128xbf16>
    %c0_34 = arith.constant 0 : index
    %c0_35 = arith.constant 0 : index
    %c0_36 = arith.constant 0 : index
    %c0_37 = arith.constant 0 : index
    %56 = vector.load %arg13[%c0_34, %c0_35, %c0_36, %c0_37] : memref<1x2x256x128xbf16, #tpu.memory_space<vmem>>, vector<1x1x256x128xbf16>
    %57 = vector.shape_cast %56 : vector<1x1x256x128xbf16> to vector<256x128xbf16>
    %58 = vector.shape_cast %55 : vector<256x128xbf16> to vector<1x1x256x128xbf16>
    tpu.vector_store %arg13[%c0_34, %c0_35, %c0_36, %c0_37], %58 {strides = array<i32>} : memref<1x2x256x128xbf16, #tpu.memory_space<vmem>>, vector<1x1x256x128xbf16>,
    %59 = vector.extract_strided_slice %33 {offsets = [0, 128], sizes = [256, 128], strides = [1, 1]} : vector<256x256xf32> to vector<256x128xf32>
    %60 = arith.truncf %59 : vector<256x128xf32> to vector<256x128xbf16>
    %c0_38 = arith.constant 0 : index
    %c1 = arith.constant 1 : index
    %c0_39 = arith.constant 0 : index
    %c0_40 = arith.constant 0 : index
    %61 = vector.load %arg11[%c0_38, %c1, %c0_39, %c0_40] : memref<1x2x256x128xbf16, #tpu.memory_space<vmem>>, vector<1x1x256x128xbf16>
    %62 = vector.shape_cast %61 : vector<1x1x256x128xbf16> to vector<256x128xbf16>
    %63 = vector.shape_cast %60 : vector<256x128xbf16> to vector<1x1x256x128xbf16>
    tpu.vector_store %arg11[%c0_38, %c1, %c0_39, %c0_40], %63 {strides = array<i32>} : memref<1x2x256x128xbf16, #tpu.memory_space<vmem>>, vector<1x1x256x128xbf16>,
    %64 = vector.extract_strided_slice %38 {offsets = [0, 128], sizes = [256, 128], strides = [1, 1]} : vector<256x256xf32> to vector<256x128xf32>
    %65 = arith.truncf %64 : vector<256x128xf32> to vector<256x128xbf16>
    %c0_41 = arith.constant 0 : index
    %c1_42 = arith.constant 1 : index
    %c0_43 = arith.constant 0 : index
    %c0_44 = arith.constant 0 : index
    %66 = vector.load %arg12[%c0_41, %c1_42, %c0_43, %c0_44] : memref<1x2x256x128xbf16, #tpu.memory_space<vmem>>, vector<1x1x256x128xbf16>
    %67 = vector.shape_cast %66 : vector<1x1x256x128xbf16> to vector<256x128xbf16>
    %68 = vector.shape_cast %65 : vector<256x128xbf16> to vector<1x1x256x128xbf16>
    tpu.vector_store %arg12[%c0_41, %c1_42, %c0_43, %c0_44], %68 {strides = array<i32>} : memref<1x2x256x128xbf16, #tpu.memory_space<vmem>>, vector<1x1x256x128xbf16>,
    %69 = vector.extract_strided_slice %43 {offsets = [0, 128], sizes = [256, 128], strides = [1, 1]} : vector<256x256xf32> to vector<256x128xf32>
    %70 = arith.truncf %69 : vector<256x128xf32> to vector<256x128xbf16>
    %c0_45 = arith.constant 0 : index
    %c1_46 = arith.constant 1 : index
    %c0_47 = arith.constant 0 : index
    %c0_48 = arith.constant 0 : index
    %71 = vector.load %arg13[%c0_45, %c1_46, %c0_47, %c0_48] : memref<1x2x256x128xbf16, #tpu.memory_space<vmem>>, vector<1x1x256x128xbf16>
    %72 = vector.shape_cast %71 : vector<1x1x256x128xbf16> to vector<256x128xbf16>
    %73 = vector.shape_cast %70 : vector<256x128xbf16> to vector<1x1x256x128xbf16>
    tpu.vector_store %arg13[%c0_45, %c1_46, %c0_47, %c0_48], %73 {strides = array<i32>} : memref<1x2x256x128xbf16, #tpu.memory_space<vmem>>, vector<1x1x256x128xbf16>,
    return
  }
  func.func @transform_0(%arg0: i32, %arg1: i32) -> (i32, i32, i32) {
    %c0_i32 = arith.constant 0 : i32
    %c0_i32_0 = arith.constant 0 : i32
    return %arg0, %arg1, %c0_i32 : i32, i32, i32
  }
  func.func @transform_1(%arg0: i32, %arg1: i32) -> (i32, i32) {
    %c0_i32 = arith.constant 0 : i32
    %c0_i32_0 = arith.constant 0 : i32
    %c0_i32_1 = arith.constant 0 : i32
    return %c0_i32, %c0_i32_0 : i32, i32
  }
  func.func @transform_2(%arg0: i32, %arg1: i32) -> (i32, i32) {
    %c0_i32 = arith.constant 0 : i32
    %c0_i32_0 = arith.constant 0 : i32
    %c0_i32_1 = arith.constant 0 : i32
    return %c0_i32, %c0_i32_0 : i32, i32
  }
  func.func @transform_3(%arg0: i32, %arg1: i32) -> (i32, i32) {
    %c0_i32 = arith.constant 0 : i32
    %c0_i32_0 = arith.constant 0 : i32
    %c0_i32_1 = arith.constant 0 : i32
    return %c0_i32, %c0_i32_0 : i32, i32
  }
  func.func @transform_4(%arg0: i32, %arg1: i32) -> (i32, i32) {
    %c0_i32 = arith.constant 0 : i32
    %c0_i32_0 = arith.constant 0 : i32
    %c0_i32_1 = arith.constant 0 : i32
    return %c0_i32, %c0_i32_0 : i32, i32
  }
  func.func @transform_5(%arg0: i32, %arg1: i32) -> (i32, i32) {
    %c0_i32 = arith.constant 0 : i32
    %c0_i32_0 = arith.constant 0 : i32
    %c0_i32_1 = arith.constant 0 : i32
    return %c0_i32, %c0_i32_0 : i32, i32
  }
  func.func @transform_6(%arg0: i32, %arg1: i32) -> (i32, i32) {
    %c0_i32 = arith.constant 0 : i32
    %c0_i32_0 = arith.constant 0 : i32
    %c0_i32_1 = arith.constant 0 : i32
    return %c0_i32, %c0_i32_0 : i32, i32
  }
  func.func @transform_7(%arg0: i32, %arg1: i32) -> (i32, i32) {
    %c0_i32 = arith.constant 0 : i32
    %c0_i32_0 = arith.constant 0 : i32
    %c0_i32_1 = arith.constant 0 : i32
    return %c0_i32, %c0_i32_0 : i32, i32
  }
  func.func @transform_8(%arg0: i32, %arg1: i32) -> (i32, i32) {
    %c0_i32 = arith.constant 0 : i32
    %c0_i32_0 = arith.constant 0 : i32
    %c0_i32_1 = arith.constant 0 : i32
    return %c0_i32, %c0_i32_0 : i32, i32
  }
  func.func @transform_9(%arg0: i32, %arg1: i32) -> (i32, i32, i32, i32) {
    %c0_i32 = arith.constant 0 : i32
    %c0_i32_0 = arith.constant 0 : i32
    %c0_i32_1 = arith.constant 0 : i32
    return %arg0, %c0_i32, %arg1, %c0_i32_0 : i32, i32, i32, i32
  }
  func.func @transform_10(%arg0: i32, %arg1: i32) -> (i32, i32, i32, i32) {
    %c0_i32 = arith.constant 0 : i32
    %c0_i32_0 = arith.constant 0 : i32
    %c0_i32_1 = arith.constant 0 : i32
    return %arg0, %c0_i32, %arg1, %c0_i32_0 : i32, i32, i32, i32
  }
  func.func @transform_11(%arg0: i32, %arg1: i32) -> (i32, i32, i32, i32) {
    %c0_i32 = arith.constant 0 : i32
    %c0_i32_0 = arith.constant 0 : i32
    %c0_i32_1 = arith.constant 0 : i32
    return %arg0, %c0_i32, %arg1, %c0_i32_0 : i32, i32, i32, i32
  }
}

</mosaic_0001>

<llo_original>
// kernel: tpu_custom_call.1
$region0: #{tpu_custom_call.1}
  #allocation0 [shape = 'u32[]', space=smem, size = 0x4, offset = 0x4, fixed_abs, tag = 'smem constant byte address 0x4 - core index']
  #allocation1 [shape = 'u32[144,128]{1,0:T(1,128)}', space=vmem, size = 0x12000, scoped, tag = 'internal scratch']
  #allocation14 [shape = 's32[]', space=sflag, size = 0x4, offset = 0, fixed_abs, tag = 'sflag constant byte address 0x0 - dummy sync flag']
  #allocation16 [shape = 's32[]', space=sflag, size = 0x4, offset = 0, fixed_abs, tag = 'sflag constant byte address 0x0 - dummy sync flag']
  #allocation18 [shape = 's32[]', space=sflag, size = 0x4, offset = 0, fixed_abs, tag = 'sflag constant byte address 0x0 - dummy sync flag']
  %s0 = inlined_call_operand.hbm [shape: f32[2,512,256], index: 0, kind: input, shape index: {}]
  %s1 = inlined_call_operand.vmem [shape: f32[1,256], index: 1, kind: input, shape index: {}]
  %s2 = inlined_call_operand.vmem [shape: f32[1,256], index: 2, kind: input, shape index: {}]
  %s3 = inlined_call_operand.hbm [shape: bf16[256,256], index: 3, kind: input, shape index: {}]
  %s4 = inlined_call_operand.vmem [shape: f32[1,256], index: 4, kind: input, shape index: {}]
  %s5 = inlined_call_operand.hbm [shape: bf16[256,256], index: 5, kind: input, shape index: {}]
  %s6 = inlined_call_operand.vmem [shape: f32[1,256], index: 6, kind: input, shape index: {}]
  %s7 = inlined_call_operand.hbm [shape: bf16[256,256], index: 7, kind: input, shape index: {}]
  %s8 = inlined_call_operand.vmem [shape: f32[1,256], index: 8, kind: input, shape index: {}]
  %s9 = inlined_call_operand.hbm [shape: bf16[2,2,512,128], index: 9, kind: output, shape index: {0}]
  %s10 = inlined_call_operand.hbm [shape: bf16[2,2,512,128], index: 10, kind: output, shape index: {1}]
  %s11 = inlined_call_operand.hbm [shape: bf16[2,2,512,128], index: 11, kind: output, shape index: {2}]
  %12 = xla_tuple %s9, %s10, %s11
  %s13 = sld [smem:[#allocation0]]
  $region101: #{tpu_custom_call.1} parent=0
    _
  %s15 = ssub.s32 1, %s13
  %s16 = scalar_select 0, %s15, %s13
  $region1: #{tpu_custom_call.1} parent=0
    #allocation2 [shape = 'u8[524288]{0}', space=vmem, size = 0x80000, scoped, tag = 'input window, operand 0']
    #allocation3 [shape = 's32[2]{0}', space=sflag, size = 0x8, scoped, tag = 'scoped memory for tpu_custom_call.1']
    #allocation4 [shape = 's32[2]{0}', space=sflag, size = 0x8, scoped, tag = 'scoped memory for tpu_custom_call.1']
    #allocation5 [shape = 'u8[131072]{0}', space=vmem, size = 0x20000, scoped, tag = 'input window, operand 3, single buffered']
    #allocation6 [shape = 's32[1]{0}', space=sflag, size = 0x4, scoped, tag = 'scoped memory for tpu_custom_call.1']
    #allocation7 [shape = 'u8[131072]{0}', space=vmem, size = 0x20000, scoped, tag = 'input window, operand 5, single buffered']
    #allocation8 [shape = 'u8[131072]{0}', space=vmem, size = 0x20000, scoped, tag = 'input window, operand 7, single buffered']
    #allocation9 [shape = 's32[1]{0}', space=sflag, size = 0x4, scoped, tag = 'scoped memory for tpu_custom_call.1']
    #allocation10 [shape = 'u8[262144]{0}', space=vmem, size = 0x40000, scoped, tag = 'output window, operand 0']
    #allocation11 [shape = 'u8[262144]{0}', space=vmem, size = 0x40000, scoped, tag = 'output window, operand 1']
    #allocation12 [shape = 's32[2]{0}', space=sflag, size = 0x8, scoped, tag = 'scoped memory for tpu_custom_call.1']
    #allocation13 [shape = 'u8[262144]{0}', space=vmem, size = 0x40000, scoped, tag = 'output window, operand 2']
    %17 = vsyncpa [#allocation3], 0
    %s18 = scalar_lea.sflag [#allocation3], 1
    %19 = vsyncpa %s18, 0
    %20 = vsyncpa [#allocation6], 0
    %21 = vsyncpa [#allocation9], 0
    %22 = vsyncpa [#allocation4], 0
    %s23 = scalar_lea.sflag [#allocation4], 1
    %24 = vsyncpa %s23, 0
    %25 = vsyncpa [#allocation12], 0
    %s26 = scalar_lea.sflag [#allocation12], 1
    %27 = vsyncpa %s26, 0
    loop: start=0, step=1, limit=6
    $region2: #{tpu_custom_call.1} parent=1 // loop_pre_header
      _
    $region3: #{tpu_custom_call.1} parent=1 // loop_header
      %s29 = sphi 0, %s33
      %p30 = scmp.ge.s32.totalorder %s29, 6
      %s36 = sphi 0, %s48
      %s37 = sphi 0, %s44
      %s38 = sphi 0, %s36
      %s39 = sphi 0, %s37
      %s40 = sphi 0, %s38
      %s41 = sphi 0, %s39
      %s53 = sphi 0, %s55
      %s56 = sphi 0, %s53
      %s57 = sphi 0, %s56
      %s73 = sphi 0, %s57
      %s77 = sphi 0, %s77
      %s79 = sphi 0, %s77
      %s80 = sphi 0, %s79
      %s94 = sphi 0, %s80
      %s98 = sphi 0, %s98
      %s100 = sphi 0, %s98
      %s101 = sphi 0, %s100
      %s115 = sphi 0, %s101
      %s119 = sphi 0, %s119
      %s121 = sphi 0, %s119
      %s122 = sphi 0, %s121
      %s136 = sphi 0, %s122
      %s140 = sphi 0, %s140
      %s142 = sphi 0, %s140
      %s143 = sphi 0, %s142
      %s157 = sphi 0, %s143
      %s161 = sphi 0, %s161
      %s163 = sphi 0, %s161
      %s164 = sphi 0, %s163
      %s178 = sphi 0, %s164
      %s182 = sphi 0, %s182
      %s184 = sphi 0, %s182
      %s185 = sphi 0, %s184
      %s199 = sphi 0, %s185
      %s203 = sphi 0, %s203
      %s205 = sphi 0, %s203
      %s206 = sphi 0, %s205
      %s220 = sphi 0, %s206
      %s224 = sphi 0, %s224
      %s226 = sphi 0, %s224
      %s227 = sphi 0, %s226
      %s241 = sphi 0, %s227
      %s249 = sphi 0, %s251
      %s252 = sphi 0, %s249
      %s253 = sphi 0, %s252
      %s269 = sphi 0, %s253
      %s277 = sphi 0, %s279
      %s280 = sphi 0, %s277
      %s281 = sphi 0, %s280
      %s297 = sphi 0, %s281
      %s305 = sphi 0, %s307
      %s308 = sphi 0, %s305
      %s309 = sphi 0, %s308
      %s325 = sphi 0, %s309
    $region4: #{tpu_custom_call.1} parent=1 // loop_header_branch
      %32 = sbr.rel (%p30) target = $region8
    $region5: #{tpu_custom_call.1} parent=1 // loop_body
      %s34 = ssub.s32 %s29, 1
      %s35 = ssub.s32 %s29, 2
      %s42 = sadd.s32 1, %s37
      %p43 = scmp.ge.s32.totalorder %s42, 2
      %s44 = scalar_select %p43, 0, %s42
      %s45 = sadd.s32 1, %s36
      %s46 = scalar_select %p43, %s45, %s36
      %p47 = scmp.ge.s32.totalorder %s46, 2
      %s48 = scalar_select %p47, 0, %s46
      %s49 = ssub.s32 %s36, %s48
      %s50 = ssub.s32 %s37, %s44
      %s51 = sor.u32 %s49, %s50
      %p52 = scmp.eq.s32.totalorder %s51, 0
      %s54 = sadd.s32 %s53, 1
      %s55 = scalar_select %p52, %s53, %s54
      %p58 = pneg %p52
      %p59 = scmp.eq.s32.totalorder %s29, 3
      %p60 = por %p58, %p59
      %p61 = scmp.ne.s32.totalorder %s53, %s56
      %p62 = scmp.eq.s32.totalorder %s29, 0
      %p63 = por %p61, %p62
      %p64 = scmp.ne.s32.totalorder %s53, %s56
      %p65 = scmp.eq.s32.totalorder %s34, 3
      %p66 = por %p64, %p65
      %p67 = scmp.ne.s32.totalorder %s56, %s57
      %p68 = scmp.eq.s32.totalorder %s34, 0
      %p69 = por %p67, %p68
      %p70 = scmp.ne.s32.totalorder %s56, %s57
      %p71 = scmp.eq.s32.totalorder %s35, 3
      %p72 = por %p70, %p71
      %p74 = scmp.ne.s32.totalorder %s57, %s73
      %p75 = scmp.eq.s32.totalorder %s35, 0
      %p76 = por %p74, %p75
      %s78 = sadd.s32 %s77, 1
      %p81 = scmp.eq.s32.totalorder %s29, 3
      %p82 = scmp.ne.s32.totalorder %s77, %s79
      %p83 = scmp.eq.s32.totalorder %s29, 0
      %p84 = por %p82, %p83
      %p85 = scmp.ne.s32.totalorder %s77, %s79
      %p86 = scmp.eq.s32.totalorder %s34, 3
      %p87 = por %p85, %p86
      %p88 = scmp.ne.s32.totalorder %s79, %s80
      %p89 = scmp.eq.s32.totalorder %s34, 0
      %p90 = por %p88, %p89
      %p91 = scmp.ne.s32.totalorder %s79, %s80
      %p92 = scmp.eq.s32.totalorder %s35, 3
      %p93 = por %p91, %p92
      %p95 = scmp.ne.s32.totalorder %s80, %s94
      %p96 = scmp.eq.s32.totalorder %s35, 0
      %p97 = por %p95, %p96
      %s99 = sadd.s32 %s98, 1
      %p102 = scmp.eq.s32.totalorder %s29, 3
      %p103 = scmp.ne.s32.totalorder %s98, %s100
      %p104 = scmp.eq.s32.totalorder %s29, 0
      %p105 = por %p103, %p104
      %p106 = scmp.ne.s32.totalorder %s98, %s100
      %p107 = scmp.eq.s32.totalorder %s34, 3
      %p108 = por %p106, %p107
      %p109 = scmp.ne.s32.totalorder %s100, %s101
      %p110 = scmp.eq.s32.totalorder %s34, 0
      %p111 = por %p109, %p110
      %p112 = scmp.ne.s32.totalorder %s100, %s101
      %p113 = scmp.eq.s32.totalorder %s35, 3
      %p114 = por %p112, %p113
      %p116 = scmp.ne.s32.totalorder %s101, %s115
      %p117 = scmp.eq.s32.totalorder %s35, 0
      %p118 = por %p116, %p117
      %s120 = sadd.s32 %s119, 1
      %p123 = scmp.eq.s32.totalorder %s29, 3
      %p124 = scmp.ne.s32.totalorder %s119, %s121
      %p125 = scmp.eq.s32.totalorder %s29, 0
      %p126 = por %p124, %p125
      %p127 = scmp.ne.s32.totalorder %s119, %s121
      %p128 = scmp.eq.s32.totalorder %s34, 3
      %p129 = por %p127, %p128
      %p130 = scmp.ne.s32.totalorder %s121, %s122
      %p131 = scmp.eq.s32.totalorder %s34, 0
      %p132 = por %p130, %p131
      %p133 = scmp.ne.s32.totalorder %s121, %s122
      %p134 = scmp.eq.s32.totalorder %s35, 3
      %p135 = por %p133, %p134
      %p137 = scmp.ne.s32.totalorder %s122, %s136
      %p138 = scmp.eq.s32.totalorder %s35, 0
      %p139 = por %p137, %p138
      %s141 = sadd.s32 %s140, 1
      %p144 = scmp.eq.s32.totalorder %s29, 3
      %p145 = scmp.ne.s32.totalorder %s140, %s142
      %p146 = scmp.eq.s32.totalorder %s29, 0
      %p147 = por %p145, %p146
      %p148 = scmp.ne.s32.totalorder %s140, %s142
      %p149 = scmp.eq.s32.totalorder %s34, 3
      %p150 = por %p148, %p149
      %p151 = scmp.ne.s32.totalorder %s142, %s143
      %p152 = scmp.eq.s32.totalorder %s34, 0
      %p153 = por %p151, %p152
      %p154 = scmp.ne.s32.totalorder %s142, %s143
      %p155 = scmp.eq.s32.totalorder %s35, 3
      %p156 = por %p154, %p155
      %p158 = scmp.ne.s32.totalorder %s143, %s157
      %p159 = scmp.eq.s32.totalorder %s35, 0
      %p160 = por %p158, %p159
      %s162 = sadd.s32 %s161, 1
      %p165 = scmp.eq.s32.totalorder %s29, 3
      %p166 = scmp.ne.s32.totalorder %s161, %s163
      %p167 = scmp.eq.s32.totalorder %s29, 0
      %p168 = por %p166, %p167
      %p169 = scmp.ne.s32.totalorder %s161, %s163
      %p170 = scmp.eq.s32.totalorder %s34, 3
      %p171 = por %p169, %p170
      %p172 = scmp.ne.s32.totalorder %s163, %s164
      %p173 = scmp.eq.s32.totalorder %s34, 0
      %p174 = por %p172, %p173
      %p175 = scmp.ne.s32.totalorder %s163, %s164
      %p176 = scmp.eq.s32.totalorder %s35, 3
      %p177 = por %p175, %p176
      %p179 = scmp.ne.s32.totalorder %s164, %s178
      %p180 = scmp.eq.s32.totalorder %s35, 0
      %p181 = por %p179, %p180
      %s183 = sadd.s32 %s182, 1
      %p186 = scmp.eq.s32.totalorder %s29, 3
      %p187 = scmp.ne.s32.totalorder %s182, %s184
      %p188 = scmp.eq.s32.totalorder %s29, 0
      %p189 = por %p187, %p188
      %p190 = scmp.ne.s32.totalorder %s182, %s184
      %p191 = scmp.eq.s32.totalorder %s34, 3
      %p192 = por %p190, %p191
      %p193 = scmp.ne.s32.totalorder %s184, %s185
      %p194 = scmp.eq.s32.totalorder %s34, 0
      %p195 = por %p193, %p194
      %p196 = scmp.ne.s32.totalorder %s184, %s185
      %p197 = scmp.eq.s32.totalorder %s35, 3
      %p198 = por %p196, %p197
      %p200 = scmp.ne.s32.totalorder %s185, %s199
      %p201 = scmp.eq.s32.totalorder %s35, 0
      %p202 = por %p200, %p201
      %s204 = sadd.s32 %s203, 1
      %p207 = scmp.eq.s32.totalorder %s29, 3
      %p208 = scmp.ne.s32.totalorder %s203, %s205
      %p209 = scmp.eq.s32.totalorder %s29, 0
      %p210 = por %p208, %p209
      %p211 = scmp.ne.s32.totalorder %s203, %s205
      %p212 = scmp.eq.s32.totalorder %s34, 3
      %p213 = por %p211, %p212
      %p214 = scmp.ne.s32.totalorder %s205, %s206
      %p215 = scmp.eq.s32.totalorder %s34, 0
      %p216 = por %p214, %p215
      %p217 = scmp.ne.s32.totalorder %s205, %s206
      %p218 = scmp.eq.s32.totalorder %s35, 3
      %p219 = por %p217, %p218
      %p221 = scmp.ne.s32.totalorder %s206, %s220
      %p222 = scmp.eq.s32.totalorder %s35, 0
      %p223 = por %p221, %p222
      %s225 = sadd.s32 %s224, 1
      %p228 = scmp.eq.s32.totalorder %s29, 3
      %p229 = scmp.ne.s32.totalorder %s224, %s226
      %p230 = scmp.eq.s32.totalorder %s29, 0
      %p231 = por %p229, %p230
      %p232 = scmp.ne.s32.totalorder %s224, %s226
      %p233 = scmp.eq.s32.totalorder %s34, 3
      %p234 = por %p232, %p233
      %p235 = scmp.ne.s32.totalorder %s226, %s227
      %p236 = scmp.eq.s32.totalorder %s34, 0
      %p237 = por %p235, %p236
      %p238 = scmp.ne.s32.totalorder %s226, %s227
      %p239 = scmp.eq.s32.totalorder %s35, 3
      %p240 = por %p238, %p239
      %p242 = scmp.ne.s32.totalorder %s227, %s241
      %p243 = scmp.eq.s32.totalorder %s35, 0
      %p244 = por %p242, %p243
      %s245 = ssub.s32 %s36, %s48
      %s246 = ssub.s32 %s37, %s44
      %s247 = sor.u32 %s245, %s246
      %p248 = scmp.eq.s32.totalorder %s247, 0
      %s250 = sadd.s32 %s249, 1
      %s251 = scalar_select %p248, %s249, %s250
      %p254 = pneg %p248
      %p255 = scmp.eq.s32.totalorder %s29, 3
      %p256 = por %p254, %p255
      %p257 = scmp.ne.s32.totalorder %s249, %s252
      %p258 = scmp.eq.s32.totalorder %s29, 0
      %p259 = por %p257, %p258
      %p260 = scmp.ne.s32.totalorder %s249, %s252
      %p261 = scmp.eq.s32.totalorder %s34, 3
      %p262 = por %p260, %p261
      %p263 = scmp.ne.s32.totalorder %s252, %s253
      %p264 = scmp.eq.s32.totalorder %s34, 0
      %p265 = por %p263, %p264
      %p266 = scmp.ne.s32.totalorder %s252, %s253
      %p267 = scmp.eq.s32.totalorder %s35, 3
      %p268 = por %p266, %p267
      %p270 = scmp.ne.s32.totalorder %s253, %s269
      %p271 = scmp.eq.s32.totalorder %s35, 0
      %p272 = por %p270, %p271
      %s273 = ssub.s32 %s36, %s48
      %s274 = ssub.s32 %s37, %s44
      %s275 = sor.u32 %s273, %s274
      %p276 = scmp.eq.s32.totalorder %s275, 0
      %s278 = sadd.s32 %s277, 1
      %s279 = scalar_select %p276, %s277, %s278
      %p282 = pneg %p276
      %p283 = scmp.eq.s32.totalorder %s29, 3
      %p284 = por %p282, %p283
      %p285 = scmp.ne.s32.totalorder %s277, %s280
      %p286 = scmp.eq.s32.totalorder %s29, 0
      %p287 = por %p285, %p286
      %p288 = scmp.ne.s32.totalorder %s277, %s280
      %p289 = scmp.eq.s32.totalorder %s34, 3
      %p290 = por %p288, %p289
      %p291 = scmp.ne.s32.totalorder %s280, %s281
      %p292 = scmp.eq.s32.totalorder %s34, 0
      %p293 = por %p291, %p292
      %p294 = scmp.ne.s32.totalorder %s280, %s281
      %p295 = scmp.eq.s32.totalorder %s35, 3
      %p296 = por %p294, %p295
      %p298 = scmp.ne.s32.totalorder %s281, %s297
      %p299 = scmp.eq.s32.totalorder %s35, 0
      %p300 = por %p298, %p299
      %s301 = ssub.s32 %s36, %s48
      %s302 = ssub.s32 %s37, %s44
      %s303 = sor.u32 %s301, %s302
      %p304 = scmp.eq.s32.totalorder %s303, 0
      %s306 = sadd.s32 %s305, 1
      %s307 = scalar_select %p304, %s305, %s306
      %p310 = pneg %p304
      %p311 = scmp.eq.s32.totalorder %s29, 3
      %p312 = por %p310, %p311
      %p313 = scmp.ne.s32.totalorder %s305, %s308
      %p314 = scmp.eq.s32.totalorder %s29, 0
      %p315 = por %p313, %p314
      %p316 = scmp.ne.s32.totalorder %s305, %s308
      %p317 = scmp.eq.s32.totalorder %s34, 3
      %p318 = por %p316, %p317
      %p319 = scmp.ne.s32.totalorder %s308, %s309
      %p320 = scmp.eq.s32.totalorder %s34, 0
      %p321 = por %p319, %p320
      %p322 = scmp.ne.s32.totalorder %s308, %s309
      %p323 = scmp.eq.s32.totalorder %s35, 3
      %p324 = por %p322, %p323
      %p326 = scmp.ne.s32.totalorder %s309, %s325
      %p327 = scmp.eq.s32.totalorder %s35, 0
      %p328 = por %p326, %p327
      %p329 = scmp.le.s32.totalorder 1, %s29
      %p330 = scmp.lt.s32.totalorder %s29, 5
      %p331 = pnand %p329, %p330
      %p332 = pneg %p331
      // Predicated region
      $region9: #{tpu_custom_call.1} parent=5 // pred_check
        _
      $region10: #{tpu_custom_call.1} parent=5 // pred_check_branch
        %334 = sbr.rel (%p331) target = $region12
      $region11: #{tpu_custom_call.1} parent=5 // pred_region
        %s335 = ssub.s32 %s29, 1
        // Predicated region
        $region13: #{tpu_custom_call.1} parent=11 // pred_check
          %p336 = pneg %p90
        $region14: #{tpu_custom_call.1} parent=11 // pred_check_branch
          %338 = sbr.rel (%p336) target = $region16
        $region15: #{tpu_custom_call.1} parent=11 // pred_region
          _
        $region16: #{tpu_custom_call.1} parent=11 // pred_fallthru
          _
        // Predicated region
        $region17: #{tpu_custom_call.1} parent=11 // pred_check
          %p339 = pneg %p111
        $region18: #{tpu_custom_call.1} parent=11 // pred_check_branch
          %341 = sbr.rel (%p339) target = $region20
        $region19: #{tpu_custom_call.1} parent=11 // pred_region
          _
        $region20: #{tpu_custom_call.1} parent=11 // pred_fallthru
          _
        // Predicated region
        $region21: #{tpu_custom_call.1} parent=11 // pred_check
          %p342 = pneg %p132
        $region22: #{tpu_custom_call.1} parent=11 // pred_check_branch
          %344 = sbr.rel (%p342) target = $region24
        $region23: #{tpu_custom_call.1} parent=11 // pred_region
          %s346 = ssub.s32 4096, 4096
          %347 = vsyncadd [#allocation6], %s346
          %s348 = sshll.u32 [#allocation5], 4
          %s349 = int_to_ptr.vmem [resolvable:$true] %s348
          %354 = dma.hbm_to_vmem [thread:$0]  %s3, 4096, %s349, [#allocation6], 128, 128, 8
        $region24: #{tpu_custom_call.1} parent=11 // pred_fallthru
          _
        // Predicated region
        $region25: #{tpu_custom_call.1} parent=11 // pred_check
          %p355 = pneg %p153
        $region26: #{tpu_custom_call.1} parent=11 // pred_check_branch
          %357 = sbr.rel (%p355) target = $region28
        $region27: #{tpu_custom_call.1} parent=11 // pred_region
          _
        $region28: #{tpu_custom_call.1} parent=11 // pred_fallthru
          _
        // Predicated region
        $region29: #{tpu_custom_call.1} parent=11 // pred_check
          %p358 = pneg %p174
        $region30: #{tpu_custom_call.1} parent=11 // pred_check_branch
          %360 = sbr.rel (%p358) target = $region32
        $region31: #{tpu_custom_call.1} parent=11 // pred_region
          %s362 = ssub.s32 4096, 4096
          %363 = vsyncadd [#allocation6], %s362
          %s364 = sshll.u32 [#allocation7], 4
          %s365 = int_to_ptr.vmem [resolvable:$true] %s364
          %370 = dma.hbm_to_vmem [thread:$0]  %s5, 4096, %s365, [#allocation6], 128, 128, 8
        $region32: #{tpu_custom_call.1} parent=11 // pred_fallthru
          _
        // Predicated region
        $region33: #{tpu_custom_call.1} parent=11 // pred_check
          %p371 = pneg %p195
        $region34: #{tpu_custom_call.1} parent=11 // pred_check_branch
          %373 = sbr.rel (%p371) target = $region36
        $region35: #{tpu_custom_call.1} parent=11 // pred_region
          _
        $region36: #{tpu_custom_call.1} parent=11 // pred_fallthru
          _
        // Predicated region
        $region37: #{tpu_custom_call.1} parent=11 // pred_check
          %p374 = pneg %p216
        $region38: #{tpu_custom_call.1} parent=11 // pred_check_branch
          %376 = sbr.rel (%p374) target = $region40
        $region39: #{tpu_custom_call.1} parent=11 // pred_region
          %s378 = ssub.s32 4096, 4096
          %379 = vsyncadd [#allocation9], %s378
          %s380 = sshll.u32 [#allocation8], 4
          %s381 = int_to_ptr.vmem [resolvable:$true] %s380
          %386 = dma.hbm_to_vmem [thread:$0]  %s7, 4096, %s381, [#allocation9], 128, 128, 8
        $region40: #{tpu_custom_call.1} parent=11 // pred_fallthru
          _
        // Predicated region
        $region41: #{tpu_custom_call.1} parent=11 // pred_check
          %p387 = pneg %p237
        $region42: #{tpu_custom_call.1} parent=11 // pred_check_branch
          %389 = sbr.rel (%p387) target = $region44
        $region43: #{tpu_custom_call.1} parent=11 // pred_region
          _
        $region44: #{tpu_custom_call.1} parent=11 // pred_fallthru
          _
      $region12: #{tpu_custom_call.1} parent=5 // pred_fallthru
        _
      %p390 = scmp.lt.s32.totalorder %s29, 4
      // Predicated region
      $region45: #{tpu_custom_call.1} parent=5 // pred_check
        %p391 = pneg %p390
      $region46: #{tpu_custom_call.1} parent=5 // pred_check_branch
        %393 = sbr.rel (%p391) target = $region48
      $region47: #{tpu_custom_call.1} parent=5 // pred_region
        // Predicated region
        $region49: #{tpu_custom_call.1} parent=47 // pred_check
          %p394 = pneg %p63
        $region50: #{tpu_custom_call.1} parent=47 // pred_check_branch
          %396 = sbr.rel (%p394) target = $region52
        $region51: #{tpu_custom_call.1} parent=47 // pred_region
          %s397 = sand.u32 %s53, 1
          %s398 = scalar_lea.sflag [#allocation3], %s397
          %s399 = sand.u32 %s53, 1
          %s400 = smul.addr %s399, 512
          %s401 = scalar_lea.vmem [#allocation2], %s400
          %s402 = smul.u32 32, %s37
          %s404 = ssub.s32 8192, 8192
          %405 = vsyncadd %s398, %s404
          %s406 = smul.addr %s402, 2
          %s407 = smul.addr %s36, 128
          %s408 = sadd.s32 %s406, %s407
          %s409 = smul.addr %s408, 128
          %s410 = scalar_lea.hbm %s0, %s409
          %s411 = sshll.u32 %s401, 4
          %s412 = int_to_ptr.vmem [resolvable:$true] %s411
          %417 = dma.hbm_to_vmem [thread:$0]  %s410, 8192, %s412, %s398, 256, 256, 16
        $region52: #{tpu_custom_call.1} parent=47 // pred_fallthru
          _
      $region48: #{tpu_custom_call.1} parent=5 // pred_fallthru
        _
      %p418 = scmp.le.s32.totalorder 1, %s29
      %p419 = scmp.lt.s32.totalorder %s29, 5
      %p420 = pnand %p418, %p419
      %p421 = pneg %p420
      // Predicated region
      $region53: #{tpu_custom_call.1} parent=5 // pred_check
        _
      $region54: #{tpu_custom_call.1} parent=5 // pred_check_branch
        %423 = sbr.rel (%p420) target = $region56
      $region55: #{tpu_custom_call.1} parent=5 // pred_region
        %s424 = ssub.s32 %s29, 1
        %s425 = sand.u32 %s56, 1
        %s426 = scalar_lea.sflag [#allocation3], %s425
        %s427 = sand.u32 %s56, 1
        %s428 = smul.addr %s427, 512
        %s429 = scalar_lea.vmem [#allocation2], %s428
        // Predicated region
        $region57: #{tpu_custom_call.1} parent=55 // pred_check
          %p430 = pneg %p69
        $region58: #{tpu_custom_call.1} parent=55 // pred_check_branch
          %432 = sbr.rel (%p430) target = $region60
        $region59: #{tpu_custom_call.1} parent=55 // pred_region
          %433 = dma.done %s426, 8192
        $region60: #{tpu_custom_call.1} parent=55 // pred_fallthru
          _
        // Predicated region
        $region61: #{tpu_custom_call.1} parent=55 // pred_check
          %p434 = pneg %p132
        $region62: #{tpu_custom_call.1} parent=55 // pred_check_branch
          %436 = sbr.rel (%p434) target = $region64
        $region63: #{tpu_custom_call.1} parent=55 // pred_region
          %437 = dma.done [#allocation6], 4096
        $region64: #{tpu_custom_call.1} parent=55 // pred_fallthru
          _
        // Predicated region
        $region65: #{tpu_custom_call.1} parent=55 // pred_check
          %p438 = pneg %p174
        $region66: #{tpu_custom_call.1} parent=55 // pred_check_branch
          %440 = sbr.rel (%p438) target = $region68
        $region67: #{tpu_custom_call.1} parent=55 // pred_region
          %441 = dma.done [#allocation6], 4096
        $region68: #{tpu_custom_call.1} parent=55 // pred_fallthru
          _
        // Predicated region
        $region69: #{tpu_custom_call.1} parent=55 // pred_check
          %p442 = pneg %p216
        $region70: #{tpu_custom_call.1} parent=55 // pred_check_branch
          %444 = sbr.rel (%p442) target = $region72
        $region71: #{tpu_custom_call.1} parent=55 // pred_region
          %445 = dma.done [#allocation9], 4096
        $region72: #{tpu_custom_call.1} parent=55 // pred_fallthru
          _
        %s446 = sand.u32 %s56, 1
        %s447 = scalar_lea.sflag [#allocation3], %s446
        %s448 = sand.u32 %s56, 1
        %s449 = smul.addr %s448, 512
        %s450 = scalar_lea.vmem [#allocation2], %s449
        %p451 = pneg %p69
        %p452 = pneg %p66
        %p453 = pneg %p90
        %p454 = pneg %p87
        %p455 = pneg %p111
        %p456 = pneg %p108
        %p457 = pneg %p132
        %p458 = pneg %p129
        %p459 = pneg %p153
        %p460 = pneg %p150
        %p461 = pneg %p174
        %p462 = pneg %p171
        %p463 = pneg %p195
        %p464 = pneg %p192
        %p465 = pneg %p216
        %p466 = pneg %p213
        %p467 = pneg %p237
        %p468 = pneg %p234
        %p469 = pneg %p265
        %p470 = pneg %p262
        %s471 = sand.u32 %s252, 1
        %s472 = scalar_lea.sflag [#allocation4], %s471
        %s473 = sand.u32 %s252, 1
        %s474 = smul.addr %s473, 256
        %s475 = scalar_lea.vmem [#allocation10], %s474
        %p476 = pneg %p293
        %p477 = pneg %p290
        %s478 = sand.u32 %s34, 1
        %s479 = scalar_lea.sflag [#allocation12], %s478
        %s480 = sand.u32 %s280, 1
        %s481 = smul.addr %s480, 256
        %s482 = scalar_lea.vmem [#allocation11], %s481
        %p483 = pneg %p321
        %p484 = pneg %p318
        %s485 = sand.u32 %s34, 1
        %s486 = scalar_lea.sflag [#allocation12], %s485
        %s487 = sand.u32 %s308, 1
        %s488 = smul.addr %s487, 256
        %s489 = scalar_lea.vmem [#allocation13], %s488
        %s490 = smul.u32 32, %s39
        %s491 = smul.u32 32, %s39
        %s492 = smul.u32 32, %s39
        %s493 = smul.u32 32, %s39
        %v494 = vld [vmem:[%s429] sm:$0xff]
        %v495 = vld [vmem:[%s429 + $0x8] sm:$0xff]
        %v496 = vld [vmem:[%s429 + $0x10] sm:$0xff]
        %v497 = vld [vmem:[%s429 + $0x18] sm:$0xff]
        %v498 = vld [vmem:[%s429 + $0x20] sm:$0xff]
        %v499 = vld [vmem:[%s429 + $0x28] sm:$0xff]
        %v500 = vld [vmem:[%s429 + $0x30] sm:$0xff]
        %v501 = vld [vmem:[%s429 + $0x38] sm:$0xff]
        %v502 = vld [vmem:[%s429 + $0x40] sm:$0xff]
        %v503 = vld [vmem:[%s429 + $0x48] sm:$0xff]
        %v504 = vld [vmem:[%s429 + $0x50] sm:$0xff]
        %v505 = vld [vmem:[%s429 + $0x58] sm:$0xff]
        %v506 = vld [vmem:[%s429 + $0x60] sm:$0xff]
        %v507 = vld [vmem:[%s429 + $0x68] sm:$0xff]
        %v508 = vld [vmem:[%s429 + $0x70] sm:$0xff]
        %v509 = vld [vmem:[%s429 + $0x78] sm:$0xff]
        %v510 = vld [vmem:[%s429 + $0x80] sm:$0xff]
        %v511 = vld [vmem:[%s429 + $0x88] sm:$0xff]
        %v512 = vld [vmem:[%s429 + $0x90] sm:$0xff]
        %v513 = vld [vmem:[%s429 + $0x98] sm:$0xff]
        %v514 = vld [vmem:[%s429 + $0xa0] sm:$0xff]
        %v515 = vld [vmem:[%s429 + $0xa8] sm:$0xff]
        %v516 = vld [vmem:[%s429 + $0xb0] sm:$0xff]
        %v517 = vld [vmem:[%s429 + $0xb8] sm:$0xff]
        %v518 = vld [vmem:[%s429 + $0xc0] sm:$0xff]
        %v519 = vld [vmem:[%s429 + $0xc8] sm:$0xff]
        %v520 = vld [vmem:[%s429 + $0xd0] sm:$0xff]
        %v521 = vld [vmem:[%s429 + $0xd8] sm:$0xff]
        %v522 = vld [vmem:[%s429 + $0xe0] sm:$0xff]
        %v523 = vld [vmem:[%s429 + $0xe8] sm:$0xff]
        %v524 = vld [vmem:[%s429 + $0xf0] sm:$0xff]
        %v525 = vld [vmem:[%s429 + $0xf8] sm:$0xff]
        %v526 = vld [vmem:[%s429 + $0x100] sm:$0xff]
        %v527 = vld [vmem:[%s429 + $0x108] sm:$0xff]
        %v528 = vld [vmem:[%s429 + $0x110] sm:$0xff]
        %v529 = vld [vmem:[%s429 + $0x118] sm:$0xff]
        %v530 = vld [vmem:[%s429 + $0x120] sm:$0xff]
        %v531 = vld [vmem:[%s429 + $0x128] sm:$0xff]
        %v532 = vld [vmem:[%s429 + $0x130] sm:$0xff]
        %v533 = vld [vmem:[%s429 + $0x138] sm:$0xff]
        %v534 = vld [vmem:[%s429 + $0x140] sm:$0xff]
        %v535 = vld [vmem:[%s429 + $0x148] sm:$0xff]
        %v536 = vld [vmem:[%s429 + $0x150] sm:$0xff]
        %v537 = vld [vmem:[%s429 + $0x158] sm:$0xff]
        %v538 = vld [vmem:[%s429 + $0x160] sm:$0xff]
        %v539 = vld [vmem:[%s429 + $0x168] sm:$0xff]
        %v540 = vld [vmem:[%s429 + $0x170] sm:$0xff]
        %v541 = vld [vmem:[%s429 + $0x178] sm:$0xff]
        %v542 = vld [vmem:[%s429 + $0x180] sm:$0xff]
        %v543 = vld [vmem:[%s429 + $0x188] sm:$0xff]
        %v544 = vld [vmem:[%s429 + $0x190] sm:$0xff]
        %v545 = vld [vmem:[%s429 + $0x198] sm:$0xff]
        %v546 = vld [vmem:[%s429 + $0x1a0] sm:$0xff]
        %v547 = vld [vmem:[%s429 + $0x1a8] sm:$0xff]
        %v548 = vld [vmem:[%s429 + $0x1b0] sm:$0xff]
        %v549 = vld [vmem:[%s429 + $0x1b8] sm:$0xff]
        %v550 = vld [vmem:[%s429 + $0x1c0] sm:$0xff]
        %v551 = vld [vmem:[%s429 + $0x1c8] sm:$0xff]
        %v552 = vld [vmem:[%s429 + $0x1d0] sm:$0xff]
        %v553 = vld [vmem:[%s429 + $0x1d8] sm:$0xff]
        %v554 = vld [vmem:[%s429 + $0x1e0] sm:$0xff]
        %v555 = vld [vmem:[%s429 + $0x1e8] sm:$0xff]
        %v556 = vld [vmem:[%s429 + $0x1f0] sm:$0xff]
        %v557 = vld [vmem:[%s429 + $0x1f8] sm:$0xff]
        %v558 = vld [vmem:[%s1] sm:$0x3]
        %v559 = vld [vmem:[%s2] sm:$0x3]
        %v560 = vadd.f32 %v494, %v495
        %561 = vadd.xlane.f32.xlu0 %v560
        %v562 = vpop.xlane.xlu0 %561
        %v563 = vadd.f32 %v496, %v497
        %564 = vadd.xlane.f32.xlu0 %v563
        %v565 = vpop.xlane.xlu0 %564
        %v566 = vadd.f32 %v498, %v499
        %567 = vadd.xlane.f32.xlu0 %v566
        %v568 = vpop.xlane.xlu0 %567
        %v569 = vadd.f32 %v500, %v501
        %570 = vadd.xlane.f32.xlu0 %v569
        %v571 = vpop.xlane.xlu0 %570
        %v572 = vadd.f32 %v502, %v503
        %573 = vadd.xlane.f32.xlu0 %v572
        %v574 = vpop.xlane.xlu0 %573
        %v575 = vadd.f32 %v504, %v505
        %576 = vadd.xlane.f32.xlu0 %v575
        %v577 = vpop.xlane.xlu0 %576
        %v578 = vadd.f32 %v506, %v507
        %579 = vadd.xlane.f32.xlu0 %v578
        %v580 = vpop.xlane.xlu0 %579
        %v581 = vadd.f32 %v508, %v509
        %582 = vadd.xlane.f32.xlu0 %v581
        %v583 = vpop.xlane.xlu0 %582
        %v584 = vadd.f32 %v510, %v511
        %585 = vadd.xlane.f32.xlu0 %v584
        %v586 = vpop.xlane.xlu0 %585
        %v587 = vadd.f32 %v512, %v513
        %588 = vadd.xlane.f32.xlu0 %v587
        %v589 = vpop.xlane.xlu0 %588
        %v590 = vadd.f32 %v514, %v515
        %591 = vadd.xlane.f32.xlu0 %v590
        %v592 = vpop.xlane.xlu0 %591
        %v593 = vadd.f32 %v516, %v517
        %594 = vadd.xlane.f32.xlu0 %v593
        %v595 = vpop.xlane.xlu0 %594
        %v596 = vadd.f32 %v518, %v519
        %597 = vadd.xlane.f32.xlu0 %v596
        %v598 = vpop.xlane.xlu0 %597
        %v599 = vadd.f32 %v520, %v521
        %600 = vadd.xlane.f32.xlu0 %v599
        %v601 = vpop.xlane.xlu0 %600
        %v602 = vadd.f32 %v522, %v523
        %603 = vadd.xlane.f32.xlu0 %v602
        %v604 = vpop.xlane.xlu0 %603
        %v605 = vadd.f32 %v524, %v525
        %606 = vadd.xlane.f32.xlu0 %v605
        %v607 = vpop.xlane.xlu0 %606
        %v608 = vadd.f32 %v526, %v527
        %609 = vadd.xlane.f32.xlu0 %v608
        %v610 = vpop.xlane.xlu0 %609
        %v611 = vadd.f32 %v528, %v529
        %612 = vadd.xlane.f32.xlu0 %v611
        %v613 = vpop.xlane.xlu0 %612
        %v614 = vadd.f32 %v530, %v531
        %615 = vadd.xlane.f32.xlu0 %v614
        %v616 = vpop.xlane.xlu0 %615
        %v617 = vadd.f32 %v532, %v533
        %618 = vadd.xlane.f32.xlu0 %v617
        %v619 = vpop.xlane.xlu0 %618
        %v620 = vadd.f32 %v534, %v535
        %621 = vadd.xlane.f32.xlu0 %v620
        %v622 = vpop.xlane.xlu0 %621
        %v623 = vadd.f32 %v536, %v537
        %624 = vadd.xlane.f32.xlu0 %v623
        %v625 = vpop.xlane.xlu0 %624
        %v626 = vadd.f32 %v538, %v539
        %627 = vadd.xlane.f32.xlu0 %v626
        %v628 = vpop.xlane.xlu0 %627
        %v629 = vadd.f32 %v540, %v541
        %630 = vadd.xlane.f32.xlu0 %v629
        %v631 = vpop.xlane.xlu0 %630
        %v632 = vadd.f32 %v542, %v543
        %633 = vadd.xlane.f32.xlu0 %v632
        %v634 = vpop.xlane.xlu0 %633
        %v635 = vadd.f32 %v544, %v545
        %636 = vadd.xlane.f32.xlu0 %v635
        %v637 = vpop.xlane.xlu0 %636
        %v638 = vadd.f32 %v546, %v547
        %639 = vadd.xlane.f32.xlu0 %v638
        %v640 = vpop.xlane.xlu0 %639
        %v641 = vadd.f32 %v548, %v549
        %642 = vadd.xlane.f32.xlu0 %v641
        %v643 = vpop.xlane.xlu0 %642
        %v644 = vadd.f32 %v550, %v551
        %645 = vadd.xlane.f32.xlu0 %v644
        %v646 = vpop.xlane.xlu0 %645
        %v647 = vadd.f32 %v552, %v553
        %648 = vadd.xlane.f32.xlu0 %v647
        %v649 = vpop.xlane.xlu0 %648
        %v650 = vadd.f32 %v554, %v555
        %651 = vadd.xlane.f32.xlu0 %v650
        %v652 = vpop.xlane.xlu0 %651
        %v653 = vadd.f32 %v556, %v557
        %654 = vadd.xlane.f32.xlu0 %v653
        %v655 = vpop.xlane.xlu0 %654
        %v656 = vrcp.pop 256.0
        %v657 = vmul.f32 %v562, %v656
        %v658 = vmul.f32 %v565, %v656
        %v659 = vmul.f32 %v568, %v656
        %v660 = vmul.f32 %v571, %v656
        %v661 = vmul.f32 %v574, %v656
        %v662 = vmul.f32 %v577, %v656
        %v663 = vmul.f32 %v580, %v656
        %v664 = vmul.f32 %v583, %v656
        %v665 = vmul.f32 %v586, %v656
        %v666 = vmul.f32 %v589, %v656
        %v667 = vmul.f32 %v592, %v656
        %v668 = vmul.f32 %v595, %v656
        %v669 = vmul.f32 %v598, %v656
        %v670 = vmul.f32 %v601, %v656
        %v671 = vmul.f32 %v604, %v656
        %v672 = vmul.f32 %v607, %v656
        %v673 = vmul.f32 %v610, %v656
        %v674 = vmul.f32 %v613, %v656
        %v675 = vmul.f32 %v616, %v656
        %v676 = vmul.f32 %v619, %v656
        %v677 = vmul.f32 %v622, %v656
        %v678 = vmul.f32 %v625, %v656
        %v679 = vmul.f32 %v628, %v656
        %v680 = vmul.f32 %v631, %v656
        %v681 = vmul.f32 %v634, %v656
        %v682 = vmul.f32 %v637, %v656
        %v683 = vmul.f32 %v640, %v656
        %v684 = vmul.f32 %v643, %v656
        %v685 = vmul.f32 %v646, %v656
        %v686 = vmul.f32 %v649, %v656
        %v687 = vmul.f32 %v652, %v656
        %v688 = vmul.f32 %v655, %v656
        %v689 = vsub.f32 %v494, %v657
        %v690 = vsub.f32 %v495, %v657
        %v691 = vsub.f32 %v496, %v658
        %v692 = vsub.f32 %v497, %v658
        %v693 = vsub.f32 %v498, %v659
        %v694 = vsub.f32 %v499, %v659
        %v695 = vsub.f32 %v500, %v660
        %v696 = vsub.f32 %v501, %v660
        %v697 = vsub.f32 %v502, %v661
        %v698 = vsub.f32 %v503, %v661
        %v699 = vsub.f32 %v504, %v662
        %v700 = vsub.f32 %v505, %v662
        %v701 = vsub.f32 %v506, %v663
        %v702 = vsub.f32 %v507, %v663
        %v703 = vsub.f32 %v508, %v664
        %v704 = vsub.f32 %v509, %v664
        %v705 = vsub.f32 %v510, %v665
        %v706 = vsub.f32 %v511, %v665
        %v707 = vsub.f32 %v512, %v666
        %v708 = vsub.f32 %v513, %v666
        %v709 = vsub.f32 %v514, %v667
        %v710 = vsub.f32 %v515, %v667
        %v711 = vsub.f32 %v516, %v668
        %v712 = vsub.f32 %v517, %v668
        %v713 = vsub.f32 %v518, %v669
        %v714 = vsub.f32 %v519, %v669
        %v715 = vsub.f32 %v520, %v670
        %v716 = vsub.f32 %v521, %v670
        %v717 = vsub.f32 %v522, %v671
        %v718 = vsub.f32 %v523, %v671
        %v719 = vsub.f32 %v524, %v672
        %v720 = vsub.f32 %v525, %v672
        %v721 = vsub.f32 %v526, %v673
        %v722 = vsub.f32 %v527, %v673
        %v723 = vsub.f32 %v528, %v674
        %v724 = vsub.f32 %v529, %v674
        %v725 = vsub.f32 %v530, %v675
        %v726 = vsub.f32 %v531, %v675
        %v727 = vsub.f32 %v532, %v676
        %v728 = vsub.f32 %v533, %v676
        %v729 = vsub.f32 %v534, %v677
        %v730 = vsub.f32 %v535, %v677
        %v731 = vsub.f32 %v536, %v678
        %v732 = vsub.f32 %v537, %v678
        %v733 = vsub.f32 %v538, %v679
        %v734 = vsub.f32 %v539, %v679
        %v735 = vsub.f32 %v540, %v680
        %v736 = vsub.f32 %v541, %v680
        %v737 = vsub.f32 %v542, %v681
        %v738 = vsub.f32 %v543, %v681
        %v739 = vsub.f32 %v544, %v682
        %v740 = vsub.f32 %v545, %v682
        %v741 = vsub.f32 %v546, %v683
        %v742 = vsub.f32 %v547, %v683
        %v743 = vsub.f32 %v548, %v684
        %v744 = vsub.f32 %v549, %v684
        %v745 = vsub.f32 %v550, %v685
        %v746 = vsub.f32 %v551, %v685
        %v747 = vsub.f32 %v552, %v686
        %v748 = vsub.f32 %v553, %v686
        %v749 = vsub.f32 %v554, %v687
        %v750 = vsub.f32 %v555, %v687
        %v751 = vsub.f32 %v556, %v688
        %v752 = vsub.f32 %v557, %v688
        %v753 = vmul.f32 %v689, %v689
        %v754 = vmul.f32 %v690, %v690
        %v755 = vmul.f32 %v691, %v691
        %v756 = vmul.f32 %v692, %v692
        %v757 = vmul.f32 %v693, %v693
        %v758 = vmul.f32 %v694, %v694
        %v759 = vmul.f32 %v695, %v695
        %v760 = vmul.f32 %v696, %v696
        %v761 = vmul.f32 %v697, %v697
        %v762 = vmul.f32 %v698, %v698
        %v763 = vmul.f32 %v699, %v699
        %v764 = vmul.f32 %v700, %v700
        %v765 = vmul.f32 %v701, %v701
        %v766 = vmul.f32 %v702, %v702
        %v767 = vmul.f32 %v703, %v703
        %v768 = vmul.f32 %v704, %v704
        %v769 = vmul.f32 %v705, %v705
        %v770 = vmul.f32 %v706, %v706
        %v771 = vmul.f32 %v707, %v707
        %v772 = vmul.f32 %v708, %v708
        %v773 = vmul.f32 %v709, %v709
        %v774 = vmul.f32 %v710, %v710
        %v775 = vmul.f32 %v711, %v711
        %v776 = vmul.f32 %v712, %v712
        %v777 = vmul.f32 %v713, %v713
        %v778 = vmul.f32 %v714, %v714
        %v779 = vmul.f32 %v715, %v715
        %v780 = vmul.f32 %v716, %v716
        %v781 = vmul.f32 %v717, %v717
        %v782 = vmul.f32 %v718, %v718
        %v783 = vmul.f32 %v719, %v719
        %v784 = vmul.f32 %v720, %v720
        %v785 = vmul.f32 %v721, %v721
        %v786 = vmul.f32 %v722, %v722
        %v787 = vmul.f32 %v723, %v723
        %v788 = vmul.f32 %v724, %v724
        %v789 = vmul.f32 %v725, %v725
        %v790 = vmul.f32 %v726, %v726
        %v791 = vmul.f32 %v727, %v727
        %v792 = vmul.f32 %v728, %v728
        %v793 = vmul.f32 %v729, %v729
        %v794 = vmul.f32 %v730, %v730
        %v795 = vmul.f32 %v731, %v731
        %v796 = vmul.f32 %v732, %v732
        %v797 = vmul.f32 %v733, %v733
        %v798 = vmul.f32 %v734, %v734
        %v799 = vmul.f32 %v735, %v735
        %v800 = vmul.f32 %v736, %v736
        %v801 = vmul.f32 %v737, %v737
        %v802 = vmul.f32 %v738, %v738
        %v803 = vmul.f32 %v739, %v739
        %v804 = vmul.f32 %v740, %v740
        %v805 = vmul.f32 %v741, %v741
        %v806 = vmul.f32 %v742, %v742
        %v807 = vmul.f32 %v743, %v743
        %v808 = vmul.f32 %v744, %v744
        %v809 = vmul.f32 %v745, %v745
        %v810 = vmul.f32 %v746, %v746
        %v811 = vmul.f32 %v747, %v747
        %v812 = vmul.f32 %v748, %v748
        %v813 = vmul.f32 %v749, %v749
        %v814 = vmul.f32 %v750, %v750
        %v815 = vmul.f32 %v751, %v751
        %v816 = vmul.f32 %v752, %v752
        %v817 = vadd.f32 %v753, %v754
        %818 = vadd.xlane.f32.xlu0 %v817
        %v819 = vpop.xlane.xlu0 %818
        %v820 = vadd.f32 %v755, %v756
        %821 = vadd.xlane.f32.xlu0 %v820
        %v822 = vpop.xlane.xlu0 %821
        %v823 = vadd.f32 %v757, %v758
        %824 = vadd.xlane.f32.xlu0 %v823
        %v825 = vpop.xlane.xlu0 %824
        %v826 = vadd.f32 %v759, %v760
        %827 = vadd.xlane.f32.xlu0 %v826
        %v828 = vpop.xlane.xlu0 %827
        %v829 = vadd.f32 %v761, %v762
        %830 = vadd.xlane.f32.xlu0 %v829
        %v831 = vpop.xlane.xlu0 %830
        %v832 = vadd.f32 %v763, %v764
        %833 = vadd.xlane.f32.xlu0 %v832
        %v834 = vpop.xlane.xlu0 %833
        %v835 = vadd.f32 %v765, %v766
        %836 = vadd.xlane.f32.xlu0 %v835
        %v837 = vpop.xlane.xlu0 %836
        %v838 = vadd.f32 %v767, %v768
        %839 = vadd.xlane.f32.xlu0 %v838
        %v840 = vpop.xlane.xlu0 %839
        %v841 = vadd.f32 %v769, %v770
        %842 = vadd.xlane.f32.xlu0 %v841
        %v843 = vpop.xlane.xlu0 %842
        %v844 = vadd.f32 %v771, %v772
        %845 = vadd.xlane.f32.xlu0 %v844
        %v846 = vpop.xlane.xlu0 %845
        %v847 = vadd.f32 %v773, %v774
        %848 = vadd.xlane.f32.xlu0 %v847
        %v849 = vpop.xlane.xlu0 %848
        %v850 = vadd.f32 %v775, %v776
        %851 = vadd.xlane.f32.xlu0 %v850
        %v852 = vpop.xlane.xlu0 %851
        %v853 = vadd.f32 %v777, %v778
        %854 = vadd.xlane.f32.xlu0 %v853
        %v855 = vpop.xlane.xlu0 %854
        %v856 = vadd.f32 %v779, %v780
        %857 = vadd.xlane.f32.xlu0 %v856
        %v858 = vpop.xlane.xlu0 %857
        %v859 = vadd.f32 %v781, %v782
        %860 = vadd.xlane.f32.xlu0 %v859
        %v861 = vpop.xlane.xlu0 %860
        %v862 = vadd.f32 %v783, %v784
        %863 = vadd.xlane.f32.xlu0 %v862
        %v864 = vpop.xlane.xlu0 %863
        %v865 = vadd.f32 %v785, %v786
        %866 = vadd.xlane.f32.xlu0 %v865
        %v867 = vpop.xlane.xlu0 %866
        %v868 = vadd.f32 %v787, %v788
        %869 = vadd.xlane.f32.xlu0 %v868
        %v870 = vpop.xlane.xlu0 %869
        %v871 = vadd.f32 %v789, %v790
        %872 = vadd.xlane.f32.xlu0 %v871
        %v873 = vpop.xlane.xlu0 %872
        %v874 = vadd.f32 %v791, %v792
        %875 = vadd.xlane.f32.xlu0 %v874
        %v876 = vpop.xlane.xlu0 %875
        %v877 = vadd.f32 %v793, %v794
        %878 = vadd.xlane.f32.xlu0 %v877
        %v879 = vpop.xlane.xlu0 %878
        %v880 = vadd.f32 %v795, %v796
        %881 = vadd.xlane.f32.xlu0 %v880
        %v882 = vpop.xlane.xlu0 %881
        %v883 = vadd.f32 %v797, %v798
        %884 = vadd.xlane.f32.xlu0 %v883
        %v885 = vpop.xlane.xlu0 %884
        %v886 = vadd.f32 %v799, %v800
        %887 = vadd.xlane.f32.xlu0 %v886
        %v888 = vpop.xlane.xlu0 %887
        %v889 = vadd.f32 %v801, %v802
        %890 = vadd.xlane.f32.xlu0 %v889
        %v891 = vpop.xlane.xlu0 %890
        %v892 = vadd.f32 %v803, %v804
        %893 = vadd.xlane.f32.xlu0 %v892
        %v894 = vpop.xlane.xlu0 %893
        %v895 = vadd.f32 %v805, %v806
        %896 = vadd.xlane.f32.xlu0 %v895
        %v897 = vpop.xlane.xlu0 %896
        %v898 = vadd.f32 %v807, %v808
        %899 = vadd.xlane.f32.xlu0 %v898
        %v900 = vpop.xlane.xlu0 %899
        %v901 = vadd.f32 %v809, %v810
        %902 = vadd.xlane.f32.xlu0 %v901
        %v903 = vpop.xlane.xlu0 %902
        %v904 = vadd.f32 %v811, %v812
        %905 = vadd.xlane.f32.xlu0 %v904
        %v906 = vpop.xlane.xlu0 %905
        %v907 = vadd.f32 %v813, %v814
        %908 = vadd.xlane.f32.xlu0 %v907
        %v909 = vpop.xlane.xlu0 %908
        %v910 = vadd.f32 %v815, %v816
        %911 = vadd.xlane.f32.xlu0 %v910
        %v912 = vpop.xlane.xlu0 %911
        %v913 = vmul.f32 %v819, %v656
        %v914 = vmul.f32 %v822, %v656
        %v915 = vmul.f32 %v825, %v656
        %v916 = vmul.f32 %v828, %v656
        %v917 = vmul.f32 %v831, %v656
        %v918 = vmul.f32 %v834, %v656
        %v919 = vmul.f32 %v837, %v656
        %v920 = vmul.f32 %v840, %v656
        %v921 = vmul.f32 %v843, %v656
        %v922 = vmul.f32 %v846, %v656
        %v923 = vmul.f32 %v849, %v656
        %v924 = vmul.f32 %v852, %v656
        %v925 = vmul.f32 %v855, %v656
        %v926 = vmul.f32 %v858, %v656
        %v927 = vmul.f32 %v861, %v656
        %v928 = vmul.f32 %v864, %v656
        %v929 = vmul.f32 %v867, %v656
        %v930 = vmul.f32 %v870, %v656
        %v931 = vmul.f32 %v873, %v656
        %v932 = vmul.f32 %v876, %v656
        %v933 = vmul.f32 %v879, %v656
        %v934 = vmul.f32 %v882, %v656
        %v935 = vmul.f32 %v885, %v656
        %v936 = vmul.f32 %v888, %v656
        %v937 = vmul.f32 %v891, %v656
        %v938 = vmul.f32 %v894, %v656
        %v939 = vmul.f32 %v897, %v656
        %v940 = vmul.f32 %v900, %v656
        %v941 = vmul.f32 %v903, %v656
        %v942 = vmul.f32 %v906, %v656
        %v943 = vmul.f32 %v909, %v656
        %v944 = vmul.f32 %v912, %v656
        %v945 = vadd.f32 %v913, 1e-05
        %v946 = vadd.f32 %v914, 1e-05
        %v947 = vadd.f32 %v915, 1e-05
        %v948 = vadd.f32 %v916, 1e-05
        %v949 = vadd.f32 %v917, 1e-05
        %v950 = vadd.f32 %v918, 1e-05
        %v951 = vadd.f32 %v919, 1e-05
        %v952 = vadd.f32 %v920, 1e-05
        %v953 = vadd.f32 %v921, 1e-05
        %v954 = vadd.f32 %v922, 1e-05
        %v955 = vadd.f32 %v923, 1e-05
        %v956 = vadd.f32 %v924, 1e-05
        %v957 = vadd.f32 %v925, 1e-05
        %v958 = vadd.f32 %v926, 1e-05
        %v959 = vadd.f32 %v927, 1e-05
        %v960 = vadd.f32 %v928, 1e-05
        %v961 = vadd.f32 %v929, 1e-05
        %v962 = vadd.f32 %v930, 1e-05
        %v963 = vadd.f32 %v931, 1e-05
        %v964 = vadd.f32 %v932, 1e-05
        %v965 = vadd.f32 %v933, 1e-05
        %v966 = vadd.f32 %v934, 1e-05
        %v967 = vadd.f32 %v935, 1e-05
        %v968 = vadd.f32 %v936, 1e-05
        %v969 = vadd.f32 %v937, 1e-05
        %v970 = vadd.f32 %v938, 1e-05
        %v971 = vadd.f32 %v939, 1e-05
        %v972 = vadd.f32 %v940, 1e-05
        %v973 = vadd.f32 %v941, 1e-05
        %v974 = vadd.f32 %v942, 1e-05
        %v975 = vadd.f32 %v943, 1e-05
        %v976 = vadd.f32 %v944, 1e-05
        %v977 = vrsqrt.pop %v945
        %v978 = vrsqrt.pop %v946
        %v979 = vrsqrt.pop %v947
        %v980 = vrsqrt.pop %v948
        %v981 = vrsqrt.pop %v949
        %v982 = vrsqrt.pop %v950
        %v983 = vrsqrt.pop %v951
        %v984 = vrsqrt.pop %v952
        %v985 = vrsqrt.pop %v953
        %v986 = vrsqrt.pop %v954
        %v987 = vrsqrt.pop %v955
        %v988 = vrsqrt.pop %v956
        %v989 = vrsqrt.pop %v957
        %v990 = vrsqrt.pop %v958
        %v991 = vrsqrt.pop %v959
        %v992 = vrsqrt.pop %v960
        %v993 = vrsqrt.pop %v961
        %v994 = vrsqrt.pop %v962
        %v995 = vrsqrt.pop %v963
        %v996 = vrsqrt.pop %v964
        %v997 = vrsqrt.pop %v965
        %v998 = vrsqrt.pop %v966
        %v999 = vrsqrt.pop %v967
        %v1000 = vrsqrt.pop %v968
        %v1001 = vrsqrt.pop %v969
        %v1002 = vrsqrt.pop %v970
        %v1003 = vrsqrt.pop %v971
        %v1004 = vrsqrt.pop %v972
        %v1005 = vrsqrt.pop %v973
        %v1006 = vrsqrt.pop %v974
        %v1007 = vrsqrt.pop %v975
        %v1008 = vrsqrt.pop %v976
        %v1009 = vmul.f32 %v689, %v977
        %v1010 = vmul.f32 %v690, %v977
        %v1011 = vmul.f32 %v691, %v978
        %v1012 = vmul.f32 %v692, %v978
        %v1013 = vmul.f32 %v693, %v979
        %v1014 = vmul.f32 %v694, %v979
        %v1015 = vmul.f32 %v695, %v980
        %v1016 = vmul.f32 %v696, %v980
        %v1017 = vmul.f32 %v697, %v981
        %v1018 = vmul.f32 %v698, %v981
        %v1019 = vmul.f32 %v699, %v982
        %v1020 = vmul.f32 %v700, %v982
        %v1021 = vmul.f32 %v701, %v983
        %v1022 = vmul.f32 %v702, %v983
        %v1023 = vmul.f32 %v703, %v984
        %v1024 = vmul.f32 %v704, %v984
        %v1025 = vmul.f32 %v705, %v985
        %v1026 = vmul.f32 %v706, %v985
        %v1027 = vmul.f32 %v707, %v986
        %v1028 = vmul.f32 %v708, %v986
        %v1029 = vmul.f32 %v709, %v987
        %v1030 = vmul.f32 %v710, %v987
        %v1031 = vmul.f32 %v711, %v988
        %v1032 = vmul.f32 %v712, %v988
        %v1033 = vmul.f32 %v713, %v989
        %v1034 = vmul.f32 %v714, %v989
        %v1035 = vmul.f32 %v715, %v990
        %v1036 = vmul.f32 %v716, %v990
        %v1037 = vmul.f32 %v717, %v991
        %v1038 = vmul.f32 %v718, %v991
        %v1039 = vmul.f32 %v719, %v992
        %v1040 = vmul.f32 %v720, %v992
        %v1041 = vmul.f32 %v721, %v993
        %v1042 = vmul.f32 %v722, %v993
        %v1043 = vmul.f32 %v723, %v994
        %v1044 = vmul.f32 %v724, %v994
        %v1045 = vmul.f32 %v725, %v995
        %v1046 = vmul.f32 %v726, %v995
        %v1047 = vmul.f32 %v727, %v996
        %v1048 = vmul.f32 %v728, %v996
        %v1049 = vmul.f32 %v729, %v997
        %v1050 = vmul.f32 %v730, %v997
        %v1051 = vmul.f32 %v731, %v998
        %v1052 = vmul.f32 %v732, %v998
        %v1053 = vmul.f32 %v733, %v999
        %v1054 = vmul.f32 %v734, %v999
        %v1055 = vmul.f32 %v735, %v1000
        %v1056 = vmul.f32 %v736, %v1000
        %v1057 = vmul.f32 %v737, %v1001
        %v1058 = vmul.f32 %v738, %v1001
        %v1059 = vmul.f32 %v739, %v1002
        %v1060 = vmul.f32 %v740, %v1002
        %v1061 = vmul.f32 %v741, %v1003
        %v1062 = vmul.f32 %v742, %v1003
        %v1063 = vmul.f32 %v743, %v1004
        %v1064 = vmul.f32 %v744, %v1004
        %v1065 = vmul.f32 %v745, %v1005
        %v1066 = vmul.f32 %v746, %v1005
        %v1067 = vmul.f32 %v747, %v1006
        %v1068 = vmul.f32 %v748, %v1006
        %v1069 = vmul.f32 %v749, %v1007
        %v1070 = vmul.f32 %v750, %v1007
        %v1071 = vmul.f32 %v751, %v1008
        %v1072 = vmul.f32 %v752, %v1008
        %v1074 = vlaneseq
        %v1075 = vshrl.u32 %v1074, 7
        %v1076 = vsub.s32 0, %v1075
        %v1077 = vrot.slane %v558, %v1076
        %v1078 = vlaneseq
        %v1079 = vshrl.u32 %v1078, 7
        %v1080 = vsub.s32 1, %v1079
        %v1081 = vrot.slane %v558, %v1080
        %v1084 = vmul.f32 %v1009, %v1077
        %v1085 = vmul.f32 %v1010, %v1081
        %v1086 = vmul.f32 %v1011, %v1077
        %v1087 = vmul.f32 %v1012, %v1081
        %v1088 = vmul.f32 %v1013, %v1077
        %v1089 = vmul.f32 %v1014, %v1081
        %v1090 = vmul.f32 %v1015, %v1077
        %v1091 = vmul.f32 %v1016, %v1081
        %v1092 = vmul.f32 %v1017, %v1077
        %v1093 = vmul.f32 %v1018, %v1081
        %v1094 = vmul.f32 %v1019, %v1077
        %v1095 = vmul.f32 %v1020, %v1081
        %v1096 = vmul.f32 %v1021, %v1077
        %v1097 = vmul.f32 %v1022, %v1081
        %v1098 = vmul.f32 %v1023, %v1077
        %v1099 = vmul.f32 %v1024, %v1081
        %v1100 = vmul.f32 %v1025, %v1077
        %v1101 = vmul.f32 %v1026, %v1081
        %v1102 = vmul.f32 %v1027, %v1077
        %v1103 = vmul.f32 %v1028, %v1081
        %v1104 = vmul.f32 %v1029, %v1077
        %v1105 = vmul.f32 %v1030, %v1081
        %v1106 = vmul.f32 %v1031, %v1077
        %v1107 = vmul.f32 %v1032, %v1081
        %v1108 = vmul.f32 %v1033, %v1077
        %v1109 = vmul.f32 %v1034, %v1081
        %v1110 = vmul.f32 %v1035, %v1077
        %v1111 = vmul.f32 %v1036, %v1081
        %v1112 = vmul.f32 %v1037, %v1077
        %v1113 = vmul.f32 %v1038, %v1081
        %v1114 = vmul.f32 %v1039, %v1077
        %v1115 = vmul.f32 %v1040, %v1081
        %v1116 = vmul.f32 %v1041, %v1077
        %v1117 = vmul.f32 %v1042, %v1081
        %v1118 = vmul.f32 %v1043, %v1077
        %v1119 = vmul.f32 %v1044, %v1081
        %v1120 = vmul.f32 %v1045, %v1077
        %v1121 = vmul.f32 %v1046, %v1081
        %v1122 = vmul.f32 %v1047, %v1077
        %v1123 = vmul.f32 %v1048, %v1081
        %v1124 = vmul.f32 %v1049, %v1077
        %v1125 = vmul.f32 %v1050, %v1081
        %v1126 = vmul.f32 %v1051, %v1077
        %v1127 = vmul.f32 %v1052, %v1081
        %v1128 = vmul.f32 %v1053, %v1077
        %v1129 = vmul.f32 %v1054, %v1081
        %v1130 = vmul.f32 %v1055, %v1077
        %v1131 = vmul.f32 %v1056, %v1081
        %v1132 = vmul.f32 %v1057, %v1077
        %v1133 = vmul.f32 %v1058, %v1081
        %v1134 = vmul.f32 %v1059, %v1077
        %v1135 = vmul.f32 %v1060, %v1081
        %v1136 = vmul.f32 %v1061, %v1077
        %v1137 = vmul.f32 %v1062, %v1081
        %v1138 = vmul.f32 %v1063, %v1077
        %v1139 = vmul.f32 %v1064, %v1081
        %v1140 = vmul.f32 %v1065, %v1077
        %v1141 = vmul.f32 %v1066, %v1081
        %v1142 = vmul.f32 %v1067, %v1077
        %v1143 = vmul.f32 %v1068, %v1081
        %v1144 = vmul.f32 %v1069, %v1077
        %v1145 = vmul.f32 %v1070, %v1081
        %v1146 = vmul.f32 %v1071, %v1077
        %v1147 = vmul.f32 %v1072, %v1081
        %v1149 = vlaneseq
        %v1150 = vshrl.u32 %v1149, 7
        %v1151 = vsub.s32 0, %v1150
        %v1152 = vrot.slane %v559, %v1151
        %v1153 = vlaneseq
        %v1154 = vshrl.u32 %v1153, 7
        %v1155 = vsub.s32 1, %v1154
        %v1156 = vrot.slane %v559, %v1155
        %v1159 = vadd.f32 %v1084, %v1152
        %v1160 = vadd.f32 %v1085, %v1156
        %v1161 = vadd.f32 %v1086, %v1152
        %v1162 = vadd.f32 %v1087, %v1156
        %v1163 = vadd.f32 %v1088, %v1152
        %v1164 = vadd.f32 %v1089, %v1156
        %v1165 = vadd.f32 %v1090, %v1152
        %v1166 = vadd.f32 %v1091, %v1156
        %v1167 = vadd.f32 %v1092, %v1152
        %v1168 = vadd.f32 %v1093, %v1156
        %v1169 = vadd.f32 %v1094, %v1152
        %v1170 = vadd.f32 %v1095, %v1156
        %v1171 = vadd.f32 %v1096, %v1152
        %v1172 = vadd.f32 %v1097, %v1156
        %v1173 = vadd.f32 %v1098, %v1152
        %v1174 = vadd.f32 %v1099, %v1156
        %v1175 = vadd.f32 %v1100, %v1152
        %v1176 = vadd.f32 %v1101, %v1156
        %v1177 = vadd.f32 %v1102, %v1152
        %v1178 = vadd.f32 %v1103, %v1156
        %v1179 = vadd.f32 %v1104, %v1152
        %v1180 = vadd.f32 %v1105, %v1156
        %v1181 = vadd.f32 %v1106, %v1152
        %v1182 = vadd.f32 %v1107, %v1156
        %v1183 = vadd.f32 %v1108, %v1152
        %v1184 = vadd.f32 %v1109, %v1156
        %v1185 = vadd.f32 %v1110, %v1152
        %v1186 = vadd.f32 %v1111, %v1156
        %v1187 = vadd.f32 %v1112, %v1152
        %v1188 = vadd.f32 %v1113, %v1156
        %v1189 = vadd.f32 %v1114, %v1152
        %v1190 = vadd.f32 %v1115, %v1156
        %v1191 = vadd.f32 %v1116, %v1152
        %v1192 = vadd.f32 %v1117, %v1156
        %v1193 = vadd.f32 %v1118, %v1152
        %v1194 = vadd.f32 %v1119, %v1156
        %v1195 = vadd.f32 %v1120, %v1152
        %v1196 = vadd.f32 %v1121, %v1156
        %v1197 = vadd.f32 %v1122, %v1152
        %v1198 = vadd.f32 %v1123, %v1156
        %v1199 = vadd.f32 %v1124, %v1152
        %v1200 = vadd.f32 %v1125, %v1156
        %v1201 = vadd.f32 %v1126, %v1152
        %v1202 = vadd.f32 %v1127, %v1156
        %v1203 = vadd.f32 %v1128, %v1152
        %v1204 = vadd.f32 %v1129, %v1156
        %v1205 = vadd.f32 %v1130, %v1152
        %v1206 = vadd.f32 %v1131, %v1156
        %v1207 = vadd.f32 %v1132, %v1152
        %v1208 = vadd.f32 %v1133, %v1156
        %v1209 = vadd.f32 %v1134, %v1152
        %v1210 = vadd.f32 %v1135, %v1156
        %v1211 = vadd.f32 %v1136, %v1152
        %v1212 = vadd.f32 %v1137, %v1156
        %v1213 = vadd.f32 %v1138, %v1152
        %v1214 = vadd.f32 %v1139, %v1156
        %v1215 = vadd.f32 %v1140, %v1152
        %v1216 = vadd.f32 %v1141, %v1156
        %v1217 = vadd.f32 %v1142, %v1152
        %v1218 = vadd.f32 %v1143, %v1156
        %v1219 = vadd.f32 %v1144, %v1152
        %v1220 = vadd.f32 %v1145, %v1156
        %v1221 = vadd.f32 %v1146, %v1152
        %v1222 = vadd.f32 %v1147, %v1156
        %v1223 = vpack.c.bf16 %v1161, %v1159
        %v1224 = vpack.c.bf16 %v1162, %v1160
        %v1225 = vpack.c.bf16 %v1165, %v1163
        %v1226 = vpack.c.bf16 %v1166, %v1164
        %v1227 = vpack.c.bf16 %v1169, %v1167
        %v1228 = vpack.c.bf16 %v1170, %v1168
        %v1229 = vpack.c.bf16 %v1173, %v1171
        %v1230 = vpack.c.bf16 %v1174, %v1172
        %v1231 = vpack.c.bf16 %v1177, %v1175
        %v1232 = vpack.c.bf16 %v1178, %v1176
        %v1233 = vpack.c.bf16 %v1181, %v1179
        %v1234 = vpack.c.bf16 %v1182, %v1180
        %v1235 = vpack.c.bf16 %v1185, %v1183
        %v1236 = vpack.c.bf16 %v1186, %v1184
        %v1237 = vpack.c.bf16 %v1189, %v1187
        %v1238 = vpack.c.bf16 %v1190, %v1188
        %v1239 = vpack.c.bf16 %v1193, %v1191
        %v1240 = vpack.c.bf16 %v1194, %v1192
        %v1241 = vpack.c.bf16 %v1197, %v1195
        %v1242 = vpack.c.bf16 %v1198, %v1196
        %v1243 = vpack.c.bf16 %v1201, %v1199
        %v1244 = vpack.c.bf16 %v1202, %v1200
        %v1245 = vpack.c.bf16 %v1205, %v1203
        %v1246 = vpack.c.bf16 %v1206, %v1204
        %v1247 = vpack.c.bf16 %v1209, %v1207
        %v1248 = vpack.c.bf16 %v1210, %v1208
        %v1249 = vpack.c.bf16 %v1213, %v1211
        %v1250 = vpack.c.bf16 %v1214, %v1212
        %v1251 = vpack.c.bf16 %v1217, %v1215
        %v1252 = vpack.c.bf16 %v1218, %v1216
        %v1253 = vpack.c.bf16 %v1221, %v1219
        %v1254 = vpack.c.bf16 %v1222, %v1220
        %v1255 = vld [vmem:[#allocation5] sm:$0xff]
        %v1256 = vld [vmem:[#allocation5 + $0x8] sm:$0xff]
        %v1257 = vld [vmem:[#allocation5 + $0x10] sm:$0xff]
        %v1258 = vld [vmem:[#allocation5 + $0x18] sm:$0xff]
        %v1259 = vld [vmem:[#allocation5 + $0x20] sm:$0xff]
        %v1260 = vld [vmem:[#allocation5 + $0x28] sm:$0xff]
        %v1261 = vld [vmem:[#allocation5 + $0x30] sm:$0xff]
        %v1262 = vld [vmem:[#allocation5 + $0x38] sm:$0xff]
        %v1263 = vld [vmem:[#allocation5 + $0x40] sm:$0xff]
        %v1264 = vld [vmem:[#allocation5 + $0x48] sm:$0xff]
        %v1265 = vld [vmem:[#allocation5 + $0x50] sm:$0xff]
        %v1266 = vld [vmem:[#allocation5 + $0x58] sm:$0xff]
        %v1267 = vld [vmem:[#allocation5 + $0x60] sm:$0xff]
        %v1268 = vld [vmem:[#allocation5 + $0x68] sm:$0xff]
        %v1269 = vld [vmem:[#allocation5 + $0x70] sm:$0xff]
        %v1270 = vld [vmem:[#allocation5 + $0x78] sm:$0xff]
        %v1271 = vld [vmem:[#allocation5 + $0x80] sm:$0xff]
        %v1272 = vld [vmem:[#allocation5 + $0x88] sm:$0xff]
        %v1273 = vld [vmem:[#allocation5 + $0x90] sm:$0xff]
        %v1274 = vld [vmem:[#allocation5 + $0x98] sm:$0xff]
        %v1275 = vld [vmem:[#allocation5 + $0xa0] sm:$0xff]
        %v1276 = vld [vmem:[#allocation5 + $0xa8] sm:$0xff]
        %v1277 = vld [vmem:[#allocation5 + $0xb0] sm:$0xff]
        %v1278 = vld [vmem:[#allocation5 + $0xb8] sm:$0xff]
        %v1279 = vld [vmem:[#allocation5 + $0xc0] sm:$0xff]
        %v1280 = vld [vmem:[#allocation5 + $0xc8] sm:$0xff]
        %v1281 = vld [vmem:[#allocation5 + $0xd0] sm:$0xff]
        %v1282 = vld [vmem:[#allocation5 + $0xd8] sm:$0xff]
        %v1283 = vld [vmem:[#allocation5 + $0xe0] sm:$0xff]
        %v1284 = vld [vmem:[#allocation5 + $0xe8] sm:$0xff]
        %v1285 = vld [vmem:[#allocation5 + $0xf0] sm:$0xff]
        %v1286 = vld [vmem:[#allocation5 + $0xf8] sm:$0xff]
        %v1287 = vld [vmem:[%s4] sm:$0x3]
        %v1289 = vlaneseq
        %v1290 = vshrl.u32 %v1289, 7
        %v1291 = vsub.s32 0, %v1290
        %v1292 = vrot.slane %v1287, %v1291
        %v1293 = vlaneseq
        %v1294 = vshrl.u32 %v1293, 7
        %v1295 = vsub.s32 1, %v1294
        %v1296 = vrot.slane %v1287, %v1295
        %v1331 = vunpack.c.l.b16 %v1255
        %v1332 = vunpack.c.h.b16 %v1255
        %v1333 = vunpack.c.l.b16 %v1256
        %v1334 = vunpack.c.h.b16 %v1256
        %v1335 = vunpack.c.l.b16 %v1257
        %v1336 = vunpack.c.h.b16 %v1257
        %v1337 = vunpack.c.l.b16 %v1258
        %v1338 = vunpack.c.h.b16 %v1258
        %v1339 = vunpack.c.l.b16 %v1259
        %v1340 = vunpack.c.h.b16 %v1259
        %v1341 = vunpack.c.l.b16 %v1260
        %v1342 = vunpack.c.h.b16 %v1260
        %v1343 = vunpack.c.l.b16 %v1261
        %v1344 = vunpack.c.h.b16 %v1261
        %v1345 = vunpack.c.l.b16 %v1262
        %v1346 = vunpack.c.h.b16 %v1262
        %v1347 = vunpack.c.l.b16 %v1263
        %v1348 = vunpack.c.h.b16 %v1263
        %v1349 = vunpack.c.l.b16 %v1264
        %v1350 = vunpack.c.h.b16 %v1264
        %v1351 = vunpack.c.l.b16 %v1265
        %v1352 = vunpack.c.h.b16 %v1265
        %v1353 = vunpack.c.l.b16 %v1266
        %v1354 = vunpack.c.h.b16 %v1266
        %v1355 = vunpack.c.l.b16 %v1267
        %v1356 = vunpack.c.h.b16 %v1267
        %v1357 = vunpack.c.l.b16 %v1268
        %v1358 = vunpack.c.h.b16 %v1268
        %v1359 = vunpack.c.l.b16 %v1269
        %v1360 = vunpack.c.h.b16 %v1269
        %v1361 = vunpack.c.l.b16 %v1270
        %v1362 = vunpack.c.h.b16 %v1270
        %v1363 = vunpack.c.l.b16 %v1271
        %v1364 = vunpack.c.h.b16 %v1271
        %v1365 = vunpack.c.l.b16 %v1272
        %v1366 = vunpack.c.h.b16 %v1272
        %v1367 = vunpack.c.l.b16 %v1273
        %v1368 = vunpack.c.h.b16 %v1273
        %v1369 = vunpack.c.l.b16 %v1274
        %v1370 = vunpack.c.h.b16 %v1274
        %v1371 = vunpack.c.l.b16 %v1275
        %v1372 = vunpack.c.h.b16 %v1275
        %v1373 = vunpack.c.l.b16 %v1276
        %v1374 = vunpack.c.h.b16 %v1276
        %v1375 = vunpack.c.l.b16 %v1277
        %v1376 = vunpack.c.h.b16 %v1277
        %v1377 = vunpack.c.l.b16 %v1278
        %v1378 = vunpack.c.h.b16 %v1278
        %v1379 = vunpack.c.l.b16 %v1279
        %v1380 = vunpack.c.h.b16 %v1279
        %v1381 = vunpack.c.l.b16 %v1280
        %v1382 = vunpack.c.h.b16 %v1280
        %v1383 = vunpack.c.l.b16 %v1281
        %v1384 = vunpack.c.h.b16 %v1281
        %v1385 = vunpack.c.l.b16 %v1282
        %v1386 = vunpack.c.h.b16 %v1282
        %v1387 = vunpack.c.l.b16 %v1283
        %v1388 = vunpack.c.h.b16 %v1283
        %v1389 = vunpack.c.l.b16 %v1284
        %v1390 = vunpack.c.h.b16 %v1284
        %v1391 = vunpack.c.l.b16 %v1285
        %v1392 = vunpack.c.h.b16 %v1285
        %v1393 = vunpack.c.l.b16 %v1286
        %v1394 = vunpack.c.h.b16 %v1286
        %v1395 = vpack.c.b16 %v1333, %v1331
        %v1396 = vpack.c.b16 %v1334, %v1332
        %v1397 = vpack.c.b16 %v1337, %v1335
        %v1398 = vpack.c.b16 %v1338, %v1336
        %v1399 = vpack.c.b16 %v1341, %v1339
        %v1400 = vpack.c.b16 %v1342, %v1340
        %v1401 = vpack.c.b16 %v1345, %v1343
        %v1402 = vpack.c.b16 %v1346, %v1344
        %v1403 = vpack.c.b16 %v1349, %v1347
        %v1404 = vpack.c.b16 %v1350, %v1348
        %v1405 = vpack.c.b16 %v1353, %v1351
        %v1406 = vpack.c.b16 %v1354, %v1352
        %v1407 = vpack.c.b16 %v1357, %v1355
        %v1408 = vpack.c.b16 %v1358, %v1356
        %v1409 = vpack.c.b16 %v1361, %v1359
        %v1410 = vpack.c.b16 %v1362, %v1360
        %v1411 = vpack.c.b16 %v1365, %v1363
        %v1412 = vpack.c.b16 %v1366, %v1364
        %v1413 = vpack.c.b16 %v1369, %v1367
        %v1414 = vpack.c.b16 %v1370, %v1368
        %v1415 = vpack.c.b16 %v1373, %v1371
        %v1416 = vpack.c.b16 %v1374, %v1372
        %v1417 = vpack.c.b16 %v1377, %v1375
        %v1418 = vpack.c.b16 %v1378, %v1376
        %v1419 = vpack.c.b16 %v1381, %v1379
        %v1420 = vpack.c.b16 %v1382, %v1380
        %v1421 = vpack.c.b16 %v1385, %v1383
        %v1422 = vpack.c.b16 %v1386, %v1384
        %v1423 = vpack.c.b16 %v1389, %v1387
        %v1424 = vpack.c.b16 %v1390, %v1388
        %v1425 = vpack.c.b16 %v1393, %v1391
        %v1426 = vpack.c.b16 %v1394, %v1392
        %1459 = vmatprep.subr.bf16.mxu0 %v1396
        %1460 = vmatpush1.bf16.msra.mxu0 %v1395
        %1461 = vmatprep.subr.bf16.mxu0 %v1398
        %1462 = vmatpush1.bf16.msra.mxu0 %v1397
        %1463 = vmatprep.subr.bf16.mxu0 %v1400
        %1464 = vmatpush1.bf16.msra.mxu0 %v1399
        %1465 = vmatprep.subr.bf16.mxu0 %v1402
        %1466 = vmatpush1.bf16.msra.mxu0 %v1401
        %1467 = vmatprep.subr.bf16.mxu0 %v1404
        %1468 = vmatpush1.bf16.msra.mxu0 %v1403
        %1469 = vmatprep.subr.bf16.mxu0 %v1406
        %1470 = vmatpush1.bf16.msra.mxu0 %v1405
        %1471 = vmatprep.subr.bf16.mxu0 %v1408
        %1472 = vmatpush1.bf16.msra.mxu0 %v1407
        %1473 = vmatprep.subr.bf16.mxu0 %v1410
        %1474 = vmatpush1.bf16.msra.mxu0 %v1409
        %1475 = vmatprep.subr.bf16.mxu0 %v1412
        %1476 = vmatpush1.bf16.msra.mxu0 %v1411
        %1477 = vmatprep.subr.bf16.mxu0 %v1414
        %1478 = vmatpush1.bf16.msra.mxu0 %v1413
        %1479 = vmatprep.subr.bf16.mxu0 %v1416
        %1480 = vmatpush1.bf16.msra.mxu0 %v1415
        %1481 = vmatprep.subr.bf16.mxu0 %v1418
        %1482 = vmatpush1.bf16.msra.mxu0 %v1417
        %1483 = vmatprep.subr.bf16.mxu0 %v1420
        %1484 = vmatpush1.bf16.msra.mxu0 %v1419
        %1485 = vmatprep.subr.bf16.mxu0 %v1422
        %1486 = vmatpush1.bf16.msra.mxu0 %v1421
        %1487 = vmatprep.subr.bf16.mxu0 %v1424
        %1488 = vmatpush1.bf16.msra.mxu0 %v1423
        %1489 = vmatprep.subr.bf16.mxu0 %v1426
        %1490 = vmatpush1.bf16.msra.mxu0 %v1425
        %1491 = vmatprep.mubr.bf16.mxu0 %v1224
        %1492 = vmatmul.mubr.bf16.gmra.mrb[0].mxu0 %v1223
        %v1493 = vpop.f32.mrb[0].mxu0
        %v1494 = vadd.f32 %v1292, %v1493
        %v1495 = vpop.f32.mrb[0].mxu0
        %v1496 = vadd.f32 %v1296, %v1495
        %v1497 = vpop.f32.mrb[0].mxu0
        %v1498 = vadd.f32 %v1292, %v1497
        %v1499 = vpop.f32.mrb[0].mxu0
        %v1500 = vadd.f32 %v1296, %v1499
        %1501 = vmatprep.mubr.bf16.mxu0 %v1226
        %1502 = vmatmul.mubr.bf16.gmra.mrb[0].mxu0 %v1225
        %v1503 = vpop.f32.mrb[0].mxu0
        %v1504 = vadd.f32 %v1292, %v1503
        %v1505 = vpop.f32.mrb[0].mxu0
        %v1506 = vadd.f32 %v1296, %v1505
        %v1507 = vpop.f32.mrb[0].mxu0
        %v1508 = vadd.f32 %v1292, %v1507
        %v1509 = vpop.f32.mrb[0].mxu0
        %v1510 = vadd.f32 %v1296, %v1509
        %1511 = vmatprep.mubr.bf16.mxu0 %v1228
        %1512 = vmatmul.mubr.bf16.gmra.mrb[0].mxu0 %v1227
        %v1513 = vpop.f32.mrb[0].mxu0
        %v1514 = vadd.f32 %v1292, %v1513
        %v1515 = vpop.f32.mrb[0].mxu0
        %v1516 = vadd.f32 %v1296, %v1515
        %v1517 = vpop.f32.mrb[0].mxu0
        %v1518 = vadd.f32 %v1292, %v1517
        %v1519 = vpop.f32.mrb[0].mxu0
        %v1520 = vadd.f32 %v1296, %v1519
        %1521 = vmatprep.mubr.bf16.mxu0 %v1230
        %1522 = vmatmul.mubr.bf16.gmra.mrb[0].mxu0 %v1229
        %v1523 = vpop.f32.mrb[0].mxu0
        %v1524 = vadd.f32 %v1292, %v1523
        %v1525 = vpop.f32.mrb[0].mxu0
        %v1526 = vadd.f32 %v1296, %v1525
        %v1527 = vpop.f32.mrb[0].mxu0
        %v1528 = vadd.f32 %v1292, %v1527
        %v1529 = vpop.f32.mrb[0].mxu0
        %v1530 = vadd.f32 %v1296, %v1529
        %1531 = vmatprep.mubr.bf16.mxu0 %v1232
        %1532 = vmatmul.mubr.bf16.gmra.mrb[0].mxu0 %v1231
        %v1533 = vpop.f32.mrb[0].mxu0
        %v1534 = vadd.f32 %v1292, %v1533
        %v1535 = vpop.f32.mrb[0].mxu0
        %v1536 = vadd.f32 %v1296, %v1535
        %v1537 = vpop.f32.mrb[0].mxu0
        %v1538 = vadd.f32 %v1292, %v1537
        %v1539 = vpop.f32.mrb[0].mxu0
        %v1540 = vadd.f32 %v1296, %v1539
        %1541 = vmatprep.mubr.bf16.mxu0 %v1234
        %1542 = vmatmul.mubr.bf16.gmra.mrb[0].mxu0 %v1233
        %v1543 = vpop.f32.mrb[0].mxu0
        %v1544 = vadd.f32 %v1292, %v1543
        %v1545 = vpop.f32.mrb[0].mxu0
        %v1546 = vadd.f32 %v1296, %v1545
        %v1547 = vpop.f32.mrb[0].mxu0
        %v1548 = vadd.f32 %v1292, %v1547
        %v1549 = vpop.f32.mrb[0].mxu0
        %v1550 = vadd.f32 %v1296, %v1549
        %1551 = vmatprep.mubr.bf16.mxu0 %v1236
        %1552 = vmatmul.mubr.bf16.gmra.mrb[0].mxu0 %v1235
        %v1553 = vpop.f32.mrb[0].mxu0
        %v1554 = vadd.f32 %v1292, %v1553
        %v1555 = vpop.f32.mrb[0].mxu0
        %v1556 = vadd.f32 %v1296, %v1555
        %v1557 = vpop.f32.mrb[0].mxu0
        %v1558 = vadd.f32 %v1292, %v1557
        %v1559 = vpop.f32.mrb[0].mxu0
        %v1560 = vadd.f32 %v1296, %v1559
        %1561 = vmatprep.mubr.bf16.mxu0 %v1238
        %1562 = vmatmul.mubr.bf16.gmra.mrb[0].mxu0 %v1237
        %v1563 = vpop.f32.mrb[0].mxu0
        %v1564 = vadd.f32 %v1292, %v1563
        %v1565 = vpop.f32.mrb[0].mxu0
        %v1566 = vadd.f32 %v1296, %v1565
        %v1567 = vpop.f32.mrb[0].mxu0
        %v1568 = vadd.f32 %v1292, %v1567
        %v1569 = vpop.f32.mrb[0].mxu0
        %v1570 = vadd.f32 %v1296, %v1569
        %1571 = vmatprep.mubr.bf16.mxu0 %v1240
        %1572 = vmatmul.mubr.bf16.gmra.mrb[0].mxu0 %v1239
        %v1573 = vpop.f32.mrb[0].mxu0
        %v1574 = vadd.f32 %v1292, %v1573
        %v1575 = vpop.f32.mrb[0].mxu0
        %v1576 = vadd.f32 %v1296, %v1575
        %v1577 = vpop.f32.mrb[0].mxu0
        %v1578 = vadd.f32 %v1292, %v1577
        %v1579 = vpop.f32.mrb[0].mxu0
        %v1580 = vadd.f32 %v1296, %v1579
        %1581 = vmatprep.mubr.bf16.mxu0 %v1242
        %1582 = vmatmul.mubr.bf16.gmra.mrb[0].mxu0 %v1241
        %v1583 = vpop.f32.mrb[0].mxu0
        %v1584 = vadd.f32 %v1292, %v1583
        %v1585 = vpop.f32.mrb[0].mxu0
        %v1586 = vadd.f32 %v1296, %v1585
        %v1587 = vpop.f32.mrb[0].mxu0
        %v1588 = vadd.f32 %v1292, %v1587
        %v1589 = vpop.f32.mrb[0].mxu0
        %v1590 = vadd.f32 %v1296, %v1589
        %1591 = vmatprep.mubr.bf16.mxu0 %v1244
        %1592 = vmatmul.mubr.bf16.gmra.mrb[0].mxu0 %v1243
        %v1593 = vpop.f32.mrb[0].mxu0
        %v1594 = vadd.f32 %v1292, %v1593
        %v1595 = vpop.f32.mrb[0].mxu0
        %v1596 = vadd.f32 %v1296, %v1595
        %v1597 = vpop.f32.mrb[0].mxu0
        %v1598 = vadd.f32 %v1292, %v1597
        %v1599 = vpop.f32.mrb[0].mxu0
        %v1600 = vadd.f32 %v1296, %v1599
        %1601 = vmatprep.mubr.bf16.mxu0 %v1246
        %1602 = vmatmul.mubr.bf16.gmra.mrb[0].mxu0 %v1245
        %v1603 = vpop.f32.mrb[0].mxu0
        %v1604 = vadd.f32 %v1292, %v1603
        %v1605 = vpop.f32.mrb[0].mxu0
        %v1606 = vadd.f32 %v1296, %v1605
        %v1607 = vpop.f32.mrb[0].mxu0
        %v1608 = vadd.f32 %v1292, %v1607
        %v1609 = vpop.f32.mrb[0].mxu0
        %v1610 = vadd.f32 %v1296, %v1609
        %1611 = vmatprep.mubr.bf16.mxu0 %v1248
        %1612 = vmatmul.mubr.bf16.gmra.mrb[0].mxu0 %v1247
        %v1613 = vpop.f32.mrb[0].mxu0
        %v1614 = vadd.f32 %v1292, %v1613
        %v1615 = vpop.f32.mrb[0].mxu0
        %v1616 = vadd.f32 %v1296, %v1615
        %v1617 = vpop.f32.mrb[0].mxu0
        %v1618 = vadd.f32 %v1292, %v1617
        %v1619 = vpop.f32.mrb[0].mxu0
        %v1620 = vadd.f32 %v1296, %v1619
        %1621 = vmatprep.mubr.bf16.mxu0 %v1250
        %1622 = vmatmul.mubr.bf16.gmra.mrb[0].mxu0 %v1249
        %v1623 = vpop.f32.mrb[0].mxu0
        %v1624 = vadd.f32 %v1292, %v1623
        %v1625 = vpop.f32.mrb[0].mxu0
        %v1626 = vadd.f32 %v1296, %v1625
        %v1627 = vpop.f32.mrb[0].mxu0
        %v1628 = vadd.f32 %v1292, %v1627
        %v1629 = vpop.f32.mrb[0].mxu0
        %v1630 = vadd.f32 %v1296, %v1629
        %1631 = vmatprep.mubr.bf16.mxu0 %v1252
        %1632 = vmatmul.mubr.bf16.gmra.mrb[0].mxu0 %v1251
        %v1633 = vpop.f32.mrb[0].mxu0
        %v1634 = vadd.f32 %v1292, %v1633
        %v1635 = vpop.f32.mrb[0].mxu0
        %v1636 = vadd.f32 %v1296, %v1635
        %v1637 = vpop.f32.mrb[0].mxu0
        %v1638 = vadd.f32 %v1292, %v1637
        %v1639 = vpop.f32.mrb[0].mxu0
        %v1640 = vadd.f32 %v1296, %v1639
        %1641 = vmatprep.mubr.bf16.mxu0 %v1254
        %1642 = vmatmul.mubr.bf16.gmra.mrb[0].mxu0 %v1253
        %v1643 = vpop.f32.mrb[0].mxu0
        %v1644 = vadd.f32 %v1292, %v1643
        %v1645 = vpop.f32.mrb[0].mxu0
        %v1646 = vadd.f32 %v1296, %v1645
        %v1647 = vpop.f32.mrb[0].mxu0
        %v1648 = vadd.f32 %v1292, %v1647
        %v1649 = vpop.f32.mrb[0].mxu0
        %v1650 = vadd.f32 %v1296, %v1649
        %1651 = vdwg.mxu0
        %v1652 = vmul.f32 %v1494, 0.088388346
        %v1653 = vmul.f32 %v1496, 0.088388346
        %v1654 = vmul.f32 %v1498, 0.088388346
        %v1655 = vmul.f32 %v1500, 0.088388346
        %v1656 = vmul.f32 %v1504, 0.088388346
        %v1657 = vmul.f32 %v1506, 0.088388346
        %v1658 = vmul.f32 %v1508, 0.088388346
        %v1659 = vmul.f32 %v1510, 0.088388346
        %v1660 = vmul.f32 %v1514, 0.088388346
        %v1661 = vmul.f32 %v1516, 0.088388346
        %v1662 = vmul.f32 %v1518, 0.088388346
        %v1663 = vmul.f32 %v1520, 0.088388346
        %v1664 = vmul.f32 %v1524, 0.088388346
        %v1665 = vmul.f32 %v1526, 0.088388346
        %v1666 = vmul.f32 %v1528, 0.088388346
        %v1667 = vmul.f32 %v1530, 0.088388346
        %v1668 = vmul.f32 %v1534, 0.088388346
        %v1669 = vmul.f32 %v1536, 0.088388346
        %v1670 = vmul.f32 %v1538, 0.088388346
        %v1671 = vmul.f32 %v1540, 0.088388346
        %v1672 = vmul.f32 %v1544, 0.088388346
        %v1673 = vmul.f32 %v1546, 0.088388346
        %v1674 = vmul.f32 %v1548, 0.088388346
        %v1675 = vmul.f32 %v1550, 0.088388346
        %v1676 = vmul.f32 %v1554, 0.088388346
        %v1677 = vmul.f32 %v1556, 0.088388346
        %v1678 = vmul.f32 %v1558, 0.088388346
        %v1679 = vmul.f32 %v1560, 0.088388346
        %v1680 = vmul.f32 %v1564, 0.088388346
        %v1681 = vmul.f32 %v1566, 0.088388346
        %v1682 = vmul.f32 %v1568, 0.088388346
        %v1683 = vmul.f32 %v1570, 0.088388346
        %v1684 = vmul.f32 %v1574, 0.088388346
        %v1685 = vmul.f32 %v1576, 0.088388346
        %v1686 = vmul.f32 %v1578, 0.088388346
        %v1687 = vmul.f32 %v1580, 0.088388346
        %v1688 = vmul.f32 %v1584, 0.088388346
        %v1689 = vmul.f32 %v1586, 0.088388346
        %v1690 = vmul.f32 %v1588, 0.088388346
        %v1691 = vmul.f32 %v1590, 0.088388346
        %v1692 = vmul.f32 %v1594, 0.088388346
        %v1693 = vmul.f32 %v1596, 0.088388346
        %v1694 = vmul.f32 %v1598, 0.088388346
        %v1695 = vmul.f32 %v1600, 0.088388346
        %v1696 = vmul.f32 %v1604, 0.088388346
        %v1697 = vmul.f32 %v1606, 0.088388346
        %v1698 = vmul.f32 %v1608, 0.088388346
        %v1699 = vmul.f32 %v1610, 0.088388346
        %v1700 = vmul.f32 %v1614, 0.088388346
        %v1701 = vmul.f32 %v1616, 0.088388346
        %v1702 = vmul.f32 %v1618, 0.088388346
        %v1703 = vmul.f32 %v1620, 0.088388346
        %v1704 = vmul.f32 %v1624, 0.088388346
        %v1705 = vmul.f32 %v1626, 0.088388346
        %v1706 = vmul.f32 %v1628, 0.088388346
        %v1707 = vmul.f32 %v1630, 0.088388346
        %v1708 = vmul.f32 %v1634, 0.088388346
        %v1709 = vmul.f32 %v1636, 0.088388346
        %v1710 = vmul.f32 %v1638, 0.088388346
        %v1711 = vmul.f32 %v1640, 0.088388346
        %v1712 = vmul.f32 %v1644, 0.088388346
        %v1713 = vmul.f32 %v1646, 0.088388346
        %v1714 = vmul.f32 %v1648, 0.088388346
        %v1715 = vmul.f32 %v1650, 0.088388346
        %v1716 = vld [vmem:[#allocation7] sm:$0xff]
        %v1717 = vld [vmem:[#allocation7 + $0x8] sm:$0xff]
        %v1718 = vld [vmem:[#allocation7 + $0x10] sm:$0xff]
        %v1719 = vld [vmem:[#allocation7 + $0x18] sm:$0xff]
        %v1720 = vld [vmem:[#allocation7 + $0x20] sm:$0xff]
        %v1721 = vld [vmem:[#allocation7 + $0x28] sm:$0xff]
        %v1722 = vld [vmem:[#allocation7 + $0x30] sm:$0xff]
        %v1723 = vld [vmem:[#allocation7 + $0x38] sm:$0xff]
        %v1724 = vld [vmem:[#allocation7 + $0x40] sm:$0xff]
        %v1725 = vld [vmem:[#allocation7 + $0x48] sm:$0xff]
        %v1726 = vld [vmem:[#allocation7 + $0x50] sm:$0xff]
        %v1727 = vld [vmem:[#allocation7 + $0x58] sm:$0xff]
        %v1728 = vld [vmem:[#allocation7 + $0x60] sm:$0xff]
        %v1729 = vld [vmem:[#allocation7 + $0x68] sm:$0xff]
        %v1730 = vld [vmem:[#allocation7 + $0x70] sm:$0xff]
        %v1731 = vld [vmem:[#allocation7 + $0x78] sm:$0xff]
        %v1732 = vld [vmem:[#allocation7 + $0x80] sm:$0xff]
        %v1733 = vld [vmem:[#allocation7 + $0x88] sm:$0xff]
        %v1734 = vld [vmem:[#allocation7 + $0x90] sm:$0xff]
        %v1735 = vld [vmem:[#allocation7 + $0x98] sm:$0xff]
        %v1736 = vld [vmem:[#allocation7 + $0xa0] sm:$0xff]
        %v1737 = vld [vmem:[#allocation7 + $0xa8] sm:$0xff]
        %v1738 = vld [vmem:[#allocation7 + $0xb0] sm:$0xff]
        %v1739 = vld [vmem:[#allocation7 + $0xb8] sm:$0xff]
        %v1740 = vld [vmem:[#allocation7 + $0xc0] sm:$0xff]
        %v1741 = vld [vmem:[#allocation7 + $0xc8] sm:$0xff]
        %v1742 = vld [vmem:[#allocation7 + $0xd0] sm:$0xff]
        %v1743 = vld [vmem:[#allocation7 + $0xd8] sm:$0xff]
        %v1744 = vld [vmem:[#allocation7 + $0xe0] sm:$0xff]
        %v1745 = vld [vmem:[#allocation7 + $0xe8] sm:$0xff]
        %v1746 = vld [vmem:[#allocation7 + $0xf0] sm:$0xff]
        %v1747 = vld [vmem:[#allocation7 + $0xf8] sm:$0xff]
        %v1748 = vld [vmem:[%s6] sm:$0x3]
        %v1750 = vlaneseq
        %v1751 = vshrl.u32 %v1750, 7
        %v1752 = vsub.s32 0, %v1751
        %v1753 = vrot.slane %v1748, %v1752
        %v1754 = vlaneseq
        %v1755 = vshrl.u32 %v1754, 7
        %v1756 = vsub.s32 1, %v1755
        %v1757 = vrot.slane %v1748, %v1756
        %v1792 = vunpack.c.l.b16 %v1716
        %v1793 = vunpack.c.h.b16 %v1716
        %v1794 = vunpack.c.l.b16 %v1717
        %v1795 = vunpack.c.h.b16 %v1717
        %v1796 = vunpack.c.l.b16 %v1718
        %v1797 = vunpack.c.h.b16 %v1718
        %v1798 = vunpack.c.l.b16 %v1719
        %v1799 = vunpack.c.h.b16 %v1719
        %v1800 = vunpack.c.l.b16 %v1720
        %v1801 = vunpack.c.h.b16 %v1720
        %v1802 = vunpack.c.l.b16 %v1721
        %v1803 = vunpack.c.h.b16 %v1721
        %v1804 = vunpack.c.l.b16 %v1722
        %v1805 = vunpack.c.h.b16 %v1722
        %v1806 = vunpack.c.l.b16 %v1723
        %v1807 = vunpack.c.h.b16 %v1723
        %v1808 = vunpack.c.l.b16 %v1724
        %v1809 = vunpack.c.h.b16 %v1724
        %v1810 = vunpack.c.l.b16 %v1725
        %v1811 = vunpack.c.h.b16 %v1725
        %v1812 = vunpack.c.l.b16 %v1726
        %v1813 = vunpack.c.h.b16 %v1726
        %v1814 = vunpack.c.l.b16 %v1727
        %v1815 = vunpack.c.h.b16 %v1727
        %v1816 = vunpack.c.l.b16 %v1728
        %v1817 = vunpack.c.h.b16 %v1728
        %v1818 = vunpack.c.l.b16 %v1729
        %v1819 = vunpack.c.h.b16 %v1729
        %v1820 = vunpack.c.l.b16 %v1730
        %v1821 = vunpack.c.h.b16 %v1730
        %v1822 = vunpack.c.l.b16 %v1731
        %v1823 = vunpack.c.h.b16 %v1731
        %v1824 = vunpack.c.l.b16 %v1732
        %v1825 = vunpack.c.h.b16 %v1732
        %v1826 = vunpack.c.l.b16 %v1733
        %v1827 = vunpack.c.h.b16 %v1733
        %v1828 = vunpack.c.l.b16 %v1734
        %v1829 = vunpack.c.h.b16 %v1734
        %v1830 = vunpack.c.l.b16 %v1735
        %v1831 = vunpack.c.h.b16 %v1735
        %v1832 = vunpack.c.l.b16 %v1736
        %v1833 = vunpack.c.h.b16 %v1736
        %v1834 = vunpack.c.l.b16 %v1737
        %v1835 = vunpack.c.h.b16 %v1737
        %v1836 = vunpack.c.l.b16 %v1738
        %v1837 = vunpack.c.h.b16 %v1738
        %v1838 = vunpack.c.l.b16 %v1739
        %v1839 = vunpack.c.h.b16 %v1739
        %v1840 = vunpack.c.l.b16 %v1740
        %v1841 = vunpack.c.h.b16 %v1740
        %v1842 = vunpack.c.l.b16 %v1741
        %v1843 = vunpack.c.h.b16 %v1741
        %v1844 = vunpack.c.l.b16 %v1742
        %v1845 = vunpack.c.h.b16 %v1742
        %v1846 = vunpack.c.l.b16 %v1743
        %v1847 = vunpack.c.h.b16 %v1743
        %v1848 = vunpack.c.l.b16 %v1744
        %v1849 = vunpack.c.h.b16 %v1744
        %v1850 = vunpack.c.l.b16 %v1745
        %v1851 = vunpack.c.h.b16 %v1745
        %v1852 = vunpack.c.l.b16 %v1746
        %v1853 = vunpack.c.h.b16 %v1746
        %v1854 = vunpack.c.l.b16 %v1747
        %v1855 = vunpack.c.h.b16 %v1747
        %v1856 = vpack.c.b16 %v1794, %v1792
        %v1857 = vpack.c.b16 %v1795, %v1793
        %v1858 = vpack.c.b16 %v1798, %v1796
        %v1859 = vpack.c.b16 %v1799, %v1797
        %v1860 = vpack.c.b16 %v1802, %v1800
        %v1861 = vpack.c.b16 %v1803, %v1801
        %v1862 = vpack.c.b16 %v1806, %v1804
        %v1863 = vpack.c.b16 %v1807, %v1805
        %v1864 = vpack.c.b16 %v1810, %v1808
        %v1865 = vpack.c.b16 %v1811, %v1809
        %v1866 = vpack.c.b16 %v1814, %v1812
        %v1867 = vpack.c.b16 %v1815, %v1813
        %v1868 = vpack.c.b16 %v1818, %v1816
        %v1869 = vpack.c.b16 %v1819, %v1817
        %v1870 = vpack.c.b16 %v1822, %v1820
        %v1871 = vpack.c.b16 %v1823, %v1821
        %v1872 = vpack.c.b16 %v1826, %v1824
        %v1873 = vpack.c.b16 %v1827, %v1825
        %v1874 = vpack.c.b16 %v1830, %v1828
        %v1875 = vpack.c.b16 %v1831, %v1829
        %v1876 = vpack.c.b16 %v1834, %v1832
        %v1877 = vpack.c.b16 %v1835, %v1833
        %v1878 = vpack.c.b16 %v1838, %v1836
        %v1879 = vpack.c.b16 %v1839, %v1837
        %v1880 = vpack.c.b16 %v1842, %v1840
        %v1881 = vpack.c.b16 %v1843, %v1841
        %v1882 = vpack.c.b16 %v1846, %v1844
        %v1883 = vpack.c.b16 %v1847, %v1845
        %v1884 = vpack.c.b16 %v1850, %v1848
        %v1885 = vpack.c.b16 %v1851, %v1849
        %v1886 = vpack.c.b16 %v1854, %v1852
        %v1887 = vpack.c.b16 %v1855, %v1853
        %1920 = vmatprep.subr.bf16.mxu0 %v1857
        %1921 = vmatpush1.bf16.msra.mxu0 %v1856
        %1922 = vmatprep.subr.bf16.mxu0 %v1859
        %1923 = vmatpush1.bf16.msra.mxu0 %v1858
        %1924 = vmatprep.subr.bf16.mxu0 %v1861
        %1925 = vmatpush1.bf16.msra.mxu0 %v1860
        %1926 = vmatprep.subr.bf16.mxu0 %v1863
        %1927 = vmatpush1.bf16.msra.mxu0 %v1862
        %1928 = vmatprep.subr.bf16.mxu0 %v1865
        %1929 = vmatpush1.bf16.msra.mxu0 %v1864
        %1930 = vmatprep.subr.bf16.mxu0 %v1867
        %1931 = vmatpush1.bf16.msra.mxu0 %v1866
        %1932 = vmatprep.subr.bf16.mxu0 %v1869
        %1933 = vmatpush1.bf16.msra.mxu0 %v1868
        %1934 = vmatprep.subr.bf16.mxu0 %v1871
        %1935 = vmatpush1.bf16.msra.mxu0 %v1870
        %1936 = vmatprep.subr.bf16.mxu0 %v1873
        %1937 = vmatpush1.bf16.msra.mxu0 %v1872
        %1938 = vmatprep.subr.bf16.mxu0 %v1875
        %1939 = vmatpush1.bf16.msra.mxu0 %v1874
        %1940 = vmatprep.subr.bf16.mxu0 %v1877
        %1941 = vmatpush1.bf16.msra.mxu0 %v1876
        %1942 = vmatprep.subr.bf16.mxu0 %v1879
        %1943 = vmatpush1.bf16.msra.mxu0 %v1878
        %1944 = vmatprep.subr.bf16.mxu0 %v1881
        %1945 = vmatpush1.bf16.msra.mxu0 %v1880
        %1946 = vmatprep.subr.bf16.mxu0 %v1883
        %1947 = vmatpush1.bf16.msra.mxu0 %v1882
        %1948 = vmatprep.subr.bf16.mxu0 %v1885
        %1949 = vmatpush1.bf16.msra.mxu0 %v1884
        %1950 = vmatprep.subr.bf16.mxu0 %v1887
        %1951 = vmatpush1.bf16.msra.mxu0 %v1886
        %1952 = vmatprep.mubr.bf16.mxu0 %v1224
        %1953 = vmatmul.mubr.bf16.gmra.mrb[0].mxu0 %v1223
        %v1954 = vpop.f32.mrb[0].mxu0
        %v1955 = vadd.f32 %v1753, %v1954
        %v1956 = vpop.f32.mrb[0].mxu0
        %v1957 = vadd.f32 %v1757, %v1956
        %v1958 = vpop.f32.mrb[0].mxu0
        %v1959 = vadd.f32 %v1753, %v1958
        %v1960 = vpop.f32.mrb[0].mxu0
        %v1961 = vadd.f32 %v1757, %v1960
        %1962 = vmatprep.mubr.bf16.mxu0 %v1226
        %1963 = vmatmul.mubr.bf16.gmra.mrb[0].mxu0 %v1225
        %v1964 = vpop.f32.mrb[0].mxu0
        %v1965 = vadd.f32 %v1753, %v1964
        %v1966 = vpop.f32.mrb[0].mxu0
        %v1967 = vadd.f32 %v1757, %v1966
        %v1968 = vpop.f32.mrb[0].mxu0
        %v1969 = vadd.f32 %v1753, %v1968
        %v1970 = vpop.f32.mrb[0].mxu0
        %v1971 = vadd.f32 %v1757, %v1970
        %1972 = vmatprep.mubr.bf16.mxu0 %v1228
        %1973 = vmatmul.mubr.bf16.gmra.mrb[0].mxu0 %v1227
        %v1974 = vpop.f32.mrb[0].mxu0
        %v1975 = vadd.f32 %v1753, %v1974
        %v1976 = vpop.f32.mrb[0].mxu0
        %v1977 = vadd.f32 %v1757, %v1976
        %v1978 = vpop.f32.mrb[0].mxu0
        %v1979 = vadd.f32 %v1753, %v1978
        %v1980 = vpop.f32.mrb[0].mxu0
        %v1981 = vadd.f32 %v1757, %v1980
        %1982 = vmatprep.mubr.bf16.mxu0 %v1230
        %1983 = vmatmul.mubr.bf16.gmra.mrb[0].mxu0 %v1229
        %v1984 = vpop.f32.mrb[0].mxu0
        %v1985 = vadd.f32 %v1753, %v1984
        %v1986 = vpop.f32.mrb[0].mxu0
        %v1987 = vadd.f32 %v1757, %v1986
        %v1988 = vpop.f32.mrb[0].mxu0
        %v1989 = vadd.f32 %v1753, %v1988
        %v1990 = vpop.f32.mrb[0].mxu0
        %v1991 = vadd.f32 %v1757, %v1990
        %1992 = vmatprep.mubr.bf16.mxu0 %v1232
        %1993 = vmatmul.mubr.bf16.gmra.mrb[0].mxu0 %v1231
        %v1994 = vpop.f32.mrb[0].mxu0
        %v1995 = vadd.f32 %v1753, %v1994
        %v1996 = vpop.f32.mrb[0].mxu0
        %v1997 = vadd.f32 %v1757, %v1996
        %v1998 = vpop.f32.mrb[0].mxu0
        %v1999 = vadd.f32 %v1753, %v1998
        %v2000 = vpop.f32.mrb[0].mxu0
        %v2001 = vadd.f32 %v1757, %v2000
        %2002 = vmatprep.mubr.bf16.mxu0 %v1234
        %2003 = vmatmul.mubr.bf16.gmra.mrb[0].mxu0 %v1233
        %v2004 = vpop.f32.mrb[0].mxu0
        %v2005 = vadd.f32 %v1753, %v2004
        %v2006 = vpop.f32.mrb[0].mxu0
        %v2007 = vadd.f32 %v1757, %v2006
        %v2008 = vpop.f32.mrb[0].mxu0
        %v2009 = vadd.f32 %v1753, %v2008
        %v2010 = vpop.f32.mrb[0].mxu0
        %v2011 = vadd.f32 %v1757, %v2010
        %2012 = vmatprep.mubr.bf16.mxu0 %v1236
        %2013 = vmatmul.mubr.bf16.gmra.mrb[0].mxu0 %v1235
        %v2014 = vpop.f32.mrb[0].mxu0
        %v2015 = vadd.f32 %v1753, %v2014
        %v2016 = vpop.f32.mrb[0].mxu0
        %v2017 = vadd.f32 %v1757, %v2016
        %v2018 = vpop.f32.mrb[0].mxu0
        %v2019 = vadd.f32 %v1753, %v2018
        %v2020 = vpop.f32.mrb[0].mxu0
        %v2021 = vadd.f32 %v1757, %v2020
        %2022 = vmatprep.mubr.bf16.mxu0 %v1238
        %2023 = vmatmul.mubr.bf16.gmra.mrb[0].mxu0 %v1237
        %v2024 = vpop.f32.mrb[0].mxu0
        %v2025 = vadd.f32 %v1753, %v2024
        %v2026 = vpop.f32.mrb[0].mxu0
        %v2027 = vadd.f32 %v1757, %v2026
        %v2028 = vpop.f32.mrb[0].mxu0
        %v2029 = vadd.f32 %v1753, %v2028
        %v2030 = vpop.f32.mrb[0].mxu0
        %v2031 = vadd.f32 %v1757, %v2030
        %2032 = vmatprep.mubr.bf16.mxu0 %v1240
        %2033 = vmatmul.mubr.bf16.gmra.mrb[0].mxu0 %v1239
        %v2034 = vpop.f32.mrb[0].mxu0
        %v2035 = vadd.f32 %v1753, %v2034
        %v2036 = vpop.f32.mrb[0].mxu0
        %v2037 = vadd.f32 %v1757, %v2036
        %v2038 = vpop.f32.mrb[0].mxu0
        %v2039 = vadd.f32 %v1753, %v2038
        %v2040 = vpop.f32.mrb[0].mxu0
        %v2041 = vadd.f32 %v1757, %v2040
        %2042 = vmatprep.mubr.bf16.mxu0 %v1242
        %2043 = vmatmul.mubr.bf16.gmra.mrb[0].mxu0 %v1241
        %v2044 = vpop.f32.mrb[0].mxu0
        %v2045 = vadd.f32 %v1753, %v2044
        %v2046 = vpop.f32.mrb[0].mxu0
        %v2047 = vadd.f32 %v1757, %v2046
        %v2048 = vpop.f32.mrb[0].mxu0
        %v2049 = vadd.f32 %v1753, %v2048
        %v2050 = vpop.f32.mrb[0].mxu0
        %v2051 = vadd.f32 %v1757, %v2050
        %2052 = vmatprep.mubr.bf16.mxu0 %v1244
        %2053 = vmatmul.mubr.bf16.gmra.mrb[0].mxu0 %v1243
        %v2054 = vpop.f32.mrb[0].mxu0
        %v2055 = vadd.f32 %v1753, %v2054
        %v2056 = vpop.f32.mrb[0].mxu0
        %v2057 = vadd.f32 %v1757, %v2056
        %v2058 = vpop.f32.mrb[0].mxu0
        %v2059 = vadd.f32 %v1753, %v2058
        %v2060 = vpop.f32.mrb[0].mxu0
        %v2061 = vadd.f32 %v1757, %v2060
        %2062 = vmatprep.mubr.bf16.mxu0 %v1246
        %2063 = vmatmul.mubr.bf16.gmra.mrb[0].mxu0 %v1245
        %v2064 = vpop.f32.mrb[0].mxu0
        %v2065 = vadd.f32 %v1753, %v2064
        %v2066 = vpop.f32.mrb[0].mxu0
        %v2067 = vadd.f32 %v1757, %v2066
        %v2068 = vpop.f32.mrb[0].mxu0
        %v2069 = vadd.f32 %v1753, %v2068
        %v2070 = vpop.f32.mrb[0].mxu0
        %v2071 = vadd.f32 %v1757, %v2070
        %2072 = vmatprep.mubr.bf16.mxu0 %v1248
        %2073 = vmatmul.mubr.bf16.gmra.mrb[0].mxu0 %v1247
        %v2074 = vpop.f32.mrb[0].mxu0
        %v2075 = vadd.f32 %v1753, %v2074
        %v2076 = vpop.f32.mrb[0].mxu0
        %v2077 = vadd.f32 %v1757, %v2076
        %v2078 = vpop.f32.mrb[0].mxu0
        %v2079 = vadd.f32 %v1753, %v2078
        %v2080 = vpop.f32.mrb[0].mxu0
        %v2081 = vadd.f32 %v1757, %v2080
        %2082 = vmatprep.mubr.bf16.mxu0 %v1250
        %2083 = vmatmul.mubr.bf16.gmra.mrb[0].mxu0 %v1249
        %v2084 = vpop.f32.mrb[0].mxu0
        %v2085 = vadd.f32 %v1753, %v2084
        %v2086 = vpop.f32.mrb[0].mxu0
        %v2087 = vadd.f32 %v1757, %v2086
        %v2088 = vpop.f32.mrb[0].mxu0
        %v2089 = vadd.f32 %v1753, %v2088
        %v2090 = vpop.f32.mrb[0].mxu0
        %v2091 = vadd.f32 %v1757, %v2090
        %2092 = vmatprep.mubr.bf16.mxu0 %v1252
        %2093 = vmatmul.mubr.bf16.gmra.mrb[0].mxu0 %v1251
        %v2094 = vpop.f32.mrb[0].mxu0
        %v2095 = vadd.f32 %v1753, %v2094
        %v2096 = vpop.f32.mrb[0].mxu0
        %v2097 = vadd.f32 %v1757, %v2096
        %v2098 = vpop.f32.mrb[0].mxu0
        %v2099 = vadd.f32 %v1753, %v2098
        %v2100 = vpop.f32.mrb[0].mxu0
        %v2101 = vadd.f32 %v1757, %v2100
        %2102 = vmatprep.mubr.bf16.mxu0 %v1254
        %2103 = vmatmul.mubr.bf16.gmra.mrb[0].mxu0 %v1253
        %v2104 = vpop.f32.mrb[0].mxu0
        %v2105 = vadd.f32 %v1753, %v2104
        %v2106 = vpop.f32.mrb[0].mxu0
        %v2107 = vadd.f32 %v1757, %v2106
        %v2108 = vpop.f32.mrb[0].mxu0
        %v2109 = vadd.f32 %v1753, %v2108
        %v2110 = vpop.f32.mrb[0].mxu0
        %v2111 = vadd.f32 %v1757, %v2110
        %2112 = vdwg.mxu0
        %v2113 = vld [vmem:[#allocation8] sm:$0xff]
        %v2114 = vld [vmem:[#allocation8 + $0x8] sm:$0xff]
        %v2115 = vld [vmem:[#allocation8 + $0x10] sm:$0xff]
        %v2116 = vld [vmem:[#allocation8 + $0x18] sm:$0xff]
        %v2117 = vld [vmem:[#allocation8 + $0x20] sm:$0xff]
        %v2118 = vld [vmem:[#allocation8 + $0x28] sm:$0xff]
        %v2119 = vld [vmem:[#allocation8 + $0x30] sm:$0xff]
        %v2120 = vld [vmem:[#allocation8 + $0x38] sm:$0xff]
        %v2121 = vld [vmem:[#allocation8 + $0x40] sm:$0xff]
        %v2122 = vld [vmem:[#allocation8 + $0x48] sm:$0xff]
        %v2123 = vld [vmem:[#allocation8 + $0x50] sm:$0xff]
        %v2124 = vld [vmem:[#allocation8 + $0x58] sm:$0xff]
        %v2125 = vld [vmem:[#allocation8 + $0x60] sm:$0xff]
        %v2126 = vld [vmem:[#allocation8 + $0x68] sm:$0xff]
        %v2127 = vld [vmem:[#allocation8 + $0x70] sm:$0xff]
        %v2128 = vld [vmem:[#allocation8 + $0x78] sm:$0xff]
        %v2129 = vld [vmem:[#allocation8 + $0x80] sm:$0xff]
        %v2130 = vld [vmem:[#allocation8 + $0x88] sm:$0xff]
        %v2131 = vld [vmem:[#allocation8 + $0x90] sm:$0xff]
        %v2132 = vld [vmem:[#allocation8 + $0x98] sm:$0xff]
        %v2133 = vld [vmem:[#allocation8 + $0xa0] sm:$0xff]
        %v2134 = vld [vmem:[#allocation8 + $0xa8] sm:$0xff]
        %v2135 = vld [vmem:[#allocation8 + $0xb0] sm:$0xff]
        %v2136 = vld [vmem:[#allocation8 + $0xb8] sm:$0xff]
        %v2137 = vld [vmem:[#allocation8 + $0xc0] sm:$0xff]
        %v2138 = vld [vmem:[#allocation8 + $0xc8] sm:$0xff]
        %v2139 = vld [vmem:[#allocation8 + $0xd0] sm:$0xff]
        %v2140 = vld [vmem:[#allocation8 + $0xd8] sm:$0xff]
        %v2141 = vld [vmem:[#allocation8 + $0xe0] sm:$0xff]
        %v2142 = vld [vmem:[#allocation8 + $0xe8] sm:$0xff]
        %v2143 = vld [vmem:[#allocation8 + $0xf0] sm:$0xff]
        %v2144 = vld [vmem:[#allocation8 + $0xf8] sm:$0xff]
        %v2145 = vld [vmem:[%s8] sm:$0x3]
        %v2147 = vlaneseq
        %v2148 = vshrl.u32 %v2147, 7
        %v2149 = vsub.s32 0, %v2148
        %v2150 = vrot.slane %v2145, %v2149
        %v2151 = vlaneseq
        %v2152 = vshrl.u32 %v2151, 7
        %v2153 = vsub.s32 1, %v2152
        %v2154 = vrot.slane %v2145, %v2153
        %v2189 = vunpack.c.l.b16 %v2113
        %v2190 = vunpack.c.h.b16 %v2113
        %v2191 = vunpack.c.l.b16 %v2114
        %v2192 = vunpack.c.h.b16 %v2114
        %v2193 = vunpack.c.l.b16 %v2115
        %v2194 = vunpack.c.h.b16 %v2115
        %v2195 = vunpack.c.l.b16 %v2116
        %v2196 = vunpack.c.h.b16 %v2116
        %v2197 = vunpack.c.l.b16 %v2117
        %v2198 = vunpack.c.h.b16 %v2117
        %v2199 = vunpack.c.l.b16 %v2118
        %v2200 = vunpack.c.h.b16 %v2118
        %v2201 = vunpack.c.l.b16 %v2119
        %v2202 = vunpack.c.h.b16 %v2119
        %v2203 = vunpack.c.l.b16 %v2120
        %v2204 = vunpack.c.h.b16 %v2120
        %v2205 = vunpack.c.l.b16 %v2121
        %v2206 = vunpack.c.h.b16 %v2121
        %v2207 = vunpack.c.l.b16 %v2122
        %v2208 = vunpack.c.h.b16 %v2122
        %v2209 = vunpack.c.l.b16 %v2123
        %v2210 = vunpack.c.h.b16 %v2123
        %v2211 = vunpack.c.l.b16 %v2124
        %v2212 = vunpack.c.h.b16 %v2124
        %v2213 = vunpack.c.l.b16 %v2125
        %v2214 = vunpack.c.h.b16 %v2125
        %v2215 = vunpack.c.l.b16 %v2126
        %v2216 = vunpack.c.h.b16 %v2126
        %v2217 = vunpack.c.l.b16 %v2127
        %v2218 = vunpack.c.h.b16 %v2127
        %v2219 = vunpack.c.l.b16 %v2128
        %v2220 = vunpack.c.h.b16 %v2128
        %v2221 = vunpack.c.l.b16 %v2129
        %v2222 = vunpack.c.h.b16 %v2129
        %v2223 = vunpack.c.l.b16 %v2130
        %v2224 = vunpack.c.h.b16 %v2130
        %v2225 = vunpack.c.l.b16 %v2131
        %v2226 = vunpack.c.h.b16 %v2131
        %v2227 = vunpack.c.l.b16 %v2132
        %v2228 = vunpack.c.h.b16 %v2132
        %v2229 = vunpack.c.l.b16 %v2133
        %v2230 = vunpack.c.h.b16 %v2133
        %v2231 = vunpack.c.l.b16 %v2134
        %v2232 = vunpack.c.h.b16 %v2134
        %v2233 = vunpack.c.l.b16 %v2135
        %v2234 = vunpack.c.h.b16 %v2135
        %v2235 = vunpack.c.l.b16 %v2136
        %v2236 = vunpack.c.h.b16 %v2136
        %v2237 = vunpack.c.l.b16 %v2137
        %v2238 = vunpack.c.h.b16 %v2137
        %v2239 = vunpack.c.l.b16 %v2138
        %v2240 = vunpack.c.h.b16 %v2138
        %v2241 = vunpack.c.l.b16 %v2139
        %v2242 = vunpack.c.h.b16 %v2139
        %v2243 = vunpack.c.l.b16 %v2140
        %v2244 = vunpack.c.h.b16 %v2140
        %v2245 = vunpack.c.l.b16 %v2141
        %v2246 = vunpack.c.h.b16 %v2141
        %v2247 = vunpack.c.l.b16 %v2142
        %v2248 = vunpack.c.h.b16 %v2142
        %v2249 = vunpack.c.l.b16 %v2143
        %v2250 = vunpack.c.h.b16 %v2143
        %v2251 = vunpack.c.l.b16 %v2144
        %v2252 = vunpack.c.h.b16 %v2144
        %v2253 = vpack.c.b16 %v2191, %v2189
        %v2254 = vpack.c.b16 %v2192, %v2190
        %v2255 = vpack.c.b16 %v2195, %v2193
        %v2256 = vpack.c.b16 %v2196, %v2194
        %v2257 = vpack.c.b16 %v2199, %v2197
        %v2258 = vpack.c.b16 %v2200, %v2198
        %v2259 = vpack.c.b16 %v2203, %v2201
        %v2260 = vpack.c.b16 %v2204, %v2202
        %v2261 = vpack.c.b16 %v2207, %v2205
        %v2262 = vpack.c.b16 %v2208, %v2206
        %v2263 = vpack.c.b16 %v2211, %v2209
        %v2264 = vpack.c.b16 %v2212, %v2210
        %v2265 = vpack.c.b16 %v2215, %v2213
        %v2266 = vpack.c.b16 %v2216, %v2214
        %v2267 = vpack.c.b16 %v2219, %v2217
        %v2268 = vpack.c.b16 %v2220, %v2218
        %v2269 = vpack.c.b16 %v2223, %v2221
        %v2270 = vpack.c.b16 %v2224, %v2222
        %v2271 = vpack.c.b16 %v2227, %v2225
        %v2272 = vpack.c.b16 %v2228, %v2226
        %v2273 = vpack.c.b16 %v2231, %v2229
        %v2274 = vpack.c.b16 %v2232, %v2230
        %v2275 = vpack.c.b16 %v2235, %v2233
        %v2276 = vpack.c.b16 %v2236, %v2234
        %v2277 = vpack.c.b16 %v2239, %v2237
        %v2278 = vpack.c.b16 %v2240, %v2238
        %v2279 = vpack.c.b16 %v2243, %v2241
        %v2280 = vpack.c.b16 %v2244, %v2242
        %v2281 = vpack.c.b16 %v2247, %v2245
        %v2282 = vpack.c.b16 %v2248, %v2246
        %v2283 = vpack.c.b16 %v2251, %v2249
        %v2284 = vpack.c.b16 %v2252, %v2250
        %2317 = vmatprep.subr.bf16.mxu0 %v2254
        %2318 = vmatpush1.bf16.msra.mxu0 %v2253
        %2319 = vmatprep.subr.bf16.mxu0 %v2256
        %2320 = vmatpush1.bf16.msra.mxu0 %v2255
        %2321 = vmatprep.subr.bf16.mxu0 %v2258
        %2322 = vmatpush1.bf16.msra.mxu0 %v2257
        %2323 = vmatprep.subr.bf16.mxu0 %v2260
        %2324 = vmatpush1.bf16.msra.mxu0 %v2259
        %2325 = vmatprep.subr.bf16.mxu0 %v2262
        %2326 = vmatpush1.bf16.msra.mxu0 %v2261
        %2327 = vmatprep.subr.bf16.mxu0 %v2264
        %2328 = vmatpush1.bf16.msra.mxu0 %v2263
        %2329 = vmatprep.subr.bf16.mxu0 %v2266
        %2330 = vmatpush1.bf16.msra.mxu0 %v2265
        %2331 = vmatprep.subr.bf16.mxu0 %v2268
        %2332 = vmatpush1.bf16.msra.mxu0 %v2267
        %2333 = vmatprep.subr.bf16.mxu0 %v2270
        %2334 = vmatpush1.bf16.msra.mxu0 %v2269
        %2335 = vmatprep.subr.bf16.mxu0 %v2272
        %2336 = vmatpush1.bf16.msra.mxu0 %v2271
        %2337 = vmatprep.subr.bf16.mxu0 %v2274
        %2338 = vmatpush1.bf16.msra.mxu0 %v2273
        %2339 = vmatprep.subr.bf16.mxu0 %v2276
        %2340 = vmatpush1.bf16.msra.mxu0 %v2275
        %2341 = vmatprep.subr.bf16.mxu0 %v2278
        %2342 = vmatpush1.bf16.msra.mxu0 %v2277
        %2343 = vmatprep.subr.bf16.mxu0 %v2280
        %2344 = vmatpush1.bf16.msra.mxu0 %v2279
        %2345 = vmatprep.subr.bf16.mxu0 %v2282
        %2346 = vmatpush1.bf16.msra.mxu0 %v2281
        %2347 = vmatprep.subr.bf16.mxu0 %v2284
        %2348 = vmatpush1.bf16.msra.mxu0 %v2283
        %2349 = vmatprep.mubr.bf16.mxu0 %v1224
        %2350 = vmatmul.mubr.bf16.gmra.mrb[0].mxu0 %v1223
        %v2351 = vpop.f32.mrb[0].mxu0
        %v2352 = vadd.f32 %v2150, %v2351
        %v2353 = vpop.f32.mrb[0].mxu0
        %v2354 = vadd.f32 %v2154, %v2353
        %v2355 = vpop.f32.mrb[0].mxu0
        %v2356 = vadd.f32 %v2150, %v2355
        %v2357 = vpop.f32.mrb[0].mxu0
        %v2358 = vadd.f32 %v2154, %v2357
        %2359 = vmatprep.mubr.bf16.mxu0 %v1226
        %2360 = vmatmul.mubr.bf16.gmra.mrb[0].mxu0 %v1225
        %v2361 = vpop.f32.mrb[0].mxu0
        %v2362 = vadd.f32 %v2150, %v2361
        %v2363 = vpop.f32.mrb[0].mxu0
        %v2364 = vadd.f32 %v2154, %v2363
        %v2365 = vpop.f32.mrb[0].mxu0
        %v2366 = vadd.f32 %v2150, %v2365
        %v2367 = vpop.f32.mrb[0].mxu0
        %v2368 = vadd.f32 %v2154, %v2367
        %2369 = vmatprep.mubr.bf16.mxu0 %v1228
        %2370 = vmatmul.mubr.bf16.gmra.mrb[0].mxu0 %v1227
        %v2371 = vpop.f32.mrb[0].mxu0
        %v2372 = vadd.f32 %v2150, %v2371
        %v2373 = vpop.f32.mrb[0].mxu0
        %v2374 = vadd.f32 %v2154, %v2373
        %v2375 = vpop.f32.mrb[0].mxu0
        %v2376 = vadd.f32 %v2150, %v2375
        %v2377 = vpop.f32.mrb[0].mxu0
        %v2378 = vadd.f32 %v2154, %v2377
        %2379 = vmatprep.mubr.bf16.mxu0 %v1230
        %2380 = vmatmul.mubr.bf16.gmra.mrb[0].mxu0 %v1229
        %v2381 = vpop.f32.mrb[0].mxu0
        %v2382 = vadd.f32 %v2150, %v2381
        %v2383 = vpop.f32.mrb[0].mxu0
        %v2384 = vadd.f32 %v2154, %v2383
        %v2385 = vpop.f32.mrb[0].mxu0
        %v2386 = vadd.f32 %v2150, %v2385
        %v2387 = vpop.f32.mrb[0].mxu0
        %v2388 = vadd.f32 %v2154, %v2387
        %2389 = vmatprep.mubr.bf16.mxu0 %v1232
        %2390 = vmatmul.mubr.bf16.gmra.mrb[0].mxu0 %v1231
        %v2391 = vpop.f32.mrb[0].mxu0
        %v2392 = vadd.f32 %v2150, %v2391
        %v2393 = vpop.f32.mrb[0].mxu0
        %v2394 = vadd.f32 %v2154, %v2393
        %v2395 = vpop.f32.mrb[0].mxu0
        %v2396 = vadd.f32 %v2150, %v2395
        %v2397 = vpop.f32.mrb[0].mxu0
        %v2398 = vadd.f32 %v2154, %v2397
        %2399 = vmatprep.mubr.bf16.mxu0 %v1234
        %2400 = vmatmul.mubr.bf16.gmra.mrb[0].mxu0 %v1233
        %v2401 = vpop.f32.mrb[0].mxu0
        %v2402 = vadd.f32 %v2150, %v2401
        %v2403 = vpop.f32.mrb[0].mxu0
        %v2404 = vadd.f32 %v2154, %v2403
        %v2405 = vpop.f32.mrb[0].mxu0
        %v2406 = vadd.f32 %v2150, %v2405
        %v2407 = vpop.f32.mrb[0].mxu0
        %v2408 = vadd.f32 %v2154, %v2407
        %2409 = vmatprep.mubr.bf16.mxu0 %v1236
        %2410 = vmatmul.mubr.bf16.gmra.mrb[0].mxu0 %v1235
        %v2411 = vpop.f32.mrb[0].mxu0
        %v2412 = vadd.f32 %v2150, %v2411
        %v2413 = vpop.f32.mrb[0].mxu0
        %v2414 = vadd.f32 %v2154, %v2413
        %v2415 = vpop.f32.mrb[0].mxu0
        %v2416 = vadd.f32 %v2150, %v2415
        %v2417 = vpop.f32.mrb[0].mxu0
        %v2418 = vadd.f32 %v2154, %v2417
        %2419 = vmatprep.mubr.bf16.mxu0 %v1238
        %2420 = vmatmul.mubr.bf16.gmra.mrb[0].mxu0 %v1237
        %v2421 = vpop.f32.mrb[0].mxu0
        %v2422 = vadd.f32 %v2150, %v2421
        %v2423 = vpop.f32.mrb[0].mxu0
        %v2424 = vadd.f32 %v2154, %v2423
        %v2425 = vpop.f32.mrb[0].mxu0
        %v2426 = vadd.f32 %v2150, %v2425
        %v2427 = vpop.f32.mrb[0].mxu0
        %v2428 = vadd.f32 %v2154, %v2427
        %2429 = vmatprep.mubr.bf16.mxu0 %v1240
        %2430 = vmatmul.mubr.bf16.gmra.mrb[0].mxu0 %v1239
        %v2431 = vpop.f32.mrb[0].mxu0
        %v2432 = vadd.f32 %v2150, %v2431
        %v2433 = vpop.f32.mrb[0].mxu0
        %v2434 = vadd.f32 %v2154, %v2433
        %v2435 = vpop.f32.mrb[0].mxu0
        %v2436 = vadd.f32 %v2150, %v2435
        %v2437 = vpop.f32.mrb[0].mxu0
        %v2438 = vadd.f32 %v2154, %v2437
        %2439 = vmatprep.mubr.bf16.mxu0 %v1242
        %2440 = vmatmul.mubr.bf16.gmra.mrb[0].mxu0 %v1241
        %v2441 = vpop.f32.mrb[0].mxu0
        %v2442 = vadd.f32 %v2150, %v2441
        %v2443 = vpop.f32.mrb[0].mxu0
        %v2444 = vadd.f32 %v2154, %v2443
        %v2445 = vpop.f32.mrb[0].mxu0
        %v2446 = vadd.f32 %v2150, %v2445
        %v2447 = vpop.f32.mrb[0].mxu0
        %v2448 = vadd.f32 %v2154, %v2447
        %2449 = vmatprep.mubr.bf16.mxu0 %v1244
        %2450 = vmatmul.mubr.bf16.gmra.mrb[0].mxu0 %v1243
        %v2451 = vpop.f32.mrb[0].mxu0
        %v2452 = vadd.f32 %v2150, %v2451
        %v2453 = vpop.f32.mrb[0].mxu0
        %v2454 = vadd.f32 %v2154, %v2453
        %v2455 = vpop.f32.mrb[0].mxu0
        %v2456 = vadd.f32 %v2150, %v2455
        %v2457 = vpop.f32.mrb[0].mxu0
        %v2458 = vadd.f32 %v2154, %v2457
        %2459 = vmatprep.mubr.bf16.mxu0 %v1246
        %2460 = vmatmul.mubr.bf16.gmra.mrb[0].mxu0 %v1245
        %v2461 = vpop.f32.mrb[0].mxu0
        %v2462 = vadd.f32 %v2150, %v2461
        %v2463 = vpop.f32.mrb[0].mxu0
        %v2464 = vadd.f32 %v2154, %v2463
        %v2465 = vpop.f32.mrb[0].mxu0
        %v2466 = vadd.f32 %v2150, %v2465
        %v2467 = vpop.f32.mrb[0].mxu0
        %v2468 = vadd.f32 %v2154, %v2467
        %2469 = vmatprep.mubr.bf16.mxu0 %v1248
        %2470 = vmatmul.mubr.bf16.gmra.mrb[0].mxu0 %v1247
        %v2471 = vpop.f32.mrb[0].mxu0
        %v2472 = vadd.f32 %v2150, %v2471
        %v2473 = vpop.f32.mrb[0].mxu0
        %v2474 = vadd.f32 %v2154, %v2473
        %v2475 = vpop.f32.mrb[0].mxu0
        %v2476 = vadd.f32 %v2150, %v2475
        %v2477 = vpop.f32.mrb[0].mxu0
        %v2478 = vadd.f32 %v2154, %v2477
        %2479 = vmatprep.mubr.bf16.mxu0 %v1250
        %2480 = vmatmul.mubr.bf16.gmra.mrb[0].mxu0 %v1249
        %v2481 = vpop.f32.mrb[0].mxu0
        %v2482 = vadd.f32 %v2150, %v2481
        %v2483 = vpop.f32.mrb[0].mxu0
        %v2484 = vadd.f32 %v2154, %v2483
        %v2485 = vpop.f32.mrb[0].mxu0
        %v2486 = vadd.f32 %v2150, %v2485
        %v2487 = vpop.f32.mrb[0].mxu0
        %v2488 = vadd.f32 %v2154, %v2487
        %2489 = vmatprep.mubr.bf16.mxu0 %v1252
        %2490 = vmatmul.mubr.bf16.gmra.mrb[0].mxu0 %v1251
        %v2491 = vpop.f32.mrb[0].mxu0
        %v2492 = vadd.f32 %v2150, %v2491
        %v2493 = vpop.f32.mrb[0].mxu0
        %v2494 = vadd.f32 %v2154, %v2493
        %v2495 = vpop.f32.mrb[0].mxu0
        %v2496 = vadd.f32 %v2150, %v2495
        %v2497 = vpop.f32.mrb[0].mxu0
        %v2498 = vadd.f32 %v2154, %v2497
        %2499 = vmatprep.mubr.bf16.mxu0 %v1254
        %2500 = vmatmul.mubr.bf16.gmra.mrb[0].mxu0 %v1253
        %v2501 = vpop.f32.mrb[0].mxu0
        %v2502 = vadd.f32 %v2150, %v2501
        %v2503 = vpop.f32.mrb[0].mxu0
        %v2504 = vadd.f32 %v2154, %v2503
        %v2505 = vpop.f32.mrb[0].mxu0
        %v2506 = vadd.f32 %v2150, %v2505
        %v2507 = vpop.f32.mrb[0].mxu0
        %v2508 = vadd.f32 %v2154, %v2507
        %2509 = vdwg.mxu0
        %v2510 = vpack.c.bf16 %v1654, %v1652
        %v2511 = vpack.c.bf16 %v1658, %v1656
        %v2512 = vpack.c.bf16 %v1662, %v1660
        %v2513 = vpack.c.bf16 %v1666, %v1664
        %v2514 = vpack.c.bf16 %v1670, %v1668
        %v2515 = vpack.c.bf16 %v1674, %v1672
        %v2516 = vpack.c.bf16 %v1678, %v1676
        %v2517 = vpack.c.bf16 %v1682, %v1680
        %v2518 = vpack.c.bf16 %v1686, %v1684
        %v2519 = vpack.c.bf16 %v1690, %v1688
        %v2520 = vpack.c.bf16 %v1694, %v1692
        %v2521 = vpack.c.bf16 %v1698, %v1696
        %v2522 = vpack.c.bf16 %v1702, %v1700
        %v2523 = vpack.c.bf16 %v1706, %v1704
        %v2524 = vpack.c.bf16 %v1710, %v1708
        %v2525 = vpack.c.bf16 %v1714, %v1712
        %v2542 = vunpack.c.l.b16 %v2510
        %v2543 = vunpack.c.h.b16 %v2510
        %v2544 = vunpack.c.l.b16 %v2511
        %v2545 = vunpack.c.h.b16 %v2511
        %v2546 = vunpack.c.l.b16 %v2512
        %v2547 = vunpack.c.h.b16 %v2512
        %v2548 = vunpack.c.l.b16 %v2513
        %v2549 = vunpack.c.h.b16 %v2513
        %v2550 = vunpack.c.l.b16 %v2514
        %v2551 = vunpack.c.h.b16 %v2514
        %v2552 = vunpack.c.l.b16 %v2515
        %v2553 = vunpack.c.h.b16 %v2515
        %v2554 = vunpack.c.l.b16 %v2516
        %v2555 = vunpack.c.h.b16 %v2516
        %v2556 = vunpack.c.l.b16 %v2517
        %v2557 = vunpack.c.h.b16 %v2517
        %v2558 = vunpack.c.l.b16 %v2518
        %v2559 = vunpack.c.h.b16 %v2518
        %v2560 = vunpack.c.l.b16 %v2519
        %v2561 = vunpack.c.h.b16 %v2519
        %v2562 = vunpack.c.l.b16 %v2520
        %v2563 = vunpack.c.h.b16 %v2520
        %v2564 = vunpack.c.l.b16 %v2521
        %v2565 = vunpack.c.h.b16 %v2521
        %v2566 = vunpack.c.l.b16 %v2522
        %v2567 = vunpack.c.h.b16 %v2522
        %v2568 = vunpack.c.l.b16 %v2523
        %v2569 = vunpack.c.h.b16 %v2523
        %v2570 = vunpack.c.l.b16 %v2524
        %v2571 = vunpack.c.h.b16 %v2524
        %v2572 = vunpack.c.l.b16 %v2525
        %v2573 = vunpack.c.h.b16 %v2525
        %v2574 = vpack.c.b16 %v2542, %v2542
        %v2575 = vpack.c.b16 %v2543, %v2543
        %v2576 = vpack.c.b16 %v2544, %v2544
        %v2577 = vpack.c.b16 %v2545, %v2545
        %v2578 = vpack.c.b16 %v2546, %v2546
        %v2579 = vpack.c.b16 %v2547, %v2547
        %v2580 = vpack.c.b16 %v2548, %v2548
        %v2581 = vpack.c.b16 %v2549, %v2549
        %v2582 = vpack.c.b16 %v2550, %v2550
        %v2583 = vpack.c.b16 %v2551, %v2551
        %v2584 = vpack.c.b16 %v2552, %v2552
        %v2585 = vpack.c.b16 %v2553, %v2553
        %v2586 = vpack.c.b16 %v2554, %v2554
        %v2587 = vpack.c.b16 %v2555, %v2555
        %v2588 = vpack.c.b16 %v2556, %v2556
        %v2589 = vpack.c.b16 %v2557, %v2557
        %v2590 = vpack.c.b16 %v2558, %v2558
        %v2591 = vpack.c.b16 %v2559, %v2559
        %v2592 = vpack.c.b16 %v2560, %v2560
        %v2593 = vpack.c.b16 %v2561, %v2561
        %v2594 = vpack.c.b16 %v2562, %v2562
        %v2595 = vpack.c.b16 %v2563, %v2563
        %v2596 = vpack.c.b16 %v2564, %v2564
        %v2597 = vpack.c.b16 %v2565, %v2565
        %v2598 = vpack.c.b16 %v2566, %v2566
        %v2599 = vpack.c.b16 %v2567, %v2567
        %v2600 = vpack.c.b16 %v2568, %v2568
        %v2601 = vpack.c.b16 %v2569, %v2569
        %v2602 = vpack.c.b16 %v2570, %v2570
        %v2603 = vpack.c.b16 %v2571, %v2571
        %v2604 = vpack.c.b16 %v2572, %v2572
        %v2605 = vpack.c.b16 %v2573, %v2573
        %2638 = vst [vmem:[%s475] sm:$0xf] %v2574
        %2639 = vst [vmem:[%s475 + $0x4] sm:$0xf] %v2575
        %2640 = vst [vmem:[%s475 + $0x8] sm:$0xf] %v2576
        %2641 = vst [vmem:[%s475 + $0xc] sm:$0xf] %v2577
        %2642 = vst [vmem:[%s475 + $0x10] sm:$0xf] %v2578
        %2643 = vst [vmem:[%s475 + $0x14] sm:$0xf] %v2579
        %2644 = vst [vmem:[%s475 + $0x18] sm:$0xf] %v2580
        %2645 = vst [vmem:[%s475 + $0x1c] sm:$0xf] %v2581
        %2646 = vst [vmem:[%s475 + $0x20] sm:$0xf] %v2582
        %2647 = vst [vmem:[%s475 + $0x24] sm:$0xf] %v2583
        %2648 = vst [vmem:[%s475 + $0x28] sm:$0xf] %v2584
        %2649 = vst [vmem:[%s475 + $0x2c] sm:$0xf] %v2585
        %2650 = vst [vmem:[%s475 + $0x30] sm:$0xf] %v2586
        %2651 = vst [vmem:[%s475 + $0x34] sm:$0xf] %v2587
        %2652 = vst [vmem:[%s475 + $0x38] sm:$0xf] %v2588
        %2653 = vst [vmem:[%s475 + $0x3c] sm:$0xf] %v2589
        %2654 = vst [vmem:[%s475 + $0x40] sm:$0xf] %v2590
        %2655 = vst [vmem:[%s475 + $0x44] sm:$0xf] %v2591
        %2656 = vst [vmem:[%s475 + $0x48] sm:$0xf] %v2592
        %2657 = vst [vmem:[%s475 + $0x4c] sm:$0xf] %v2593
        %2658 = vst [vmem:[%s475 + $0x50] sm:$0xf] %v2594
        %2659 = vst [vmem:[%s475 + $0x54] sm:$0xf] %v2595
        %2660 = vst [vmem:[%s475 + $0x58] sm:$0xf] %v2596
        %2661 = vst [vmem:[%s475 + $0x5c] sm:$0xf] %v2597
        %2662 = vst [vmem:[%s475 + $0x60] sm:$0xf] %v2598
        %2663 = vst [vmem:[%s475 + $0x64] sm:$0xf] %v2599
        %2664 = vst [vmem:[%s475 + $0x68] sm:$0xf] %v2600
        %2665 = vst [vmem:[%s475 + $0x6c] sm:$0xf] %v2601
        %2666 = vst [vmem:[%s475 + $0x70] sm:$0xf] %v2602
        %2667 = vst [vmem:[%s475 + $0x74] sm:$0xf] %v2603
        %2668 = vst [vmem:[%s475 + $0x78] sm:$0xf] %v2604
        %2669 = vst [vmem:[%s475 + $0x7c] sm:$0xf] %v2605
        %v2670 = vpack.c.bf16 %v1959, %v1955
        %v2671 = vpack.c.bf16 %v1969, %v1965
        %v2672 = vpack.c.bf16 %v1979, %v1975
        %v2673 = vpack.c.bf16 %v1989, %v1985
        %v2674 = vpack.c.bf16 %v1999, %v1995
        %v2675 = vpack.c.bf16 %v2009, %v2005
        %v2676 = vpack.c.bf16 %v2019, %v2015
        %v2677 = vpack.c.bf16 %v2029, %v2025
        %v2678 = vpack.c.bf16 %v2039, %v2035
        %v2679 = vpack.c.bf16 %v2049, %v2045
        %v2680 = vpack.c.bf16 %v2059, %v2055
        %v2681 = vpack.c.bf16 %v2069, %v2065
        %v2682 = vpack.c.bf16 %v2079, %v2075
        %v2683 = vpack.c.bf16 %v2089, %v2085
        %v2684 = vpack.c.bf16 %v2099, %v2095
        %v2685 = vpack.c.bf16 %v2109, %v2105
        %v2702 = vunpack.c.l.b16 %v2670
        %v2703 = vunpack.c.h.b16 %v2670
        %v2704 = vunpack.c.l.b16 %v2671
        %v2705 = vunpack.c.h.b16 %v2671
        %v2706 = vunpack.c.l.b16 %v2672
        %v2707 = vunpack.c.h.b16 %v2672
        %v2708 = vunpack.c.l.b16 %v2673
        %v2709 = vunpack.c.h.b16 %v2673
        %v2710 = vunpack.c.l.b16 %v2674
        %v2711 = vunpack.c.h.b16 %v2674
        %v2712 = vunpack.c.l.b16 %v2675
        %v2713 = vunpack.c.h.b16 %v2675
        %v2714 = vunpack.c.l.b16 %v2676
        %v2715 = vunpack.c.h.b16 %v2676
        %v2716 = vunpack.c.l.b16 %v2677
        %v2717 = vunpack.c.h.b16 %v2677
        %v2718 = vunpack.c.l.b16 %v2678
        %v2719 = vunpack.c.h.b16 %v2678
        %v2720 = vunpack.c.l.b16 %v2679
        %v2721 = vunpack.c.h.b16 %v2679
        %v2722 = vunpack.c.l.b16 %v2680
        %v2723 = vunpack.c.h.b16 %v2680
        %v2724 = vunpack.c.l.b16 %v2681
        %v2725 = vunpack.c.h.b16 %v2681
        %v2726 = vunpack.c.l.b16 %v2682
        %v2727 = vunpack.c.h.b16 %v2682
        %v2728 = vunpack.c.l.b16 %v2683
        %v2729 = vunpack.c.h.b16 %v2683
        %v2730 = vunpack.c.l.b16 %v2684
        %v2731 = vunpack.c.h.b16 %v2684
        %v2732 = vunpack.c.l.b16 %v2685
        %v2733 = vunpack.c.h.b16 %v2685
        %v2734 = vpack.c.b16 %v2702, %v2702
        %v2735 = vpack.c.b16 %v2703, %v2703
        %v2736 = vpack.c.b16 %v2704, %v2704
        %v2737 = vpack.c.b16 %v2705, %v2705
        %v2738 = vpack.c.b16 %v2706, %v2706
        %v2739 = vpack.c.b16 %v2707, %v2707
        %v2740 = vpack.c.b16 %v2708, %v2708
        %v2741 = vpack.c.b16 %v2709, %v2709
        %v2742 = vpack.c.b16 %v2710, %v2710
        %v2743 = vpack.c.b16 %v2711, %v2711
        %v2744 = vpack.c.b16 %v2712, %v2712
        %v2745 = vpack.c.b16 %v2713, %v2713
        %v2746 = vpack.c.b16 %v2714, %v2714
        %v2747 = vpack.c.b16 %v2715, %v2715
        %v2748 = vpack.c.b16 %v2716, %v2716
        %v2749 = vpack.c.b16 %v2717, %v2717
        %v2750 = vpack.c.b16 %v2718, %v2718
        %v2751 = vpack.c.b16 %v2719, %v2719
        %v2752 = vpack.c.b16 %v2720, %v2720
        %v2753 = vpack.c.b16 %v2721, %v2721
        %v2754 = vpack.c.b16 %v2722, %v2722
        %v2755 = vpack.c.b16 %v2723, %v2723
        %v2756 = vpack.c.b16 %v2724, %v2724
        %v2757 = vpack.c.b16 %v2725, %v2725
        %v2758 = vpack.c.b16 %v2726, %v2726
        %v2759 = vpack.c.b16 %v2727, %v2727
        %v2760 = vpack.c.b16 %v2728, %v2728
        %v2761 = vpack.c.b16 %v2729, %v2729
        %v2762 = vpack.c.b16 %v2730, %v2730
        %v2763 = vpack.c.b16 %v2731, %v2731
        %v2764 = vpack.c.b16 %v2732, %v2732
        %v2765 = vpack.c.b16 %v2733, %v2733
        %2798 = vst [vmem:[%s482] sm:$0xf] %v2734
        %2799 = vst [vmem:[%s482 + $0x4] sm:$0xf] %v2735
        %2800 = vst [vmem:[%s482 + $0x8] sm:$0xf] %v2736
        %2801 = vst [vmem:[%s482 + $0xc] sm:$0xf] %v2737
        %2802 = vst [vmem:[%s482 + $0x10] sm:$0xf] %v2738
        %2803 = vst [vmem:[%s482 + $0x14] sm:$0xf] %v2739
        %2804 = vst [vmem:[%s482 + $0x18] sm:$0xf] %v2740
        %2805 = vst [vmem:[%s482 + $0x1c] sm:$0xf] %v2741
        %2806 = vst [vmem:[%s482 + $0x20] sm:$0xf] %v2742
        %2807 = vst [vmem:[%s482 + $0x24] sm:$0xf] %v2743
        %2808 = vst [vmem:[%s482 + $0x28] sm:$0xf] %v2744
        %2809 = vst [vmem:[%s482 + $0x2c] sm:$0xf] %v2745
        %2810 = vst [vmem:[%s482 + $0x30] sm:$0xf] %v2746
        %2811 = vst [vmem:[%s482 + $0x34] sm:$0xf] %v2747
        %2812 = vst [vmem:[%s482 + $0x38] sm:$0xf] %v2748
        %2813 = vst [vmem:[%s482 + $0x3c] sm:$0xf] %v2749
        %2814 = vst [vmem:[%s482 + $0x40] sm:$0xf] %v2750
        %2815 = vst [vmem:[%s482 + $0x44] sm:$0xf] %v2751
        %2816 = vst [vmem:[%s482 + $0x48] sm:$0xf] %v2752
        %2817 = vst [vmem:[%s482 + $0x4c] sm:$0xf] %v2753
        %2818 = vst [vmem:[%s482 + $0x50] sm:$0xf] %v2754
        %2819 = vst [vmem:[%s482 + $0x54] sm:$0xf] %v2755
        %2820 = vst [vmem:[%s482 + $0x58] sm:$0xf] %v2756
        %2821 = vst [vmem:[%s482 + $0x5c] sm:$0xf] %v2757
        %2822 = vst [vmem:[%s482 + $0x60] sm:$0xf] %v2758
        %2823 = vst [vmem:[%s482 + $0x64] sm:$0xf] %v2759
        %2824 = vst [vmem:[%s482 + $0x68] sm:$0xf] %v2760
        %2825 = vst [vmem:[%s482 + $0x6c] sm:$0xf] %v2761
        %2826 = vst [vmem:[%s482 + $0x70] sm:$0xf] %v2762
        %2827 = vst [vmem:[%s482 + $0x74] sm:$0xf] %v2763
        %2828 = vst [vmem:[%s482 + $0x78] sm:$0xf] %v2764
        %2829 = vst [vmem:[%s482 + $0x7c] sm:$0xf] %v2765
        %v2830 = vpack.c.bf16 %v2356, %v2352
        %v2831 = vpack.c.bf16 %v2366, %v2362
        %v2832 = vpack.c.bf16 %v2376, %v2372
        %v2833 = vpack.c.bf16 %v2386, %v2382
        %v2834 = vpack.c.bf16 %v2396, %v2392
        %v2835 = vpack.c.bf16 %v2406, %v2402
        %v2836 = vpack.c.bf16 %v2416, %v2412
        %v2837 = vpack.c.bf16 %v2426, %v2422
        %v2838 = vpack.c.bf16 %v2436, %v2432
        %v2839 = vpack.c.bf16 %v2446, %v2442
        %v2840 = vpack.c.bf16 %v2456, %v2452
        %v2841 = vpack.c.bf16 %v2466, %v2462
        %v2842 = vpack.c.bf16 %v2476, %v2472
        %v2843 = vpack.c.bf16 %v2486, %v2482
        %v2844 = vpack.c.bf16 %v2496, %v2492
        %v2845 = vpack.c.bf16 %v2506, %v2502
        %v2862 = vunpack.c.l.b16 %v2830
        %v2863 = vunpack.c.h.b16 %v2830
        %v2864 = vunpack.c.l.b16 %v2831
        %v2865 = vunpack.c.h.b16 %v2831
        %v2866 = vunpack.c.l.b16 %v2832
        %v2867 = vunpack.c.h.b16 %v2832
        %v2868 = vunpack.c.l.b16 %v2833
        %v2869 = vunpack.c.h.b16 %v2833
        %v2870 = vunpack.c.l.b16 %v2834
        %v2871 = vunpack.c.h.b16 %v2834
        %v2872 = vunpack.c.l.b16 %v2835
        %v2873 = vunpack.c.h.b16 %v2835
        %v2874 = vunpack.c.l.b16 %v2836
        %v2875 = vunpack.c.h.b16 %v2836
        %v2876 = vunpack.c.l.b16 %v2837
        %v2877 = vunpack.c.h.b16 %v2837
        %v2878 = vunpack.c.l.b16 %v2838
        %v2879 = vunpack.c.h.b16 %v2838
        %v2880 = vunpack.c.l.b16 %v2839
        %v2881 = vunpack.c.h.b16 %v2839
        %v2882 = vunpack.c.l.b16 %v2840
        %v2883 = vunpack.c.h.b16 %v2840
        %v2884 = vunpack.c.l.b16 %v2841
        %v2885 = vunpack.c.h.b16 %v2841
        %v2886 = vunpack.c.l.b16 %v2842
        %v2887 = vunpack.c.h.b16 %v2842
        %v2888 = vunpack.c.l.b16 %v2843
        %v2889 = vunpack.c.h.b16 %v2843
        %v2890 = vunpack.c.l.b16 %v2844
        %v2891 = vunpack.c.h.b16 %v2844
        %v2892 = vunpack.c.l.b16 %v2845
        %v2893 = vunpack.c.h.b16 %v2845
        %v2894 = vpack.c.b16 %v2862, %v2862
        %v2895 = vpack.c.b16 %v2863, %v2863
        %v2896 = vpack.c.b16 %v2864, %v2864
        %v2897 = vpack.c.b16 %v2865, %v2865
        %v2898 = vpack.c.b16 %v2866, %v2866
        %v2899 = vpack.c.b16 %v2867, %v2867
        %v2900 = vpack.c.b16 %v2868, %v2868
        %v2901 = vpack.c.b16 %v2869, %v2869
        %v2902 = vpack.c.b16 %v2870, %v2870
        %v2903 = vpack.c.b16 %v2871, %v2871
        %v2904 = vpack.c.b16 %v2872, %v2872
        %v2905 = vpack.c.b16 %v2873, %v2873
        %v2906 = vpack.c.b16 %v2874, %v2874
        %v2907 = vpack.c.b16 %v2875, %v2875
        %v2908 = vpack.c.b16 %v2876, %v2876
        %v2909 = vpack.c.b16 %v2877, %v2877
        %v2910 = vpack.c.b16 %v2878, %v2878
        %v2911 = vpack.c.b16 %v2879, %v2879
        %v2912 = vpack.c.b16 %v2880, %v2880
        %v2913 = vpack.c.b16 %v2881, %v2881
        %v2914 = vpack.c.b16 %v2882, %v2882
        %v2915 = vpack.c.b16 %v2883, %v2883
        %v2916 = vpack.c.b16 %v2884, %v2884
        %v2917 = vpack.c.b16 %v2885, %v2885
        %v2918 = vpack.c.b16 %v2886, %v2886
        %v2919 = vpack.c.b16 %v2887, %v2887
        %v2920 = vpack.c.b16 %v2888, %v2888
        %v2921 = vpack.c.b16 %v2889, %v2889
        %v2922 = vpack.c.b16 %v2890, %v2890
        %v2923 = vpack.c.b16 %v2891, %v2891
        %v2924 = vpack.c.b16 %v2892, %v2892
        %v2925 = vpack.c.b16 %v2893, %v2893
        %2958 = vst [vmem:[%s489] sm:$0xf] %v2894
        %2959 = vst [vmem:[%s489 + $0x4] sm:$0xf] %v2895
        %2960 = vst [vmem:[%s489 + $0x8] sm:$0xf] %v2896
        %2961 = vst [vmem:[%s489 + $0xc] sm:$0xf] %v2897
        %2962 = vst [vmem:[%s489 + $0x10] sm:$0xf] %v2898
        %2963 = vst [vmem:[%s489 + $0x14] sm:$0xf] %v2899
        %2964 = vst [vmem:[%s489 + $0x18] sm:$0xf] %v2900
        %2965 = vst [vmem:[%s489 + $0x1c] sm:$0xf] %v2901
        %2966 = vst [vmem:[%s489 + $0x20] sm:$0xf] %v2902
        %2967 = vst [vmem:[%s489 + $0x24] sm:$0xf] %v2903
        %2968 = vst [vmem:[%s489 + $0x28] sm:$0xf] %v2904
        %2969 = vst [vmem:[%s489 + $0x2c] sm:$0xf] %v2905
        %2970 = vst [vmem:[%s489 + $0x30] sm:$0xf] %v2906
        %2971 = vst [vmem:[%s489 + $0x34] sm:$0xf] %v2907
        %2972 = vst [vmem:[%s489 + $0x38] sm:$0xf] %v2908
        %2973 = vst [vmem:[%s489 + $0x3c] sm:$0xf] %v2909
        %2974 = vst [vmem:[%s489 + $0x40] sm:$0xf] %v2910
        %2975 = vst [vmem:[%s489 + $0x44] sm:$0xf] %v2911
        %2976 = vst [vmem:[%s489 + $0x48] sm:$0xf] %v2912
        %2977 = vst [vmem:[%s489 + $0x4c] sm:$0xf] %v2913
        %2978 = vst [vmem:[%s489 + $0x50] sm:$0xf] %v2914
        %2979 = vst [vmem:[%s489 + $0x54] sm:$0xf] %v2915
        %2980 = vst [vmem:[%s489 + $0x58] sm:$0xf] %v2916
        %2981 = vst [vmem:[%s489 + $0x5c] sm:$0xf] %v2917
        %2982 = vst [vmem:[%s489 + $0x60] sm:$0xf] %v2918
        %2983 = vst [vmem:[%s489 + $0x64] sm:$0xf] %v2919
        %2984 = vst [vmem:[%s489 + $0x68] sm:$0xf] %v2920
        %2985 = vst [vmem:[%s489 + $0x6c] sm:$0xf] %v2921
        %2986 = vst [vmem:[%s489 + $0x70] sm:$0xf] %v2922
        %2987 = vst [vmem:[%s489 + $0x74] sm:$0xf] %v2923
        %2988 = vst [vmem:[%s489 + $0x78] sm:$0xf] %v2924
        %2989 = vst [vmem:[%s489 + $0x7c] sm:$0xf] %v2925
        %v2990 = vpack.c.bf16 %v1655, %v1653
        %v2991 = vpack.c.bf16 %v1659, %v1657
        %v2992 = vpack.c.bf16 %v1663, %v1661
        %v2993 = vpack.c.bf16 %v1667, %v1665
        %v2994 = vpack.c.bf16 %v1671, %v1669
        %v2995 = vpack.c.bf16 %v1675, %v1673
        %v2996 = vpack.c.bf16 %v1679, %v1677
        %v2997 = vpack.c.bf16 %v1683, %v1681
        %v2998 = vpack.c.bf16 %v1687, %v1685
        %v2999 = vpack.c.bf16 %v1691, %v1689
        %v3000 = vpack.c.bf16 %v1695, %v1693
        %v3001 = vpack.c.bf16 %v1699, %v1697
        %v3002 = vpack.c.bf16 %v1703, %v1701
        %v3003 = vpack.c.bf16 %v1707, %v1705
        %v3004 = vpack.c.bf16 %v1711, %v1709
        %v3005 = vpack.c.bf16 %v1715, %v1713
        %v3022 = vunpack.c.l.b16 %v2990
        %v3023 = vunpack.c.h.b16 %v2990
        %v3024 = vunpack.c.l.b16 %v2991
        %v3025 = vunpack.c.h.b16 %v2991
        %v3026 = vunpack.c.l.b16 %v2992
        %v3027 = vunpack.c.h.b16 %v2992
        %v3028 = vunpack.c.l.b16 %v2993
        %v3029 = vunpack.c.h.b16 %v2993
        %v3030 = vunpack.c.l.b16 %v2994
        %v3031 = vunpack.c.h.b16 %v2994
        %v3032 = vunpack.c.l.b16 %v2995
        %v3033 = vunpack.c.h.b16 %v2995
        %v3034 = vunpack.c.l.b16 %v2996
        %v3035 = vunpack.c.h.b16 %v2996
        %v3036 = vunpack.c.l.b16 %v2997
        %v3037 = vunpack.c.h.b16 %v2997
        %v3038 = vunpack.c.l.b16 %v2998
        %v3039 = vunpack.c.h.b16 %v2998
        %v3040 = vunpack.c.l.b16 %v2999
        %v3041 = vunpack.c.h.b16 %v2999
        %v3042 = vunpack.c.l.b16 %v3000
        %v3043 = vunpack.c.h.b16 %v3000
        %v3044 = vunpack.c.l.b16 %v3001
        %v3045 = vunpack.c.h.b16 %v3001
        %v3046 = vunpack.c.l.b16 %v3002
        %v3047 = vunpack.c.h.b16 %v3002
        %v3048 = vunpack.c.l.b16 %v3003
        %v3049 = vunpack.c.h.b16 %v3003
        %v3050 = vunpack.c.l.b16 %v3004
        %v3051 = vunpack.c.h.b16 %v3004
        %v3052 = vunpack.c.l.b16 %v3005
        %v3053 = vunpack.c.h.b16 %v3005
        %v3054 = vpack.c.b16 %v3022, %v3022
        %v3055 = vpack.c.b16 %v3023, %v3023
        %v3056 = vpack.c.b16 %v3024, %v3024
        %v3057 = vpack.c.b16 %v3025, %v3025
        %v3058 = vpack.c.b16 %v3026, %v3026
        %v3059 = vpack.c.b16 %v3027, %v3027
        %v3060 = vpack.c.b16 %v3028, %v3028
        %v3061 = vpack.c.b16 %v3029, %v3029
        %v3062 = vpack.c.b16 %v3030, %v3030
        %v3063 = vpack.c.b16 %v3031, %v3031
        %v3064 = vpack.c.b16 %v3032, %v3032
        %v3065 = vpack.c.b16 %v3033, %v3033
        %v3066 = vpack.c.b16 %v3034, %v3034
        %v3067 = vpack.c.b16 %v3035, %v3035
        %v3068 = vpack.c.b16 %v3036, %v3036
        %v3069 = vpack.c.b16 %v3037, %v3037
        %v3070 = vpack.c.b16 %v3038, %v3038
        %v3071 = vpack.c.b16 %v3039, %v3039
        %v3072 = vpack.c.b16 %v3040, %v3040
        %v3073 = vpack.c.b16 %v3041, %v3041
        %v3074 = vpack.c.b16 %v3042, %v3042
        %v3075 = vpack.c.b16 %v3043, %v3043
        %v3076 = vpack.c.b16 %v3044, %v3044
        %v3077 = vpack.c.b16 %v3045, %v3045
        %v3078 = vpack.c.b16 %v3046, %v3046
        %v3079 = vpack.c.b16 %v3047, %v3047
        %v3080 = vpack.c.b16 %v3048, %v3048
        %v3081 = vpack.c.b16 %v3049, %v3049
        %v3082 = vpack.c.b16 %v3050, %v3050
        %v3083 = vpack.c.b16 %v3051, %v3051
        %v3084 = vpack.c.b16 %v3052, %v3052
        %v3085 = vpack.c.b16 %v3053, %v3053
        %s3118 = scalar_lea.vmem %s475, 128 [#allocation10]
        %3119 = vst [vmem:[%s3118] sm:$0xf] %v3054
        %3120 = vst [vmem:[%s3118 + $0x4] sm:$0xf] %v3055
        %3121 = vst [vmem:[%s3118 + $0x8] sm:$0xf] %v3056
        %3122 = vst [vmem:[%s3118 + $0xc] sm:$0xf] %v3057
        %3123 = vst [vmem:[%s3118 + $0x10] sm:$0xf] %v3058
        %3124 = vst [vmem:[%s3118 + $0x14] sm:$0xf] %v3059
        %3125 = vst [vmem:[%s3118 + $0x18] sm:$0xf] %v3060
        %3126 = vst [vmem:[%s3118 + $0x1c] sm:$0xf] %v3061
        %3127 = vst [vmem:[%s3118 + $0x20] sm:$0xf] %v3062
        %3128 = vst [vmem:[%s3118 + $0x24] sm:$0xf] %v3063
        %3129 = vst [vmem:[%s3118 + $0x28] sm:$0xf] %v3064
        %3130 = vst [vmem:[%s3118 + $0x2c] sm:$0xf] %v3065
        %3131 = vst [vmem:[%s3118 + $0x30] sm:$0xf] %v3066
        %3132 = vst [vmem:[%s3118 + $0x34] sm:$0xf] %v3067
        %3133 = vst [vmem:[%s3118 + $0x38] sm:$0xf] %v3068
        %3134 = vst [vmem:[%s3118 + $0x3c] sm:$0xf] %v3069
        %3135 = vst [vmem:[%s3118 + $0x40] sm:$0xf] %v3070
        %3136 = vst [vmem:[%s3118 + $0x44] sm:$0xf] %v3071
        %3137 = vst [vmem:[%s3118 + $0x48] sm:$0xf] %v3072
        %3138 = vst [vmem:[%s3118 + $0x4c] sm:$0xf] %v3073
        %3139 = vst [vmem:[%s3118 + $0x50] sm:$0xf] %v3074
        %3140 = vst [vmem:[%s3118 + $0x54] sm:$0xf] %v3075
        %3141 = vst [vmem:[%s3118 + $0x58] sm:$0xf] %v3076
        %3142 = vst [vmem:[%s3118 + $0x5c] sm:$0xf] %v3077
        %3143 = vst [vmem:[%s3118 + $0x60] sm:$0xf] %v3078
        %3144 = vst [vmem:[%s3118 + $0x64] sm:$0xf] %v3079
        %3145 = vst [vmem:[%s3118 + $0x68] sm:$0xf] %v3080
        %3146 = vst [vmem:[%s3118 + $0x6c] sm:$0xf] %v3081
        %3147 = vst [vmem:[%s3118 + $0x70] sm:$0xf] %v3082
        %3148 = vst [vmem:[%s3118 + $0x74] sm:$0xf] %v3083
        %3149 = vst [vmem:[%s3118 + $0x78] sm:$0xf] %v3084
        %3150 = vst [vmem:[%s3118 + $0x7c] sm:$0xf] %v3085
        %v3151 = vpack.c.bf16 %v1961, %v1957
        %v3152 = vpack.c.bf16 %v1971, %v1967
        %v3153 = vpack.c.bf16 %v1981, %v1977
        %v3154 = vpack.c.bf16 %v1991, %v1987
        %v3155 = vpack.c.bf16 %v2001, %v1997
        %v3156 = vpack.c.bf16 %v2011, %v2007
        %v3157 = vpack.c.bf16 %v2021, %v2017
        %v3158 = vpack.c.bf16 %v2031, %v2027
        %v3159 = vpack.c.bf16 %v2041, %v2037
        %v3160 = vpack.c.bf16 %v2051, %v2047
        %v3161 = vpack.c.bf16 %v2061, %v2057
        %v3162 = vpack.c.bf16 %v2071, %v2067
        %v3163 = vpack.c.bf16 %v2081, %v2077
        %v3164 = vpack.c.bf16 %v2091, %v2087
        %v3165 = vpack.c.bf16 %v2101, %v2097
        %v3166 = vpack.c.bf16 %v2111, %v2107
        %v3183 = vunpack.c.l.b16 %v3151
        %v3184 = vunpack.c.h.b16 %v3151
        %v3185 = vunpack.c.l.b16 %v3152
        %v3186 = vunpack.c.h.b16 %v3152
        %v3187 = vunpack.c.l.b16 %v3153
        %v3188 = vunpack.c.h.b16 %v3153
        %v3189 = vunpack.c.l.b16 %v3154
        %v3190 = vunpack.c.h.b16 %v3154
        %v3191 = vunpack.c.l.b16 %v3155
        %v3192 = vunpack.c.h.b16 %v3155
        %v3193 = vunpack.c.l.b16 %v3156
        %v3194 = vunpack.c.h.b16 %v3156
        %v3195 = vunpack.c.l.b16 %v3157
        %v3196 = vunpack.c.h.b16 %v3157
        %v3197 = vunpack.c.l.b16 %v3158
        %v3198 = vunpack.c.h.b16 %v3158
        %v3199 = vunpack.c.l.b16 %v3159
        %v3200 = vunpack.c.h.b16 %v3159
        %v3201 = vunpack.c.l.b16 %v3160
        %v3202 = vunpack.c.h.b16 %v3160
        %v3203 = vunpack.c.l.b16 %v3161
        %v3204 = vunpack.c.h.b16 %v3161
        %v3205 = vunpack.c.l.b16 %v3162
        %v3206 = vunpack.c.h.b16 %v3162
        %v3207 = vunpack.c.l.b16 %v3163
        %v3208 = vunpack.c.h.b16 %v3163
        %v3209 = vunpack.c.l.b16 %v3164
        %v3210 = vunpack.c.h.b16 %v3164
        %v3211 = vunpack.c.l.b16 %v3165
        %v3212 = vunpack.c.h.b16 %v3165
        %v3213 = vunpack.c.l.b16 %v3166
        %v3214 = vunpack.c.h.b16 %v3166
        %v3215 = vpack.c.b16 %v3183, %v3183
        %v3216 = vpack.c.b16 %v3184, %v3184
        %v3217 = vpack.c.b16 %v3185, %v3185
        %v3218 = vpack.c.b16 %v3186, %v3186
        %v3219 = vpack.c.b16 %v3187, %v3187
        %v3220 = vpack.c.b16 %v3188, %v3188
        %v3221 = vpack.c.b16 %v3189, %v3189
        %v3222 = vpack.c.b16 %v3190, %v3190
        %v3223 = vpack.c.b16 %v3191, %v3191
        %v3224 = vpack.c.b16 %v3192, %v3192
        %v3225 = vpack.c.b16 %v3193, %v3193
        %v3226 = vpack.c.b16 %v3194, %v3194
        %v3227 = vpack.c.b16 %v3195, %v3195
        %v3228 = vpack.c.b16 %v3196, %v3196
        %v3229 = vpack.c.b16 %v3197, %v3197
        %v3230 = vpack.c.b16 %v3198, %v3198
        %v3231 = vpack.c.b16 %v3199, %v3199
        %v3232 = vpack.c.b16 %v3200, %v3200
        %v3233 = vpack.c.b16 %v3201, %v3201
        %v3234 = vpack.c.b16 %v3202, %v3202
        %v3235 = vpack.c.b16 %v3203, %v3203
        %v3236 = vpack.c.b16 %v3204, %v3204
        %v3237 = vpack.c.b16 %v3205, %v3205
        %v3238 = vpack.c.b16 %v3206, %v3206
        %v3239 = vpack.c.b16 %v3207, %v3207
        %v3240 = vpack.c.b16 %v3208, %v3208
        %v3241 = vpack.c.b16 %v3209, %v3209
        %v3242 = vpack.c.b16 %v3210, %v3210
        %v3243 = vpack.c.b16 %v3211, %v3211
        %v3244 = vpack.c.b16 %v3212, %v3212
        %v3245 = vpack.c.b16 %v3213, %v3213
        %v3246 = vpack.c.b16 %v3214, %v3214
        %s3279 = scalar_lea.vmem %s482, 128 [#allocation11]
        %3280 = vst [vmem:[%s3279] sm:$0xf] %v3215
        %3281 = vst [vmem:[%s3279 + $0x4] sm:$0xf] %v3216
        %3282 = vst [vmem:[%s3279 + $0x8] sm:$0xf] %v3217
        %3283 = vst [vmem:[%s3279 + $0xc] sm:$0xf] %v3218
        %3284 = vst [vmem:[%s3279 + $0x10] sm:$0xf] %v3219
        %3285 = vst [vmem:[%s3279 + $0x14] sm:$0xf] %v3220
        %3286 = vst [vmem:[%s3279 + $0x18] sm:$0xf] %v3221
        %3287 = vst [vmem:[%s3279 + $0x1c] sm:$0xf] %v3222
        %3288 = vst [vmem:[%s3279 + $0x20] sm:$0xf] %v3223
        %3289 = vst [vmem:[%s3279 + $0x24] sm:$0xf] %v3224
        %3290 = vst [vmem:[%s3279 + $0x28] sm:$0xf] %v3225
        %3291 = vst [vmem:[%s3279 + $0x2c] sm:$0xf] %v3226
        %3292 = vst [vmem:[%s3279 + $0x30] sm:$0xf] %v3227
        %3293 = vst [vmem:[%s3279 + $0x34] sm:$0xf] %v3228
        %3294 = vst [vmem:[%s3279 + $0x38] sm:$0xf] %v3229
        %3295 = vst [vmem:[%s3279 + $0x3c] sm:$0xf] %v3230
        %3296 = vst [vmem:[%s3279 + $0x40] sm:$0xf] %v3231
        %3297 = vst [vmem:[%s3279 + $0x44] sm:$0xf] %v3232
        %3298 = vst [vmem:[%s3279 + $0x48] sm:$0xf] %v3233
        %3299 = vst [vmem:[%s3279 + $0x4c] sm:$0xf] %v3234
        %3300 = vst [vmem:[%s3279 + $0x50] sm:$0xf] %v3235
        %3301 = vst [vmem:[%s3279 + $0x54] sm:$0xf] %v3236
        %3302 = vst [vmem:[%s3279 + $0x58] sm:$0xf] %v3237
        %3303 = vst [vmem:[%s3279 + $0x5c] sm:$0xf] %v3238
        %3304 = vst [vmem:[%s3279 + $0x60] sm:$0xf] %v3239
        %3305 = vst [vmem:[%s3279 + $0x64] sm:$0xf] %v3240
        %3306 = vst [vmem:[%s3279 + $0x68] sm:$0xf] %v3241
        %3307 = vst [vmem:[%s3279 + $0x6c] sm:$0xf] %v3242
        %3308 = vst [vmem:[%s3279 + $0x70] sm:$0xf] %v3243
        %3309 = vst [vmem:[%s3279 + $0x74] sm:$0xf] %v3244
        %3310 = vst [vmem:[%s3279 + $0x78] sm:$0xf] %v3245
        %3311 = vst [vmem:[%s3279 + $0x7c] sm:$0xf] %v3246
        %v3312 = vpack.c.bf16 %v2358, %v2354
        %v3313 = vpack.c.bf16 %v2368, %v2364
        %v3314 = vpack.c.bf16 %v2378, %v2374
        %v3315 = vpack.c.bf16 %v2388, %v2384
        %v3316 = vpack.c.bf16 %v2398, %v2394
        %v3317 = vpack.c.bf16 %v2408, %v2404
        %v3318 = vpack.c.bf16 %v2418, %v2414
        %v3319 = vpack.c.bf16 %v2428, %v2424
        %v3320 = vpack.c.bf16 %v2438, %v2434
        %v3321 = vpack.c.bf16 %v2448, %v2444
        %v3322 = vpack.c.bf16 %v2458, %v2454
        %v3323 = vpack.c.bf16 %v2468, %v2464
        %v3324 = vpack.c.bf16 %v2478, %v2474
        %v3325 = vpack.c.bf16 %v2488, %v2484
        %v3326 = vpack.c.bf16 %v2498, %v2494
        %v3327 = vpack.c.bf16 %v2508, %v2504
        %v3344 = vunpack.c.l.b16 %v3312
        %v3345 = vunpack.c.h.b16 %v3312
        %v3346 = vunpack.c.l.b16 %v3313
        %v3347 = vunpack.c.h.b16 %v3313
        %v3348 = vunpack.c.l.b16 %v3314
        %v3349 = vunpack.c.h.b16 %v3314
        %v3350 = vunpack.c.l.b16 %v3315
        %v3351 = vunpack.c.h.b16 %v3315
        %v3352 = vunpack.c.l.b16 %v3316
        %v3353 = vunpack.c.h.b16 %v3316
        %v3354 = vunpack.c.l.b16 %v3317
        %v3355 = vunpack.c.h.b16 %v3317
        %v3356 = vunpack.c.l.b16 %v3318
        %v3357 = vunpack.c.h.b16 %v3318
        %v3358 = vunpack.c.l.b16 %v3319
        %v3359 = vunpack.c.h.b16 %v3319
        %v3360 = vunpack.c.l.b16 %v3320
        %v3361 = vunpack.c.h.b16 %v3320
        %v3362 = vunpack.c.l.b16 %v3321
        %v3363 = vunpack.c.h.b16 %v3321
        %v3364 = vunpack.c.l.b16 %v3322
        %v3365 = vunpack.c.h.b16 %v3322
        %v3366 = vunpack.c.l.b16 %v3323
        %v3367 = vunpack.c.h.b16 %v3323
        %v3368 = vunpack.c.l.b16 %v3324
        %v3369 = vunpack.c.h.b16 %v3324
        %v3370 = vunpack.c.l.b16 %v3325
        %v3371 = vunpack.c.h.b16 %v3325
        %v3372 = vunpack.c.l.b16 %v3326
        %v3373 = vunpack.c.h.b16 %v3326
        %v3374 = vunpack.c.l.b16 %v3327
        %v3375 = vunpack.c.h.b16 %v3327
        %v3376 = vpack.c.b16 %v3344, %v3344
        %v3377 = vpack.c.b16 %v3345, %v3345
        %v3378 = vpack.c.b16 %v3346, %v3346
        %v3379 = vpack.c.b16 %v3347, %v3347
        %v3380 = vpack.c.b16 %v3348, %v3348
        %v3381 = vpack.c.b16 %v3349, %v3349
        %v3382 = vpack.c.b16 %v3350, %v3350
        %v3383 = vpack.c.b16 %v3351, %v3351
        %v3384 = vpack.c.b16 %v3352, %v3352
        %v3385 = vpack.c.b16 %v3353, %v3353
        %v3386 = vpack.c.b16 %v3354, %v3354
        %v3387 = vpack.c.b16 %v3355, %v3355
        %v3388 = vpack.c.b16 %v3356, %v3356
        %v3389 = vpack.c.b16 %v3357, %v3357
        %v3390 = vpack.c.b16 %v3358, %v3358
        %v3391 = vpack.c.b16 %v3359, %v3359
        %v3392 = vpack.c.b16 %v3360, %v3360
        %v3393 = vpack.c.b16 %v3361, %v3361
        %v3394 = vpack.c.b16 %v3362, %v3362
        %v3395 = vpack.c.b16 %v3363, %v3363
        %v3396 = vpack.c.b16 %v3364, %v3364
        %v3397 = vpack.c.b16 %v3365, %v3365
        %v3398 = vpack.c.b16 %v3366, %v3366
        %v3399 = vpack.c.b16 %v3367, %v3367
        %v3400 = vpack.c.b16 %v3368, %v3368
        %v3401 = vpack.c.b16 %v3369, %v3369
        %v3402 = vpack.c.b16 %v3370, %v3370
        %v3403 = vpack.c.b16 %v3371, %v3371
        %v3404 = vpack.c.b16 %v3372, %v3372
        %v3405 = vpack.c.b16 %v3373, %v3373
        %v3406 = vpack.c.b16 %v3374, %v3374
        %v3407 = vpack.c.b16 %v3375, %v3375
        %s3440 = scalar_lea.vmem %s489, 128 [#allocation13]
        %3441 = vst [vmem:[%s3440] sm:$0xf] %v3376
        %3442 = vst [vmem:[%s3440 + $0x4] sm:$0xf] %v3377
        %3443 = vst [vmem:[%s3440 + $0x8] sm:$0xf] %v3378
        %3444 = vst [vmem:[%s3440 + $0xc] sm:$0xf] %v3379
        %3445 = vst [vmem:[%s3440 + $0x10] sm:$0xf] %v3380
        %3446 = vst [vmem:[%s3440 + $0x14] sm:$0xf] %v3381
        %3447 = vst [vmem:[%s3440 + $0x18] sm:$0xf] %v3382
        %3448 = vst [vmem:[%s3440 + $0x1c] sm:$0xf] %v3383
        %3449 = vst [vmem:[%s3440 + $0x20] sm:$0xf] %v3384
        %3450 = vst [vmem:[%s3440 + $0x24] sm:$0xf] %v3385
        %3451 = vst [vmem:[%s3440 + $0x28] sm:$0xf] %v3386
        %3452 = vst [vmem:[%s3440 + $0x2c] sm:$0xf] %v3387
        %3453 = vst [vmem:[%s3440 + $0x30] sm:$0xf] %v3388
        %3454 = vst [vmem:[%s3440 + $0x34] sm:$0xf] %v3389
        %3455 = vst [vmem:[%s3440 + $0x38] sm:$0xf] %v3390
        %3456 = vst [vmem:[%s3440 + $0x3c] sm:$0xf] %v3391
        %3457 = vst [vmem:[%s3440 + $0x40] sm:$0xf] %v3392
        %3458 = vst [vmem:[%s3440 + $0x44] sm:$0xf] %v3393
        %3459 = vst [vmem:[%s3440 + $0x48] sm:$0xf] %v3394
        %3460 = vst [vmem:[%s3440 + $0x4c] sm:$0xf] %v3395
        %3461 = vst [vmem:[%s3440 + $0x50] sm:$0xf] %v3396
        %3462 = vst [vmem:[%s3440 + $0x54] sm:$0xf] %v3397
        %3463 = vst [vmem:[%s3440 + $0x58] sm:$0xf] %v3398
        %3464 = vst [vmem:[%s3440 + $0x5c] sm:$0xf] %v3399
        %3465 = vst [vmem:[%s3440 + $0x60] sm:$0xf] %v3400
        %3466 = vst [vmem:[%s3440 + $0x64] sm:$0xf] %v3401
        %3467 = vst [vmem:[%s3440 + $0x68] sm:$0xf] %v3402
        %3468 = vst [vmem:[%s3440 + $0x6c] sm:$0xf] %v3403
        %3469 = vst [vmem:[%s3440 + $0x70] sm:$0xf] %v3404
        %3470 = vst [vmem:[%s3440 + $0x74] sm:$0xf] %v3405
        %3471 = vst [vmem:[%s3440 + $0x78] sm:$0xf] %v3406
        %3472 = vst [vmem:[%s3440 + $0x7c] sm:$0xf] %v3407
        %s3473 = sand.u32 %s252, 1
        %s3474 = scalar_lea.sflag [#allocation4], %s3473
        %s3475 = sand.u32 %s252, 1
        %s3476 = smul.addr %s3475, 256
        %s3477 = scalar_lea.vmem [#allocation10], %s3476
        %s3478 = sand.u32 %s34, 1
        %s3479 = scalar_lea.sflag [#allocation12], %s3478
        %s3480 = sand.u32 %s280, 1
        %s3481 = smul.addr %s3480, 256
        %s3482 = scalar_lea.vmem [#allocation11], %s3481
        %s3483 = sand.u32 %s34, 1
        %s3484 = scalar_lea.sflag [#allocation12], %s3483
        %s3485 = sand.u32 %s308, 1
        %s3486 = smul.addr %s3485, 256
        %s3487 = scalar_lea.vmem [#allocation13], %s3486
        // Predicated region
        $region73: #{tpu_custom_call.1} parent=55 // pred_check
          %p3488 = pneg %p262
        $region74: #{tpu_custom_call.1} parent=55 // pred_check_branch
          %3490 = sbr.rel (%p3488) target = $region76
        $region75: #{tpu_custom_call.1} parent=55 // pred_region
          #allocation15 [shape = 'u32[6]{0}', space=smem, size = 0x18, scoped, tag = 'DMA stride descriptor']
          %s3491 = smul.u32 32, %s39
          %s3493 = ssub.s32 4096, 4096
          %3494 = vsyncadd %s3474, %s3493
          %s3495 = smul.addr %s38, 128
          %s3496 = sadd.s32 %s3491, %s3495
          %s3497 = smul.addr %s3496, 64
          %s3498 = scalar_lea.hbm %s9, %s3497
          %s3500 = sshll.u32 1, 14
          %s3501 = sxor.u32 4294967295, %s3500
          %s3504 = sshll.u32 7, 18
          %s3505 = sxor.u32 4294967295, %s3504
          %s3506 = sand.u32 0, %s3505
          %s3508 = sor.u32 %s3506, 0
          %s3510 = sshll.u32 3, 24
          %s3511 = sxor.u32 4294967295, %s3510
          %s3512 = sand.u32 %s3508, %s3511
          %s3514 = sor.u32 %s3512, 0
          %s3515 = sshll.u32 %s3477, 4
          %s3516 = int_to_ptr.vmem [resolvable:$true] %s3515
          %3522 = sst [smem:[#allocation15]] 2048
          %s3523 = scalar_lea.smem [#allocation15], 1
          %3524 = sst [smem:[%s3523]] 4096
          %s3525 = scalar_lea.smem [#allocation15], 2
          %3526 = sst [smem:[%s3525]] 32
          %s3527 = scalar_lea.smem [#allocation15], 3
          %3528 = sst [smem:[%s3527]] 64
          %s3529 = scalar_lea.smem [#allocation15], 4
          %3530 = sst [smem:[%s3529]] 64
          %s3531 = scalar_lea.smem [#allocation15], 5
          %3532 = sst [smem:[%s3531]] 4
          %3534 = dma.general %s3516, 4096, %s3498, %s3474, [#allocation14], [#allocation15], %s3514, 0
        $region76: #{tpu_custom_call.1} parent=55 // pred_fallthru
          _
        // Predicated region
        $region77: #{tpu_custom_call.1} parent=55 // pred_check
          %p3535 = pneg %p290
        $region78: #{tpu_custom_call.1} parent=55 // pred_check_branch
          %3537 = sbr.rel (%p3535) target = $region80
        $region79: #{tpu_custom_call.1} parent=55 // pred_region
          #allocation17 [shape = 'u32[6]{0}', space=smem, size = 0x18, scoped, tag = 'DMA stride descriptor']
          %s3538 = smul.u32 32, %s39
          %s3540 = ssub.s32 4096, 4096
          %3541 = vsyncadd %s3479, %s3540
          %s3542 = smul.addr %s38, 128
          %s3543 = sadd.s32 %s3538, %s3542
          %s3544 = smul.addr %s3543, 64
          %s3545 = scalar_lea.hbm %s10, %s3544
          %s3547 = sshll.u32 1, 14
          %s3548 = sxor.u32 4294967295, %s3547
          %s3551 = sshll.u32 7, 18
          %s3552 = sxor.u32 4294967295, %s3551
          %s3553 = sand.u32 0, %s3552
          %s3555 = sor.u32 %s3553, 0
          %s3557 = sshll.u32 3, 24
          %s3558 = sxor.u32 4294967295, %s3557
          %s3559 = sand.u32 %s3555, %s3558
          %s3561 = sor.u32 %s3559, 0
          %s3562 = sshll.u32 %s3482, 4
          %s3563 = int_to_ptr.vmem [resolvable:$true] %s3562
          %3569 = sst [smem:[#allocation17]] 2048
          %s3570 = scalar_lea.smem [#allocation17], 1
          %3571 = sst [smem:[%s3570]] 4096
          %s3572 = scalar_lea.smem [#allocation17], 2
          %3573 = sst [smem:[%s3572]] 32
          %s3574 = scalar_lea.smem [#allocation17], 3
          %3575 = sst [smem:[%s3574]] 64
          %s3576 = scalar_lea.smem [#allocation17], 4
          %3577 = sst [smem:[%s3576]] 64
          %s3578 = scalar_lea.smem [#allocation17], 5
          %3579 = sst [smem:[%s3578]] 4
          %3581 = dma.general %s3563, 4096, %s3545, %s3479, [#allocation16], [#allocation17], %s3561, 0
        $region80: #{tpu_custom_call.1} parent=55 // pred_fallthru
          _
        // Predicated region
        $region81: #{tpu_custom_call.1} parent=55 // pred_check
          %p3582 = pneg %p318
        $region82: #{tpu_custom_call.1} parent=55 // pred_check_branch
          %3584 = sbr.rel (%p3582) target = $region84
        $region83: #{tpu_custom_call.1} parent=55 // pred_region
          #allocation19 [shape = 'u32[6]{0}', space=smem, size = 0x18, scoped, tag = 'DMA stride descriptor']
          %s3585 = smul.u32 32, %s39
          %s3587 = ssub.s32 4096, 4096
          %3588 = vsyncadd %s3484, %s3587
          %s3589 = smul.addr %s38, 128
          %s3590 = sadd.s32 %s3585, %s3589
          %s3591 = smul.addr %s3590, 64
          %s3592 = scalar_lea.hbm %s11, %s3591
          %s3594 = sshll.u32 1, 14
          %s3595 = sxor.u32 4294967295, %s3594
          %s3598 = sshll.u32 7, 18
          %s3599 = sxor.u32 4294967295, %s3598
          %s3600 = sand.u32 0, %s3599
          %s3602 = sor.u32 %s3600, 0
          %s3604 = sshll.u32 3, 24
          %s3605 = sxor.u32 4294967295, %s3604
          %s3606 = sand.u32 %s3602, %s3605
          %s3608 = sor.u32 %s3606, 0
          %s3609 = sshll.u32 %s3487, 4
          %s3610 = int_to_ptr.vmem [resolvable:$true] %s3609
          %3616 = sst [smem:[#allocation19]] 2048
          %s3617 = scalar_lea.smem [#allocation19], 1
          %3618 = sst [smem:[%s3617]] 4096
          %s3619 = scalar_lea.smem [#allocation19], 2
          %3620 = sst [smem:[%s3619]] 32
          %s3621 = scalar_lea.smem [#allocation19], 3
          %3622 = sst [smem:[%s3621]] 64
          %s3623 = scalar_lea.smem [#allocation19], 4
          %3624 = sst [smem:[%s3623]] 64
          %s3625 = scalar_lea.smem [#allocation19], 5
          %3626 = sst [smem:[%s3625]] 4
          %3628 = dma.general %s3610, 4096, %s3592, %s3484, [#allocation18], [#allocation19], %s3608, 0
        $region84: #{tpu_custom_call.1} parent=55 // pred_fallthru
          _
      $region56: #{tpu_custom_call.1} parent=5 // pred_fallthru
        _
      %p3629 = scmp.le.s32.totalorder 2, %s29
      // Predicated region
      $region85: #{tpu_custom_call.1} parent=5 // pred_check
        %p3630 = pneg %p3629
      $region86: #{tpu_custom_call.1} parent=5 // pred_check_branch
        %3632 = sbr.rel (%p3630) target = $region88
      $region87: #{tpu_custom_call.1} parent=5 // pred_region
        %s3633 = ssub.s32 %s29, 2
        // Predicated region
        $region89: #{tpu_custom_call.1} parent=87 // pred_check
          %p3634 = pneg %p268
        $region90: #{tpu_custom_call.1} parent=87 // pred_check_branch
          %3636 = sbr.rel (%p3634) target = $region92
        $region91: #{tpu_custom_call.1} parent=87 // pred_region
          %s3637 = sand.u32 %s253, 1
          %s3638 = scalar_lea.sflag [#allocation4], %s3637
          %s3639 = sand.u32 %s253, 1
          %s3640 = smul.addr %s3639, 256
          %s3641 = scalar_lea.vmem [#allocation10], %s3640
          %3642 = dma.done %s3638, 4096
        $region92: #{tpu_custom_call.1} parent=87 // pred_fallthru
          _
        // Predicated region
        $region93: #{tpu_custom_call.1} parent=87 // pred_check
          %p3643 = pneg %p296
        $region94: #{tpu_custom_call.1} parent=87 // pred_check_branch
          %3645 = sbr.rel (%p3643) target = $region96
        $region95: #{tpu_custom_call.1} parent=87 // pred_region
          %s3646 = sand.u32 %s35, 1
          %s3647 = scalar_lea.sflag [#allocation12], %s3646
          %s3648 = sand.u32 %s281, 1
          %s3649 = smul.addr %s3648, 256
          %s3650 = scalar_lea.vmem [#allocation11], %s3649
          %3651 = dma.done %s3647, 4096
        $region96: #{tpu_custom_call.1} parent=87 // pred_fallthru
          _
        // Predicated region
        $region97: #{tpu_custom_call.1} parent=87 // pred_check
          %p3652 = pneg %p324
        $region98: #{tpu_custom_call.1} parent=87 // pred_check_branch
          %3654 = sbr.rel (%p3652) target = $region100
        $region99: #{tpu_custom_call.1} parent=87 // pred_region
          %s3655 = sand.u32 %s35, 1
          %s3656 = scalar_lea.sflag [#allocation12], %s3655
          %s3657 = sand.u32 %s309, 1
          %s3658 = smul.addr %s3657, 256
          %s3659 = scalar_lea.vmem [#allocation13], %s3658
          %3660 = dma.done %s3656, 4096
        $region100: #{tpu_custom_call.1} parent=87 // pred_fallthru
          _
      $region88: #{tpu_custom_call.1} parent=5 // pred_fallthru
        _
    $region6: #{tpu_custom_call.1} parent=1 // loop_footer
      %s33 = sadd.s32 1, %s29
    $region7: #{tpu_custom_call.1} parent=1 // loop_footer_branch
      %28 = sbr.rel target = $region3
    $region8: #{tpu_custom_call.1} parent=1 // loop_exit
      _
    %3661 = vsyncpa [#allocation3], 1
    %s3662 = scalar_lea.sflag [#allocation3], 1
    %3663 = vsyncpa %s3662, 1
    %3664 = vsyncpa [#allocation6], 1
    %3665 = vsyncpa [#allocation9], 1
    %3666 = vsyncpa [#allocation4], 1
    %s3667 = scalar_lea.sflag [#allocation4], 1
    %3668 = vsyncpa %s3667, 1
    %3669 = vsyncpa [#allocation12], 1
    %s3670 = scalar_lea.sflag [#allocation12], 1
    %3671 = vsyncpa %s3670, 1

// kernel: tpu_custom_call.1
$region0: #{tpu_custom_call.1}
  #allocation0 [shape = 'u32[]', space=smem, size = 0x4, offset = 0x4, fixed_abs, tag = 'smem constant byte address 0x4 - core index']
  #allocation1 [shape = 'u32[144,128]{1,0:T(1,128)}', space=vmem, size = 0x12000, scoped, tag = 'internal scratch']
  #allocation14 [shape = 's32[]', space=sflag, size = 0x4, offset = 0, fixed_abs, tag = 'sflag constant byte address 0x0 - dummy sync flag']
  #allocation16 [shape = 's32[]', space=sflag, size = 0x4, offset = 0, fixed_abs, tag = 'sflag constant byte address 0x0 - dummy sync flag']
  #allocation18 [shape = 's32[]', space=sflag, size = 0x4, offset = 0, fixed_abs, tag = 'sflag constant byte address 0x0 - dummy sync flag']
  %s0 = inlined_call_operand.hbm [shape: f32[2,512,256], index: 0, kind: input, shape index: {}]
  %s1 = inlined_call_operand.vmem [shape: f32[1,256], index: 1, kind: input, shape index: {}]
  %s2 = inlined_call_operand.vmem [shape: f32[1,256], index: 2, kind: input, shape index: {}]
  %s3 = inlined_call_operand.hbm [shape: bf16[256,256], index: 3, kind: input, shape index: {}]
  %s4 = inlined_call_operand.vmem [shape: f32[1,256], index: 4, kind: input, shape index: {}]
  %s5 = inlined_call_operand.hbm [shape: bf16[256,256], index: 5, kind: input, shape index: {}]
  %s6 = inlined_call_operand.vmem [shape: f32[1,256], index: 6, kind: input, shape index: {}]
  %s7 = inlined_call_operand.hbm [shape: bf16[256,256], index: 7, kind: input, shape index: {}]
  %s8 = inlined_call_operand.vmem [shape: f32[1,256], index: 8, kind: input, shape index: {}]
  %s9 = inlined_call_operand.hbm [shape: bf16[2,2,512,128], index: 9, kind: output, shape index: {0}]
  %s10 = inlined_call_operand.hbm [shape: bf16[2,2,512,128], index: 10, kind: output, shape index: {1}]
  %s11 = inlined_call_operand.hbm [shape: bf16[2,2,512,128], index: 11, kind: output, shape index: {2}]
  %12 = xla_tuple %s9, %s10, %s11
  %s13 = sld [smem:[#allocation0]]
  $region101: #{tpu_custom_call.1} parent=0
    _
  %s15 = ssub.s32 1, %s13
  %s16 = scalar_select 0, %s15, %s13
  $region1: #{tpu_custom_call.1} parent=0
    #allocation2 [shape = 'u8[524288]{0}', space=vmem, size = 0x80000, scoped, tag = 'input window, operand 0']
    #allocation3 [shape = 's32[2]{0}', space=sflag, size = 0x8, scoped, tag = 'scoped memory for tpu_custom_call.1']
    #allocation4 [shape = 's32[2]{0}', space=sflag, size = 0x8, scoped, tag = 'scoped memory for tpu_custom_call.1']
    #allocation5 [shape = 'u8[131072]{0}', space=vmem, size = 0x20000, scoped, tag = 'input window, operand 3, single buffered']
    #allocation6 [shape = 's32[1]{0}', space=sflag, size = 0x4, scoped, tag = 'scoped memory for tpu_custom_call.1']
    #allocation7 [shape = 'u8[131072]{0}', space=vmem, size = 0x20000, scoped, tag = 'input window, operand 5, single buffered']
    #allocation8 [shape = 'u8[131072]{0}', space=vmem, size = 0x20000, scoped, tag = 'input window, operand 7, single buffered']
    #allocation9 [shape = 's32[1]{0}', space=sflag, size = 0x4, scoped, tag = 'scoped memory for tpu_custom_call.1']
    #allocation10 [shape = 'u8[262144]{0}', space=vmem, size = 0x40000, scoped, tag = 'output window, operand 0']
    #allocation11 [shape = 'u8[262144]{0}', space=vmem, size = 0x40000, scoped, tag = 'output window, operand 1']
    #allocation12 [shape = 's32[2]{0}', space=sflag, size = 0x8, scoped, tag = 'scoped memory for tpu_custom_call.1']
    #allocation13 [shape = 'u8[262144]{0}', space=vmem, size = 0x40000, scoped, tag = 'output window, operand 2']
    %17 = vsyncpa [#allocation3], 0
    %s18 = scalar_lea.sflag [#allocation3], 1
    %19 = vsyncpa %s18, 0
    %20 = vsyncpa [#allocation6], 0
    %21 = vsyncpa [#allocation9], 0
    %22 = vsyncpa [#allocation4], 0
    %s23 = scalar_lea.sflag [#allocation4], 1
    %24 = vsyncpa %s23, 0
    %25 = vsyncpa [#allocation12], 0
    %s26 = scalar_lea.sflag [#allocation12], 1
    %27 = vsyncpa %s26, 0
    loop: start=0, step=1, limit=6
    $region2: #{tpu_custom_call.1} parent=1 // loop_pre_header
      _
    $region3: #{tpu_custom_call.1} parent=1 // loop_header
      %s29 = sphi 0, %s33
      %p30 = scmp.ge.s32.totalorder %s29, 6
      %s36 = sphi 0, %s48
      %s37 = sphi 0, %s44
      %s38 = sphi 0, %s36
      %s39 = sphi 0, %s37
      %s40 = sphi 0, %s38
      %s41 = sphi 0, %s39
      %s53 = sphi 0, %s55
      %s56 = sphi 0, %s53
      %s57 = sphi 0, %s56
      %s73 = sphi 0, %s57
      %s77 = sphi 0, %s77
      %s79 = sphi 0, %s77
      %s80 = sphi 0, %s79
      %s94 = sphi 0, %s80
      %s98 = sphi 0, %s98
      %s100 = sphi 0, %s98
      %s101 = sphi 0, %s100
      %s115 = sphi 0, %s101
      %s119 = sphi 0, %s119
      %s121 = sphi 0, %s119
      %s122 = sphi 0, %s121
      %s136 = sphi 0, %s122
      %s140 = sphi 0, %s140
      %s142 = sphi 0, %s140
      %s143 = sphi 0, %s142
      %s157 = sphi 0, %s143
      %s161 = sphi 0, %s161
      %s163 = sphi 0, %s161
      %s164 = sphi 0, %s163
      %s178 = sphi 0, %s164
      %s182 = sphi 0, %s182
      %s184 = sphi 0, %s182
      %s185 = sphi 0, %s184
      %s199 = sphi 0, %s185
      %s203 = sphi 0, %s203
      %s205 = sphi 0, %s203
      %s206 = sphi 0, %s205
      %s220 = sphi 0, %s206
      %s224 = sphi 0, %s224
      %s226 = sphi 0, %s224
      %s227 = sphi 0, %s226
      %s241 = sphi 0, %s227
      %s249 = sphi 0, %s251
      %s252 = sphi 0, %s249
      %s253 = sphi 0, %s252
      %s269 = sphi 0, %s253
      %s277 = sphi 0, %s279
      %s280 = sphi 0, %s277
      %s281 = sphi 0, %s280
      %s297 = sphi 0, %s281
      %s305 = sphi 0, %s307
      %s308 = sphi 0, %s305
      %s309 = sphi 0, %s308
      %s325 = sphi 0, %s309
    $region4: #{tpu_custom_call.1} parent=1 // loop_header_branch
      %32 = sbr.rel (%p30) target = $region8
    $region5: #{tpu_custom_call.1} parent=1 // loop_body
      %s34 = ssub.s32 %s29, 1
      %s35 = ssub.s32 %s29, 2
      %s42 = sadd.s32 1, %s37
      %p43 = scmp.ge.s32.totalorder %s42, 2
      %s44 = scalar_select %p43, 0, %s42
      %s45 = sadd.s32 1, %s36
      %s46 = scalar_select %p43, %s45, %s36
      %p47 = scmp.ge.s32.totalorder %s46, 2
      %s48 = scalar_select %p47, 0, %s46
      %s49 = ssub.s32 %s36, %s48
      %s50 = ssub.s32 %s37, %s44
      %s51 = sor.u32 %s49, %s50
      %p52 = scmp.eq.s32.totalorder %s51, 0
      %s54 = sadd.s32 %s53, 1
      %s55 = scalar_select %p52, %s53, %s54
      %p58 = pneg %p52
      %p59 = scmp.eq.s32.totalorder %s29, 3
      %p60 = por %p58, %p59
      %p61 = scmp.ne.s32.totalorder %s53, %s56
      %p62 = scmp.eq.s32.totalorder %s29, 0
      %p63 = por %p61, %p62
      %p64 = scmp.ne.s32.totalorder %s53, %s56
      %p65 = scmp.eq.s32.totalorder %s34, 3
      %p66 = por %p64, %p65
      %p67 = scmp.ne.s32.totalorder %s56, %s57
      %p68 = scmp.eq.s32.totalorder %s34, 0
      %p69 = por %p67, %p68
      %p70 = scmp.ne.s32.totalorder %s56, %s57
      %p71 = scmp.eq.s32.totalorder %s35, 3
      %p72 = por %p70, %p71
      %p74 = scmp.ne.s32.totalorder %s57, %s73
      %p75 = scmp.eq.s32.totalorder %s35, 0
      %p76 = por %p74, %p75
      %s78 = sadd.s32 %s77, 1
      %p81 = scmp.eq.s32.totalorder %s29, 3
      %p82 = scmp.ne.s32.totalorder %s77, %s79
      %p83 = scmp.eq.s32.totalorder %s29, 0
      %p84 = por %p82, %p83
      %p85 = scmp.ne.s32.totalorder %s77, %s79
      %p86 = scmp.eq.s32.totalorder %s34, 3
      %p87 = por %p85, %p86
      %p88 = scmp.ne.s32.totalorder %s79, %s80
      %p89 = scmp.eq.s32.totalorder %s34, 0
      %p90 = por %p88, %p89
      %p91 = scmp.ne.s32.totalorder %s79, %s80
      %p92 = scmp.eq.s32.totalorder %s35, 3
      %p93 = por %p91, %p92
      %p95 = scmp.ne.s32.totalorder %s80, %s94
      %p96 = scmp.eq.s32.totalorder %s35, 0
      %p97 = por %p95, %p96
      %s99 = sadd.s32 %s98, 1
      %p102 = scmp.eq.s32.totalorder %s29, 3
      %p103 = scmp.ne.s32.totalorder %s98, %s100
      %p104 = scmp.eq.s32.totalorder %s29, 0
      %p105 = por %p103, %p104
      %p106 = scmp.ne.s32.totalorder %s98, %s100
      %p107 = scmp.eq.s32.totalorder %s34, 3
      %p108 = por %p106, %p107
      %p109 = scmp.ne.s32.totalorder %s100, %s101
      %p110 = scmp.eq.s32.totalorder %s34, 0
      %p111 = por %p109, %p110
      %p112 = scmp.ne.s32.totalorder %s100, %s101
      %p113 = scmp.eq.s32.totalorder %s35, 3
      %p114 = por %p112, %p113
      %p116 = scmp.ne.s32.totalorder %s101, %s115
      %p117 = scmp.eq.s32.totalorder %s35, 0
      %p118 = por %p116, %p117
      %s120 = sadd.s32 %s119, 1
      %p123 = scmp.eq.s32.totalorder %s29, 3
      %p124 = scmp.ne.s32.totalorder %s119, %s121
      %p125 = scmp.eq.s32.totalorder %s29, 0
      %p126 = por %p124, %p125
      %p127 = scmp.ne.s32.totalorder %s119, %s121
      %p128 = scmp.eq.s32.totalorder %s34, 3
      %p129 = por %p127, %p128
      %p130 = scmp.ne.s32.totalorder %s121, %s122
      %p131 = scmp.eq.s32.totalorder %s34, 0
      %p132 = por %p130, %p131
      %p133 = scmp.ne.s32.totalorder %s121, %s122
      %p134 = scmp.eq.s32.totalorder %s35, 3
      %p135 = por %p133, %p134
      %p137 = scmp.ne.s32.totalorder %s122, %s136
      %p138 = scmp.eq.s32.totalorder %s35, 0
      %p139 = por %p137, %p138
      %s141 = sadd.s32 %s140, 1
      %p144 = scmp.eq.s32.totalorder %s29, 3
      %p145 = scmp.ne.s32.totalorder %s140, %s142
      %p146 = scmp.eq.s32.totalorder %s29, 0
      %p147 = por %p145, %p146
      %p148 = scmp.ne.s32.totalorder %s140, %s142
      %p149 = scmp.eq.s32.totalorder %s34, 3
      %p150 = por %p148, %p149
      %p151 = scmp.ne.s32.totalorder %s142, %s143
      %p152 = scmp.eq.s32.totalorder %s34, 0
      %p153 = por %p151, %p152
      %p154 = scmp.ne.s32.totalorder %s142, %s143
      %p155 = scmp.eq.s32.totalorder %s35, 3
      %p156 = por %p154, %p155
      %p158 = scmp.ne.s32.totalorder %s143, %s157
      %p159 = scmp.eq.s32.totalorder %s35, 0
      %p160 = por %p158, %p159
      %s162 = sadd.s32 %s161, 1
      %p165 = scmp.eq.s32.totalorder %s29, 3
      %p166 = scmp.ne.s32.totalorder %s161, %s163
      %p167 = scmp.eq.s32.totalorder %s29, 0
      %p168 = por %p166, %p167
      %p169 = scmp.ne.s32.totalorder %s161, %s163
      %p170 = scmp.eq.s32.totalorder %s34, 3
      %p171 = por %p169, %p170
      %p172 = scmp.ne.s32.totalorder %s163, %s164
      %p173 = scmp.eq.s32.totalorder %s34, 0
      %p174 = por %p172, %p173
      %p175 = scmp.ne.s32.totalorder %s163, %s164
      %p176 = scmp.eq.s32.totalorder %s35, 3
      %p177 = por %p175, %p176
      %p179 = scmp.ne.s32.totalorder %s164, %s178
      %p180 = scmp.eq.s32.totalorder %s35, 0
      %p181 = por %p179, %p180
      %s183 = sadd.s32 %s182, 1
      %p186 = scmp.eq.s32.totalorder %s29, 3
      %p187 = scmp.ne.s32.totalorder %s182, %s184
      %p188 = scmp.eq.s32.totalorder %s29, 0
      %p189 = por %p187, %p188
      %p190 = scmp.ne.s32.totalorder %s182, %s184
      %p191 = scmp.eq.s32.totalorder %s34, 3
      %p192 = por %p190, %p191
      %p193 = scmp.ne.s32.totalorder %s184, %s185
      %p194 = scmp.eq.s32.totalorder %s34, 0
      %p195 = por %p193, %p194
      %p196 = scmp.ne.s32.totalorder %s184, %s185
      %p197 = scmp.eq.s32.totalorder %s35, 3
      %p198 = por %p196, %p197
      %p200 = scmp.ne.s32.totalorder %s185, %s199
      %p201 = scmp.eq.s32.totalorder %s35, 0
      %p202 = por %p200, %p201
      %s204 = sadd.s32 %s203, 1
      %p207 = scmp.eq.s32.totalorder %s29, 3
      %p208 = scmp.ne.s32.totalorder %s203, %s205
      %p209 = scmp.eq.s32.totalorder %s29, 0
      %p210 = por %p208, %p209
      %p211 = scmp.ne.s32.totalorder %s203, %s205
      %p212 = scmp.eq.s32.totalorder %s34, 3
      %p213 = por %p211, %p212
      %p214 = scmp.ne.s32.totalorder %s205, %s206
      %p215 = scmp.eq.s32.totalorder %s34, 0
      %p216 = por %p214, %p215
      %p217 = scmp.ne.s32.totalorder %s205, %s206
      %p218 = scmp.eq.s32.totalorder %s35, 3
      %p219 = por %p217, %p218
      %p221 = scmp.ne.s32.totalorder %s206, %s220
      %p222 = scmp.eq.s32.totalorder %s35, 0
      %p223 = por %p221, %p222
      %s225 = sadd.s32 %s224, 1
      %p228 = scmp.eq.s32.totalorder %s29, 3
      %p229 = scmp.ne.s32.totalorder %s224, %s226
      %p230 = scmp.eq.s32.totalorder %s29, 0
      %p231 = por %p229, %p230
      %p232 = scmp.ne.s32.totalorder %s224, %s226
      %p233 = scmp.eq.s32.totalorder %s34, 3
      %p234 = por %p232, %p233
      %p235 = scmp.ne.s32.totalorder %s226, %s227
      %p236 = scmp.eq.s32.totalorder %s34, 0
      %p237 = por %p235, %p236
      %p238 = scmp.ne.s32.totalorder %s226, %s227
      %p239 = scmp.eq.s32.totalorder %s35, 3
      %p240 = por %p238, %p239
      %p242 = scmp.ne.s32.totalorder %s227, %s241
      %p243 = scmp.eq.s32.totalorder %s35, 0
      %p244 = por %p242, %p243
      %s245 = ssub.s32 %s36, %s48
      %s246 = ssub.s32 %s37, %s44
      %s247 = sor.u32 %s245, %s246
      %p248 = scmp.eq.s32.totalorder %s247, 0
      %s250 = sadd.s32 %s249, 1
      %s251 = scalar_select %p248, %s249, %s250
      %p254 = pneg %p248
      %p255 = scmp.eq.s32.totalorder %s29, 3
      %p256 = por %p254, %p255
      %p257 = scmp.ne.s32.totalorder %s249, %s252
      %p258 = scmp.eq.s32.totalorder %s29, 0
      %p259 = por %p257, %p258
      %p260 = scmp.ne.s32.totalorder %s249, %s252
      %p261 = scmp.eq.s32.totalorder %s34, 3
      %p262 = por %p260, %p261
      %p263 = scmp.ne.s32.totalorder %s252, %s253
      %p264 = scmp.eq.s32.totalorder %s34, 0
      %p265 = por %p263, %p264
      %p266 = scmp.ne.s32.totalorder %s252, %s253
      %p267 = scmp.eq.s32.totalorder %s35, 3
      %p268 = por %p266, %p267
      %p270 = scmp.ne.s32.totalorder %s253, %s269
      %p271 = scmp.eq.s32.totalorder %s35, 0
      %p272 = por %p270, %p271
      %s273 = ssub.s32 %s36, %s48
      %s274 = ssub.s32 %s37, %s44
      %s275 = sor.u32 %s273, %s274
      %p276 = scmp.eq.s32.totalorder %s275, 0
      %s278 = sadd.s32 %s277, 1
      %s279 = scalar_select %p276, %s277, %s278
      %p282 = pneg %p276
      %p283 = scmp.eq.s32.totalorder %s29, 3
      %p284 = por %p282, %p283
      %p285 = scmp.ne.s32.totalorder %s277, %s280
      %p286 = scmp.eq.s32.totalorder %s29, 0
      %p287 = por %p285, %p286
      %p288 = scmp.ne.s32.totalorder %s277, %s280
      %p289 = scmp.eq.s32.totalorder %s34, 3
      %p290 = por %p288, %p289
      %p291 = scmp.ne.s32.totalorder %s280, %s281
      %p292 = scmp.eq.s32.totalorder %s34, 0
      %p293 = por %p291, %p292
      %p294 = scmp.ne.s32.totalorder %s280, %s281
      %p295 = scmp.eq.s32.totalorder %s35, 3
      %p296 = por %p294, %p295
      %p298 = scmp.ne.s32.totalorder %s281, %s297
      %p299 = scmp.eq.s32.totalorder %s35, 0
      %p300 = por %p298, %p299
      %s301 = ssub.s32 %s36, %s48
      %s302 = ssub.s32 %s37, %s44
      %s303 = sor.u32 %s301, %s302
      %p304 = scmp.eq.s32.totalorder %s303, 0
      %s306 = sadd.s32 %s305, 1
      %s307 = scalar_select %p304, %s305, %s306
      %p310 = pneg %p304
      %p311 = scmp.eq.s32.totalorder %s29, 3
      %p312 = por %p310, %p311
      %p313 = scmp.ne.s32.totalorder %s305, %s308
      %p314 = scmp.eq.s32.totalorder %s29, 0
      %p315 = por %p313, %p314
      %p316 = scmp.ne.s32.totalorder %s305, %s308
      %p317 = scmp.eq.s32.totalorder %s34, 3
      %p318 = por %p316, %p317
      %p319 = scmp.ne.s32.totalorder %s308, %s309
      %p320 = scmp.eq.s32.totalorder %s34, 0
      %p321 = por %p319, %p320
      %p322 = scmp.ne.s32.totalorder %s308, %s309
      %p323 = scmp.eq.s32.totalorder %s35, 3
      %p324 = por %p322, %p323
      %p326 = scmp.ne.s32.totalorder %s309, %s325
      %p327 = scmp.eq.s32.totalorder %s35, 0
      %p328 = por %p326, %p327
      %p329 = scmp.le.s32.totalorder 1, %s29
      %p330 = scmp.lt.s32.totalorder %s29, 5
      %p331 = pnand %p329, %p330
      %p332 = pneg %p331
      // Predicated region
      $region9: #{tpu_custom_call.1} parent=5 // pred_check
        _
      $region10: #{tpu_custom_call.1} parent=5 // pred_check_branch
        %334 = sbr.rel (%p331) target = $region12
      $region11: #{tpu_custom_call.1} parent=5 // pred_region
        %s335 = ssub.s32 %s29, 1
        // Predicated region
        $region13: #{tpu_custom_call.1} parent=11 // pred_check
          %p336 = pneg %p90
        $region14: #{tpu_custom_call.1} parent=11 // pred_check_branch
          %338 = sbr.rel (%p336) target = $region16
        $region15: #{tpu_custom_call.1} parent=11 // pred_region
          _
        $region16: #{tpu_custom_call.1} parent=11 // pred_fallthru
          _
        // Predicated region
        $region17: #{tpu_custom_call.1} parent=11 // pred_check
          %p339 = pneg %p111
        $region18: #{tpu_custom_call.1} parent=11 // pred_check_branch
          %341 = sbr.rel (%p339) target = $region20
        $region19: #{tpu_custom_call.1} parent=11 // pred_region
          _
        $region20: #{tpu_custom_call.1} parent=11 // pred_fallthru
          _
        // Predicated region
        $region21: #{tpu_custom_call.1} parent=11 // pred_check
          %p342 = pneg %p132
        $region22: #{tpu_custom_call.1} parent=11 // pred_check_branch
          %344 = sbr.rel (%p342) target = $region24
        $region23: #{tpu_custom_call.1} parent=11 // pred_region
          %s346 = ssub.s32 4096, 4096
          %347 = vsyncadd [#allocation6], %s346
          %s348 = sshll.u32 [#allocation5], 4
          %s349 = int_to_ptr.vmem [resolvable:$true] %s348
          %354 = dma.hbm_to_vmem [thread:$0]  %s3, 4096, %s349, [#allocation6], 128, 128, 8
        $region24: #{tpu_custom_call.1} parent=11 // pred_fallthru
          _
        // Predicated region
        $region25: #{tpu_custom_call.1} parent=11 // pred_check
          %p355 = pneg %p153
        $region26: #{tpu_custom_call.1} parent=11 // pred_check_branch
          %357 = sbr.rel (%p355) target = $region28
        $region27: #{tpu_custom_call.1} parent=11 // pred_region
          _
        $region28: #{tpu_custom_call.1} parent=11 // pred_fallthru
          _
        // Predicated region
        $region29: #{tpu_custom_call.1} parent=11 // pred_check
          %p358 = pneg %p174
        $region30: #{tpu_custom_call.1} parent=11 // pred_check_branch
          %360 = sbr.rel (%p358) target = $region32
        $region31: #{tpu_custom_call.1} parent=11 // pred_region
          %s362 = ssub.s32 4096, 4096
          %363 = vsyncadd [#allocation6], %s362
          %s364 = sshll.u32 [#allocation7], 4
          %s365 = int_to_ptr.vmem [resolvable:$true] %s364
          %370 = dma.hbm_to_vmem [thread:$0]  %s5, 4096, %s365, [#allocation6], 128, 128, 8
        $region32: #{tpu_custom_call.1} parent=11 // pred_fallthru
          _
        // Predicated region
        $region33: #{tpu_custom_call.1} parent=11 // pred_check
          %p371 = pneg %p195
        $region34: #{tpu_custom_call.1} parent=11 // pred_check_branch
          %373 = sbr.rel (%p371) target = $region36
        $region35: #{tpu_custom_call.1} parent=11 // pred_region
          _
        $region36: #{tpu_custom_call.1} parent=11 // pred_fallthru
          _
        // Predicated region
        $region37: #{tpu_custom_call.1} parent=11 // pred_check
          %p374 = pneg %p216
        $region38: #{tpu_custom_call.1} parent=11 // pred_check_branch
          %376 = sbr.rel (%p374) target = $region40
        $region39: #{tpu_custom_call.1} parent=11 // pred_region
          %s378 = ssub.s32 4096, 4096
          %379 = vsyncadd [#allocation9], %s378
          %s380 = sshll.u32 [#allocation8], 4
          %s381 = int_to_ptr.vmem [resolvable:$true] %s380
          %386 = dma.hbm_to_vmem [thread:$0]  %s7, 4096, %s381, [#allocation9], 128, 128, 8
        $region40: #{tpu_custom_call.1} parent=11 // pred_fallthru
          _
        // Predicated region
        $region41: #{tpu_custom_call.1} parent=11 // pred_check
          %p387 = pneg %p237
        $region42: #{tpu_custom_call.1} parent=11 // pred_check_branch
          %389 = sbr.rel (%p387) target = $region44
        $region43: #{tpu_custom_call.1} parent=11 // pred_region
          _
        $region44: #{tpu_custom_call.1} parent=11 // pred_fallthru
          _
      $region12: #{tpu_custom_call.1} parent=5 // pred_fallthru
        _
      %p390 = scmp.lt.s32.totalorder %s29, 4
      // Predicated region
      $region45: #{tpu_custom_call.1} parent=5 // pred_check
        %p391 = pneg %p390
      $region46: #{tpu_custom_call.1} parent=5 // pred_check_branch
        %393 = sbr.rel (%p391) target = $region48
      $region47: #{tpu_custom_call.1} parent=5 // pred_region
        // Predicated region
        $region49: #{tpu_custom_call.1} parent=47 // pred_check
          %p394 = pneg %p63
        $region50: #{tpu_custom_call.1} parent=47 // pred_check_branch
          %396 = sbr.rel (%p394) target = $region52
        $region51: #{tpu_custom_call.1} parent=47 // pred_region
          %s397 = sand.u32 %s53, 1
          %s398 = scalar_lea.sflag [#allocation3], %s397
          %s399 = sand.u32 %s53, 1
          %s400 = smul.addr %s399, 512
          %s401 = scalar_lea.vmem [#allocation2], %s400
          %s402 = smul.u32 32, %s37
          %s404 = ssub.s32 8192, 8192
          %405 = vsyncadd %s398, %s404
          %s406 = smul.addr %s402, 2
          %s407 = smul.addr %s36, 128
          %s408 = sadd.s32 %s406, %s407
          %s409 = smul.addr %s408, 128
          %s410 = scalar_lea.hbm %s0, %s409
          %s411 = sshll.u32 %s401, 4
          %s412 = int_to_ptr.vmem [resolvable:$true] %s411
          %417 = dma.hbm_to_vmem [thread:$0]  %s410, 8192, %s412, %s398, 256, 256, 16
        $region52: #{tpu_custom_call.1} parent=47 // pred_fallthru
          _
      $region48: #{tpu_custom_call.1} parent=5 // pred_fallthru
        _
      %p418 = scmp.le.s32.totalorder 1, %s29
      %p419 = scmp.lt.s32.totalorder %s29, 5
      %p420 = pnand %p418, %p419
      %p421 = pneg %p420
      // Predicated region
      $region53: #{tpu_custom_call.1} parent=5 // pred_check
        _
      $region54: #{tpu_custom_call.1} parent=5 // pred_check_branch
        %423 = sbr.rel (%p420) target = $region56
      $region55: #{tpu_custom_call.1} parent=5 // pred_region
        %s424 = ssub.s32 %s29, 1
        %s425 = sand.u32 %s56, 1
        %s426 = scalar_lea.sflag [#allocation3], %s425
        %s427 = sand.u32 %s56, 1
        %s428 = smul.addr %s427, 512
        %s429 = scalar_lea.vmem [#allocation2], %s428
        // Predicated region
        $region57: #{tpu_custom_call.1} parent=55 // pred_check
          %p430 = pneg %p69
        $region58: #{tpu_custom_call.1} parent=55 // pred_check_branch
          %432 = sbr.rel (%p430) target = $region60
        $region59: #{tpu_custom_call.1} parent=55 // pred_region
          %433 = dma.done %s426, 8192
        $region60: #{tpu_custom_call.1} parent=55 // pred_fallthru
          _
        // Predicated region
        $region61: #{tpu_custom_call.1} parent=55 // pred_check
          %p434 = pneg %p132
        $region62: #{tpu_custom_call.1} parent=55 // pred_check_branch
          %436 = sbr.rel (%p434) target = $region64
        $region63: #{tpu_custom_call.1} parent=55 // pred_region
          %437 = dma.done [#allocation6], 4096
        $region64: #{tpu_custom_call.1} parent=55 // pred_fallthru
          _
        // Predicated region
        $region65: #{tpu_custom_call.1} parent=55 // pred_check
          %p438 = pneg %p174
        $region66: #{tpu_custom_call.1} parent=55 // pred_check_branch
          %440 = sbr.rel (%p438) target = $region68
        $region67: #{tpu_custom_call.1} parent=55 // pred_region
          %441 = dma.done [#allocation6], 4096
        $region68: #{tpu_custom_call.1} parent=55 // pred_fallthru
          _
        // Predicated region
        $region69: #{tpu_custom_call.1} parent=55 // pred_check
          %p442 = pneg %p216
        $region70: #{tpu_custom_call.1} parent=55 // pred_check_branch
          %444 = sbr.rel (%p442) target = $region72
        $region71: #{tpu_custom_call.1} parent=55 // pred_region
          %445 = dma.done [#allocation9], 4096
        $region72: #{tpu_custom_call.1} parent=55 // pred_fallthru
          _
        %s446 = sand.u32 %s56, 1
        %s447 = scalar_lea.sflag [#allocation3], %s446
        %s448 = sand.u32 %s56, 1
        %s449 = smul.addr %s448, 512
        %s450 = scalar_lea.vmem [#allocation2], %s449
        %p451 = pneg %p69
        %p452 = pneg %p66
        %p453 = pneg %p90
        %p454 = pneg %p87
        %p455 = pneg %p111
        %p456 = pneg %p108
        %p457 = pneg %p132
        %p458 = pneg %p129
        %p459 = pneg %p153
        %p460 = pneg %p150
        %p461 = pneg %p174
        %p462 = pneg %p171
        %p463 = pneg %p195
        %p464 = pneg %p192
        %p465 = pneg %p216
        %p466 = pneg %p213
        %p467 = pneg %p237
        %p468 = pneg %p234
        %p469 = pneg %p265
        %p470 = pneg %p262
        %s471 = sand.u32 %s252, 1
        %s472 = scalar_lea.sflag [#allocation4], %s471
        %s473 = sand.u32 %s252, 1
        %s474 = smul.addr %s473, 256
        %s475 = scalar_lea.vmem [#allocation10], %s474
        %p476 = pneg %p293
        %p477 = pneg %p290
        %s478 = sand.u32 %s34, 1
        %s479 = scalar_lea.sflag [#allocation12], %s478
        %s480 = sand.u32 %s280, 1
        %s481 = smul.addr %s480, 256
        %s482 = scalar_lea.vmem [#allocation11], %s481
        %p483 = pneg %p321
        %p484 = pneg %p318
        %s485 = sand.u32 %s34, 1
        %s486 = scalar_lea.sflag [#allocation12], %s485
        %s487 = sand.u32 %s308, 1
        %s488 = smul.addr %s487, 256
        %s489 = scalar_lea.vmem [#allocation13], %s488
        %s490 = smul.u32 32, %s39
        %s491 = smul.u32 32, %s39
        %s492 = smul.u32 32, %s39
        %s493 = smul.u32 32, %s39
        %v494 = vld [vmem:[%s429] sm:$0xff]
        %v495 = vld [vmem:[%s429 + $0x8] sm:$0xff]
        %v496 = vld [vmem:[%s429 + $0x10] sm:$0xff]
        %v497 = vld [vmem:[%s429 + $0x18] sm:$0xff]
        %v498 = vld [vmem:[%s429 + $0x20] sm:$0xff]
        %v499 = vld [vmem:[%s429 + $0x28] sm:$0xff]
        %v500 = vld [vmem:[%s429 + $0x30] sm:$0xff]
        %v501 = vld [vmem:[%s429 + $0x38] sm:$0xff]
        %v502 = vld [vmem:[%s429 + $0x40] sm:$0xff]
        %v503 = vld [vmem:[%s429 + $0x48] sm:$0xff]
        %v504 = vld [vmem:[%s429 + $0x50] sm:$0xff]
        %v505 = vld [vmem:[%s429 + $0x58] sm:$0xff]
        %v506 = vld [vmem:[%s429 + $0x60] sm:$0xff]
        %v507 = vld [vmem:[%s429 + $0x68] sm:$0xff]
        %v508 = vld [vmem:[%s429 + $0x70] sm:$0xff]
        %v509 = vld [vmem:[%s429 + $0x78] sm:$0xff]
        %v510 = vld [vmem:[%s429 + $0x80] sm:$0xff]
        %v511 = vld [vmem:[%s429 + $0x88] sm:$0xff]
        %v512 = vld [vmem:[%s429 + $0x90] sm:$0xff]
        %v513 = vld [vmem:[%s429 + $0x98] sm:$0xff]
        %v514 = vld [vmem:[%s429 + $0xa0] sm:$0xff]
        %v515 = vld [vmem:[%s429 + $0xa8] sm:$0xff]
        %v516 = vld [vmem:[%s429 + $0xb0] sm:$0xff]
        %v517 = vld [vmem:[%s429 + $0xb8] sm:$0xff]
        %v518 = vld [vmem:[%s429 + $0xc0] sm:$0xff]
        %v519 = vld [vmem:[%s429 + $0xc8] sm:$0xff]
        %v520 = vld [vmem:[%s429 + $0xd0] sm:$0xff]
        %v521 = vld [vmem:[%s429 + $0xd8] sm:$0xff]
        %v522 = vld [vmem:[%s429 + $0xe0] sm:$0xff]
        %v523 = vld [vmem:[%s429 + $0xe8] sm:$0xff]
        %v524 = vld [vmem:[%s429 + $0xf0] sm:$0xff]
        %v525 = vld [vmem:[%s429 + $0xf8] sm:$0xff]
        %v526 = vld [vmem:[%s429 + $0x100] sm:$0xff]
        %v527 = vld [vmem:[%s429 + $0x108] sm:$0xff]
        %v528 = vld [vmem:[%s429 + $0x110] sm:$0xff]
        %v529 = vld [vmem:[%s429 + $0x118] sm:$0xff]
        %v530 = vld [vmem:[%s429 + $0x120] sm:$0xff]
        %v531 = vld [vmem:[%s429 + $0x128] sm:$0xff]
        %v532 = vld [vmem:[%s429 + $0x130] sm:$0xff]
        %v533 = vld [vmem:[%s429 + $0x138] sm:$0xff]
        %v534 = vld [vmem:[%s429 + $0x140] sm:$0xff]
        %v535 = vld [vmem:[%s429 + $0x148] sm:$0xff]
        %v536 = vld [vmem:[%s429 + $0x150] sm:$0xff]
        %v537 = vld [vmem:[%s429 + $0x158] sm:$0xff]
        %v538 = vld [vmem:[%s429 + $0x160] sm:$0xff]
        %v539 = vld [vmem:[%s429 + $0x168] sm:$0xff]
        %v540 = vld [vmem:[%s429 + $0x170] sm:$0xff]
        %v541 = vld [vmem:[%s429 + $0x178] sm:$0xff]
        %v542 = vld [vmem:[%s429 + $0x180] sm:$0xff]
        %v543 = vld [vmem:[%s429 + $0x188] sm:$0xff]
        %v544 = vld [vmem:[%s429 + $0x190] sm:$0xff]
        %v545 = vld [vmem:[%s429 + $0x198] sm:$0xff]
        %v546 = vld [vmem:[%s429 + $0x1a0] sm:$0xff]
        %v547 = vld [vmem:[%s429 + $0x1a8] sm:$0xff]
        %v548 = vld [vmem:[%s429 + $0x1b0] sm:$0xff]
        %v549 = vld [vmem:[%s429 + $0x1b8] sm:$0xff]
        %v550 = vld [vmem:[%s429 + $0x1c0] sm:$0xff]
        %v551 = vld [vmem:[%s429 + $0x1c8] sm:$0xff]
        %v552 = vld [vmem:[%s429 + $0x1d0] sm:$0xff]
        %v553 = vld [vmem:[%s429 + $0x1d8] sm:$0xff]
        %v554 = vld [vmem:[%s429 + $0x1e0] sm:$0xff]
        %v555 = vld [vmem:[%s429 + $0x1e8] sm:$0xff]
        %v556 = vld [vmem:[%s429 + $0x1f0] sm:$0xff]
        %v557 = vld [vmem:[%s429 + $0x1f8] sm:$0xff]
        %v558 = vld [vmem:[%s1] sm:$0x3]
        %v559 = vld [vmem:[%s2] sm:$0x3]
        %v560 = vadd.f32 %v494, %v495
        %561 = vadd.xlane.f32.xlu0 %v560
        %v562 = vpop.xlane.xlu0 %561
        %v563 = vadd.f32 %v496, %v497
        %564 = vadd.xlane.f32.xlu0 %v563
        %v565 = vpop.xlane.xlu0 %564
        %v566 = vadd.f32 %v498, %v499
        %567 = vadd.xlane.f32.xlu0 %v566
        %v568 = vpop.xlane.xlu0 %567
        %v569 = vadd.f32 %v500, %v501
        %570 = vadd.xlane.f32.xlu0 %v569
        %v571 = vpop.xlane.xlu0 %570
        %v572 = vadd.f32 %v502, %v503
        %573 = vadd.xlane.f32.xlu0 %v572
        %v574 = vpop.xlane.xlu0 %573
        %v575 = vadd.f32 %v504, %v505
        %576 = vadd.xlane.f32.xlu0 %v575
        %v577 = vpop.xlane.xlu0 %576
        %v578 = vadd.f32 %v506, %v507
        %579 = vadd.xlane.f32.xlu0 %v578
        %v580 = vpop.xlane.xlu0 %579
        %v581 = vadd.f32 %v508, %v509
        %582 = vadd.xlane.f32.xlu0 %v581
        %v583 = vpop.xlane.xlu0 %582
        %v584 = vadd.f32 %v510, %v511
        %585 = vadd.xlane.f32.xlu0 %v584
        %v586 = vpop.xlane.xlu0 %585
        %v587 = vadd.f32 %v512, %v513
        %588 = vadd.xlane.f32.xlu0 %v587
        %v589 = vpop.xlane.xlu0 %588
        %v590 = vadd.f32 %v514, %v515
        %591 = vadd.xlane.f32.xlu0 %v590
        %v592 = vpop.xlane.xlu0 %591
        %v593 = vadd.f32 %v516, %v517
        %594 = vadd.xlane.f32.xlu0 %v593
        %v595 = vpop.xlane.xlu0 %594
        %v596 = vadd.f32 %v518, %v519
        %597 = vadd.xlane.f32.xlu0 %v596
        %v598 = vpop.xlane.xlu0 %597
        %v599 = vadd.f32 %v520, %v521
        %600 = vadd.xlane.f32.xlu0 %v599
        %v601 = vpop.xlane.xlu0 %600
        %v602 = vadd.f32 %v522, %v523
        %603 = vadd.xlane.f32.xlu0 %v602
        %v604 = vpop.xlane.xlu0 %603
        %v605 = vadd.f32 %v524, %v525
        %606 = vadd.xlane.f32.xlu0 %v605
        %v607 = vpop.xlane.xlu0 %606
        %v608 = vadd.f32 %v526, %v527
        %609 = vadd.xlane.f32.xlu0 %v608
        %v610 = vpop.xlane.xlu0 %609
        %v611 = vadd.f32 %v528, %v529
        %612 = vadd.xlane.f32.xlu0 %v611
        %v613 = vpop.xlane.xlu0 %612
        %v614 = vadd.f32 %v530, %v531
        %615 = vadd.xlane.f32.xlu0 %v614
        %v616 = vpop.xlane.xlu0 %615
        %v617 = vadd.f32 %v532, %v533
        %618 = vadd.xlane.f32.xlu0 %v617
        %v619 = vpop.xlane.xlu0 %618
        %v620 = vadd.f32 %v534, %v535
        %621 = vadd.xlane.f32.xlu0 %v620
        %v622 = vpop.xlane.xlu0 %621
        %v623 = vadd.f32 %v536, %v537
        %624 = vadd.xlane.f32.xlu0 %v623
        %v625 = vpop.xlane.xlu0 %624
        %v626 = vadd.f32 %v538, %v539
        %627 = vadd.xlane.f32.xlu0 %v626
        %v628 = vpop.xlane.xlu0 %627
        %v629 = vadd.f32 %v540, %v541
        %630 = vadd.xlane.f32.xlu0 %v629
        %v631 = vpop.xlane.xlu0 %630
        %v632 = vadd.f32 %v542, %v543
        %633 = vadd.xlane.f32.xlu0 %v632
        %v634 = vpop.xlane.xlu0 %633
        %v635 = vadd.f32 %v544, %v545
        %636 = vadd.xlane.f32.xlu0 %v635
        %v637 = vpop.xlane.xlu0 %636
        %v638 = vadd.f32 %v546, %v547
        %639 = vadd.xlane.f32.xlu0 %v638
        %v640 = vpop.xlane.xlu0 %639
        %v641 = vadd.f32 %v548, %v549
        %642 = vadd.xlane.f32.xlu0 %v641
        %v643 = vpop.xlane.xlu0 %642
        %v644 = vadd.f32 %v550, %v551
        %645 = vadd.xlane.f32.xlu0 %v644
        %v646 = vpop.xlane.xlu0 %645
        %v647 = vadd.f32 %v552, %v553
        %648 = vadd.xlane.f32.xlu0 %v647
        %v649 = vpop.xlane.xlu0 %648
        %v650 = vadd.f32 %v554, %v555
        %651 = vadd.xlane.f32.xlu0 %v650
        %v652 = vpop.xlane.xlu0 %651
        %v653 = vadd.f32 %v556, %v557
        %654 = vadd.xlane.f32.xlu0 %v653
        %v655 = vpop.xlane.xlu0 %654
        %v656 = vrcp.pop 256.0
        %v657 = vmul.f32 %v562, %v656
        %v658 = vmul.f32 %v565, %v656
        %v659 = vmul.f32 %v568, %v656
        %v660 = vmul.f32 %v571, %v656
        %v661 = vmul.f32 %v574, %v656
        %v662 = vmul.f32 %v577, %v656
        %v663 = vmul.f32 %v580, %v656
        %v664 = vmul.f32 %v583, %v656
        %v665 = vmul.f32 %v586, %v656
        %v666 = vmul.f32 %v589, %v656
        %v667 = vmul.f32 %v592, %v656
        %v668 = vmul.f32 %v595, %v656
        %v669 = vmul.f32 %v598, %v656
        %v670 = vmul.f32 %v601, %v656
        %v671 = vmul.f32 %v604, %v656
        %v672 = vmul.f32 %v607, %v656
        %v673 = vmul.f32 %v610, %v656
        %v674 = vmul.f32 %v613, %v656
        %v675 = vmul.f32 %v616, %v656
        %v676 = vmul.f32 %v619, %v656
        %v677 = vmul.f32 %v622, %v656
        %v678 = vmul.f32 %v625, %v656
        %v679 = vmul.f32 %v628, %v656
        %v680 = vmul.f32 %v631, %v656
        %v681 = vmul.f32 %v634, %v656
        %v682 = vmul.f32 %v637, %v656
        %v683 = vmul.f32 %v640, %v656
        %v684 = vmul.f32 %v643, %v656
        %v685 = vmul.f32 %v646, %v656
        %v686 = vmul.f32 %v649, %v656
        %v687 = vmul.f32 %v652, %v656
        %v688 = vmul.f32 %v655, %v656
        %v689 = vsub.f32 %v494, %v657
        %v690 = vsub.f32 %v495, %v657
        %v691 = vsub.f32 %v496, %v658
        %v692 = vsub.f32 %v497, %v658
        %v693 = vsub.f32 %v498, %v659
        %v694 = vsub.f32 %v499, %v659
        %v695 = vsub.f32 %v500, %v660
        %v696 = vsub.f32 %v501, %v660
        %v697 = vsub.f32 %v502, %v661
        %v698 = vsub.f32 %v503, %v661
        %v699 = vsub.f32 %v504, %v662
        %v700 = vsub.f32 %v505, %v662
        %v701 = vsub.f32 %v506, %v663
        %v702 = vsub.f32 %v507, %v663
        %v703 = vsub.f32 %v508, %v664
        %v704 = vsub.f32 %v509, %v664
        %v705 = vsub.f32 %v510, %v665
        %v706 = vsub.f32 %v511, %v665
        %v707 = vsub.f32 %v512, %v666
        %v708 = vsub.f32 %v513, %v666
        %v709 = vsub.f32 %v514, %v667
        %v710 = vsub.f32 %v515, %v667
        %v711 = vsub.f32 %v516, %v668
        %v712 = vsub.f32 %v517, %v668
        %v713 = vsub.f32 %v518, %v669
        %v714 = vsub.f32 %v519, %v669
        %v715 = vsub.f32 %v520, %v670
        %v716 = vsub.f32 %v521, %v670
        %v717 = vsub.f32 %v522, %v671
        %v718 = vsub.f32 %v523, %v671
        %v719 = vsub.f32 %v524, %v672
        %v720 = vsub.f32 %v525, %v672
        %v721 = vsub.f32 %v526, %v673
        %v722 = vsub.f32 %v527, %v673
        %v723 = vsub.f32 %v528, %v674
        %v724 = vsub.f32 %v529, %v674
        %v725 = vsub.f32 %v530, %v675
        %v726 = vsub.f32 %v531, %v675
        %v727 = vsub.f32 %v532, %v676
        %v728 = vsub.f32 %v533, %v676
        %v729 = vsub.f32 %v534, %v677
        %v730 = vsub.f32 %v535, %v677
        %v731 = vsub.f32 %v536, %v678
        %v732 = vsub.f32 %v537, %v678
        %v733 = vsub.f32 %v538, %v679
        %v734 = vsub.f32 %v539, %v679
        %v735 = vsub.f32 %v540, %v680
        %v736 = vsub.f32 %v541, %v680
        %v737 = vsub.f32 %v542, %v681
        %v738 = vsub.f32 %v543, %v681
        %v739 = vsub.f32 %v544, %v682
        %v740 = vsub.f32 %v545, %v682
        %v741 = vsub.f32 %v546, %v683
        %v742 = vsub.f32 %v547, %v683
        %v743 = vsub.f32 %v548, %v684
        %v744 = vsub.f32 %v549, %v684
        %v745 = vsub.f32 %v550, %v685
        %v746 = vsub.f32 %v551, %v685
        %v747 = vsub.f32 %v552, %v686
        %v748 = vsub.f32 %v553, %v686
        %v749 = vsub.f32 %v554, %v687
        %v750 = vsub.f32 %v555, %v687
        %v751 = vsub.f32 %v556, %v688
        %v752 = vsub.f32 %v557, %v688
        %v753 = vmul.f32 %v689, %v689
        %v754 = vmul.f32 %v690, %v690
        %v755 = vmul.f32 %v691, %v691
        %v756 = vmul.f32 %v692, %v692
        %v757 = vmul.f32 %v693, %v693
        %v758 = vmul.f32 %v694, %v694
        %v759 = vmul.f32 %v695, %v695
        %v760 = vmul.f32 %v696, %v696
        %v761 = vmul.f32 %v697, %v697
        %v762 = vmul.f32 %v698, %v698
        %v763 = vmul.f32 %v699, %v699
        %v764 = vmul.f32 %v700, %v700
        %v765 = vmul.f32 %v701, %v701
        %v766 = vmul.f32 %v702, %v702
        %v767 = vmul.f32 %v703, %v703
        %v768 = vmul.f32 %v704, %v704
        %v769 = vmul.f32 %v705, %v705
        %v770 = vmul.f32 %v706, %v706
        %v771 = vmul.f32 %v707, %v707
        %v772 = vmul.f32 %v708, %v708
        %v773 = vmul.f32 %v709, %v709
        %v774 = vmul.f32 %v710, %v710
        %v775 = vmul.f32 %v711, %v711
        %v776 = vmul.f32 %v712, %v712
        %v777 = vmul.f32 %v713, %v713
        %v778 = vmul.f32 %v714, %v714
        %v779 = vmul.f32 %v715, %v715
        %v780 = vmul.f32 %v716, %v716
        %v781 = vmul.f32 %v717, %v717
        %v782 = vmul.f32 %v718, %v718
        %v783 = vmul.f32 %v719, %v719
        %v784 = vmul.f32 %v720, %v720
        %v785 = vmul.f32 %v721, %v721
        %v786 = vmul.f32 %v722, %v722
        %v787 = vmul.f32 %v723, %v723
        %v788 = vmul.f32 %v724, %v724
        %v789 = vmul.f32 %v725, %v725
        %v790 = vmul.f32 %v726, %v726
        %v791 = vmul.f32 %v727, %v727
        %v792 = vmul.f32 %v728, %v728
        %v793 = vmul.f32 %v729, %v729
        %v794 = vmul.f32 %v730, %v730
        %v795 = vmul.f32 %v731, %v731
        %v796 = vmul.f32 %v732, %v732
        %v797 = vmul.f32 %v733, %v733
        %v798 = vmul.f32 %v734, %v734
        %v799 = vmul.f32 %v735, %v735
        %v800 = vmul.f32 %v736, %v736
        %v801 = vmul.f32 %v737, %v737
        %v802 = vmul.f32 %v738, %v738
        %v803 = vmul.f32 %v739, %v739
        %v804 = vmul.f32 %v740, %v740
        %v805 = vmul.f32 %v741, %v741
        %v806 = vmul.f32 %v742, %v742
        %v807 = vmul.f32 %v743, %v743
        %v808 = vmul.f32 %v744, %v744
        %v809 = vmul.f32 %v745, %v745
        %v810 = vmul.f32 %v746, %v746
        %v811 = vmul.f32 %v747, %v747
        %v812 = vmul.f32 %v748, %v748
        %v813 = vmul.f32 %v749, %v749
        %v814 = vmul.f32 %v750, %v750
        %v815 = vmul.f32 %v751, %v751
        %v816 = vmul.f32 %v752, %v752
        %v817 = vadd.f32 %v753, %v754
        %818 = vadd.xlane.f32.xlu0 %v817
        %v819 = vpop.xlane.xlu0 %818
        %v820 = vadd.f32 %v755, %v756
        %821 = vadd.xlane.f32.xlu0 %v820
        %v822 = vpop.xlane.xlu0 %821
        %v823 = vadd.f32 %v757, %v758
        %824 = vadd.xlane.f32.xlu0 %v823
        %v825 = vpop.xlane.xlu0 %824
        %v826 = vadd.f32 %v759, %v760
        %827 = vadd.xlane.f32.xlu0 %v826
        %v828 = vpop.xlane.xlu0 %827
        %v829 = vadd.f32 %v761, %v762
        %830 = vadd.xlane.f32.xlu0 %v829
        %v831 = vpop.xlane.xlu0 %830
        %v832 = vadd.f32 %v763, %v764
        %833 = vadd.xlane.f32.xlu0 %v832
        %v834 = vpop.xlane.xlu0 %833
        %v835 = vadd.f32 %v765, %v766
        %836 = vadd.xlane.f32.xlu0 %v835
        %v837 = vpop.xlane.xlu0 %836
        %v838 = vadd.f32 %v767, %v768
        %839 = vadd.xlane.f32.xlu0 %v838
        %v840 = vpop.xlane.xlu0 %839
        %v841 = vadd.f32 %v769, %v770
        %842 = vadd.xlane.f32.xlu0 %v841
        %v843 = vpop.xlane.xlu0 %842
        %v844 = vadd.f32 %v771, %v772
        %845 = vadd.xlane.f32.xlu0 %v844
        %v846 = vpop.xlane.xlu0 %845
        %v847 = vadd.f32 %v773, %v774
        %848 = vadd.xlane.f32.xlu0 %v847
        %v849 = vpop.xlane.xlu0 %848
        %v850 = vadd.f32 %v775, %v776
        %851 = vadd.xlane.f32.xlu0 %v850
        %v852 = vpop.xlane.xlu0 %851
        %v853 = vadd.f32 %v777, %v778
        %854 = vadd.xlane.f32.xlu0 %v853
        %v855 = vpop.xlane.xlu0 %854
        %v856 = vadd.f32 %v779, %v780
        %857 = vadd.xlane.f32.xlu0 %v856
        %v858 = vpop.xlane.xlu0 %857
        %v859 = vadd.f32 %v781, %v782
        %860 = vadd.xlane.f32.xlu0 %v859
        %v861 = vpop.xlane.xlu0 %860
        %v862 = vadd.f32 %v783, %v784
        %863 = vadd.xlane.f32.xlu0 %v862
        %v864 = vpop.xlane.xlu0 %863
        %v865 = vadd.f32 %v785, %v786
        %866 = vadd.xlane.f32.xlu0 %v865
        %v867 = vpop.xlane.xlu0 %866
        %v868 = vadd.f32 %v787, %v788
        %869 = vadd.xlane.f32.xlu0 %v868
        %v870 = vpop.xlane.xlu0 %869
        %v871 = vadd.f32 %v789, %v790
        %872 = vadd.xlane.f32.xlu0 %v871
        %v873 = vpop.xlane.xlu0 %872
        %v874 = vadd.f32 %v791, %v792
        %875 = vadd.xlane.f32.xlu0 %v874
        %v876 = vpop.xlane.xlu0 %875
        %v877 = vadd.f32 %v793, %v794
        %878 = vadd.xlane.f32.xlu0 %v877
        %v879 = vpop.xlane.xlu0 %878
        %v880 = vadd.f32 %v795, %v796
        %881 = vadd.xlane.f32.xlu0 %v880
        %v882 = vpop.xlane.xlu0 %881
        %v883 = vadd.f32 %v797, %v798
        %884 = vadd.xlane.f32.xlu0 %v883
        %v885 = vpop.xlane.xlu0 %884
        %v886 = vadd.f32 %v799, %v800
        %887 = vadd.xlane.f32.xlu0 %v886
        %v888 = vpop.xlane.xlu0 %887
        %v889 = vadd.f32 %v801, %v802
        %890 = vadd.xlane.f32.xlu0 %v889
        %v891 = vpop.xlane.xlu0 %890
        %v892 = vadd.f32 %v803, %v804
        %893 = vadd.xlane.f32.xlu0 %v892
        %v894 = vpop.xlane.xlu0 %893
        %v895 = vadd.f32 %v805, %v806
        %896 = vadd.xlane.f32.xlu0 %v895
        %v897 = vpop.xlane.xlu0 %896
        %v898 = vadd.f32 %v807, %v808
        %899 = vadd.xlane.f32.xlu0 %v898
        %v900 = vpop.xlane.xlu0 %899
        %v901 = vadd.f32 %v809, %v810
        %902 = vadd.xlane.f32.xlu0 %v901
        %v903 = vpop.xlane.xlu0 %902
        %v904 = vadd.f32 %v811, %v812
        %905 = vadd.xlane.f32.xlu0 %v904
        %v906 = vpop.xlane.xlu0 %905
        %v907 = vadd.f32 %v813, %v814
        %908 = vadd.xlane.f32.xlu0 %v907
        %v909 = vpop.xlane.xlu0 %908
        %v910 = vadd.f32 %v815, %v816
        %911 = vadd.xlane.f32.xlu0 %v910
        %v912 = vpop.xlane.xlu0 %911
        %v913 = vmul.f32 %v819, %v656
        %v914 = vmul.f32 %v822, %v656
        %v915 = vmul.f32 %v825, %v656
        %v916 = vmul.f32 %v828, %v656
        %v917 = vmul.f32 %v831, %v656
        %v918 = vmul.f32 %v834, %v656
        %v919 = vmul.f32 %v837, %v656
        %v920 = vmul.f32 %v840, %v656
        %v921 = vmul.f32 %v843, %v656
        %v922 = vmul.f32 %v846, %v656
        %v923 = vmul.f32 %v849, %v656
        %v924 = vmul.f32 %v852, %v656
        %v925 = vmul.f32 %v855, %v656
        %v926 = vmul.f32 %v858, %v656
        %v927 = vmul.f32 %v861, %v656
        %v928 = vmul.f32 %v864, %v656
        %v929 = vmul.f32 %v867, %v656
        %v930 = vmul.f32 %v870, %v656
        %v931 = vmul.f32 %v873, %v656
        %v932 = vmul.f32 %v876, %v656
        %v933 = vmul.f32 %v879, %v656
        %v934 = vmul.f32 %v882, %v656
        %v935 = vmul.f32 %v885, %v656
        %v936 = vmul.f32 %v888, %v656
        %v937 = vmul.f32 %v891, %v656
        %v938 = vmul.f32 %v894, %v656
        %v939 = vmul.f32 %v897, %v656
        %v940 = vmul.f32 %v900, %v656
        %v941 = vmul.f32 %v903, %v656
        %v942 = vmul.f32 %v906, %v656
        %v943 = vmul.f32 %v909, %v656
        %v944 = vmul.f32 %v912, %v656
        %v945 = vadd.f32 %v913, 1e-05
        %v946 = vadd.f32 %v914, 1e-05
        %v947 = vadd.f32 %v915, 1e-05
        %v948 = vadd.f32 %v916, 1e-05
        %v949 = vadd.f32 %v917, 1e-05
        %v950 = vadd.f32 %v918, 1e-05
        %v951 = vadd.f32 %v919, 1e-05
        %v952 = vadd.f32 %v920, 1e-05
        %v953 = vadd.f32 %v921, 1e-05
        %v954 = vadd.f32 %v922, 1e-05
        %v955 = vadd.f32 %v923, 1e-05
        %v956 = vadd.f32 %v924, 1e-05
        %v957 = vadd.f32 %v925, 1e-05
        %v958 = vadd.f32 %v926, 1e-05
        %v959 = vadd.f32 %v927, 1e-05
        %v960 = vadd.f32 %v928, 1e-05
        %v961 = vadd.f32 %v929, 1e-05
        %v962 = vadd.f32 %v930, 1e-05
        %v963 = vadd.f32 %v931, 1e-05
        %v964 = vadd.f32 %v932, 1e-05
        %v965 = vadd.f32 %v933, 1e-05
        %v966 = vadd.f32 %v934, 1e-05
        %v967 = vadd.f32 %v935, 1e-05
        %v968 = vadd.f32 %v936, 1e-05
        %v969 = vadd.f32 %v937, 1e-05
        %v970 = vadd.f32 %v938, 1e-05
        %v971 = vadd.f32 %v939, 1e-05
        %v972 = vadd.f32 %v940, 1e-05
        %v973 = vadd.f32 %v941, 1e-05
        %v974 = vadd.f32 %v942, 1e-05
        %v975 = vadd.f32 %v943, 1e-05
        %v976 = vadd.f32 %v944, 1e-05
        %v977 = vrsqrt.pop %v945
        %v978 = vrsqrt.pop %v946
        %v979 = vrsqrt.pop %v947
        %v980 = vrsqrt.pop %v948
        %v981 = vrsqrt.pop %v949
        %v982 = vrsqrt.pop %v950
        %v983 = vrsqrt.pop %v951
        %v984 = vrsqrt.pop %v952
        %v985 = vrsqrt.pop %v953
        %v986 = vrsqrt.pop %v954
        %v987 = vrsqrt.pop %v955
        %v988 = vrsqrt.pop %v956
        %v989 = vrsqrt.pop %v957
        %v990 = vrsqrt.pop %v958
        %v991 = vrsqrt.pop %v959
        %v992 = vrsqrt.pop %v960
        %v993 = vrsqrt.pop %v961
        %v994 = vrsqrt.pop %v962
        %v995 = vrsqrt.pop %v963
        %v996 = vrsqrt.pop %v964
        %v997 = vrsqrt.pop %v965
        %v998 = vrsqrt.pop %v966
        %v999 = vrsqrt.pop %v967
        %v1000 = vrsqrt.pop %v968
        %v1001 = vrsqrt.pop %v969
        %v1002 = vrsqrt.pop %v970
        %v1003 = vrsqrt.pop %v971
        %v1004 = vrsqrt.pop %v972
        %v1005 = vrsqrt.pop %v973
        %v1006 = vrsqrt.pop %v974
        %v1007 = vrsqrt.pop %v975
        %v1008 = vrsqrt.pop %v976
        %v1009 = vmul.f32 %v689, %v977
        %v1010 = vmul.f32 %v690, %v977
        %v1011 = vmul.f32 %v691, %v978
        %v1012 = vmul.f32 %v692, %v978
        %v1013 = vmul.f32 %v693, %v979
        %v1014 = vmul.f32 %v694, %v979
        %v1015 = vmul.f32 %v695, %v980
        %v1016 = vmul.f32 %v696, %v980
        %v1017 = vmul.f32 %v697, %v981
        %v1018 = vmul.f32 %v698, %v981
        %v1019 = vmul.f32 %v699, %v982
        %v1020 = vmul.f32 %v700, %v982
        %v1021 = vmul.f32 %v701, %v983
        %v1022 = vmul.f32 %v702, %v983
        %v1023 = vmul.f32 %v703, %v984
        %v1024 = vmul.f32 %v704, %v984
        %v1025 = vmul.f32 %v705, %v985
        %v1026 = vmul.f32 %v706, %v985
        %v1027 = vmul.f32 %v707, %v986
        %v1028 = vmul.f32 %v708, %v986
        %v1029 = vmul.f32 %v709, %v987
        %v1030 = vmul.f32 %v710, %v987
        %v1031 = vmul.f32 %v711, %v988
        %v1032 = vmul.f32 %v712, %v988
        %v1033 = vmul.f32 %v713, %v989
        %v1034 = vmul.f32 %v714, %v989
        %v1035 = vmul.f32 %v715, %v990
        %v1036 = vmul.f32 %v716, %v990
        %v1037 = vmul.f32 %v717, %v991
        %v1038 = vmul.f32 %v718, %v991
        %v1039 = vmul.f32 %v719, %v992
        %v1040 = vmul.f32 %v720, %v992
        %v1041 = vmul.f32 %v721, %v993
        %v1042 = vmul.f32 %v722, %v993
        %v1043 = vmul.f32 %v723, %v994
        %v1044 = vmul.f32 %v724, %v994
        %v1045 = vmul.f32 %v725, %v995
        %v1046 = vmul.f32 %v726, %v995
        %v1047 = vmul.f32 %v727, %v996
        %v1048 = vmul.f32 %v728, %v996
        %v1049 = vmul.f32 %v729, %v997
        %v1050 = vmul.f32 %v730, %v997
        %v1051 = vmul.f32 %v731, %v998
        %v1052 = vmul.f32 %v732, %v998
        %v1053 = vmul.f32 %v733, %v999
        %v1054 = vmul.f32 %v734, %v999
        %v1055 = vmul.f32 %v735, %v1000
        %v1056 = vmul.f32 %v736, %v1000
        %v1057 = vmul.f32 %v737, %v1001
        %v1058 = vmul.f32 %v738, %v1001
        %v1059 = vmul.f32 %v739, %v1002
        %v1060 = vmul.f32 %v740, %v1002
        %v1061 = vmul.f32 %v741, %v1003
        %v1062 = vmul.f32 %v742, %v1003
        %v1063 = vmul.f32 %v743, %v1004
        %v1064 = vmul.f32 %v744, %v1004
        %v1065 = vmul.f32 %v745, %v1005
        %v1066 = vmul.f32 %v746, %v1005
        %v1067 = vmul.f32 %v747, %v1006
        %v1068 = vmul.f32 %v748, %v1006
        %v1069 = vmul.f32 %v749, %v1007
        %v1070 = vmul.f32 %v750, %v1007
        %v1071 = vmul.f32 %v751, %v1008
        %v1072 = vmul.f32 %v752, %v1008
        %v1074 = vlaneseq
        %v1075 = vshrl.u32 %v1074, 7
        %v1076 = vsub.s32 0, %v1075
        %v1077 = vrot.slane %v558, %v1076
        %v1078 = vlaneseq
        %v1079 = vshrl.u32 %v1078, 7
        %v1080 = vsub.s32 1, %v1079
        %v1081 = vrot.slane %v558, %v1080
        %v1084 = vmul.f32 %v1009, %v1077
        %v1085 = vmul.f32 %v1010, %v1081
        %v1086 = vmul.f32 %v1011, %v1077
        %v1087 = vmul.f32 %v1012, %v1081
        %v1088 = vmul.f32 %v1013, %v1077
        %v1089 = vmul.f32 %v1014, %v1081
        %v1090 = vmul.f32 %v1015, %v1077
        %v1091 = vmul.f32 %v1016, %v1081
        %v1092 = vmul.f32 %v1017, %v1077
        %v1093 = vmul.f32 %v1018, %v1081
        %v1094 = vmul.f32 %v1019, %v1077
        %v1095 = vmul.f32 %v1020, %v1081
        %v1096 = vmul.f32 %v1021, %v1077
        %v1097 = vmul.f32 %v1022, %v1081
        %v1098 = vmul.f32 %v1023, %v1077
        %v1099 = vmul.f32 %v1024, %v1081
        %v1100 = vmul.f32 %v1025, %v1077
        %v1101 = vmul.f32 %v1026, %v1081
        %v1102 = vmul.f32 %v1027, %v1077
        %v1103 = vmul.f32 %v1028, %v1081
        %v1104 = vmul.f32 %v1029, %v1077
        %v1105 = vmul.f32 %v1030, %v1081
        %v1106 = vmul.f32 %v1031, %v1077
        %v1107 = vmul.f32 %v1032, %v1081
        %v1108 = vmul.f32 %v1033, %v1077
        %v1109 = vmul.f32 %v1034, %v1081
        %v1110 = vmul.f32 %v1035, %v1077
        %v1111 = vmul.f32 %v1036, %v1081
        %v1112 = vmul.f32 %v1037, %v1077
        %v1113 = vmul.f32 %v1038, %v1081
        %v1114 = vmul.f32 %v1039, %v1077
        %v1115 = vmul.f32 %v1040, %v1081
        %v1116 = vmul.f32 %v1041, %v1077
        %v1117 = vmul.f32 %v1042, %v1081
        %v1118 = vmul.f32 %v1043, %v1077
        %v1119 = vmul.f32 %v1044, %v1081
        %v1120 = vmul.f32 %v1045, %v1077
        %v1121 = vmul.f32 %v1046, %v1081
        %v1122 = vmul.f32 %v1047, %v1077
        %v1123 = vmul.f32 %v1048, %v1081
        %v1124 = vmul.f32 %v1049, %v1077
        %v1125 = vmul.f32 %v1050, %v1081
        %v1126 = vmul.f32 %v1051, %v1077
        %v1127 = vmul.f32 %v1052, %v1081
        %v1128 = vmul.f32 %v1053, %v1077
        %v1129 = vmul.f32 %v1054, %v1081
        %v1130 = vmul.f32 %v1055, %v1077
        %v1131 = vmul.f32 %v1056, %v1081
        %v1132 = vmul.f32 %v1057, %v1077
        %v1133 = vmul.f32 %v1058, %v1081
        %v1134 = vmul.f32 %v1059, %v1077
        %v1135 = vmul.f32 %v1060, %v1081
        %v1136 = vmul.f32 %v1061, %v1077
        %v1137 = vmul.f32 %v1062, %v1081
        %v1138 = vmul.f32 %v1063, %v1077
        %v1139 = vmul.f32 %v1064, %v1081
        %v1140 = vmul.f32 %v1065, %v1077
        %v1141 = vmul.f32 %v1066, %v1081
        %v1142 = vmul.f32 %v1067, %v1077
        %v1143 = vmul.f32 %v1068, %v1081
        %v1144 = vmul.f32 %v1069, %v1077
        %v1145 = vmul.f32 %v1070, %v1081
        %v1146 = vmul.f32 %v1071, %v1077
        %v1147 = vmul.f32 %v1072, %v1081
        %v1149 = vlaneseq
        %v1150 = vshrl.u32 %v1149, 7
        %v1151 = vsub.s32 0, %v1150
        %v1152 = vrot.slane %v559, %v1151
        %v1153 = vlaneseq
        %v1154 = vshrl.u32 %v1153, 7
        %v1155 = vsub.s32 1, %v1154
        %v1156 = vrot.slane %v559, %v1155
        %v1159 = vadd.f32 %v1084, %v1152
        %v1160 = vadd.f32 %v1085, %v1156
        %v1161 = vadd.f32 %v1086, %v1152
        %v1162 = vadd.f32 %v1087, %v1156
        %v1163 = vadd.f32 %v1088, %v1152
        %v1164 = vadd.f32 %v1089, %v1156
        %v1165 = vadd.f32 %v1090, %v1152
        %v1166 = vadd.f32 %v1091, %v1156
        %v1167 = vadd.f32 %v1092, %v1152
        %v1168 = vadd.f32 %v1093, %v1156
        %v1169 = vadd.f32 %v1094, %v1152
        %v1170 = vadd.f32 %v1095, %v1156
        %v1171 = vadd.f32 %v1096, %v1152
        %v1172 = vadd.f32 %v1097, %v1156
        %v1173 = vadd.f32 %v1098, %v1152
        %v1174 = vadd.f32 %v1099, %v1156
        %v1175 = vadd.f32 %v1100, %v1152
        %v1176 = vadd.f32 %v1101, %v1156
        %v1177 = vadd.f32 %v1102, %v1152
        %v1178 = vadd.f32 %v1103, %v1156
        %v1179 = vadd.f32 %v1104, %v1152
        %v1180 = vadd.f32 %v1105, %v1156
        %v1181 = vadd.f32 %v1106, %v1152
        %v1182 = vadd.f32 %v1107, %v1156
        %v1183 = vadd.f32 %v1108, %v1152
        %v1184 = vadd.f32 %v1109, %v1156
        %v1185 = vadd.f32 %v1110, %v1152
        %v1186 = vadd.f32 %v1111, %v1156
        %v1187 = vadd.f32 %v1112, %v1152
        %v1188 = vadd.f32 %v1113, %v1156
        %v1189 = vadd.f32 %v1114, %v1152
        %v1190 = vadd.f32 %v1115, %v1156
        %v1191 = vadd.f32 %v1116, %v1152
        %v1192 = vadd.f32 %v1117, %v1156
        %v1193 = vadd.f32 %v1118, %v1152
        %v1194 = vadd.f32 %v1119, %v1156
        %v1195 = vadd.f32 %v1120, %v1152
        %v1196 = vadd.f32 %v1121, %v1156
        %v1197 = vadd.f32 %v1122, %v1152
        %v1198 = vadd.f32 %v1123, %v1156
        %v1199 = vadd.f32 %v1124, %v1152
        %v1200 = vadd.f32 %v1125, %v1156
        %v1201 = vadd.f32 %v1126, %v1152
        %v1202 = vadd.f32 %v1127, %v1156
        %v1203 = vadd.f32 %v1128, %v1152
        %v1204 = vadd.f32 %v1129, %v1156
        %v1205 = vadd.f32 %v1130, %v1152
        %v1206 = vadd.f32 %v1131, %v1156
        %v1207 = vadd.f32 %v1132, %v1152
        %v1208 = vadd.f32 %v1133, %v1156
        %v1209 = vadd.f32 %v1134, %v1152
        %v1210 = vadd.f32 %v1135, %v1156
        %v1211 = vadd.f32 %v1136, %v1152
        %v1212 = vadd.f32 %v1137, %v1156
        %v1213 = vadd.f32 %v1138, %v1152
        %v1214 = vadd.f32 %v1139, %v1156
        %v1215 = vadd.f32 %v1140, %v1152
        %v1216 = vadd.f32 %v1141, %v1156
        %v1217 = vadd.f32 %v1142, %v1152
        %v1218 = vadd.f32 %v1143, %v1156
        %v1219 = vadd.f32 %v1144, %v1152
        %v1220 = vadd.f32 %v1145, %v1156
        %v1221 = vadd.f32 %v1146, %v1152
        %v1222 = vadd.f32 %v1147, %v1156
        %v1223 = vpack.c.bf16 %v1161, %v1159
        %v1224 = vpack.c.bf16 %v1162, %v1160
        %v1225 = vpack.c.bf16 %v1165, %v1163
        %v1226 = vpack.c.bf16 %v1166, %v1164
        %v1227 = vpack.c.bf16 %v1169, %v1167
        %v1228 = vpack.c.bf16 %v1170, %v1168
        %v1229 = vpack.c.bf16 %v1173, %v1171
        %v1230 = vpack.c.bf16 %v1174, %v1172
        %v1231 = vpack.c.bf16 %v1177, %v1175
        %v1232 = vpack.c.bf16 %v1178, %v1176
        %v1233 = vpack.c.bf16 %v1181, %v1179
        %v1234 = vpack.c.bf16 %v1182, %v1180
        %v1235 = vpack.c.bf16 %v1185, %v1183
        %v1236 = vpack.c.bf16 %v1186, %v1184
        %v1237 = vpack.c.bf16 %v1189, %v1187
        %v1238 = vpack.c.bf16 %v1190, %v1188
        %v1239 = vpack.c.bf16 %v1193, %v1191
        %v1240 = vpack.c.bf16 %v1194, %v1192
        %v1241 = vpack.c.bf16 %v1197, %v1195
        %v1242 = vpack.c.bf16 %v1198, %v1196
        %v1243 = vpack.c.bf16 %v1201, %v1199
        %v1244 = vpack.c.bf16 %v1202, %v1200
        %v1245 = vpack.c.bf16 %v1205, %v1203
        %v1246 = vpack.c.bf16 %v1206, %v1204
        %v1247 = vpack.c.bf16 %v1209, %v1207
        %v1248 = vpack.c.bf16 %v1210, %v1208
        %v1249 = vpack.c.bf16 %v1213, %v1211
        %v1250 = vpack.c.bf16 %v1214, %v1212
        %v1251 = vpack.c.bf16 %v1217, %v1215
        %v1252 = vpack.c.bf16 %v1218, %v1216
        %v1253 = vpack.c.bf16 %v1221, %v1219
        %v1254 = vpack.c.bf16 %v1222, %v1220
        %v1255 = vld [vmem:[#allocation5] sm:$0xff]
        %v1256 = vld [vmem:[#allocation5 + $0x8] sm:$0xff]
        %v1257 = vld [vmem:[#allocation5 + $0x10] sm:$0xff]
        %v1258 = vld [vmem:[#allocation5 + $0x18] sm:$0xff]
        %v1259 = vld [vmem:[#allocation5 + $0x20] sm:$0xff]
        %v1260 = vld [vmem:[#allocation5 + $0x28] sm:$0xff]
        %v1261 = vld [vmem:[#allocation5 + $0x30] sm:$0xff]
        %v1262 = vld [vmem:[#allocation5 + $0x38] sm:$0xff]
        %v1263 = vld [vmem:[#allocation5 + $0x40] sm:$0xff]
        %v1264 = vld [vmem:[#allocation5 + $0x48] sm:$0xff]
        %v1265 = vld [vmem:[#allocation5 + $0x50] sm:$0xff]
        %v1266 = vld [vmem:[#allocation5 + $0x58] sm:$0xff]
        %v1267 = vld [vmem:[#allocation5 + $0x60] sm:$0xff]
        %v1268 = vld [vmem:[#allocation5 + $0x68] sm:$0xff]
        %v1269 = vld [vmem:[#allocation5 + $0x70] sm:$0xff]
        %v1270 = vld [vmem:[#allocation5 + $0x78] sm:$0xff]
        %v1271 = vld [vmem:[#allocation5 + $0x80] sm:$0xff]
        %v1272 = vld [vmem:[#allocation5 + $0x88] sm:$0xff]
        %v1273 = vld [vmem:[#allocation5 + $0x90] sm:$0xff]
        %v1274 = vld [vmem:[#allocation5 + $0x98] sm:$0xff]
        %v1275 = vld [vmem:[#allocation5 + $0xa0] sm:$0xff]
        %v1276 = vld [vmem:[#allocation5 + $0xa8] sm:$0xff]
        %v1277 = vld [vmem:[#allocation5 + $0xb0] sm:$0xff]
        %v1278 = vld [vmem:[#allocation5 + $0xb8] sm:$0xff]
        %v1279 = vld [vmem:[#allocation5 + $0xc0] sm:$0xff]
        %v1280 = vld [vmem:[#allocation5 + $0xc8] sm:$0xff]
        %v1281 = vld [vmem:[#allocation5 + $0xd0] sm:$0xff]
        %v1282 = vld [vmem:[#allocation5 + $0xd8] sm:$0xff]
        %v1283 = vld [vmem:[#allocation5 + $0xe0] sm:$0xff]
        %v1284 = vld [vmem:[#allocation5 + $0xe8] sm:$0xff]
        %v1285 = vld [vmem:[#allocation5 + $0xf0] sm:$0xff]
        %v1286 = vld [vmem:[#allocation5 + $0xf8] sm:$0xff]
        %v1287 = vld [vmem:[%s4] sm:$0x3]
        %v1289 = vlaneseq
        %v1290 = vshrl.u32 %v1289, 7
        %v1291 = vsub.s32 0, %v1290
        %v1292 = vrot.slane %v1287, %v1291
        %v1293 = vlaneseq
        %v1294 = vshrl.u32 %v1293, 7
        %v1295 = vsub.s32 1, %v1294
        %v1296 = vrot.slane %v1287, %v1295
        %v1331 = vunpack.c.l.b16 %v1255
        %v1332 = vunpack.c.h.b16 %v1255
        %v1333 = vunpack.c.l.b16 %v1256
        %v1334 = vunpack.c.h.b16 %v1256
        %v1335 = vunpack.c.l.b16 %v1257
        %v1336 = vunpack.c.h.b16 %v1257
        %v1337 = vunpack.c.l.b16 %v1258
        %v1338 = vunpack.c.h.b16 %v1258
        %v1339 = vunpack.c.l.b16 %v1259
        %v1340 = vunpack.c.h.b16 %v1259
        %v1341 = vunpack.c.l.b16 %v1260
        %v1342 = vunpack.c.h.b16 %v1260
        %v1343 = vunpack.c.l.b16 %v1261
        %v1344 = vunpack.c.h.b16 %v1261
        %v1345 = vunpack.c.l.b16 %v1262
        %v1346 = vunpack.c.h.b16 %v1262
        %v1347 = vunpack.c.l.b16 %v1263
        %v1348 = vunpack.c.h.b16 %v1263
        %v1349 = vunpack.c.l.b16 %v1264
        %v1350 = vunpack.c.h.b16 %v1264
        %v1351 = vunpack.c.l.b16 %v1265
        %v1352 = vunpack.c.h.b16 %v1265
        %v1353 = vunpack.c.l.b16 %v1266
        %v1354 = vunpack.c.h.b16 %v1266
        %v1355 = vunpack.c.l.b16 %v1267
        %v1356 = vunpack.c.h.b16 %v1267
        %v1357 = vunpack.c.l.b16 %v1268
        %v1358 = vunpack.c.h.b16 %v1268
        %v1359 = vunpack.c.l.b16 %v1269
        %v1360 = vunpack.c.h.b16 %v1269
        %v1361 = vunpack.c.l.b16 %v1270
        %v1362 = vunpack.c.h.b16 %v1270
        %v1363 = vunpack.c.l.b16 %v1271
        %v1364 = vunpack.c.h.b16 %v1271
        %v1365 = vunpack.c.l.b16 %v1272
        %v1366 = vunpack.c.h.b16 %v1272
        %v1367 = vunpack.c.l.b16 %v1273
        %v1368 = vunpack.c.h.b16 %v1273
        %v1369 = vunpack.c.l.b16 %v1274
        %v1370 = vunpack.c.h.b16 %v1274
        %v1371 = vunpack.c.l.b16 %v1275
        %v1372 = vunpack.c.h.b16 %v1275
        %v1373 = vunpack.c.l.b16 %v1276
        %v1374 = vunpack.c.h.b16 %v1276
        %v1375 = vunpack.c.l.b16 %v1277
        %v1376 = vunpack.c.h.b16 %v1277
        %v1377 = vunpack.c.l.b16 %v1278
        %v1378 = vunpack.c.h.b16 %v1278
        %v1379 = vunpack.c.l.b16 %v1279
        %v1380 = vunpack.c.h.b16 %v1279
        %v1381 = vunpack.c.l.b16 %v1280
        %v1382 = vunpack.c.h.b16 %v1280
        %v1383 = vunpack.c.l.b16 %v1281
        %v1384 = vunpack.c.h.b16 %v1281
        %v1385 = vunpack.c.l.b16 %v1282
        %v1386 = vunpack.c.h.b16 %v1282
        %v1387 = vunpack.c.l.b16 %v1283
        %v1388 = vunpack.c.h.b16 %v1283
        %v1389 = vunpack.c.l.b16 %v1284
        %v1390 = vunpack.c.h.b16 %v1284
        %v1391 = vunpack.c.l.b16 %v1285
        %v1392 = vunpack.c.h.b16 %v1285
        %v1393 = vunpack.c.l.b16 %v1286
        %v1394 = vunpack.c.h.b16 %v1286
        %v1395 = vpack.c.b16 %v1333, %v1331
        %v1396 = vpack.c.b16 %v1334, %v1332
        %v1397 = vpack.c.b16 %v1337, %v1335
        %v1398 = vpack.c.b16 %v1338, %v1336
        %v1399 = vpack.c.b16 %v1341, %v1339
        %v1400 = vpack.c.b16 %v1342, %v1340
        %v1401 = vpack.c.b16 %v1345, %v1343
        %v1402 = vpack.c.b16 %v1346, %v1344
        %v1403 = vpack.c.b16 %v1349, %v1347
        %v1404 = vpack.c.b16 %v1350, %v1348
        %v1405 = vpack.c.b16 %v1353, %v1351
        %v1406 = vpack.c.b16 %v1354, %v1352
        %v1407 = vpack.c.b16 %v1357, %v1355
        %v1408 = vpack.c.b16 %v1358, %v1356
        %v1409 = vpack.c.b16 %v1361, %v1359
        %v1410 = vpack.c.b16 %v1362, %v1360
        %v1411 = vpack.c.b16 %v1365, %v1363
        %v1412 = vpack.c.b16 %v1366, %v1364
        %v1413 = vpack.c.b16 %v1369, %v1367
        %v1414 = vpack.c.b16 %v1370, %v1368
        %v1415 = vpack.c.b16 %v1373, %v1371
        %v1416 = vpack.c.b16 %v1374, %v1372
        %v1417 = vpack.c.b16 %v1377, %v1375
        %v1418 = vpack.c.b16 %v1378, %v1376
        %v1419 = vpack.c.b16 %v1381, %v1379
        %v1420 = vpack.c.b16 %v1382, %v1380
        %v1421 = vpack.c.b16 %v1385, %v1383
        %v1422 = vpack.c.b16 %v1386, %v1384
        %v1423 = vpack.c.b16 %v1389, %v1387
        %v1424 = vpack.c.b16 %v1390, %v1388
        %v1425 = vpack.c.b16 %v1393, %v1391
        %v1426 = vpack.c.b16 %v1394, %v1392
        %1459 = vmatprep.subr.bf16.mxu0 %v1396
        %1460 = vmatpush1.bf16.msra.mxu0 %v1395
        %1461 = vmatprep.subr.bf16.mxu0 %v1398
        %1462 = vmatpush1.bf16.msra.mxu0 %v1397
        %1463 = vmatprep.subr.bf16.mxu0 %v1400
        %1464 = vmatpush1.bf16.msra.mxu0 %v1399
        %1465 = vmatprep.subr.bf16.mxu0 %v1402
        %1466 = vmatpush1.bf16.msra.mxu0 %v1401
        %1467 = vmatprep.subr.bf16.mxu0 %v1404
        %1468 = vmatpush1.bf16.msra.mxu0 %v1403
        %1469 = vmatprep.subr.bf16.mxu0 %v1406
        %1470 = vmatpush1.bf16.msra.mxu0 %v1405
        %1471 = vmatprep.subr.bf16.mxu0 %v1408
        %1472 = vmatpush1.bf16.msra.mxu0 %v1407
        %1473 = vmatprep.subr.bf16.mxu0 %v1410
        %1474 = vmatpush1.bf16.msra.mxu0 %v1409
        %1475 = vmatprep.subr.bf16.mxu0 %v1412
        %1476 = vmatpush1.bf16.msra.mxu0 %v1411
        %1477 = vmatprep.subr.bf16.mxu0 %v1414
        %1478 = vmatpush1.bf16.msra.mxu0 %v1413
        %1479 = vmatprep.subr.bf16.mxu0 %v1416
        %1480 = vmatpush1.bf16.msra.mxu0 %v1415
        %1481 = vmatprep.subr.bf16.mxu0 %v1418
        %1482 = vmatpush1.bf16.msra.mxu0 %v1417
        %1483 = vmatprep.subr.bf16.mxu0 %v1420
        %1484 = vmatpush1.bf16.msra.mxu0 %v1419
        %1485 = vmatprep.subr.bf16.mxu0 %v1422
        %1486 = vmatpush1.bf16.msra.mxu0 %v1421
        %1487 = vmatprep.subr.bf16.mxu0 %v1424
        %1488 = vmatpush1.bf16.msra.mxu0 %v1423
        %1489 = vmatprep.subr.bf16.mxu0 %v1426
        %1490 = vmatpush1.bf16.msra.mxu0 %v1425
        %1491 = vmatprep.mubr.bf16.mxu0 %v1224
        %1492 = vmatmul.mubr.bf16.gmra.mrb[0].mxu0 %v1223
        %v1493 = vpop.f32.mrb[0].mxu0
        %v1494 = vadd.f32 %v1292, %v1493
        %v1495 = vpop.f32.mrb[0].mxu0
        %v1496 = vadd.f32 %v1296, %v1495
        %v1497 = vpop.f32.mrb[0].mxu0
        %v1498 = vadd.f32 %v1292, %v1497
        %v1499 = vpop.f32.mrb[0].mxu0
        %v1500 = vadd.f32 %v1296, %v1499
        %1501 = vmatprep.mubr.bf16.mxu0 %v1226
        %1502 = vmatmul.mubr.bf16.gmra.mrb[0].mxu0 %v1225
        %v1503 = vpop.f32.mrb[0].mxu0
        %v1504 = vadd.f32 %v1292, %v1503
        %v1505 = vpop.f32.mrb[0].mxu0
        %v1506 = vadd.f32 %v1296, %v1505
        %v1507 = vpop.f32.mrb[0].mxu0
        %v1508 = vadd.f32 %v1292, %v1507
        %v1509 = vpop.f32.mrb[0].mxu0
        %v1510 = vadd.f32 %v1296, %v1509
        %1511 = vmatprep.mubr.bf16.mxu0 %v1228
        %1512 = vmatmul.mubr.bf16.gmra.mrb[0].mxu0 %v1227
        %v1513 = vpop.f32.mrb[0].mxu0
        %v1514 = vadd.f32 %v1292, %v1513
        %v1515 = vpop.f32.mrb[0].mxu0
        %v1516 = vadd.f32 %v1296, %v1515
        %v1517 = vpop.f32.mrb[0].mxu0
        %v1518 = vadd.f32 %v1292, %v1517
        %v1519 = vpop.f32.mrb[0].mxu0
        %v1520 = vadd.f32 %v1296, %v1519
        %1521 = vmatprep.mubr.bf16.mxu0 %v1230
        %1522 = vmatmul.mubr.bf16.gmra.mrb[0].mxu0 %v1229
        %v1523 = vpop.f32.mrb[0].mxu0
        %v1524 = vadd.f32 %v1292, %v1523
        %v1525 = vpop.f32.mrb[0].mxu0
        %v1526 = vadd.f32 %v1296, %v1525
        %v1527 = vpop.f32.mrb[0].mxu0
        %v1528 = vadd.f32 %v1292, %v1527
        %v1529 = vpop.f32.mrb[0].mxu0
        %v1530 = vadd.f32 %v1296, %v1529
        %1531 = vmatprep.mubr.bf16.mxu0 %v1232
        %1532 = vmatmul.mubr.bf16.gmra.mrb[0].mxu0 %v1231
        %v1533 = vpop.f32.mrb[0].mxu0
        %v1534 = vadd.f32 %v1292, %v1533
        %v1535 = vpop.f32.mrb[0].mxu0
        %v1536 = vadd.f32 %v1296, %v1535
        %v1537 = vpop.f32.mrb[0].mxu0
        %v1538 = vadd.f32 %v1292, %v1537
        %v1539 = vpop.f32.mrb[0].mxu0
        %v1540 = vadd.f32 %v1296, %v1539
        %1541 = vmatprep.mubr.bf16.mxu0 %v1234
        %1542 = vmatmul.mubr.bf16.gmra.mrb[0].mxu0 %v1233
        %v1543 = vpop.f32.mrb[0].mxu0
        %v1544 = vadd.f32 %v1292, %v1543
        %v1545 = vpop.f32.mrb[0].mxu0
        %v1546 = vadd.f32 %v1296, %v1545
        %v1547 = vpop.f32.mrb[0].mxu0
        %v1548 = vadd.f32 %v1292, %v1547
        %v1549 = vpop.f32.mrb[0].mxu0
        %v1550 = vadd.f32 %v1296, %v1549
        %1551 = vmatprep.mubr.bf16.mxu0 %v1236
        %1552 = vmatmul.mubr.bf16.gmra.mrb[0].mxu0 %v1235
        %v1553 = vpop.f32.mrb[0].mxu0
        %v1554 = vadd.f32 %v1292, %v1553
        %v1555 = vpop.f32.mrb[0].mxu0
        %v1556 = vadd.f32 %v1296, %v1555
        %v1557 = vpop.f32.mrb[0].mxu0
        %v1558 = vadd.f32 %v1292, %v1557
        %v1559 = vpop.f32.mrb[0].mxu0
        %v1560 = vadd.f32 %v1296, %v1559
        %1561 = vmatprep.mubr.bf16.mxu0 %v1238
        %1562 = vmatmul.mubr.bf16.gmra.mrb[0].mxu0 %v1237
        %v1563 = vpop.f32.mrb[0].mxu0
        %v1564 = vadd.f32 %v1292, %v1563
        %v1565 = vpop.f32.mrb[0].mxu0
        %v1566 = vadd.f32 %v1296, %v1565
        %v1567 = vpop.f32.mrb[0].mxu0
        %v1568 = vadd.f32 %v1292, %v1567
        %v1569 = vpop.f32.mrb[0].mxu0
        %v1570 = vadd.f32 %v1296, %v1569
        %1571 = vmatprep.mubr.bf16.mxu0 %v1240
        %1572 = vmatmul.mubr.bf16.gmra.mrb[0].mxu0 %v1239
        %v1573 = vpop.f32.mrb[0].mxu0
        %v1574 = vadd.f32 %v1292, %v1573
        %v1575 = vpop.f32.mrb[0].mxu0
        %v1576 = vadd.f32 %v1296, %v1575
        %v1577 = vpop.f32.mrb[0].mxu0
        %v1578 = vadd.f32 %v1292, %v1577
        %v1579 = vpop.f32.mrb[0].mxu0
        %v1580 = vadd.f32 %v1296, %v1579
        %1581 = vmatprep.mubr.bf16.mxu0 %v1242
        %1582 = vmatmul.mubr.bf16.gmra.mrb[0].mxu0 %v1241
        %v1583 = vpop.f32.mrb[0].mxu0
        %v1584 = vadd.f32 %v1292, %v1583
        %v1585 = vpop.f32.mrb[0].mxu0
        %v1586 = vadd.f32 %v1296, %v1585
        %v1587 = vpop.f32.mrb[0].mxu0
        %v1588 = vadd.f32 %v1292, %v1587
        %v1589 = vpop.f32.mrb[0].mxu0
        %v1590 = vadd.f32 %v1296, %v1589
        %1591 = vmatprep.mubr.bf16.mxu0 %v1244
        %1592 = vmatmul.mubr.bf16.gmra.mrb[0].mxu0 %v1243
        %v1593 = vpop.f32.mrb[0].mxu0
        %v1594 = vadd.f32 %v1292, %v1593
        %v1595 = vpop.f32.mrb[0].mxu0
        %v1596 = vadd.f32 %v1296, %v1595
        %v1597 = vpop.f32.mrb[0].mxu0
        %v1598 = vadd.f32 %v1292, %v1597
        %v1599 = vpop.f32.mrb[0].mxu0
        %v1600 = vadd.f32 %v1296, %v1599
        %1601 = vmatprep.mubr.bf16.mxu0 %v1246
        %1602 = vmatmul.mubr.bf16.gmra.mrb[0].mxu0 %v1245
        %v1603 = vpop.f32.mrb[0].mxu0
        %v1604 = vadd.f32 %v1292, %v1603
        %v1605 = vpop.f32.mrb[0].mxu0
        %v1606 = vadd.f32 %v1296, %v1605
        %v1607 = vpop.f32.mrb[0].mxu0
        %v1608 = vadd.f32 %v1292, %v1607
        %v1609 = vpop.f32.mrb[0].mxu0
        %v1610 = vadd.f32 %v1296, %v1609
        %1611 = vmatprep.mubr.bf16.mxu0 %v1248
        %1612 = vmatmul.mubr.bf16.gmra.mrb[0].mxu0 %v1247
        %v1613 = vpop.f32.mrb[0].mxu0
        %v1614 = vadd.f32 %v1292, %v1613
        %v1615 = vpop.f32.mrb[0].mxu0
        %v1616 = vadd.f32 %v1296, %v1615
        %v1617 = vpop.f32.mrb[0].mxu0
        %v1618 = vadd.f32 %v1292, %v1617
        %v1619 = vpop.f32.mrb[0].mxu0
        %v1620 = vadd.f32 %v1296, %v1619
        %1621 = vmatprep.mubr.bf16.mxu0 %v1250
        %1622 = vmatmul.mubr.bf16.gmra.mrb[0].mxu0 %v1249
        %v1623 = vpop.f32.mrb[0].mxu0
        %v1624 = vadd.f32 %v1292, %v1623
        %v1625 = vpop.f32.mrb[0].mxu0
        %v1626 = vadd.f32 %v1296, %v1625
        %v1627 = vpop.f32.mrb[0].mxu0
        %v1628 = vadd.f32 %v1292, %v1627
        %v1629 = vpop.f32.mrb[0].mxu0
        %v1630 = vadd.f32 %v1296, %v1629
        %1631 = vmatprep.mubr.bf16.mxu0 %v1252
        %1632 = vmatmul.mubr.bf16.gmra.mrb[0].mxu0 %v1251
        %v1633 = vpop.f32.mrb[0].mxu0
        %v1634 = vadd.f32 %v1292, %v1633
        %v1635 = vpop.f32.mrb[0].mxu0
        %v1636 = vadd.f32 %v1296, %v1635
        %v1637 = vpop.f32.mrb[0].mxu0
        %v1638 = vadd.f32 %v1292, %v1637
        %v1639 = vpop.f32.mrb[0].mxu0
        %v1640 = vadd.f32 %v1296, %v1639
        %1641 = vmatprep.mubr.bf16.mxu0 %v1254
        %1642 = vmatmul.mubr.bf16.gmra.mrb[0].mxu0 %v1253
        %v1643 = vpop.f32.mrb[0].mxu0
        %v1644 = vadd.f32 %v1292, %v1643
        %v1645 = vpop.f32.mrb[0].mxu0
        %v1646 = vadd.f32 %v1296, %v1645
        %v1647 = vpop.f32.mrb[0].mxu0
        %v1648 = vadd.f32 %v1292, %v1647
        %v1649 = vpop.f32.mrb[0].mxu0
        %v1650 = vadd.f32 %v1296, %v1649
        %1651 = vdwg.mxu0
        %v1652 = vmul.f32 %v1494, 0.088388346
        %v1653 = vmul.f32 %v1496, 0.088388346
        %v1654 = vmul.f32 %v1498, 0.088388346
        %v1655 = vmul.f32 %v1500, 0.088388346
        %v1656 = vmul.f32 %v1504, 0.088388346
        %v1657 = vmul.f32 %v1506, 0.088388346
        %v1658 = vmul.f32 %v1508, 0.088388346
        %v1659 = vmul.f32 %v1510, 0.088388346
        %v1660 = vmul.f32 %v1514, 0.088388346
        %v1661 = vmul.f32 %v1516, 0.088388346
        %v1662 = vmul.f32 %v1518, 0.088388346
        %v1663 = vmul.f32 %v1520, 0.088388346
        %v1664 = vmul.f32 %v1524, 0.088388346
        %v1665 = vmul.f32 %v1526, 0.088388346
        %v1666 = vmul.f32 %v1528, 0.088388346
        %v1667 = vmul.f32 %v1530, 0.088388346
        %v1668 = vmul.f32 %v1534, 0.088388346
        %v1669 = vmul.f32 %v1536, 0.088388346
        %v1670 = vmul.f32 %v1538, 0.088388346
        %v1671 = vmul.f32 %v1540, 0.088388346
        %v1672 = vmul.f32 %v1544, 0.088388346
        %v1673 = vmul.f32 %v1546, 0.088388346
        %v1674 = vmul.f32 %v1548, 0.088388346
        %v1675 = vmul.f32 %v1550, 0.088388346
        %v1676 = vmul.f32 %v1554, 0.088388346
        %v1677 = vmul.f32 %v1556, 0.088388346
        %v1678 = vmul.f32 %v1558, 0.088388346
        %v1679 = vmul.f32 %v1560, 0.088388346
        %v1680 = vmul.f32 %v1564, 0.088388346
        %v1681 = vmul.f32 %v1566, 0.088388346
        %v1682 = vmul.f32 %v1568, 0.088388346
        %v1683 = vmul.f32 %v1570, 0.088388346
        %v1684 = vmul.f32 %v1574, 0.088388346
        %v1685 = vmul.f32 %v1576, 0.088388346
        %v1686 = vmul.f32 %v1578, 0.088388346
        %v1687 = vmul.f32 %v1580, 0.088388346
        %v1688 = vmul.f32 %v1584, 0.088388346
        %v1689 = vmul.f32 %v1586, 0.088388346
        %v1690 = vmul.f32 %v1588, 0.088388346
        %v1691 = vmul.f32 %v1590, 0.088388346
        %v1692 = vmul.f32 %v1594, 0.088388346
        %v1693 = vmul.f32 %v1596, 0.088388346
        %v1694 = vmul.f32 %v1598, 0.088388346
        %v1695 = vmul.f32 %v1600, 0.088388346
        %v1696 = vmul.f32 %v1604, 0.088388346
        %v1697 = vmul.f32 %v1606, 0.088388346
        %v1698 = vmul.f32 %v1608, 0.088388346
        %v1699 = vmul.f32 %v1610, 0.088388346
        %v1700 = vmul.f32 %v1614, 0.088388346
        %v1701 = vmul.f32 %v1616, 0.088388346
        %v1702 = vmul.f32 %v1618, 0.088388346
        %v1703 = vmul.f32 %v1620, 0.088388346
        %v1704 = vmul.f32 %v1624, 0.088388346
        %v1705 = vmul.f32 %v1626, 0.088388346
        %v1706 = vmul.f32 %v1628, 0.088388346
        %v1707 = vmul.f32 %v1630, 0.088388346
        %v1708 = vmul.f32 %v1634, 0.088388346
        %v1709 = vmul.f32 %v1636, 0.088388346
        %v1710 = vmul.f32 %v1638, 0.088388346
        %v1711 = vmul.f32 %v1640, 0.088388346
        %v1712 = vmul.f32 %v1644, 0.088388346
        %v1713 = vmul.f32 %v1646, 0.088388346
        %v1714 = vmul.f32 %v1648, 0.088388346
        %v1715 = vmul.f32 %v1650, 0.088388346
        %v1716 = vld [vmem:[#allocation7] sm:$0xff]
        %v1717 = vld [vmem:[#allocation7 + $0x8] sm:$0xff]
        %v1718 = vld [vmem:[#allocation7 + $0x10] sm:$0xff]
        %v1719 = vld [vmem:[#allocation7 + $0x18] sm:$0xff]
        %v1720 = vld [vmem:[#allocation7 + $0x20] sm:$0xff]
        %v1721 = vld [vmem:[#allocation7 + $0x28] sm:$0xff]
        %v1722 = vld [vmem:[#allocation7 + $0x30] sm:$0xff]
        %v1723 = vld [vmem:[#allocation7 + $0x38] sm:$0xff]
        %v1724 = vld [vmem:[#allocation7 + $0x40] sm:$0xff]
        %v1725 = vld [vmem:[#allocation7 + $0x48] sm:$0xff]
        %v1726 = vld [vmem:[#allocation7 + $0x50] sm:$0xff]
        %v1727 = vld [vmem:[#allocation7 + $0x58] sm:$0xff]
        %v1728 = vld [vmem:[#allocation7 + $0x60] sm:$0xff]
        %v1729 = vld [vmem:[#allocation7 + $0x68] sm:$0xff]
        %v1730 = vld [vmem:[#allocation7 + $0x70] sm:$0xff]
        %v1731 = vld [vmem:[#allocation7 + $0x78] sm:$0xff]
        %v1732 = vld [vmem:[#allocation7 + $0x80] sm:$0xff]
        %v1733 = vld [vmem:[#allocation7 + $0x88] sm:$0xff]
        %v1734 = vld [vmem:[#allocation7 + $0x90] sm:$0xff]
        %v1735 = vld [vmem:[#allocation7 + $0x98] sm:$0xff]
        %v1736 = vld [vmem:[#allocation7 + $0xa0] sm:$0xff]
        %v1737 = vld [vmem:[#allocation7 + $0xa8] sm:$0xff]
        %v1738 = vld [vmem:[#allocation7 + $0xb0] sm:$0xff]
        %v1739 = vld [vmem:[#allocation7 + $0xb8] sm:$0xff]
        %v1740 = vld [vmem:[#allocation7 + $0xc0] sm:$0xff]
        %v1741 = vld [vmem:[#allocation7 + $0xc8] sm:$0xff]
        %v1742 = vld [vmem:[#allocation7 + $0xd0] sm:$0xff]
        %v1743 = vld [vmem:[#allocation7 + $0xd8] sm:$0xff]
        %v1744 = vld [vmem:[#allocation7 + $0xe0] sm:$0xff]
        %v1745 = vld [vmem:[#allocation7 + $0xe8] sm:$0xff]
        %v1746 = vld [vmem:[#allocation7 + $0xf0] sm:$0xff]
        %v1747 = vld [vmem:[#allocation7 + $0xf8] sm:$0xff]
        %v1748 = vld [vmem:[%s6] sm:$0x3]
        %v1750 = vlaneseq
        %v1751 = vshrl.u32 %v1750, 7
        %v1752 = vsub.s32 0, %v1751
        %v1753 = vrot.slane %v1748, %v1752
        %v1754 = vlaneseq
        %v1755 = vshrl.u32 %v1754, 7
        %v1756 = vsub.s32 1, %v1755
        %v1757 = vrot.slane %v1748, %v1756
        %v1792 = vunpack.c.l.b16 %v1716
        %v1793 = vunpack.c.h.b16 %v1716
        %v1794 = vunpack.c.l.b16 %v1717
        %v1795 = vunpack.c.h.b16 %v1717
        %v1796 = vunpack.c.l.b16 %v1718
        %v1797 = vunpack.c.h.b16 %v1718
        %v1798 = vunpack.c.l.b16 %v1719
        %v1799 = vunpack.c.h.b16 %v1719
        %v1800 = vunpack.c.l.b16 %v1720
        %v1801 = vunpack.c.h.b16 %v1720
        %v1802 = vunpack.c.l.b16 %v1721
        %v1803 = vunpack.c.h.b16 %v1721
        %v1804 = vunpack.c.l.b16 %v1722
        %v1805 = vunpack.c.h.b16 %v1722
        %v1806 = vunpack.c.l.b16 %v1723
        %v1807 = vunpack.c.h.b16 %v1723
        %v1808 = vunpack.c.l.b16 %v1724
        %v1809 = vunpack.c.h.b16 %v1724
        %v1810 = vunpack.c.l.b16 %v1725
        %v1811 = vunpack.c.h.b16 %v1725
        %v1812 = vunpack.c.l.b16 %v1726
        %v1813 = vunpack.c.h.b16 %v1726
        %v1814 = vunpack.c.l.b16 %v1727
        %v1815 = vunpack.c.h.b16 %v1727
        %v1816 = vunpack.c.l.b16 %v1728
        %v1817 = vunpack.c.h.b16 %v1728
        %v1818 = vunpack.c.l.b16 %v1729
        %v1819 = vunpack.c.h.b16 %v1729
        %v1820 = vunpack.c.l.b16 %v1730
        %v1821 = vunpack.c.h.b16 %v1730
        %v1822 = vunpack.c.l.b16 %v1731
        %v1823 = vunpack.c.h.b16 %v1731
        %v1824 = vunpack.c.l.b16 %v1732
        %v1825 = vunpack.c.h.b16 %v1732
        %v1826 = vunpack.c.l.b16 %v1733
        %v1827 = vunpack.c.h.b16 %v1733
        %v1828 = vunpack.c.l.b16 %v1734
        %v1829 = vunpack.c.h.b16 %v1734
        %v1830 = vunpack.c.l.b16 %v1735
        %v1831 = vunpack.c.h.b16 %v1735
        %v1832 = vunpack.c.l.b16 %v1736
        %v1833 = vunpack.c.h.b16 %v1736
        %v1834 = vunpack.c.l.b16 %v1737
        %v1835 = vunpack.c.h.b16 %v1737
        %v1836 = vunpack.c.l.b16 %v1738
        %v1837 = vunpack.c.h.b16 %v1738
        %v1838 = vunpack.c.l.b16 %v1739
        %v1839 = vunpack.c.h.b16 %v1739
        %v1840 = vunpack.c.l.b16 %v1740
        %v1841 = vunpack.c.h.b16 %v1740
        %v1842 = vunpack.c.l.b16 %v1741
        %v1843 = vunpack.c.h.b16 %v1741
        %v1844 = vunpack.c.l.b16 %v1742
        %v1845 = vunpack.c.h.b16 %v1742
        %v1846 = vunpack.c.l.b16 %v1743
        %v1847 = vunpack.c.h.b16 %v1743
        %v1848 = vunpack.c.l.b16 %v1744
        %v1849 = vunpack.c.h.b16 %v1744
        %v1850 = vunpack.c.l.b16 %v1745
        %v1851 = vunpack.c.h.b16 %v1745
        %v1852 = vunpack.c.l.b16 %v1746
        %v1853 = vunpack.c.h.b16 %v1746
        %v1854 = vunpack.c.l.b16 %v1747
        %v1855 = vunpack.c.h.b16 %v1747
        %v1856 = vpack.c.b16 %v1794, %v1792
        %v1857 = vpack.c.b16 %v1795, %v1793
        %v1858 = vpack.c.b16 %v1798, %v1796
        %v1859 = vpack.c.b16 %v1799, %v1797
        %v1860 = vpack.c.b16 %v1802, %v1800
        %v1861 = vpack.c.b16 %v1803, %v1801
        %v1862 = vpack.c.b16 %v1806, %v1804
        %v1863 = vpack.c.b16 %v1807, %v1805
        %v1864 = vpack.c.b16 %v1810, %v1808
        %v1865 = vpack.c.b16 %v1811, %v1809
        %v1866 = vpack.c.b16 %v1814, %v1812
        %v1867 = vpack.c.b16 %v1815, %v1813
        %v1868 = vpack.c.b16 %v1818, %v1816
        %v1869 = vpack.c.b16 %v1819, %v1817
        %v1870 = vpack.c.b16 %v1822, %v1820
        %v1871 = vpack.c.b16 %v1823, %v1821
        %v1872 = vpack.c.b16 %v1826, %v1824
        %v1873 = vpack.c.b16 %v1827, %v1825
        %v1874 = vpack.c.b16 %v1830, %v1828
        %v1875 = vpack.c.b16 %v1831, %v1829
        %v1876 = vpack.c.b16 %v1834, %v1832
        %v1877 = vpack.c.b16 %v1835, %v1833
        %v1878 = vpack.c.b16 %v1838, %v1836
        %v1879 = vpack.c.b16 %v1839, %v1837
        %v1880 = vpack.c.b16 %v1842, %v1840
        %v1881 = vpack.c.b16 %v1843, %v1841
        %v1882 = vpack.c.b16 %v1846, %v1844
        %v1883 = vpack.c.b16 %v1847, %v1845
        %v1884 = vpack.c.b16 %v1850, %v1848
        %v1885 = vpack.c.b16 %v1851, %v1849
        %v1886 = vpack.c.b16 %v1854, %v1852
        %v1887 = vpack.c.b16 %v1855, %v1853
        %1920 = vmatprep.subr.bf16.mxu0 %v1857
        %1921 = vmatpush1.bf16.msra.mxu0 %v1856
        %1922 = vmatprep.subr.bf16.mxu0 %v1859
        %1923 = vmatpush1.bf16.msra.mxu0 %v1858
        %1924 = vmatprep.subr.bf16.mxu0 %v1861
        %1925 = vmatpush1.bf16.msra.mxu0 %v1860
        %1926 = vmatprep.subr.bf16.mxu0 %v1863
        %1927 = vmatpush1.bf16.msra.mxu0 %v1862
        %1928 = vmatprep.subr.bf16.mxu0 %v1865
        %1929 = vmatpush1.bf16.msra.mxu0 %v1864
        %1930 = vmatprep.subr.bf16.mxu0 %v1867
        %1931 = vmatpush1.bf16.msra.mxu0 %v1866
        %1932 = vmatprep.subr.bf16.mxu0 %v1869
        %1933 = vmatpush1.bf16.msra.mxu0 %v1868
        %1934 = vmatprep.subr.bf16.mxu0 %v1871
        %1935 = vmatpush1.bf16.msra.mxu0 %v1870
        %1936 = vmatprep.subr.bf16.mxu0 %v1873
        %1937 = vmatpush1.bf16.msra.mxu0 %v1872
        %1938 = vmatprep.subr.bf16.mxu0 %v1875
        %1939 = vmatpush1.bf16.msra.mxu0 %v1874
        %1940 = vmatprep.subr.bf16.mxu0 %v1877
        %1941 = vmatpush1.bf16.msra.mxu0 %v1876
        %1942 = vmatprep.subr.bf16.mxu0 %v1879
        %1943 = vmatpush1.bf16.msra.mxu0 %v1878
        %1944 = vmatprep.subr.bf16.mxu0 %v1881
        %1945 = vmatpush1.bf16.msra.mxu0 %v1880
        %1946 = vmatprep.subr.bf16.mxu0 %v1883
        %1947 = vmatpush1.bf16.msra.mxu0 %v1882
        %1948 = vmatprep.subr.bf16.mxu0 %v1885
        %1949 = vmatpush1.bf16.msra.mxu0 %v1884
        %1950 = vmatprep.subr.bf16.mxu0 %v1887
        %1951 = vmatpush1.bf16.msra.mxu0 %v1886
        %1952 = vmatprep.mubr.bf16.mxu0 %v1224
        %1953 = vmatmul.mubr.bf16.gmra.mrb[0].mxu0 %v1223
        %v1954 = vpop.f32.mrb[0].mxu0
        %v1955 = vadd.f32 %v1753, %v1954
        %v1956 = vpop.f32.mrb[0].mxu0
        %v1957 = vadd.f32 %v1757, %v1956
        %v1958 = vpop.f32.mrb[0].mxu0
        %v1959 = vadd.f32 %v1753, %v1958
        %v1960 = vpop.f32.mrb[0].mxu0
        %v1961 = vadd.f32 %v1757, %v1960
        %1962 = vmatprep.mubr.bf16.mxu0 %v1226
        %1963 = vmatmul.mubr.bf16.gmra.mrb[0].mxu0 %v1225
        %v1964 = vpop.f32.mrb[0].mxu0
        %v1965 = vadd.f32 %v1753, %v1964
        %v1966 = vpop.f32.mrb[0].mxu0
        %v1967 = vadd.f32 %v1757, %v1966
        %v1968 = vpop.f32.mrb[0].mxu0
        %v1969 = vadd.f32 %v1753, %v1968
        %v1970 = vpop.f32.mrb[0].mxu0
        %v1971 = vadd.f32 %v1757, %v1970
        %1972 = vmatprep.mubr.bf16.mxu0 %v1228
        %1973 = vmatmul.mubr.bf16.gmra.mrb[0].mxu0 %v1227
        %v1974 = vpop.f32.mrb[0].mxu0
        %v1975 = vadd.f32 %v1753, %v1974
        %v1976 = vpop.f32.mrb[0].mxu0
        %v1977 = vadd.f32 %v1757, %v1976
        %v1978 = vpop.f32.mrb[0].mxu0
        %v1979 = vadd.f32 %v1753, %v1978
        %v1980 = vpop.f32.mrb[0].mxu0
        %v1981 = vadd.f32 %v1757, %v1980
        %1982 = vmatprep.mubr.bf16.mxu0 %v1230
        %1983 = vmatmul.mubr.bf16.gmra.mrb[0].mxu0 %v1229
        %v1984 = vpop.f32.mrb[0].mxu0
        %v1985 = vadd.f32 %v1753, %v1984
        %v1986 = vpop.f32.mrb[0].mxu0
        %v1987 = vadd.f32 %v1757, %v1986
        %v1988 = vpop.f32.mrb[0].mxu0
        %v1989 = vadd.f32 %v1753, %v1988
        %v1990 = vpop.f32.mrb[0].mxu0
        %v1991 = vadd.f32 %v1757, %v1990
        %1992 = vmatprep.mubr.bf16.mxu0 %v1232
        %1993 = vmatmul.mubr.bf16.gmra.mrb[0].mxu0 %v1231
        %v1994 = vpop.f32.mrb[0].mxu0
        %v1995 = vadd.f32 %v1753, %v1994
        %v1996 = vpop.f32.mrb[0].mxu0
        %v1997 = vadd.f32 %v1757, %v1996
        %v1998 = vpop.f32.mrb[0].mxu0
        %v1999 = vadd.f32 %v1753, %v1998
        %v2000 = vpop.f32.mrb[0].mxu0
        %v2001 = vadd.f32 %v1757, %v2000
        %2002 = vmatprep.mubr.bf16.mxu0 %v1234
        %2003 = vmatmul.mubr.bf16.gmra.mrb[0].mxu0 %v1233
        %v2004 = vpop.f32.mrb[0].mxu0
        %v2005 = vadd.f32 %v1753, %v2004
        %v2006 = vpop.f32.mrb[0].mxu0
        %v2007 = vadd.f32 %v1757, %v2006
        %v2008 = vpop.f32.mrb[0].mxu0
        %v2009 = vadd.f32 %v1753, %v2008
        %v2010 = vpop.f32.mrb[0].mxu0
        %v2011 = vadd.f32 %v1757, %v2010
        %2012 = vmatprep.mubr.bf16.mxu0 %v1236
        %2013 = vmatmul.mubr.bf16.gmra.mrb[0].mxu0 %v1235
        %v2014 = vpop.f32.mrb[0].mxu0
        %v2015 = vadd.f32 %v1753, %v2014
        %v2016 = vpop.f32.mrb[0].mxu0
        %v2017 = vadd.f32 %v1757, %v2016
        %v2018 = vpop.f32.mrb[0].mxu0
        %v2019 = vadd.f32 %v1753, %v2018
        %v2020 = vpop.f32.mrb[0].mxu0
        %v2021 = vadd.f32 %v1757, %v2020
        %2022 = vmatprep.mubr.bf16.mxu0 %v1238
        %2023 = vmatmul.mubr.bf16.gmra.mrb[0].mxu0 %v1237
        %v2024 = vpop.f32.mrb[0].mxu0
        %v2025 = vadd.f32 %v1753, %v2024
        %v2026 = vpop.f32.mrb[0].mxu0
        %v2027 = vadd.f32 %v1757, %v2026
        %v2028 = vpop.f32.mrb[0].mxu0
        %v2029 = vadd.f32 %v1753, %v2028
        %v2030 = vpop.f32.mrb[0].mxu0
        %v2031 = vadd.f32 %v1757, %v2030
        %2032 = vmatprep.mubr.bf16.mxu0 %v1240
        %2033 = vmatmul.mubr.bf16.gmra.mrb[0].mxu0 %v1239
        %v2034 = vpop.f32.mrb[0].mxu0
        %v2035 = vadd.f32 %v1753, %v2034
        %v2036 = vpop.f32.mrb[0].mxu0
        %v2037 = vadd.f32 %v1757, %v2036
        %v2038 = vpop.f32.mrb[0].mxu0
        %v2039 = vadd.f32 %v1753, %v2038
        %v2040 = vpop.f32.mrb[0].mxu0
        %v2041 = vadd.f32 %v1757, %v2040
        %2042 = vmatprep.mubr.bf16.mxu0 %v1242
        %2043 = vmatmul.mubr.bf16.gmra.mrb[0].mxu0 %v1241
        %v2044 = vpop.f32.mrb[0].mxu0
        %v2045 = vadd.f32 %v1753, %v2044
        %v2046 = vpop.f32.mrb[0].mxu0
        %v2047 = vadd.f32 %v1757, %v2046
        %v2048 = vpop.f32.mrb[0].mxu0
        %v2049 = vadd.f32 %v1753, %v2048
        %v2050 = vpop.f32.mrb[0].mxu0
        %v2051 = vadd.f32 %v1757, %v2050
        %2052 = vmatprep.mubr.bf16.mxu0 %v1244
        %2053 = vmatmul.mubr.bf16.gmra.mrb[0].mxu0 %v1243
        %v2054 = vpop.f32.mrb[0].mxu0
        %v2055 = vadd.f32 %v1753, %v2054
        %v2056 = vpop.f32.mrb[0].mxu0
        %v2057 = vadd.f32 %v1757, %v2056
        %v2058 = vpop.f32.mrb[0].mxu0
        %v2059 = vadd.f32 %v1753, %v2058
        %v2060 = vpop.f32.mrb[0].mxu0
        %v2061 = vadd.f32 %v1757, %v2060
        %2062 = vmatprep.mubr.bf16.mxu0 %v1246
        %2063 = vmatmul.mubr.bf16.gmra.mrb[0].mxu0 %v1245
        %v2064 = vpop.f32.mrb[0].mxu0
        %v2065 = vadd.f32 %v1753, %v2064
        %v2066 = vpop.f32.mrb[0].mxu0
        %v2067 = vadd.f32 %v1757, %v2066
        %v2068 = vpop.f32.mrb[0].mxu0
        %v2069 = vadd.f32 %v1753, %v2068
        %v2070 = vpop.f32.mrb[0].mxu0
        %v2071 = vadd.f32 %v1757, %v2070
        %2072 = vmatprep.mubr.bf16.mxu0 %v1248
        %2073 = vmatmul.mubr.bf16.gmra.mrb[0].mxu0 %v1247
        %v2074 = vpop.f32.mrb[0].mxu0
        %v2075 = vadd.f32 %v1753, %v2074
        %v2076 = vpop.f32.mrb[0].mxu0
        %v2077 = vadd.f32 %v1757, %v2076
        %v2078 = vpop.f32.mrb[0].mxu0
        %v2079 = vadd.f32 %v1753, %v2078
        %v2080 = vpop.f32.mrb[0].mxu0
        %v2081 = vadd.f32 %v1757, %v2080
        %2082 = vmatprep.mubr.bf16.mxu0 %v1250
        %2083 = vmatmul.mubr.bf16.gmra.mrb[0].mxu0 %v1249
        %v2084 = vpop.f32.mrb[0].mxu0
        %v2085 = vadd.f32 %v1753, %v2084
        %v2086 = vpop.f32.mrb[0].mxu0
        %v2087 = vadd.f32 %v1757, %v2086
        %v2088 = vpop.f32.mrb[0].mxu0
        %v2089 = vadd.f32 %v1753, %v2088
        %v2090 = vpop.f32.mrb[0].mxu0
        %v2091 = vadd.f32 %v1757, %v2090
        %2092 = vmatprep.mubr.bf16.mxu0 %v1252
        %2093 = vmatmul.mubr.bf16.gmra.mrb[0].mxu0 %v1251
        %v2094 = vpop.f32.mrb[0].mxu0
        %v2095 = vadd.f32 %v1753, %v2094
        %v2096 = vpop.f32.mrb[0].mxu0
        %v2097 = vadd.f32 %v1757, %v2096
        %v2098 = vpop.f32.mrb[0].mxu0
        %v2099 = vadd.f32 %v1753, %v2098
        %v2100 = vpop.f32.mrb[0].mxu0
        %v2101 = vadd.f32 %v1757, %v2100
        %2102 = vmatprep.mubr.bf16.mxu0 %v1254
        %2103 = vmatmul.mubr.bf16.gmra.mrb[0].mxu0 %v1253
        %v2104 = vpop.f32.mrb[0].mxu0
        %v2105 = vadd.f32 %v1753, %v2104
        %v2106 = vpop.f32.mrb[0].mxu0
        %v2107 = vadd.f32 %v1757, %v2106
        %v2108 = vpop.f32.mrb[0].mxu0
        %v2109 = vadd.f32 %v1753, %v2108
        %v2110 = vpop.f32.mrb[0].mxu0
        %v2111 = vadd.f32 %v1757, %v2110
        %2112 = vdwg.mxu0
        %v2113 = vld [vmem:[#allocation8] sm:$0xff]
        %v2114 = vld [vmem:[#allocation8 + $0x8] sm:$0xff]
        %v2115 = vld [vmem:[#allocation8 + $0x10] sm:$0xff]
        %v2116 = vld [vmem:[#allocation8 + $0x18] sm:$0xff]
        %v2117 = vld [vmem:[#allocation8 + $0x20] sm:$0xff]
        %v2118 = vld [vmem:[#allocation8 + $0x28] sm:$0xff]
        %v2119 = vld [vmem:[#allocation8 + $0x30] sm:$0xff]
        %v2120 = vld [vmem:[#allocation8 + $0x38] sm:$0xff]
        %v2121 = vld [vmem:[#allocation8 + $0x40] sm:$0xff]
        %v2122 = vld [vmem:[#allocation8 + $0x48] sm:$0xff]
        %v2123 = vld [vmem:[#allocation8 + $0x50] sm:$0xff]
        %v2124 = vld [vmem:[#allocation8 + $0x58] sm:$0xff]
        %v2125 = vld [vmem:[#allocation8 + $0x60] sm:$0xff]
        %v2126 = vld [vmem:[#allocation8 + $0x68] sm:$0xff]
        %v2127 = vld [vmem:[#allocation8 + $0x70] sm:$0xff]
        %v2128 = vld [vmem:[#allocation8 + $0x78] sm:$0xff]
        %v2129 = vld [vmem:[#allocation8 + $0x80] sm:$0xff]
        %v2130 = vld [vmem:[#allocation8 + $0x88] sm:$0xff]
        %v2131 = vld [vmem:[#allocation8 + $0x90] sm:$0xff]
        %v2132 = vld [vmem:[#allocation8 + $0x98] sm:$0xff]
        %v2133 = vld [vmem:[#allocation8 + $0xa0] sm:$0xff]
        %v2134 = vld [vmem:[#allocation8 + $0xa8] sm:$0xff]
        %v2135 = vld [vmem:[#allocation8 + $0xb0] sm:$0xff]
        %v2136 = vld [vmem:[#allocation8 + $0xb8] sm:$0xff]
        %v2137 = vld [vmem:[#allocation8 + $0xc0] sm:$0xff]
        %v2138 = vld [vmem:[#allocation8 + $0xc8] sm:$0xff]
        %v2139 = vld [vmem:[#allocation8 + $0xd0] sm:$0xff]
        %v2140 = vld [vmem:[#allocation8 + $0xd8] sm:$0xff]
        %v2141 = vld [vmem:[#allocation8 + $0xe0] sm:$0xff]
        %v2142 = vld [vmem:[#allocation8 + $0xe8] sm:$0xff]
        %v2143 = vld [vmem:[#allocation8 + $0xf0] sm:$0xff]
        %v2144 = vld [vmem:[#allocation8 + $0xf8] sm:$0xff]
        %v2145 = vld [vmem:[%s8] sm:$0x3]
        %v2147 = vlaneseq
        %v2148 = vshrl.u32 %v2147, 7
        %v2149 = vsub.s32 0, %v2148
        %v2150 = vrot.slane %v2145, %v2149
        %v2151 = vlaneseq
        %v2152 = vshrl.u32 %v2151, 7
        %v2153 = vsub.s32 1, %v2152
        %v2154 = vrot.slane %v2145, %v2153
        %v2189 = vunpack.c.l.b16 %v2113
        %v2190 = vunpack.c.h.b16 %v2113
        %v2191 = vunpack.c.l.b16 %v2114
        %v2192 = vunpack.c.h.b16 %v2114
        %v2193 = vunpack.c.l.b16 %v2115
        %v2194 = vunpack.c.h.b16 %v2115
        %v2195 = vunpack.c.l.b16 %v2116
        %v2196 = vunpack.c.h.b16 %v2116
        %v2197 = vunpack.c.l.b16 %v2117
        %v2198 = vunpack.c.h.b16 %v2117
        %v2199 = vunpack.c.l.b16 %v2118
        %v2200 = vunpack.c.h.b16 %v2118
        %v2201 = vunpack.c.l.b16 %v2119
        %v2202 = vunpack.c.h.b16 %v2119
        %v2203 = vunpack.c.l.b16 %v2120
        %v2204 = vunpack.c.h.b16 %v2120
        %v2205 = vunpack.c.l.b16 %v2121
        %v2206 = vunpack.c.h.b16 %v2121
        %v2207 = vunpack.c.l.b16 %v2122
        %v2208 = vunpack.c.h.b16 %v2122
        %v2209 = vunpack.c.l.b16 %v2123
        %v2210 = vunpack.c.h.b16 %v2123
        %v2211 = vunpack.c.l.b16 %v2124
        %v2212 = vunpack.c.h.b16 %v2124
        %v2213 = vunpack.c.l.b16 %v2125
        %v2214 = vunpack.c.h.b16 %v2125
        %v2215 = vunpack.c.l.b16 %v2126
        %v2216 = vunpack.c.h.b16 %v2126
        %v2217 = vunpack.c.l.b16 %v2127
        %v2218 = vunpack.c.h.b16 %v2127
        %v2219 = vunpack.c.l.b16 %v2128
        %v2220 = vunpack.c.h.b16 %v2128
        %v2221 = vunpack.c.l.b16 %v2129
        %v2222 = vunpack.c.h.b16 %v2129
        %v2223 = vunpack.c.l.b16 %v2130
        %v2224 = vunpack.c.h.b16 %v2130
        %v2225 = vunpack.c.l.b16 %v2131
        %v2226 = vunpack.c.h.b16 %v2131
        %v2227 = vunpack.c.l.b16 %v2132
        %v2228 = vunpack.c.h.b16 %v2132
        %v2229 = vunpack.c.l.b16 %v2133
        %v2230 = vunpack.c.h.b16 %v2133
        %v2231 = vunpack.c.l.b16 %v2134
        %v2232 = vunpack.c.h.b16 %v2134
        %v2233 = vunpack.c.l.b16 %v2135
        %v2234 = vunpack.c.h.b16 %v2135
        %v2235 = vunpack.c.l.b16 %v2136
        %v2236 = vunpack.c.h.b16 %v2136
        %v2237 = vunpack.c.l.b16 %v2137
        %v2238 = vunpack.c.h.b16 %v2137
        %v2239 = vunpack.c.l.b16 %v2138
        %v2240 = vunpack.c.h.b16 %v2138
        %v2241 = vunpack.c.l.b16 %v2139
        %v2242 = vunpack.c.h.b16 %v2139
        %v2243 = vunpack.c.l.b16 %v2140
        %v2244 = vunpack.c.h.b16 %v2140
        %v2245 = vunpack.c.l.b16 %v2141
        %v2246 = vunpack.c.h.b16 %v2141
        %v2247 = vunpack.c.l.b16 %v2142
        %v2248 = vunpack.c.h.b16 %v2142
        %v2249 = vunpack.c.l.b16 %v2143
        %v2250 = vunpack.c.h.b16 %v2143
        %v2251 = vunpack.c.l.b16 %v2144
        %v2252 = vunpack.c.h.b16 %v2144
        %v2253 = vpack.c.b16 %v2191, %v2189
        %v2254 = vpack.c.b16 %v2192, %v2190
        %v2255 = vpack.c.b16 %v2195, %v2193
        %v2256 = vpack.c.b16 %v2196, %v2194
        %v2257 = vpack.c.b16 %v2199, %v2197
        %v2258 = vpack.c.b16 %v2200, %v2198
        %v2259 = vpack.c.b16 %v2203, %v2201
        %v2260 = vpack.c.b16 %v2204, %v2202
        %v2261 = vpack.c.b16 %v2207, %v2205
        %v2262 = vpack.c.b16 %v2208, %v2206
        %v2263 = vpack.c.b16 %v2211, %v2209
        %v2264 = vpack.c.b16 %v2212, %v2210
        %v2265 = vpack.c.b16 %v2215, %v2213
        %v2266 = vpack.c.b16 %v2216, %v2214
        %v2267 = vpack.c.b16 %v2219, %v2217
        %v2268 = vpack.c.b16 %v2220, %v2218
        %v2269 = vpack.c.b16 %v2223, %v2221
        %v2270 = vpack.c.b16 %v2224, %v2222
        %v2271 = vpack.c.b16 %v2227, %v2225
        %v2272 = vpack.c.b16 %v2228, %v2226
        %v2273 = vpack.c.b16 %v2231, %v2229
        %v2274 = vpack.c.b16 %v2232, %v2230
        %v2275 = vpack.c.b16 %v2235, %v2233
        %v2276 = vpack.c.b16 %v2236, %v2234
        %v2277 = vpack.c.b16 %v2239, %v2237
        %v2278 = vpack.c.b16 %v2240, %v2238
        %v2279 = vpack.c.b16 %v2243, %v2241
        %v2280 = vpack.c.b16 %v2244, %v2242
        %v2281 = vpack.c.b16 %v2247, %v2245
        %v2282 = vpack.c.b16 %v2248, %v2246
        %v2283 = vpack.c.b16 %v2251, %v2249
        %v2284 = vpack.c.b16 %v2252, %v2250
        %2317 = vmatprep.subr.bf16.mxu0 %v2254
        %2318 = vmatpush1.bf16.msra.mxu0 %v2253
        %2319 = vmatprep.subr.bf16.mxu0 %v2256
        %2320 = vmatpush1.bf16.msra.mxu0 %v2255
        %2321 = vmatprep.subr.bf16.mxu0 %v2258
        %2322 = vmatpush1.bf16.msra.mxu0 %v2257
        %2323 = vmatprep.subr.bf16.mxu0 %v2260
        %2324 = vmatpush1.bf16.msra.mxu0 %v2259
        %2325 = vmatprep.subr.bf16.mxu0 %v2262
        %2326 = vmatpush1.bf16.msra.mxu0 %v2261
        %2327 = vmatprep.subr.bf16.mxu0 %v2264
        %2328 = vmatpush1.bf16.msra.mxu0 %v2263
        %2329 = vmatprep.subr.bf16.mxu0 %v2266
        %2330 = vmatpush1.bf16.msra.mxu0 %v2265
        %2331 = vmatprep.subr.bf16.mxu0 %v2268
        %2332 = vmatpush1.bf16.msra.mxu0 %v2267
        %2333 = vmatprep.subr.bf16.mxu0 %v2270
        %2334 = vmatpush1.bf16.msra.mxu0 %v2269
        %2335 = vmatprep.subr.bf16.mxu0 %v2272
        %2336 = vmatpush1.bf16.msra.mxu0 %v2271
        %2337 = vmatprep.subr.bf16.mxu0 %v2274
        %2338 = vmatpush1.bf16.msra.mxu0 %v2273
        %2339 = vmatprep.subr.bf16.mxu0 %v2276
        %2340 = vmatpush1.bf16.msra.mxu0 %v2275
        %2341 = vmatprep.subr.bf16.mxu0 %v2278
        %2342 = vmatpush1.bf16.msra.mxu0 %v2277
        %2343 = vmatprep.subr.bf16.mxu0 %v2280
        %2344 = vmatpush1.bf16.msra.mxu0 %v2279
        %2345 = vmatprep.subr.bf16.mxu0 %v2282
        %2346 = vmatpush1.bf16.msra.mxu0 %v2281
        %2347 = vmatprep.subr.bf16.mxu0 %v2284
        %2348 = vmatpush1.bf16.msra.mxu0 %v2283
        %2349 = vmatprep.mubr.bf16.mxu0 %v1224
        %2350 = vmatmul.mubr.bf16.gmra.mrb[0].mxu0 %v1223
        %v2351 = vpop.f32.mrb[0].mxu0
        %v2352 = vadd.f32 %v2150, %v2351
        %v2353 = vpop.f32.mrb[0].mxu0
        %v2354 = vadd.f32 %v2154, %v2353
        %v2355 = vpop.f32.mrb[0].mxu0
        %v2356 = vadd.f32 %v2150, %v2355
        %v2357 = vpop.f32.mrb[0].mxu0
        %v2358 = vadd.f32 %v2154, %v2357
        %2359 = vmatprep.mubr.bf16.mxu0 %v1226
        %2360 = vmatmul.mubr.bf16.gmra.mrb[0].mxu0 %v1225
        %v2361 = vpop.f32.mrb[0].mxu0
        %v2362 = vadd.f32 %v2150, %v2361
        %v2363 = vpop.f32.mrb[0].mxu0
        %v2364 = vadd.f32 %v2154, %v2363
        %v2365 = vpop.f32.mrb[0].mxu0
        %v2366 = vadd.f32 %v2150, %v2365
        %v2367 = vpop.f32.mrb[0].mxu0
        %v2368 = vadd.f32 %v2154, %v2367
        %2369 = vmatprep.mubr.bf16.mxu0 %v1228
        %2370 = vmatmul.mubr.bf16.gmra.mrb[0].mxu0 %v1227
        %v2371 = vpop.f32.mrb[0].mxu0
        %v2372 = vadd.f32 %v2150, %v2371
        %v2373 = vpop.f32.mrb[0].mxu0
        %v2374 = vadd.f32 %v2154, %v2373
        %v2375 = vpop.f32.mrb[0].mxu0
        %v2376 = vadd.f32 %v2150, %v2375
        %v2377 = vpop.f32.mrb[0].mxu0
        %v2378 = vadd.f32 %v2154, %v2377
        %2379 = vmatprep.mubr.bf16.mxu0 %v1230
        %2380 = vmatmul.mubr.bf16.gmra.mrb[0].mxu0 %v1229
        %v2381 = vpop.f32.mrb[0].mxu0
        %v2382 = vadd.f32 %v2150, %v2381
        %v2383 = vpop.f32.mrb[0].mxu0
        %v2384 = vadd.f32 %v2154, %v2383
        %v2385 = vpop.f32.mrb[0].mxu0
        %v2386 = vadd.f32 %v2150, %v2385
        %v2387 = vpop.f32.mrb[0].mxu0
        %v2388 = vadd.f32 %v2154, %v2387
        %2389 = vmatprep.mubr.bf16.mxu0 %v1232
        %2390 = vmatmul.mubr.bf16.gmra.mrb[0].mxu0 %v1231
        %v2391 = vpop.f32.mrb[0].mxu0
        %v2392 = vadd.f32 %v2150, %v2391
        %v2393 = vpop.f32.mrb[0].mxu0
        %v2394 = vadd.f32 %v2154, %v2393
        %v2395 = vpop.f32.mrb[0].mxu0
        %v2396 = vadd.f32 %v2150, %v2395
        %v2397 = vpop.f32.mrb[0].mxu0
        %v2398 = vadd.f32 %v2154, %v2397
        %2399 = vmatprep.mubr.bf16.mxu0 %v1234
        %2400 = vmatmul.mubr.bf16.gmra.mrb[0].mxu0 %v1233
        %v2401 = vpop.f32.mrb[0].mxu0
        %v2402 = vadd.f32 %v2150, %v2401
        %v2403 = vpop.f32.mrb[0].mxu0
        %v2404 = vadd.f32 %v2154, %v2403
        %v2405 = vpop.f32.mrb[0].mxu0
        %v2406 = vadd.f32 %v2150, %v2405
        %v2407 = vpop.f32.mrb[0].mxu0
        %v2408 = vadd.f32 %v2154, %v2407
        %2409 = vmatprep.mubr.bf16.mxu0 %v1236
        %2410 = vmatmul.mubr.bf16.gmra.mrb[0].mxu0 %v1235
        %v2411 = vpop.f32.mrb[0].mxu0
        %v2412 = vadd.f32 %v2150, %v2411
        %v2413 = vpop.f32.mrb[0].mxu0
        %v2414 = vadd.f32 %v2154, %v2413
        %v2415 = vpop.f32.mrb[0].mxu0
        %v2416 = vadd.f32 %v2150, %v2415
        %v2417 = vpop.f32.mrb[0].mxu0
        %v2418 = vadd.f32 %v2154, %v2417
        %2419 = vmatprep.mubr.bf16.mxu0 %v1238
        %2420 = vmatmul.mubr.bf16.gmra.mrb[0].mxu0 %v1237
        %v2421 = vpop.f32.mrb[0].mxu0
        %v2422 = vadd.f32 %v2150, %v2421
        %v2423 = vpop.f32.mrb[0].mxu0
        %v2424 = vadd.f32 %v2154, %v2423
        %v2425 = vpop.f32.mrb[0].mxu0
        %v2426 = vadd.f32 %v2150, %v2425
        %v2427 = vpop.f32.mrb[0].mxu0
        %v2428 = vadd.f32 %v2154, %v2427
        %2429 = vmatprep.mubr.bf16.mxu0 %v1240
        %2430 = vmatmul.mubr.bf16.gmra.mrb[0].mxu0 %v1239
        %v2431 = vpop.f32.mrb[0].mxu0
        %v2432 = vadd.f32 %v2150, %v2431
        %v2433 = vpop.f32.mrb[0].mxu0
        %v2434 = vadd.f32 %v2154, %v2433
        %v2435 = vpop.f32.mrb[0].mxu0
        %v2436 = vadd.f32 %v2150, %v2435
        %v2437 = vpop.f32.mrb[0].mxu0
        %v2438 = vadd.f32 %v2154, %v2437
        %2439 = vmatprep.mubr.bf16.mxu0 %v1242
        %2440 = vmatmul.mubr.bf16.gmra.mrb[0].mxu0 %v1241
        %v2441 = vpop.f32.mrb[0].mxu0
        %v2442 = vadd.f32 %v2150, %v2441
        %v2443 = vpop.f32.mrb[0].mxu0
        %v2444 = vadd.f32 %v2154, %v2443
        %v2445 = vpop.f32.mrb[0].mxu0
        %v2446 = vadd.f32 %v2150, %v2445
        %v2447 = vpop.f32.mrb[0].mxu0
        %v2448 = vadd.f32 %v2154, %v2447
        %2449 = vmatprep.mubr.bf16.mxu0 %v1244
        %2450 = vmatmul.mubr.bf16.gmra.mrb[0].mxu0 %v1243
        %v2451 = vpop.f32.mrb[0].mxu0
        %v2452 = vadd.f32 %v2150, %v2451
        %v2453 = vpop.f32.mrb[0].mxu0
        %v2454 = vadd.f32 %v2154, %v2453
        %v2455 = vpop.f32.mrb[0].mxu0
        %v2456 = vadd.f32 %v2150, %v2455
        %v2457 = vpop.f32.mrb[0].mxu0
        %v2458 = vadd.f32 %v2154, %v2457
        %2459 = vmatprep.mubr.bf16.mxu0 %v1246
        %2460 = vmatmul.mubr.bf16.gmra.mrb[0].mxu0 %v1245
        %v2461 = vpop.f32.mrb[0].mxu0
        %v2462 = vadd.f32 %v2150, %v2461
        %v2463 = vpop.f32.mrb[0].mxu0
        %v2464 = vadd.f32 %v2154, %v2463
        %v2465 = vpop.f32.mrb[0].mxu0
        %v2466 = vadd.f32 %v2150, %v2465
        %v2467 = vpop.f32.mrb[0].mxu0
        %v2468 = vadd.f32 %v2154, %v2467
        %2469 = vmatprep.mubr.bf16.mxu0 %v1248
        %2470 = vmatmul.mubr.bf16.gmra.mrb[0].mxu0 %v1247
        %v2471 = vpop.f32.mrb[0].mxu0
        %v2472 = vadd.f32 %v2150, %v2471
        %v2473 = vpop.f32.mrb[0].mxu0
        %v2474 = vadd.f32 %v2154, %v2473
        %v2475 = vpop.f32.mrb[0].mxu0
        %v2476 = vadd.f32 %v2150, %v2475
        %v2477 = vpop.f32.mrb[0].mxu0
        %v2478 = vadd.f32 %v2154, %v2477
        %2479 = vmatprep.mubr.bf16.mxu0 %v1250
        %2480 = vmatmul.mubr.bf16.gmra.mrb[0].mxu0 %v1249
        %v2481 = vpop.f32.mrb[0].mxu0
        %v2482 = vadd.f32 %v2150, %v2481
        %v2483 = vpop.f32.mrb[0].mxu0
        %v2484 = vadd.f32 %v2154, %v2483
        %v2485 = vpop.f32.mrb[0].mxu0
        %v2486 = vadd.f32 %v2150, %v2485
        %v2487 = vpop.f32.mrb[0].mxu0
        %v2488 = vadd.f32 %v2154, %v2487
        %2489 = vmatprep.mubr.bf16.mxu0 %v1252
        %2490 = vmatmul.mubr.bf16.gmra.mrb[0].mxu0 %v1251
        %v2491 = vpop.f32.mrb[0].mxu0
        %v2492 = vadd.f32 %v2150, %v2491
        %v2493 = vpop.f32.mrb[0].mxu0
        %v2494 = vadd.f32 %v2154, %v2493
        %v2495 = vpop.f32.mrb[0].mxu0
        %v2496 = vadd.f32 %v2150, %v2495
        %v2497 = vpop.f32.mrb[0].mxu0
        %v2498 = vadd.f32 %v2154, %v2497
        %2499 = vmatprep.mubr.bf16.mxu0 %v1254
        %2500 = vmatmul.mubr.bf16.gmra.mrb[0].mxu0 %v1253
        %v2501 = vpop.f32.mrb[0].mxu0
        %v2502 = vadd.f32 %v2150, %v2501
        %v2503 = vpop.f32.mrb[0].mxu0
        %v2504 = vadd.f32 %v2154, %v2503
        %v2505 = vpop.f32.mrb[0].mxu0
        %v2506 = vadd.f32 %v2150, %v2505
        %v2507 = vpop.f32.mrb[0].mxu0
        %v2508 = vadd.f32 %v2154, %v2507
        %2509 = vdwg.mxu0
        %v2510 = vpack.c.bf16 %v1654, %v1652
        %v2511 = vpack.c.bf16 %v1658, %v1656
        %v2512 = vpack.c.bf16 %v1662, %v1660
        %v2513 = vpack.c.bf16 %v1666, %v1664
        %v2514 = vpack.c.bf16 %v1670, %v1668
        %v2515 = vpack.c.bf16 %v1674, %v1672
        %v2516 = vpack.c.bf16 %v1678, %v1676
        %v2517 = vpack.c.bf16 %v1682, %v1680
        %v2518 = vpack.c.bf16 %v1686, %v1684
        %v2519 = vpack.c.bf16 %v1690, %v1688
        %v2520 = vpack.c.bf16 %v1694, %v1692
        %v2521 = vpack.c.bf16 %v1698, %v1696
        %v2522 = vpack.c.bf16 %v1702, %v1700
        %v2523 = vpack.c.bf16 %v1706, %v1704
        %v2524 = vpack.c.bf16 %v1710, %v1708
        %v2525 = vpack.c.bf16 %v1714, %v1712
        %v2542 = vunpack.c.l.b16 %v2510
        %v2543 = vunpack.c.h.b16 %v2510
        %v2544 = vunpack.c.l.b16 %v2511
        %v2545 = vunpack.c.h.b16 %v2511
        %v2546 = vunpack.c.l.b16 %v2512
        %v2547 = vunpack.c.h.b16 %v2512
        %v2548 = vunpack.c.l.b16 %v2513
        %v2549 = vunpack.c.h.b16 %v2513
        %v2550 = vunpack.c.l.b16 %v2514
        %v2551 = vunpack.c.h.b16 %v2514
        %v2552 = vunpack.c.l.b16 %v2515
        %v2553 = vunpack.c.h.b16 %v2515
        %v2554 = vunpack.c.l.b16 %v2516
        %v2555 = vunpack.c.h.b16 %v2516
        %v2556 = vunpack.c.l.b16 %v2517
        %v2557 = vunpack.c.h.b16 %v2517
        %v2558 = vunpack.c.l.b16 %v2518
        %v2559 = vunpack.c.h.b16 %v2518
        %v2560 = vunpack.c.l.b16 %v2519
        %v2561 = vunpack.c.h.b16 %v2519
        %v2562 = vunpack.c.l.b16 %v2520
        %v2563 = vunpack.c.h.b16 %v2520
        %v2564 = vunpack.c.l.b16 %v2521
        %v2565 = vunpack.c.h.b16 %v2521
        %v2566 = vunpack.c.l.b16 %v2522
        %v2567 = vunpack.c.h.b16 %v2522
        %v2568 = vunpack.c.l.b16 %v2523
        %v2569 = vunpack.c.h.b16 %v2523
        %v2570 = vunpack.c.l.b16 %v2524
        %v2571 = vunpack.c.h.b16 %v2524
        %v2572 = vunpack.c.l.b16 %v2525
        %v2573 = vunpack.c.h.b16 %v2525
        %v2574 = vpack.c.b16 %v2542, %v2542
        %v2575 = vpack.c.b16 %v2543, %v2543
        %v2576 = vpack.c.b16 %v2544, %v2544
        %v2577 = vpack.c.b16 %v2545, %v2545
        %v2578 = vpack.c.b16 %v2546, %v2546
        %v2579 = vpack.c.b16 %v2547, %v2547
        %v2580 = vpack.c.b16 %v2548, %v2548
        %v2581 = vpack.c.b16 %v2549, %v2549
        %v2582 = vpack.c.b16 %v2550, %v2550
        %v2583 = vpack.c.b16 %v2551, %v2551
        %v2584 = vpack.c.b16 %v2552, %v2552
        %v2585 = vpack.c.b16 %v2553, %v2553
        %v2586 = vpack.c.b16 %v2554, %v2554
        %v2587 = vpack.c.b16 %v2555, %v2555
        %v2588 = vpack.c.b16 %v2556, %v2556
        %v2589 = vpack.c.b16 %v2557, %v2557
        %v2590 = vpack.c.b16 %v2558, %v2558
        %v2591 = vpack.c.b16 %v2559, %v2559
        %v2592 = vpack.c.b16 %v2560, %v2560
        %v2593 = vpack.c.b16 %v2561, %v2561
        %v2594 = vpack.c.b16 %v2562, %v2562
        %v2595 = vpack.c.b16 %v2563, %v2563
        %v2596 = vpack.c.b16 %v2564, %v2564
        %v2597 = vpack.c.b16 %v2565, %v2565
        %v2598 = vpack.c.b16 %v2566, %v2566
        %v2599 = vpack.c.b16 %v2567, %v2567
        %v2600 = vpack.c.b16 %v2568, %v2568
        %v2601 = vpack.c.b16 %v2569, %v2569
        %v2602 = vpack.c.b16 %v2570, %v2570
        %v2603 = vpack.c.b16 %v2571, %v2571
        %v2604 = vpack.c.b16 %v2572, %v2572
        %v2605 = vpack.c.b16 %v2573, %v2573
        %2638 = vst [vmem:[%s475] sm:$0xf] %v2574
        %2639 = vst [vmem:[%s475 + $0x4] sm:$0xf] %v2575
        %2640 = vst [vmem:[%s475 + $0x8] sm:$0xf] %v2576
        %2641 = vst [vmem:[%s475 + $0xc] sm:$0xf] %v2577
        %2642 = vst [vmem:[%s475 + $0x10] sm:$0xf] %v2578
        %2643 = vst [vmem:[%s475 + $0x14] sm:$0xf] %v2579
        %2644 = vst [vmem:[%s475 + $0x18] sm:$0xf] %v2580
        %2645 = vst [vmem:[%s475 + $0x1c] sm:$0xf] %v2581
        %2646 = vst [vmem:[%s475 + $0x20] sm:$0xf] %v2582
        %2647 = vst [vmem:[%s475 + $0x24] sm:$0xf] %v2583
        %2648 = vst [vmem:[%s475 + $0x28] sm:$0xf] %v2584
        %2649 = vst [vmem:[%s475 + $0x2c] sm:$0xf] %v2585
        %2650 = vst [vmem:[%s475 + $0x30] sm:$0xf] %v2586
        %2651 = vst [vmem:[%s475 + $0x34] sm:$0xf] %v2587
        %2652 = vst [vmem:[%s475 + $0x38] sm:$0xf] %v2588
        %2653 = vst [vmem:[%s475 + $0x3c] sm:$0xf] %v2589
        %2654 = vst [vmem:[%s475 + $0x40] sm:$0xf] %v2590
        %2655 = vst [vmem:[%s475 + $0x44] sm:$0xf] %v2591
        %2656 = vst [vmem:[%s475 + $0x48] sm:$0xf] %v2592
        %2657 = vst [vmem:[%s475 + $0x4c] sm:$0xf] %v2593
        %2658 = vst [vmem:[%s475 + $0x50] sm:$0xf] %v2594
        %2659 = vst [vmem:[%s475 + $0x54] sm:$0xf] %v2595
        %2660 = vst [vmem:[%s475 + $0x58] sm:$0xf] %v2596
        %2661 = vst [vmem:[%s475 + $0x5c] sm:$0xf] %v2597
        %2662 = vst [vmem:[%s475 + $0x60] sm:$0xf] %v2598
        %2663 = vst [vmem:[%s475 + $0x64] sm:$0xf] %v2599
        %2664 = vst [vmem:[%s475 + $0x68] sm:$0xf] %v2600
        %2665 = vst [vmem:[%s475 + $0x6c] sm:$0xf] %v2601
        %2666 = vst [vmem:[%s475 + $0x70] sm:$0xf] %v2602
        %2667 = vst [vmem:[%s475 + $0x74] sm:$0xf] %v2603
        %2668 = vst [vmem:[%s475 + $0x78] sm:$0xf] %v2604
        %2669 = vst [vmem:[%s475 + $0x7c] sm:$0xf] %v2605
        %v2670 = vpack.c.bf16 %v1959, %v1955
        %v2671 = vpack.c.bf16 %v1969, %v1965
        %v2672 = vpack.c.bf16 %v1979, %v1975
        %v2673 = vpack.c.bf16 %v1989, %v1985
        %v2674 = vpack.c.bf16 %v1999, %v1995
        %v2675 = vpack.c.bf16 %v2009, %v2005
        %v2676 = vpack.c.bf16 %v2019, %v2015
        %v2677 = vpack.c.bf16 %v2029, %v2025
        %v2678 = vpack.c.bf16 %v2039, %v2035
        %v2679 = vpack.c.bf16 %v2049, %v2045
        %v2680 = vpack.c.bf16 %v2059, %v2055
        %v2681 = vpack.c.bf16 %v2069, %v2065
        %v2682 = vpack.c.bf16 %v2079, %v2075
        %v2683 = vpack.c.bf16 %v2089, %v2085
        %v2684 = vpack.c.bf16 %v2099, %v2095
        %v2685 = vpack.c.bf16 %v2109, %v2105
        %v2702 = vunpack.c.l.b16 %v2670
        %v2703 = vunpack.c.h.b16 %v2670
        %v2704 = vunpack.c.l.b16 %v2671
        %v2705 = vunpack.c.h.b16 %v2671
        %v2706 = vunpack.c.l.b16 %v2672
        %v2707 = vunpack.c.h.b16 %v2672
        %v2708 = vunpack.c.l.b16 %v2673
        %v2709 = vunpack.c.h.b16 %v2673
        %v2710 = vunpack.c.l.b16 %v2674
        %v2711 = vunpack.c.h.b16 %v2674
        %v2712 = vunpack.c.l.b16 %v2675
        %v2713 = vunpack.c.h.b16 %v2675
        %v2714 = vunpack.c.l.b16 %v2676
        %v2715 = vunpack.c.h.b16 %v2676
        %v2716 = vunpack.c.l.b16 %v2677
        %v2717 = vunpack.c.h.b16 %v2677
        %v2718 = vunpack.c.l.b16 %v2678
        %v2719 = vunpack.c.h.b16 %v2678
        %v2720 = vunpack.c.l.b16 %v2679
        %v2721 = vunpack.c.h.b16 %v2679
        %v2722 = vunpack.c.l.b16 %v2680
        %v2723 = vunpack.c.h.b16 %v2680
        %v2724 = vunpack.c.l.b16 %v2681
        %v2725 = vunpack.c.h.b16 %v2681
        %v2726 = vunpack.c.l.b16 %v2682
        %v2727 = vunpack.c.h.b16 %v2682
        %v2728 = vunpack.c.l.b16 %v2683
        %v2729 = vunpack.c.h.b16 %v2683
        %v2730 = vunpack.c.l.b16 %v2684
        %v2731 = vunpack.c.h.b16 %v2684
        %v2732 = vunpack.c.l.b16 %v2685
        %v2733 = vunpack.c.h.b16 %v2685
        %v2734 = vpack.c.b16 %v2702, %v2702
        %v2735 = vpack.c.b16 %v2703, %v2703
        %v2736 = vpack.c.b16 %v2704, %v2704
        %v2737 = vpack.c.b16 %v2705, %v2705
        %v2738 = vpack.c.b16 %v2706, %v2706
        %v2739 = vpack.c.b16 %v2707, %v2707
        %v2740 = vpack.c.b16 %v2708, %v2708
        %v2741 = vpack.c.b16 %v2709, %v2709
        %v2742 = vpack.c.b16 %v2710, %v2710
        %v2743 = vpack.c.b16 %v2711, %v2711
        %v2744 = vpack.c.b16 %v2712, %v2712
        %v2745 = vpack.c.b16 %v2713, %v2713
        %v2746 = vpack.c.b16 %v2714, %v2714
        %v2747 = vpack.c.b16 %v2715, %v2715
        %v2748 = vpack.c.b16 %v2716, %v2716
        %v2749 = vpack.c.b16 %v2717, %v2717
        %v2750 = vpack.c.b16 %v2718, %v2718
        %v2751 = vpack.c.b16 %v2719, %v2719
        %v2752 = vpack.c.b16 %v2720, %v2720
        %v2753 = vpack.c.b16 %v2721, %v2721
        %v2754 = vpack.c.b16 %v2722, %v2722
        %v2755 = vpack.c.b16 %v2723, %v2723
        %v2756 = vpack.c.b16 %v2724, %v2724
        %v2757 = vpack.c.b16 %v2725, %v2725
        %v2758 = vpack.c.b16 %v2726, %v2726
        %v2759 = vpack.c.b16 %v2727, %v2727
        %v2760 = vpack.c.b16 %v2728, %v2728
        %v2761 = vpack.c.b16 %v2729, %v2729
        %v2762 = vpack.c.b16 %v2730, %v2730
        %v2763 = vpack.c.b16 %v2731, %v2731
        %v2764 = vpack.c.b16 %v2732, %v2732
        %v2765 = vpack.c.b16 %v2733, %v2733
        %2798 = vst [vmem:[%s482] sm:$0xf] %v2734
        %2799 = vst [vmem:[%s482 + $0x4] sm:$0xf] %v2735
        %2800 = vst [vmem:[%s482 + $0x8] sm:$0xf] %v2736
        %2801 = vst [vmem:[%s482 + $0xc] sm:$0xf] %v2737
        %2802 = vst [vmem:[%s482 + $0x10] sm:$0xf] %v2738
        %2803 = vst [vmem:[%s482 + $0x14] sm:$0xf] %v2739
        %2804 = vst [vmem:[%s482 + $0x18] sm:$0xf] %v2740
        %2805 = vst [vmem:[%s482 + $0x1c] sm:$0xf] %v2741
        %2806 = vst [vmem:[%s482 + $0x20] sm:$0xf] %v2742
        %2807 = vst [vmem:[%s482 + $0x24] sm:$0xf] %v2743
        %2808 = vst [vmem:[%s482 + $0x28] sm:$0xf] %v2744
        %2809 = vst [vmem:[%s482 + $0x2c] sm:$0xf] %v2745
        %2810 = vst [vmem:[%s482 + $0x30] sm:$0xf] %v2746
        %2811 = vst [vmem:[%s482 + $0x34] sm:$0xf] %v2747
        %2812 = vst [vmem:[%s482 + $0x38] sm:$0xf] %v2748
        %2813 = vst [vmem:[%s482 + $0x3c] sm:$0xf] %v2749
        %2814 = vst [vmem:[%s482 + $0x40] sm:$0xf] %v2750
        %2815 = vst [vmem:[%s482 + $0x44] sm:$0xf] %v2751
        %2816 = vst [vmem:[%s482 + $0x48] sm:$0xf] %v2752
        %2817 = vst [vmem:[%s482 + $0x4c] sm:$0xf] %v2753
        %2818 = vst [vmem:[%s482 + $0x50] sm:$0xf] %v2754
        %2819 = vst [vmem:[%s482 + $0x54] sm:$0xf] %v2755
        %2820 = vst [vmem:[%s482 + $0x58] sm:$0xf] %v2756
        %2821 = vst [vmem:[%s482 + $0x5c] sm:$0xf] %v2757
        %2822 = vst [vmem:[%s482 + $0x60] sm:$0xf] %v2758
        %2823 = vst [vmem:[%s482 + $0x64] sm:$0xf] %v2759
        %2824 = vst [vmem:[%s482 + $0x68] sm:$0xf] %v2760
        %2825 = vst [vmem:[%s482 + $0x6c] sm:$0xf] %v2761
        %2826 = vst [vmem:[%s482 + $0x70] sm:$0xf] %v2762
        %2827 = vst [vmem:[%s482 + $0x74] sm:$0xf] %v2763
        %2828 = vst [vmem:[%s482 + $0x78] sm:$0xf] %v2764
        %2829 = vst [vmem:[%s482 + $0x7c] sm:$0xf] %v2765
        %v2830 = vpack.c.bf16 %v2356, %v2352
        %v2831 = vpack.c.bf16 %v2366, %v2362
        %v2832 = vpack.c.bf16 %v2376, %v2372
        %v2833 = vpack.c.bf16 %v2386, %v2382
        %v2834 = vpack.c.bf16 %v2396, %v2392
        %v2835 = vpack.c.bf16 %v2406, %v2402
        %v2836 = vpack.c.bf16 %v2416, %v2412
        %v2837 = vpack.c.bf16 %v2426, %v2422
        %v2838 = vpack.c.bf16 %v2436, %v2432
        %v2839 = vpack.c.bf16 %v2446, %v2442
        %v2840 = vpack.c.bf16 %v2456, %v2452
        %v2841 = vpack.c.bf16 %v2466, %v2462
        %v2842 = vpack.c.bf16 %v2476, %v2472
        %v2843 = vpack.c.bf16 %v2486, %v2482
        %v2844 = vpack.c.bf16 %v2496, %v2492
        %v2845 = vpack.c.bf16 %v2506, %v2502
        %v2862 = vunpack.c.l.b16 %v2830
        %v2863 = vunpack.c.h.b16 %v2830
        %v2864 = vunpack.c.l.b16 %v2831
        %v2865 = vunpack.c.h.b16 %v2831
        %v2866 = vunpack.c.l.b16 %v2832
        %v2867 = vunpack.c.h.b16 %v2832
        %v2868 = vunpack.c.l.b16 %v2833
        %v2869 = vunpack.c.h.b16 %v2833
        %v2870 = vunpack.c.l.b16 %v2834
        %v2871 = vunpack.c.h.b16 %v2834
        %v2872 = vunpack.c.l.b16 %v2835
        %v2873 = vunpack.c.h.b16 %v2835
        %v2874 = vunpack.c.l.b16 %v2836
        %v2875 = vunpack.c.h.b16 %v2836
        %v2876 = vunpack.c.l.b16 %v2837
        %v2877 = vunpack.c.h.b16 %v2837
        %v2878 = vunpack.c.l.b16 %v2838
        %v2879 = vunpack.c.h.b16 %v2838
        %v2880 = vunpack.c.l.b16 %v2839
        %v2881 = vunpack.c.h.b16 %v2839
        %v2882 = vunpack.c.l.b16 %v2840
        %v2883 = vunpack.c.h.b16 %v2840
        %v2884 = vunpack.c.l.b16 %v2841
        %v2885 = vunpack.c.h.b16 %v2841
        %v2886 = vunpack.c.l.b16 %v2842
        %v2887 = vunpack.c.h.b16 %v2842
        %v2888 = vunpack.c.l.b16 %v2843
        %v2889 = vunpack.c.h.b16 %v2843
        %v2890 = vunpack.c.l.b16 %v2844
        %v2891 = vunpack.c.h.b16 %v2844
        %v2892 = vunpack.c.l.b16 %v2845
        %v2893 = vunpack.c.h.b16 %v2845
        %v2894 = vpack.c.b16 %v2862, %v2862
        %v2895 = vpack.c.b16 %v2863, %v2863
        %v2896 = vpack.c.b16 %v2864, %v2864
        %v2897 = vpack.c.b16 %v2865, %v2865
        %v2898 = vpack.c.b16 %v2866, %v2866
        %v2899 = vpack.c.b16 %v2867, %v2867
        %v2900 = vpack.c.b16 %v2868, %v2868
        %v2901 = vpack.c.b16 %v2869, %v2869
        %v2902 = vpack.c.b16 %v2870, %v2870
        %v2903 = vpack.c.b16 %v2871, %v2871
        %v2904 = vpack.c.b16 %v2872, %v2872
        %v2905 = vpack.c.b16 %v2873, %v2873
        %v2906 = vpack.c.b16 %v2874, %v2874
        %v2907 = vpack.c.b16 %v2875, %v2875
        %v2908 = vpack.c.b16 %v2876, %v2876
        %v2909 = vpack.c.b16 %v2877, %v2877
        %v2910 = vpack.c.b16 %v2878, %v2878
        %v2911 = vpack.c.b16 %v2879, %v2879
        %v2912 = vpack.c.b16 %v2880, %v2880
        %v2913 = vpack.c.b16 %v2881, %v2881
        %v2914 = vpack.c.b16 %v2882, %v2882
        %v2915 = vpack.c.b16 %v2883, %v2883
        %v2916 = vpack.c.b16 %v2884, %v2884
        %v2917 = vpack.c.b16 %v2885, %v2885
        %v2918 = vpack.c.b16 %v2886, %v2886
        %v2919 = vpack.c.b16 %v2887, %v2887
        %v2920 = vpack.c.b16 %v2888, %v2888
        %v2921 = vpack.c.b16 %v2889, %v2889
        %v2922 = vpack.c.b16 %v2890, %v2890
        %v2923 = vpack.c.b16 %v2891, %v2891
        %v2924 = vpack.c.b16 %v2892, %v2892
        %v2925 = vpack.c.b16 %v2893, %v2893
        %2958 = vst [vmem:[%s489] sm:$0xf] %v2894
        %2959 = vst [vmem:[%s489 + $0x4] sm:$0xf] %v2895
        %2960 = vst [vmem:[%s489 + $0x8] sm:$0xf] %v2896
        %2961 = vst [vmem:[%s489 + $0xc] sm:$0xf] %v2897
        %2962 = vst [vmem:[%s489 + $0x10] sm:$0xf] %v2898
        %2963 = vst [vmem:[%s489 + $0x14] sm:$0xf] %v2899
        %2964 = vst [vmem:[%s489 + $0x18] sm:$0xf] %v2900
        %2965 = vst [vmem:[%s489 + $0x1c] sm:$0xf] %v2901
        %2966 = vst [vmem:[%s489 + $0x20] sm:$0xf] %v2902
        %2967 = vst [vmem:[%s489 + $0x24] sm:$0xf] %v2903
        %2968 = vst [vmem:[%s489 + $0x28] sm:$0xf] %v2904
        %2969 = vst [vmem:[%s489 + $0x2c] sm:$0xf] %v2905
        %2970 = vst [vmem:[%s489 + $0x30] sm:$0xf] %v2906
        %2971 = vst [vmem:[%s489 + $0x34] sm:$0xf] %v2907
        %2972 = vst [vmem:[%s489 + $0x38] sm:$0xf] %v2908
        %2973 = vst [vmem:[%s489 + $0x3c] sm:$0xf] %v2909
        %2974 = vst [vmem:[%s489 + $0x40] sm:$0xf] %v2910
        %2975 = vst [vmem:[%s489 + $0x44] sm:$0xf] %v2911
        %2976 = vst [vmem:[%s489 + $0x48] sm:$0xf] %v2912
        %2977 = vst [vmem:[%s489 + $0x4c] sm:$0xf] %v2913
        %2978 = vst [vmem:[%s489 + $0x50] sm:$0xf] %v2914
        %2979 = vst [vmem:[%s489 + $0x54] sm:$0xf] %v2915
        %2980 = vst [vmem:[%s489 + $0x58] sm:$0xf] %v2916
        %2981 = vst [vmem:[%s489 + $0x5c] sm:$0xf] %v2917
        %2982 = vst [vmem:[%s489 + $0x60] sm:$0xf] %v2918
        %2983 = vst [vmem:[%s489 + $0x64] sm:$0xf] %v2919
        %2984 = vst [vmem:[%s489 + $0x68] sm:$0xf] %v2920
        %2985 = vst [vmem:[%s489 + $0x6c] sm:$0xf] %v2921
        %2986 = vst [vmem:[%s489 + $0x70] sm:$0xf] %v2922
        %2987 = vst [vmem:[%s489 + $0x74] sm:$0xf] %v2923
        %2988 = vst [vmem:[%s489 + $0x78] sm:$0xf] %v2924
        %2989 = vst [vmem:[%s489 + $0x7c] sm:$0xf] %v2925
        %v2990 = vpack.c.bf16 %v1655, %v1653
        %v2991 = vpack.c.bf16 %v1659, %v1657
        %v2992 = vpack.c.bf16 %v1663, %v1661
        %v2993 = vpack.c.bf16 %v1667, %v1665
        %v2994 = vpack.c.bf16 %v1671, %v1669
        %v2995 = vpack.c.bf16 %v1675, %v1673
        %v2996 = vpack.c.bf16 %v1679, %v1677
        %v2997 = vpack.c.bf16 %v1683, %v1681
        %v2998 = vpack.c.bf16 %v1687, %v1685
        %v2999 = vpack.c.bf16 %v1691, %v1689
        %v3000 = vpack.c.bf16 %v1695, %v1693
        %v3001 = vpack.c.bf16 %v1699, %v1697
        %v3002 = vpack.c.bf16 %v1703, %v1701
        %v3003 = vpack.c.bf16 %v1707, %v1705
        %v3004 = vpack.c.bf16 %v1711, %v1709
        %v3005 = vpack.c.bf16 %v1715, %v1713
        %v3022 = vunpack.c.l.b16 %v2990
        %v3023 = vunpack.c.h.b16 %v2990
        %v3024 = vunpack.c.l.b16 %v2991
        %v3025 = vunpack.c.h.b16 %v2991
        %v3026 = vunpack.c.l.b16 %v2992
        %v3027 = vunpack.c.h.b16 %v2992
        %v3028 = vunpack.c.l.b16 %v2993
        %v3029 = vunpack.c.h.b16 %v2993
        %v3030 = vunpack.c.l.b16 %v2994
        %v3031 = vunpack.c.h.b16 %v2994
        %v3032 = vunpack.c.l.b16 %v2995
        %v3033 = vunpack.c.h.b16 %v2995
        %v3034 = vunpack.c.l.b16 %v2996
        %v3035 = vunpack.c.h.b16 %v2996
        %v3036 = vunpack.c.l.b16 %v2997
        %v3037 = vunpack.c.h.b16 %v2997
        %v3038 = vunpack.c.l.b16 %v2998
        %v3039 = vunpack.c.h.b16 %v2998
        %v3040 = vunpack.c.l.b16 %v2999
        %v3041 = vunpack.c.h.b16 %v2999
        %v3042 = vunpack.c.l.b16 %v3000
        %v3043 = vunpack.c.h.b16 %v3000
        %v3044 = vunpack.c.l.b16 %v3001
        %v3045 = vunpack.c.h.b16 %v3001
        %v3046 = vunpack.c.l.b16 %v3002
        %v3047 = vunpack.c.h.b16 %v3002
        %v3048 = vunpack.c.l.b16 %v3003
        %v3049 = vunpack.c.h.b16 %v3003
        %v3050 = vunpack.c.l.b16 %v3004
        %v3051 = vunpack.c.h.b16 %v3004
        %v3052 = vunpack.c.l.b16 %v3005
        %v3053 = vunpack.c.h.b16 %v3005
        %v3054 = vpack.c.b16 %v3022, %v3022
        %v3055 = vpack.c.b16 %v3023, %v3023
        %v3056 = vpack.c.b16 %v3024, %v3024
        %v3057 = vpack.c.b16 %v3025, %v3025
        %v3058 = vpack.c.b16 %v3026, %v3026
        %v3059 = vpack.c.b16 %v3027, %v3027
        %v3060 = vpack.c.b16 %v3028, %v3028
        %v3061 = vpack.c.b16 %v3029, %v3029
        %v3062 = vpack.c.b16 %v3030, %v3030
        %v3063 = vpack.c.b16 %v3031, %v3031
        %v3064 = vpack.c.b16 %v3032, %v3032
        %v3065 = vpack.c.b16 %v3033, %v3033
        %v3066 = vpack.c.b16 %v3034, %v3034
        %v3067 = vpack.c.b16 %v3035, %v3035
        %v3068 = vpack.c.b16 %v3036, %v3036
        %v3069 = vpack.c.b16 %v3037, %v3037
        %v3070 = vpack.c.b16 %v3038, %v3038
        %v3071 = vpack.c.b16 %v3039, %v3039
        %v3072 = vpack.c.b16 %v3040, %v3040
        %v3073 = vpack.c.b16 %v3041, %v3041
        %v3074 = vpack.c.b16 %v3042, %v3042
        %v3075 = vpack.c.b16 %v3043, %v3043
        %v3076 = vpack.c.b16 %v3044, %v3044
        %v3077 = vpack.c.b16 %v3045, %v3045
        %v3078 = vpack.c.b16 %v3046, %v3046
        %v3079 = vpack.c.b16 %v3047, %v3047
        %v3080 = vpack.c.b16 %v3048, %v3048
        %v3081 = vpack.c.b16 %v3049, %v3049
        %v3082 = vpack.c.b16 %v3050, %v3050
        %v3083 = vpack.c.b16 %v3051, %v3051
        %v3084 = vpack.c.b16 %v3052, %v3052
        %v3085 = vpack.c.b16 %v3053, %v3053
        %s3118 = scalar_lea.vmem %s475, 128 [#allocation10]
        %3119 = vst [vmem:[%s3118] sm:$0xf] %v3054
        %3120 = vst [vmem:[%s3118 + $0x4] sm:$0xf] %v3055
        %3121 = vst [vmem:[%s3118 + $0x8] sm:$0xf] %v3056
        %3122 = vst [vmem:[%s3118 + $0xc] sm:$0xf] %v3057
        %3123 = vst [vmem:[%s3118 + $0x10] sm:$0xf] %v3058
        %3124 = vst [vmem:[%s3118 + $0x14] sm:$0xf] %v3059
        %3125 = vst [vmem:[%s3118 + $0x18] sm:$0xf] %v3060
        %3126 = vst [vmem:[%s3118 + $0x1c] sm:$0xf] %v3061
        %3127 = vst [vmem:[%s3118 + $0x20] sm:$0xf] %v3062
        %3128 = vst [vmem:[%s3118 + $0x24] sm:$0xf] %v3063
        %3129 = vst [vmem:[%s3118 + $0x28] sm:$0xf] %v3064
        %3130 = vst [vmem:[%s3118 + $0x2c] sm:$0xf] %v3065
        %3131 = vst [vmem:[%s3118 + $0x30] sm:$0xf] %v3066
        %3132 = vst [vmem:[%s3118 + $0x34] sm:$0xf] %v3067
        %3133 = vst [vmem:[%s3118 + $0x38] sm:$0xf] %v3068
        %3134 = vst [vmem:[%s3118 + $0x3c] sm:$0xf] %v3069
        %3135 = vst [vmem:[%s3118 + $0x40] sm:$0xf] %v3070
        %3136 = vst [vmem:[%s3118 + $0x44] sm:$0xf] %v3071
        %3137 = vst [vmem:[%s3118 + $0x48] sm:$0xf] %v3072
        %3138 = vst [vmem:[%s3118 + $0x4c] sm:$0xf] %v3073
        %3139 = vst [vmem:[%s3118 + $0x50] sm:$0xf] %v3074
        %3140 = vst [vmem:[%s3118 + $0x54] sm:$0xf] %v3075
        %3141 = vst [vmem:[%s3118 + $0x58] sm:$0xf] %v3076
        %3142 = vst [vmem:[%s3118 + $0x5c] sm:$0xf] %v3077
        %3143 = vst [vmem:[%s3118 + $0x60] sm:$0xf] %v3078
        %3144 = vst [vmem:[%s3118 + $0x64] sm:$0xf] %v3079
        %3145 = vst [vmem:[%s3118 + $0x68] sm:$0xf] %v3080
        %3146 = vst [vmem:[%s3118 + $0x6c] sm:$0xf] %v3081
        %3147 = vst [vmem:[%s3118 + $0x70] sm:$0xf] %v3082
        %3148 = vst [vmem:[%s3118 + $0x74] sm:$0xf] %v3083
        %3149 = vst [vmem:[%s3118 + $0x78] sm:$0xf] %v3084
        %3150 = vst [vmem:[%s3118 + $0x7c] sm:$0xf] %v3085
        %v3151 = vpack.c.bf16 %v1961, %v1957
        %v3152 = vpack.c.bf16 %v1971, %v1967
        %v3153 = vpack.c.bf16 %v1981, %v1977
        %v3154 = vpack.c.bf16 %v1991, %v1987
        %v3155 = vpack.c.bf16 %v2001, %v1997
        %v3156 = vpack.c.bf16 %v2011, %v2007
        %v3157 = vpack.c.bf16 %v2021, %v2017
        %v3158 = vpack.c.bf16 %v2031, %v2027
        %v3159 = vpack.c.bf16 %v2041, %v2037
        %v3160 = vpack.c.bf16 %v2051, %v2047
        %v3161 = vpack.c.bf16 %v2061, %v2057
        %v3162 = vpack.c.bf16 %v2071, %v2067
        %v3163 = vpack.c.bf16 %v2081, %v2077
        %v3164 = vpack.c.bf16 %v2091, %v2087
        %v3165 = vpack.c.bf16 %v2101, %v2097
        %v3166 = vpack.c.bf16 %v2111, %v2107
        %v3183 = vunpack.c.l.b16 %v3151
        %v3184 = vunpack.c.h.b16 %v3151
        %v3185 = vunpack.c.l.b16 %v3152
        %v3186 = vunpack.c.h.b16 %v3152
        %v3187 = vunpack.c.l.b16 %v3153
        %v3188 = vunpack.c.h.b16 %v3153
        %v3189 = vunpack.c.l.b16 %v3154
        %v3190 = vunpack.c.h.b16 %v3154
        %v3191 = vunpack.c.l.b16 %v3155
        %v3192 = vunpack.c.h.b16 %v3155
        %v3193 = vunpack.c.l.b16 %v3156
        %v3194 = vunpack.c.h.b16 %v3156
        %v3195 = vunpack.c.l.b16 %v3157
        %v3196 = vunpack.c.h.b16 %v3157
        %v3197 = vunpack.c.l.b16 %v3158
        %v3198 = vunpack.c.h.b16 %v3158
        %v3199 = vunpack.c.l.b16 %v3159
        %v3200 = vunpack.c.h.b16 %v3159
        %v3201 = vunpack.c.l.b16 %v3160
        %v3202 = vunpack.c.h.b16 %v3160
        %v3203 = vunpack.c.l.b16 %v3161
        %v3204 = vunpack.c.h.b16 %v3161
        %v3205 = vunpack.c.l.b16 %v3162
        %v3206 = vunpack.c.h.b16 %v3162
        %v3207 = vunpack.c.l.b16 %v3163
        %v3208 = vunpack.c.h.b16 %v3163
        %v3209 = vunpack.c.l.b16 %v3164
        %v3210 = vunpack.c.h.b16 %v3164
        %v3211 = vunpack.c.l.b16 %v3165
        %v3212 = vunpack.c.h.b16 %v3165
        %v3213 = vunpack.c.l.b16 %v3166
        %v3214 = vunpack.c.h.b16 %v3166
        %v3215 = vpack.c.b16 %v3183, %v3183
        %v3216 = vpack.c.b16 %v3184, %v3184
        %v3217 = vpack.c.b16 %v3185, %v3185
        %v3218 = vpack.c.b16 %v3186, %v3186
        %v3219 = vpack.c.b16 %v3187, %v3187
        %v3220 = vpack.c.b16 %v3188, %v3188
        %v3221 = vpack.c.b16 %v3189, %v3189
        %v3222 = vpack.c.b16 %v3190, %v3190
        %v3223 = vpack.c.b16 %v3191, %v3191
        %v3224 = vpack.c.b16 %v3192, %v3192
        %v3225 = vpack.c.b16 %v3193, %v3193
        %v3226 = vpack.c.b16 %v3194, %v3194
        %v3227 = vpack.c.b16 %v3195, %v3195
        %v3228 = vpack.c.b16 %v3196, %v3196
        %v3229 = vpack.c.b16 %v3197, %v3197
        %v3230 = vpack.c.b16 %v3198, %v3198
        %v3231 = vpack.c.b16 %v3199, %v3199
        %v3232 = vpack.c.b16 %v3200, %v3200
        %v3233 = vpack.c.b16 %v3201, %v3201
        %v3234 = vpack.c.b16 %v3202, %v3202
        %v3235 = vpack.c.b16 %v3203, %v3203
        %v3236 = vpack.c.b16 %v3204, %v3204
        %v3237 = vpack.c.b16 %v3205, %v3205
        %v3238 = vpack.c.b16 %v3206, %v3206
        %v3239 = vpack.c.b16 %v3207, %v3207
        %v3240 = vpack.c.b16 %v3208, %v3208
        %v3241 = vpack.c.b16 %v3209, %v3209
        %v3242 = vpack.c.b16 %v3210, %v3210
        %v3243 = vpack.c.b16 %v3211, %v3211
        %v3244 = vpack.c.b16 %v3212, %v3212
        %v3245 = vpack.c.b16 %v3213, %v3213
        %v3246 = vpack.c.b16 %v3214, %v3214
        %s3279 = scalar_lea.vmem %s482, 128 [#allocation11]
        %3280 = vst [vmem:[%s3279] sm:$0xf] %v3215
        %3281 = vst [vmem:[%s3279 + $0x4] sm:$0xf] %v3216
        %3282 = vst [vmem:[%s3279 + $0x8] sm:$0xf] %v3217
        %3283 = vst [vmem:[%s3279 + $0xc] sm:$0xf] %v3218
        %3284 = vst [vmem:[%s3279 + $0x10] sm:$0xf] %v3219
        %3285 = vst [vmem:[%s3279 + $0x14] sm:$0xf] %v3220
        %3286 = vst [vmem:[%s3279 + $0x18] sm:$0xf] %v3221
        %3287 = vst [vmem:[%s3279 + $0x1c] sm:$0xf] %v3222
        %3288 = vst [vmem:[%s3279 + $0x20] sm:$0xf] %v3223
        %3289 = vst [vmem:[%s3279 + $0x24] sm:$0xf] %v3224
        %3290 = vst [vmem:[%s3279 + $0x28] sm:$0xf] %v3225
        %3291 = vst [vmem:[%s3279 + $0x2c] sm:$0xf] %v3226
        %3292 = vst [vmem:[%s3279 + $0x30] sm:$0xf] %v3227
        %3293 = vst [vmem:[%s3279 + $0x34] sm:$0xf] %v3228
        %3294 = vst [vmem:[%s3279 + $0x38] sm:$0xf] %v3229
        %3295 = vst [vmem:[%s3279 + $0x3c] sm:$0xf] %v3230
        %3296 = vst [vmem:[%s3279 + $0x40] sm:$0xf] %v3231
        %3297 = vst [vmem:[%s3279 + $0x44] sm:$0xf] %v3232
        %3298 = vst [vmem:[%s3279 + $0x48] sm:$0xf] %v3233
        %3299 = vst [vmem:[%s3279 + $0x4c] sm:$0xf] %v3234
        %3300 = vst [vmem:[%s3279 + $0x50] sm:$0xf] %v3235
        %3301 = vst [vmem:[%s3279 + $0x54] sm:$0xf] %v3236
        %3302 = vst [vmem:[%s3279 + $0x58] sm:$0xf] %v3237
        %3303 = vst [vmem:[%s3279 + $0x5c] sm:$0xf] %v3238
        %3304 = vst [vmem:[%s3279 + $0x60] sm:$0xf] %v3239
        %3305 = vst [vmem:[%s3279 + $0x64] sm:$0xf] %v3240
        %3306 = vst [vmem:[%s3279 + $0x68] sm:$0xf] %v3241
        %3307 = vst [vmem:[%s3279 + $0x6c] sm:$0xf] %v3242
        %3308 = vst [vmem:[%s3279 + $0x70] sm:$0xf] %v3243
        %3309 = vst [vmem:[%s3279 + $0x74] sm:$0xf] %v3244
        %3310 = vst [vmem:[%s3279 + $0x78] sm:$0xf] %v3245
        %3311 = vst [vmem:[%s3279 + $0x7c] sm:$0xf] %v3246
        %v3312 = vpack.c.bf16 %v2358, %v2354
        %v3313 = vpack.c.bf16 %v2368, %v2364
        %v3314 = vpack.c.bf16 %v2378, %v2374
        %v3315 = vpack.c.bf16 %v2388, %v2384
        %v3316 = vpack.c.bf16 %v2398, %v2394
        %v3317 = vpack.c.bf16 %v2408, %v2404
        %v3318 = vpack.c.bf16 %v2418, %v2414
        %v3319 = vpack.c.bf16 %v2428, %v2424
        %v3320 = vpack.c.bf16 %v2438, %v2434
        %v3321 = vpack.c.bf16 %v2448, %v2444
        %v3322 = vpack.c.bf16 %v2458, %v2454
        %v3323 = vpack.c.bf16 %v2468, %v2464
        %v3324 = vpack.c.bf16 %v2478, %v2474
        %v3325 = vpack.c.bf16 %v2488, %v2484
        %v3326 = vpack.c.bf16 %v2498, %v2494
        %v3327 = vpack.c.bf16 %v2508, %v2504
        %v3344 = vunpack.c.l.b16 %v3312
        %v3345 = vunpack.c.h.b16 %v3312
        %v3346 = vunpack.c.l.b16 %v3313
        %v3347 = vunpack.c.h.b16 %v3313
        %v3348 = vunpack.c.l.b16 %v3314
        %v3349 = vunpack.c.h.b16 %v3314
        %v3350 = vunpack.c.l.b16 %v3315
        %v3351 = vunpack.c.h.b16 %v3315
        %v3352 = vunpack.c.l.b16 %v3316
        %v3353 = vunpack.c.h.b16 %v3316
        %v3354 = vunpack.c.l.b16 %v3317
        %v3355 = vunpack.c.h.b16 %v3317
        %v3356 = vunpack.c.l.b16 %v3318
        %v3357 = vunpack.c.h.b16 %v3318
        %v3358 = vunpack.c.l.b16 %v3319
        %v3359 = vunpack.c.h.b16 %v3319
        %v3360 = vunpack.c.l.b16 %v3320
        %v3361 = vunpack.c.h.b16 %v3320
        %v3362 = vunpack.c.l.b16 %v3321
        %v3363 = vunpack.c.h.b16 %v3321
        %v3364 = vunpack.c.l.b16 %v3322
        %v3365 = vunpack.c.h.b16 %v3322
        %v3366 = vunpack.c.l.b16 %v3323
        %v3367 = vunpack.c.h.b16 %v3323
        %v3368 = vunpack.c.l.b16 %v3324
        %v3369 = vunpack.c.h.b16 %v3324
        %v3370 = vunpack.c.l.b16 %v3325
        %v3371 = vunpack.c.h.b16 %v3325
        %v3372 = vunpack.c.l.b16 %v3326
        %v3373 = vunpack.c.h.b16 %v3326
        %v3374 = vunpack.c.l.b16 %v3327
        %v3375 = vunpack.c.h.b16 %v3327
        %v3376 = vpack.c.b16 %v3344, %v3344
        %v3377 = vpack.c.b16 %v3345, %v3345
        %v3378 = vpack.c.b16 %v3346, %v3346
        %v3379 = vpack.c.b16 %v3347, %v3347
        %v3380 = vpack.c.b16 %v3348, %v3348
        %v3381 = vpack.c.b16 %v3349, %v3349
        %v3382 = vpack.c.b16 %v3350, %v3350
        %v3383 = vpack.c.b16 %v3351, %v3351
        %v3384 = vpack.c.b16 %v3352, %v3352
        %v3385 = vpack.c.b16 %v3353, %v3353
        %v3386 = vpack.c.b16 %v3354, %v3354
        %v3387 = vpack.c.b16 %v3355, %v3355
        %v3388 = vpack.c.b16 %v3356, %v3356
        %v3389 = vpack.c.b16 %v3357, %v3357
        %v3390 = vpack.c.b16 %v3358, %v3358
        %v3391 = vpack.c.b16 %v3359, %v3359
        %v3392 = vpack.c.b16 %v3360, %v3360
        %v3393 = vpack.c.b16 %v3361, %v3361
        %v3394 = vpack.c.b16 %v3362, %v3362
        %v3395 = vpack.c.b16 %v3363, %v3363
        %v3396 = vpack.c.b16 %v3364, %v3364
        %v3397 = vpack.c.b16 %v3365, %v3365
        %v3398 = vpack.c.b16 %v3366, %v3366
        %v3399 = vpack.c.b16 %v3367, %v3367
        %v3400 = vpack.c.b16 %v3368, %v3368
        %v3401 = vpack.c.b16 %v3369, %v3369
        %v3402 = vpack.c.b16 %v3370, %v3370
        %v3403 = vpack.c.b16 %v3371, %v3371
        %v3404 = vpack.c.b16 %v3372, %v3372
        %v3405 = vpack.c.b16 %v3373, %v3373
        %v3406 = vpack.c.b16 %v3374, %v3374
        %v3407 = vpack.c.b16 %v3375, %v3375
        %s3440 = scalar_lea.vmem %s489, 128 [#allocation13]
        %3441 = vst [vmem:[%s3440] sm:$0xf] %v3376
        %3442 = vst [vmem:[%s3440 + $0x4] sm:$0xf] %v3377
        %3443 = vst [vmem:[%s3440 + $0x8] sm:$0xf] %v3378
        %3444 = vst [vmem:[%s3440 + $0xc] sm:$0xf] %v3379
        %3445 = vst [vmem:[%s3440 + $0x10] sm:$0xf] %v3380
        %3446 = vst [vmem:[%s3440 + $0x14] sm:$0xf] %v3381
        %3447 = vst [vmem:[%s3440 + $0x18] sm:$0xf] %v3382
        %3448 = vst [vmem:[%s3440 + $0x1c] sm:$0xf] %v3383
        %3449 = vst [vmem:[%s3440 + $0x20] sm:$0xf] %v3384
        %3450 = vst [vmem:[%s3440 + $0x24] sm:$0xf] %v3385
        %3451 = vst [vmem:[%s3440 + $0x28] sm:$0xf] %v3386
        %3452 = vst [vmem:[%s3440 + $0x2c] sm:$0xf] %v3387
        %3453 = vst [vmem:[%s3440 + $0x30] sm:$0xf] %v3388
        %3454 = vst [vmem:[%s3440 + $0x34] sm:$0xf] %v3389
        %3455 = vst [vmem:[%s3440 + $0x38] sm:$0xf] %v3390
        %3456 = vst [vmem:[%s3440 + $0x3c] sm:$0xf] %v3391
        %3457 = vst [vmem:[%s3440 + $0x40] sm:$0xf] %v3392
        %3458 = vst [vmem:[%s3440 + $0x44] sm:$0xf] %v3393
        %3459 = vst [vmem:[%s3440 + $0x48] sm:$0xf] %v3394
        %3460 = vst [vmem:[%s3440 + $0x4c] sm:$0xf] %v3395
        %3461 = vst [vmem:[%s3440 + $0x50] sm:$0xf] %v3396
        %3462 = vst [vmem:[%s3440 + $0x54] sm:$0xf] %v3397
        %3463 = vst [vmem:[%s3440 + $0x58] sm:$0xf] %v3398
        %3464 = vst [vmem:[%s3440 + $0x5c] sm:$0xf] %v3399
        %3465 = vst [vmem:[%s3440 + $0x60] sm:$0xf] %v3400
        %3466 = vst [vmem:[%s3440 + $0x64] sm:$0xf] %v3401
        %3467 = vst [vmem:[%s3440 + $0x68] sm:$0xf] %v3402
        %3468 = vst [vmem:[%s3440 + $0x6c] sm:$0xf] %v3403
        %3469 = vst [vmem:[%s3440 + $0x70] sm:$0xf] %v3404
        %3470 = vst [vmem:[%s3440 + $0x74] sm:$0xf] %v3405
        %3471 = vst [vmem:[%s3440 + $0x78] sm:$0xf] %v3406
        %3472 = vst [vmem:[%s3440 + $0x7c] sm:$0xf] %v3407
        %s3473 = sand.u32 %s252, 1
        %s3474 = scalar_lea.sflag [#allocation4], %s3473
        %s3475 = sand.u32 %s252, 1
        %s3476 = smul.addr %s3475, 256
        %s3477 = scalar_lea.vmem [#allocation10], %s3476
        %s3478 = sand.u32 %s34, 1
        %s3479 = scalar_lea.sflag [#allocation12], %s3478
        %s3480 = sand.u32 %s280, 1
        %s3481 = smul.addr %s3480, 256
        %s3482 = scalar_lea.vmem [#allocation11], %s3481
        %s3483 = sand.u32 %s34, 1
        %s3484 = scalar_lea.sflag [#allocation12], %s3483
        %s3485 = sand.u32 %s308, 1
        %s3486 = smul.addr %s3485, 256
        %s3487 = scalar_lea.vmem [#allocation13], %s3486
        // Predicated region
        $region73: #{tpu_custom_call.1} parent=55 // pred_check
          %p3488 = pneg %p262
        $region74: #{tpu_custom_call.1} parent=55 // pred_check_branch
          %3490 = sbr.rel (%p3488) target = $region76
        $region75: #{tpu_custom_call.1} parent=55 // pred_region
          #allocation15 [shape = 'u32[6]{0}', space=smem, size = 0x18, scoped, tag = 'DMA stride descriptor']
          %s3491 = smul.u32 32, %s39
          %s3493 = ssub.s32 4096, 4096
          %3494 = vsyncadd %s3474, %s3493
          %s3495 = smul.addr %s38, 128
          %s3496 = sadd.s32 %s3491, %s3495
          %s3497 = smul.addr %s3496, 64
          %s3498 = scalar_lea.hbm %s9, %s3497
          %s3500 = sshll.u32 1, 14
          %s3501 = sxor.u32 4294967295, %s3500
          %s3504 = sshll.u32 7, 18
          %s3505 = sxor.u32 4294967295, %s3504
          %s3506 = sand.u32 0, %s3505
          %s3508 = sor.u32 %s3506, 0
          %s3510 = sshll.u32 3, 24
          %s3511 = sxor.u32 4294967295, %s3510
          %s3512 = sand.u32 %s3508, %s3511
          %s3514 = sor.u32 %s3512, 0
          %s3515 = sshll.u32 %s3477, 4
          %s3516 = int_to_ptr.vmem [resolvable:$true] %s3515
          %3522 = sst [smem:[#allocation15]] 2048
          %s3523 = scalar_lea.smem [#allocation15], 1
          %3524 = sst [smem:[%s3523]] 4096
          %s3525 = scalar_lea.smem [#allocation15], 2
          %3526 = sst [smem:[%s3525]] 32
          %s3527 = scalar_lea.smem [#allocation15], 3
          %3528 = sst [smem:[%s3527]] 64
          %s3529 = scalar_lea.smem [#allocation15], 4
          %3530 = sst [smem:[%s3529]] 64
          %s3531 = scalar_lea.smem [#allocation15], 5
          %3532 = sst [smem:[%s3531]] 4
          %3534 = dma.general %s3516, 4096, %s3498, %s3474, [#allocation14], [#allocation15], %s3514, 0
        $region76: #{tpu_custom_call.1} parent=55 // pred_fallthru
          _
        // Predicated region
        $region77: #{tpu_custom_call.1} parent=55 // pred_check
          %p3535 = pneg %p290
        $region78: #{tpu_custom_call.1} parent=55 // pred_check_branch
          %3537 = sbr.rel (%p3535) target = $region80
        $region79: #{tpu_custom_call.1} parent=55 // pred_region
          #allocation17 [shape = 'u32[6]{0}', space=smem, size = 0x18, scoped, tag = 'DMA stride descriptor']
          %s3538 = smul.u32 32, %s39
          %s3540 = ssub.s32 4096, 4096
          %3541 = vsyncadd %s3479, %s3540
          %s3542 = smul.addr %s38, 128
          %s3543 = sadd.s32 %s3538, %s3542
          %s3544 = smul.addr %s3543, 64
          %s3545 = scalar_lea.hbm %s10, %s3544
          %s3547 = sshll.u32 1, 14
          %s3548 = sxor.u32 4294967295, %s3547
          %s3551 = sshll.u32 7, 18
          %s3552 = sxor.u32 4294967295, %s3551
          %s3553 = sand.u32 0, %s3552
          %s3555 = sor.u32 %s3553, 0
          %s3557 = sshll.u32 3, 24
          %s3558 = sxor.u32 4294967295, %s3557
          %s3559 = sand.u32 %s3555, %s3558
          %s3561 = sor.u32 %s3559, 0
          %s3562 = sshll.u32 %s3482, 4
          %s3563 = int_to_ptr.vmem [resolvable:$true] %s3562
          %3569 = sst [smem:[#allocation17]] 2048
          %s3570 = scalar_lea.smem [#allocation17], 1
          %3571 = sst [smem:[%s3570]] 4096
          %s3572 = scalar_lea.smem [#allocation17], 2
          %3573 = sst [smem:[%s3572]] 32
          %s3574 = scalar_lea.smem [#allocation17], 3
          %3575 = sst [smem:[%s3574]] 64
          %s3576 = scalar_lea.smem [#allocation17], 4
          %3577 = sst [smem:[%s3576]] 64
          %s3578 = scalar_lea.smem [#allocation17], 5
          %3579 = sst [smem:[%s3578]] 4
          %3581 = dma.general %s3563, 4096, %s3545, %s3479, [#allocation16], [#allocation17], %s3561, 0
        $region80: #{tpu_custom_call.1} parent=55 // pred_fallthru
          _
        // Predicated region
        $region81: #{tpu_custom_call.1} parent=55 // pred_check
          %p3582 = pneg %p318
        $region82: #{tpu_custom_call.1} parent=55 // pred_check_branch
          %3584 = sbr.rel (%p3582) target = $region84
        $region83: #{tpu_custom_call.1} parent=55 // pred_region
          #allocation19 [shape = 'u32[6]{0}', space=smem, size = 0x18, scoped, tag = 'DMA stride descriptor']
          %s3585 = smul.u32 32, %s39
          %s3587 = ssub.s32 4096, 4096
          %3588 = vsyncadd %s3484, %s3587
          %s3589 = smul.addr %s38, 128
          %s3590 = sadd.s32 %s3585, %s3589
          %s3591 = smul.addr %s3590, 64
          %s3592 = scalar_lea.hbm %s11, %s3591
          %s3594 = sshll.u32 1, 14
          %s3595 = sxor.u32 4294967295, %s3594
          %s3598 = sshll.u32 7, 18
          %s3599 = sxor.u32 4294967295, %s3598
          %s3600 = sand.u32 0, %s3599
          %s3602 = sor.u32 %s3600, 0
          %s3604 = sshll.u32 3, 24
          %s3605 = sxor.u32 4294967295, %s3604
          %s3606 = sand.u32 %s3602, %s3605
          %s3608 = sor.u32 %s3606, 0
          %s3609 = sshll.u32 %s3487, 4
          %s3610 = int_to_ptr.vmem [resolvable:$true] %s3609
          %3616 = sst [smem:[#allocation19]] 2048
          %s3617 = scalar_lea.smem [#allocation19], 1
          %3618 = sst [smem:[%s3617]] 4096
          %s3619 = scalar_lea.smem [#allocation19], 2
          %3620 = sst [smem:[%s3619]] 32
          %s3621 = scalar_lea.smem [#allocation19], 3
          %3622 = sst [smem:[%s3621]] 64
          %s3623 = scalar_lea.smem [#allocation19], 4
          %3624 = sst [smem:[%s3623]] 64
          %s3625 = scalar_lea.smem [#allocation19], 5
          %3626 = sst [smem:[%s3625]] 4
          %3628 = dma.general %s3610, 4096, %s3592, %s3484, [#allocation18], [#allocation19], %s3608, 0
        $region84: #{tpu_custom_call.1} parent=55 // pred_fallthru
          _
      $region56: #{tpu_custom_call.1} parent=5 // pred_fallthru
        _
      %p3629 = scmp.le.s32.totalorder 2, %s29
      // Predicated region
      $region85: #{tpu_custom_call.1} parent=5 // pred_check
        %p3630 = pneg %p3629
      $region86: #{tpu_custom_call.1} parent=5 // pred_check_branch
        %3632 = sbr.rel (%p3630) target = $region88
      $region87: #{tpu_custom_call.1} parent=5 // pred_region
        %s3633 = ssub.s32 %s29, 2
        // Predicated region
        $region89: #{tpu_custom_call.1} parent=87 // pred_check
          %p3634 = pneg %p268
        $region90: #{tpu_custom_call.1} parent=87 // pred_check_branch
          %3636 = sbr.rel (%p3634) target = $region92
        $region91: #{tpu_custom_call.1} parent=87 // pred_region
          %s3637 = sand.u32 %s253, 1
          %s3638 = scalar_lea.sflag [#allocation4], %s3637
          %s3639 = sand.u32 %s253, 1
          %s3640 = smul.addr %s3639, 256
          %s3641 = scalar_lea.vmem [#allocation10], %s3640
          %3642 = dma.done %s3638, 4096
        $region92: #{tpu_custom_call.1} parent=87 // pred_fallthru
          _
        // Predicated region
        $region93: #{tpu_custom_call.1} parent=87 // pred_check
          %p3643 = pneg %p296
        $region94: #{tpu_custom_call.1} parent=87 // pred_check_branch
          %3645 = sbr.rel (%p3643) target = $region96
        $region95: #{tpu_custom_call.1} parent=87 // pred_region
          %s3646 = sand.u32 %s35, 1
          %s3647 = scalar_lea.sflag [#allocation12], %s3646
          %s3648 = sand.u32 %s281, 1
          %s3649 = smul.addr %s3648, 256
          %s3650 = scalar_lea.vmem [#allocation11], %s3649
          %3651 = dma.done %s3647, 4096
        $region96: #{tpu_custom_call.1} parent=87 // pred_fallthru
          _
        // Predicated region
        $region97: #{tpu_custom_call.1} parent=87 // pred_check
          %p3652 = pneg %p324
        $region98: #{tpu_custom_call.1} parent=87 // pred_check_branch
          %3654 = sbr.rel (%p3652) target = $region100
        $region99: #{tpu_custom_call.1} parent=87 // pred_region
          %s3655 = sand.u32 %s35, 1
          %s3656 = scalar_lea.sflag [#allocation12], %s3655
          %s3657 = sand.u32 %s309, 1
          %s3658 = smul.addr %s3657, 256
          %s3659 = scalar_lea.vmem [#allocation13], %s3658
          %3660 = dma.done %s3656, 4096
        $region100: #{tpu_custom_call.1} parent=87 // pred_fallthru
          _
      $region88: #{tpu_custom_call.1} parent=5 // pred_fallthru
        _
    $region6: #{tpu_custom_call.1} parent=1 // loop_footer
      %s33 = sadd.s32 1, %s29
    $region7: #{tpu_custom_call.1} parent=1 // loop_footer_branch
      %28 = sbr.rel target = $region3
    $region8: #{tpu_custom_call.1} parent=1 // loop_exit
      _
    %3661 = vsyncpa [#allocation3], 1
    %s3662 = scalar_lea.sflag [#allocation3], 1
    %3663 = vsyncpa %s3662, 1
    %3664 = vsyncpa [#allocation6], 1
    %3665 = vsyncpa [#allocation9], 1
    %3666 = vsyncpa [#allocation4], 1
    %s3667 = scalar_lea.sflag [#allocation4], 1
    %3668 = vsyncpa %s3667, 1
    %3669 = vsyncpa [#allocation12], 1
    %s3670 = scalar_lea.sflag [#allocation12], 1
    %3671 = vsyncpa %s3670, 1

</llo_original>
